<compile_context>
chip_gen: v7x
topology: tpu7x:2x2x1
jax: 0.10.0
libtpu: 0.0.40
codegen_flags: <defaults>
</compile_context>

<pallas_src>
import math
from functools import partial

import jax
import jax.numpy as jnp
from jax import lax
from jax.experimental import pallas as pl
from jax.experimental.pallas import tpu as pltpu

# Matmul-operand dtype (f32 accumulation kept everywhere).
MM_DTYPE = jnp.bfloat16


# ----------------------------------------------------------------------------
# Kernel 1: row-tiled dense linear (plain, and fused eval-BN + ReLU variant)
# ----------------------------------------------------------------------------
def _linear_kernel(x_ref, w_ref, b_ref, o_ref):
    y = jnp.dot(x_ref[...].astype(MM_DTYPE), w_ref[...].astype(MM_DTYPE),
                preferred_element_type=jnp.float32) + b_ref[...]
    o_ref[...] = y


def _linear_bn_relu_kernel(x_ref, w_ref, b_ref, sc_ref, sh_ref, o_ref):
    y = jnp.dot(x_ref[...].astype(MM_DTYPE), w_ref[...].astype(MM_DTYPE),
                preferred_element_type=jnp.float32) + b_ref[...]
    o_ref[...] = jnp.maximum(y * sc_ref[...] + sh_ref[...], 0.0)


def linear(x2d, w, b, scale=None, shift=None, *, block_rows=512):
    M, Cin = x2d.shape
    Cout = w.shape[1]
    tm = M if M <= block_rows else block_rows          # block_rows is 8-aligned
    grid = (pl.cdiv(M, tm),)
    rep2 = lambda i: (0, 0)
    in_specs = [
        pl.BlockSpec((tm, Cin), lambda i: (i, 0)),
        pl.BlockSpec((Cin, Cout), rep2),
        pl.BlockSpec((1, Cout), rep2),
    ]
    args = [x2d, w, b.reshape(1, -1)]
    if scale is not None:
        kernel = _linear_bn_relu_kernel
        in_specs += [pl.BlockSpec((1, Cout), rep2), pl.BlockSpec((1, Cout), rep2)]
        args += [scale.reshape(1, -1), shift.reshape(1, -1)]
    else:
        kernel = _linear_kernel
    return pl.pallas_call(
        kernel,
        out_shape=jax.ShapeDtypeStruct((M, Cout), jnp.float32),
        grid=grid,
        in_specs=in_specs,
        out_specs=pl.BlockSpec((tm, Cout), lambda i: (i, 0)),
        compiler_params=pltpu.CompilerParams(dimension_semantics=("parallel",)),
    )(*args)


# ----------------------------------------------------------------------------
# Kernel 2: fused per-layer DensePool step (per batch element):
#   agg   = adj @ x + x                        (shared GIN aggregation)
#   s_raw = MLP_pool(agg) * mask               (assignment logits)
#   y     = relu(BN(MLP_feat(agg) * mask))     (feature path + bnsc)
#   s     = softmax(s_raw)
#   x_p   = s^T y,  adj_p = s^T adj s
#   link  = ||adj||^2 - 2 tr(adj_p) + ||s^T s||^2   (Frobenius identity)
#   ent   = sum(-s log(s + eps))
#   embd  = relu(BN(sum_k x_p))                (bns_embd)
# ----------------------------------------------------------------------------
def _fused_layer_kernel(*refs, use_mask):
    if use_mask:
        (nvalid_ref, x_ref, adj_ref,
         pw1_ref, pb1_ref, pw2_ref, pb2_ref,
         fw1_ref, fb1_ref, fw2_ref, fb2_ref,
         csc_ref, csh_ref, esc_ref, esh_ref,
         xo_ref, adjo_ref, embd_ref, link_ref, ent_ref) = refs
    else:
        (x_ref, adj_ref,
         pw1_ref, pb1_ref, pw2_ref, pb2_ref,
         fw1_ref, fb1_ref, fw2_ref, fb2_ref,
         csc_ref, csh_ref, esc_ref, esh_ref,
         xo_ref, adjo_ref, embd_ref, link_ref, ent_ref) = refs

    x = x_ref[0]                                     # [N, Cin] f32
    adj = adj_ref[0]                                 # [N, N]   f32
    N = x.shape[0]
    K = pw2_ref.shape[1]

    adj_mm = adj.astype(MM_DTYPE)
    # shared GIN aggregation (eps = 0, add_loop): adj @ x + x
    agg = jnp.dot(adj_mm, x.astype(MM_DTYPE),
                  preferred_element_type=jnp.float32) + x
    agg_mm = agg.astype(MM_DTYPE)

    # assignment MLP: Linear -> ReLU -> Linear
    hp = jnp.maximum(
        jnp.dot(agg_mm, pw1_ref[...].astype(MM_DTYPE),
                preferred_element_type=jnp.float32) + pb1_ref[...], 0.0)
    s_raw = jnp.dot(hp.astype(MM_DTYPE), pw2_ref[...].astype(MM_DTYPE),
                    preferred_element_type=jnp.float32) + pb2_ref[...]

    # feature MLP: Linear -> ReLU -> Linear
    hf = jnp.maximum(
        jnp.dot(agg_mm, fw1_ref[...].astype(MM_DTYPE),
                preferred_element_type=jnp.float32) + fb1_ref[...], 0.0)
    y = jnp.dot(hf.astype(MM_DTYPE), fw2_ref[...].astype(MM_DTYPE),
                preferred_element_type=jnp.float32) + fb2_ref[...]

    if use_mask:
        b = pl.program_id(0)
        nvalid = nvalid_ref[b]
        row = lax.broadcasted_iota(jnp.int32, (N, 1), 0)
        mask = (row < nvalid).astype(jnp.float32)    # [N, 1]
        s_raw = s_raw * mask
        y = y * mask

    # bnsc (eval) + ReLU on the feature path
    y = jnp.maximum(y * csc_ref[...] + csh_ref[...], 0.0)

    # softmax over cluster dim (f32; divide on the EUP slot)
    m = jnp.max(s_raw, axis=-1, keepdims=True)
    e = jnp.exp(s_raw - m)
    s = e * pl.reciprocal(jnp.sum(e, axis=-1, keepdims=True), approx=True)  # [N, K]
    s_mm = s.astype(MM_DTYPE)

    cN = (((0,), (0,)), ((), ()))                    # contract over the node dim
    x_p = lax.dot_general(s_mm, y.astype(MM_DTYPE), cN,
                          preferred_element_type=jnp.float32)               # [K, Cout]
    adj_s = jnp.dot(adj_mm, s_mm, preferred_element_type=jnp.float32)       # [N, K]
    adj_p = lax.dot_general(s_mm, adj_s.astype(MM_DTYPE), cN,
                            preferred_element_type=jnp.float32)             # [K, K]
    xo_ref[0] = x_p
    adjo_ref[0] = adj_p

    # link loss via ||adj - s s^T||^2 = ||adj||^2 - 2 tr(s^T adj s) + ||s^T s||^2
    sts = lax.dot_general(s, s, cN, preferred_element_type=jnp.float32)     # [K, K]
    rk = lax.broadcasted_iota(jnp.int32, (K, K), 0)
    ck = lax.broadcasted_iota(jnp.int32, (K, K), 1)
    eye = (rk == ck).astype(jnp.float32)
    adj_sq = jnp.sum(adj * adj, keepdims=True).reshape(1, 1)
    tr = jnp.sum(adj_p * eye, keepdims=True).reshape(1, 1)
    sts_sq = jnp.sum(sts * sts, keepdims=True).reshape(1, 1)
    link_ref[...] = (adj_sq - 2.0 * tr + sts_sq).reshape(1, 1, 1)
    # entropy loss partial: sum(-s log(s + eps))
    ent_ref[...] = jnp.sum(-s * jnp.log(s + 1e-15),
                           keepdims=True).reshape(1, 1, 1)

    # layer embedding: sum over pooled nodes, then eval-BN + ReLU
    embd = jnp.sum(x_p, axis=0, keepdims=True)                              # [1, Cout]
    embd_ref[0] = jnp.maximum(embd * esc_ref[...] + esh_ref[...], 0.0)


def fused_layer(x, adj, num_valid, pool_params, feat_params, bnsc, bn_embd):
    B, N, Cin = x.shape
    pw1, pb1, pw2, pb2 = pool_params
    fw1, fb1, fw2, fb2 = feat_params
    csc, csh = bnsc
    esc, esh = bn_embd
    K = pw2.shape[1]
    Cout = fw2.shape[1]
    use_mask = num_valid is not None

    if use_mask:
        def im3(b, nv): return (b, 0, 0)
        def im2(b, nv): return (0, 0)
    else:
        def im3(b): return (b, 0, 0)
        def im2(b): return (0, 0)

    in_specs = [
        pl.BlockSpec((1, N, Cin), im3),      # x
        pl.BlockSpec((1, N, N), im3),        # adj
        pl.BlockSpec((Cin, K), im2),         # pool w1
        pl.BlockSpec((1, K), im2),           # pool b1
        pl.BlockSpec((K, K), im2),           # pool w2
        pl.BlockSpec((1, K), im2),           # pool b2
        pl.BlockSpec((Cin, Cout), im2),      # feat w1
        pl.BlockSpec((1, Cout), im2),        # feat b1
        pl.BlockSpec((Cout, Cout), im2),     # feat w2
        pl.BlockSpec((1, Cout), im2),        # feat b2
        pl.BlockSpec((1, Cout), im2),        # bnsc scale
        pl.BlockSpec((1, Cout), im2),        # bnsc shift
        pl.BlockSpec((1, Cout), im2),        # bns_embd scale
        pl.BlockSpec((1, Cout), im2),        # bns_embd shift
    ]
    out_specs = [
        pl.BlockSpec((1, K, Cout), im3),
        pl.BlockSpec((1, K, K), im3),
        pl.BlockSpec((1, 1, Cout), im3),
        pl.BlockSpec((1, 1, 1), im3),
        pl.BlockSpec((1, 1, 1), im3),
    ]
    out_shape = (
        jax.ShapeDtypeStruct((B, K, Cout), jnp.float32),
        jax.ShapeDtypeStruct((B, K, K), jnp.float32),
        jax.ShapeDtypeStruct((B, 1, Cout), jnp.float32),
        jax.ShapeDtypeStruct((B, 1, 1), jnp.float32),
        jax.ShapeDtypeStruct((B, 1, 1), jnp.float32),
    )
    grid_spec = pltpu.PrefetchScalarGridSpec(
        num_scalar_prefetch=1 if use_mask else 0,
        grid=(B,),
        in_specs=in_specs,
        out_specs=out_specs,
    )
    args = (x, adj,
            pw1, pb1.reshape(1, -1), pw2, pb2.reshape(1, -1),
            fw1, fb1.reshape(1, -1), fw2, fb2.reshape(1, -1),
            csc.reshape(1, -1), csh.reshape(1, -1),
            esc.reshape(1, -1), esh.reshape(1, -1))
    if use_mask:
        args = (num_valid.astype(jnp.int32),) + args

    x_p, adj_p, embd, link_p, ent_p = pl.pallas_call(
        partial(_fused_layer_kernel, use_mask=use_mask),
        out_shape=out_shape,
        grid_spec=grid_spec,
        compiler_params=pltpu.CompilerParams(
            dimension_semantics=("parallel",),
            vmem_limit_bytes=64 * 1024 * 1024),
    )(*args)
    return x_p, adj_p, embd.reshape(B, Cout), link_p, ent_p


# ----------------------------------------------------------------------------
# Parameter initialization (deterministic, PyTorch-Linear-style uniform)
# ----------------------------------------------------------------------------
def init_linear_params(key, fan_in, fan_out):
    k1, k2 = jax.random.split(key)
    bound = 1.0 / math.sqrt(fan_in)
    w = jax.random.uniform(k1, (fan_in, fan_out), jnp.float32, -bound, bound)
    b = jax.random.uniform(k2, (fan_out,), jnp.float32, -bound, bound)
    return w, b


def init_gin_mlp(key, cin, cout):
    k1, k2 = jax.random.split(key)
    w1, b1 = init_linear_params(k1, cin, cout)
    w2, b2 = init_linear_params(k2, cout, cout)
    return (w1, b1, w2, b2)


def init_bn(c, eps=1e-5):
    # eval-mode BatchNorm after reset_parameters: gamma=1, beta=0, mean=0, var=1
    gamma = jnp.ones((c,), jnp.float32)
    beta = jnp.zeros((c,), jnp.float32)
    mean = jnp.zeros((c,), jnp.float32)
    var = jnp.ones((c,), jnp.float32)
    scale = gamma / jnp.sqrt(var + eps)
    shift = beta - mean * scale
    return scale, shift


def build_params(key, in_channels, hidden, out_channels, num_classes,
                 num_layers, ratio, max_nodes):
    keys = list(jax.random.split(key, 32))
    nxt = iter(keys)
    params = {}
    params["lin_start"] = init_linear_params(next(nxt), in_channels, hidden)
    params["bn_start"] = init_bn(hidden)
    in_c = hidden
    convs, convs_pool, bnsc, bns_embd = [], [], [], []
    num_nodes = max_nodes
    for _ in range(num_layers - 1):
        num_nodes = math.ceil(ratio * num_nodes)
        convs.append(init_gin_mlp(next(nxt), in_c, hidden))
        convs_pool.append(init_gin_mlp(next(nxt), in_c, num_nodes))
        in_c = hidden
    for _ in range(num_layers - 1):
        bnsc.append(init_bn(hidden))
        bns_embd.append(init_bn(hidden))
    convs.append(init_gin_mlp(next(nxt), hidden, out_channels))
    convs_pool.append(init_gin_mlp(next(nxt), hidden, math.ceil(ratio * num_nodes)))
    bnsc.append(init_bn(out_channels))
    bns_embd.append(init_bn(out_channels))
    params["convs"] = convs
    params["convs_pool"] = convs_pool
    params["bnsc"] = bnsc
    params["bns_embd"] = bns_embd
    params["lin"] = init_linear_params(
        next(nxt), hidden * (num_layers - 1) + out_channels, num_classes)
    # NOTE: self.bns in the reference module is created but never used in forward.
    return params


# ----------------------------------------------------------------------------
# Full forward pass (eval mode)
# ----------------------------------------------------------------------------
@partial(jax.jit, static_argnames=("num_layers",))
def densepool_forward(params, x, adj, num_valid, num_layers):
    B, N, _ = x.shape
    # lin_start + bn_start + ReLU  (fused BN/ReLU linear, row-tiled)
    w, b = params["lin_start"]
    sc, sh = params["bn_start"]
    x = linear(x.reshape(B * N, -1), w, b, sc, sh).reshape(B, N, -1)

    embds = []
    link_parts, ent_parts, layer_nodes = [], [], []
    nvalid = num_valid
    for i in range(num_layers):
        layer_nodes.append(x.shape[1])
        x, adj, embd, link_p, ent_p = fused_layer(
            x, adj, nvalid,
            params["convs_pool"][i], params["convs"][i],
            params["bnsc"][i], params["bns_embd"][i])
        link_parts.append(link_p)
        ent_parts.append(ent_p)
        embds.append(embd)          # dropout is identity in eval mode
        nvalid = None               # mask only applies to the first layer

    # per-layer pool losses:  torch.norm(adj - s s^T, p=2) / adj.numel()
    #                       + mean(-s log(s + eps)) over (B, N_layer)
    pool_loss = 0.0
    for i in range(num_layers):
        Nl = layer_nodes[i]
        link_loss = jnp.sqrt(jnp.maximum(jnp.sum(link_parts[i]), 0.0)) / (B * Nl * Nl)
        ent_loss = jnp.sum(ent_parts[i]) / (B * Nl)
        pool_loss = pool_loss + link_loss + ent_loss

    embds = jnp.concatenate(embds, axis=-1)
    lw, lb = params["lin"]
    out = linear(embds, lw, lb)
    return out, pool_loss


if __name__ == "__main__":
    B, max_nodes, in_channels = 2, 16, 4
    hidden, out_channels, num_classes, num_layers = 32, 32, 3, 3
    ratio = 0.5

    root = jax.random.PRNGKey(0)
    kparam, kx, ka = jax.random.split(root, 3)
    params = build_params(kparam, in_channels, hidden, out_channels,
                          num_classes, num_layers, ratio, max_nodes)

    # synthetic dense batch (what to_dense_batch / to_dense_adj would produce)
    num_valid = jnp.array([16, 12], dtype=jnp.int32)
    mask = (jnp.arange(max_nodes)[None, :] < num_valid[:, None]).astype(jnp.float32)
    x = jax.random.normal(kx, (B, max_nodes, in_channels), jnp.float32) * mask[..., None]
    adj_r = (jax.random.uniform(ka, (B, max_nodes, max_nodes)) < 0.3).astype(jnp.float32)
    adj = jnp.maximum(adj_r, adj_r.transpose(0, 2, 1))
    adj = adj * (1.0 - jnp.eye(max_nodes, dtype=jnp.float32))
    adj = adj * mask[:, :, None] * mask[:, None, :]

    out, pool_loss = densepool_forward(params, x, adj, num_valid, num_layers)
    jax.block_until_ready((out, pool_loss))
    assert out.shape == (B, num_classes)
    assert pool_loss.shape == ()
    print("KERNEL_OK")
</pallas_src>

<mosaic_0001>
module attributes {stable_mosaic.version = 11 : i64} {
  func.func @_linear_bn_relu_kernel(%arg0: i32, %arg1: memref<32x4xf32, #tpu.memory_space<vmem>>, %arg2: memref<4x32xf32, #tpu.memory_space<vmem>>, %arg3: memref<1x32xf32, #tpu.memory_space<vmem>>, %arg4: memref<1x32xf32, #tpu.memory_space<vmem>>, %arg5: memref<1x32xf32, #tpu.memory_space<vmem>>, %arg6: memref<32x32xf32, #tpu.memory_space<vmem>>) attributes {dimension_semantics = [#tpu.dimension_semantics<parallel>], iteration_bounds = array<i64: 1>, scalar_prefetch = 0 : i64, scratch_operands = 0 : i64, tpu.core_type = #tpu.core_type<tc>, window_params = [{transform_indices = @transform_0, window_bounds = array<i64: 32, 4>}, {pipeline_mode = #tpu.pipeline_mode<synchronous>, transform_indices = @transform_1, window_bounds = array<i64: 4, 32>}, {pipeline_mode = #tpu.pipeline_mode<synchronous>, transform_indices = @transform_2, window_bounds = array<i64: 1, 32>}, {pipeline_mode = #tpu.pipeline_mode<synchronous>, transform_indices = @transform_3, window_bounds = array<i64: 1, 32>}, {pipeline_mode = #tpu.pipeline_mode<synchronous>, transform_indices = @transform_4, window_bounds = array<i64: 1, 32>}, {transform_indices = @transform_5, window_bounds = array<i64: 32, 32>}]} {
    %c0 = arith.constant 0 : index
    %c0_0 = arith.constant 0 : index
    %0 = vector.load %arg1[%c0, %c0_0] : memref<32x4xf32, #tpu.memory_space<vmem>>, vector<32x4xf32>
    %1 = arith.truncf %0 : vector<32x4xf32> to vector<32x4xbf16>
    %c0_1 = arith.constant 0 : index
    %c0_2 = arith.constant 0 : index
    %2 = vector.load %arg2[%c0_1, %c0_2] : memref<4x32xf32, #tpu.memory_space<vmem>>, vector<4x32xf32>
    %3 = arith.truncf %2 : vector<4x32xf32> to vector<4x32xbf16>
    %cst = arith.constant dense<0.000000e+00> : vector<32x32xf32>
    %4 = tpu.matmul %1, %3, %cst {dimension_numbers = #tpu.dot_dimension_numbers<[1], [0], [0], [1], [0, 0, 1, 1], [], []>} : vector<32x4xbf16>, vector<4x32xbf16>, vector<32x32xf32> -> vector<32x32xf32>
    %c0_3 = arith.constant 0 : index
    %c0_4 = arith.constant 0 : index
    %5 = vector.load %arg3[%c0_3, %c0_4] : memref<1x32xf32, #tpu.memory_space<vmem>>, vector<1x32xf32>
    %6 = vector.broadcast %5 : vector<1x32xf32> to vector<32x32xf32>
    %7 = arith.addf %4, %6 : vector<32x32xf32>
    %c0_5 = arith.constant 0 : index
    %c0_6 = arith.constant 0 : index
    %8 = vector.load %arg4[%c0_5, %c0_6] : memref<1x32xf32, #tpu.memory_space<vmem>>, vector<1x32xf32>
    %9 = vector.broadcast %8 : vector<1x32xf32> to vector<32x32xf32>
    %10 = arith.mulf %7, %9 : vector<32x32xf32>
    %c0_7 = arith.constant 0 : index
    %c0_8 = arith.constant 0 : index
    %11 = vector.load %arg5[%c0_7, %c0_8] : memref<1x32xf32, #tpu.memory_space<vmem>>, vector<1x32xf32>
    %12 = vector.broadcast %11 : vector<1x32xf32> to vector<32x32xf32>
    %13 = arith.addf %10, %12 : vector<32x32xf32>
    %cst_9 = arith.constant 0.000000e+00 : f32
    %14 = vector.broadcast %cst_9 : f32 to vector<32x32xf32>
    %15 = arith.maximumf %13, %14 : vector<32x32xf32>
    %c0_10 = arith.constant 0 : index
    %c0_11 = arith.constant 0 : index
    %16 = vector.load %arg6[%c0_10, %c0_11] : memref<32x32xf32, #tpu.memory_space<vmem>>, vector<32x32xf32>
    tpu.vector_store %arg6[%c0_10, %c0_11], %15 {strides = array<i32>} : memref<32x32xf32, #tpu.memory_space<vmem>>, vector<32x32xf32>,
    return
  }
  func.func @transform_0(%arg0: i32) -> (i32, i32) {
    %c0_i32 = arith.constant 0 : i32
    %c0_i32_0 = arith.constant 0 : i32
    return %arg0, %c0_i32 : i32, i32
  }
  func.func @transform_1(%arg0: i32) -> (i32, i32) {
    %c0_i32 = arith.constant 0 : i32
    %c0_i32_0 = arith.constant 0 : i32
    %c0_i32_1 = arith.constant 0 : i32
    return %c0_i32, %c0_i32_0 : i32, i32
  }
  func.func @transform_2(%arg0: i32) -> (i32, i32) {
    %c0_i32 = arith.constant 0 : i32
    %c0_i32_0 = arith.constant 0 : i32
    %c0_i32_1 = arith.constant 0 : i32
    return %c0_i32, %c0_i32_0 : i32, i32
  }
  func.func @transform_3(%arg0: i32) -> (i32, i32) {
    %c0_i32 = arith.constant 0 : i32
    %c0_i32_0 = arith.constant 0 : i32
    %c0_i32_1 = arith.constant 0 : i32
    return %c0_i32, %c0_i32_0 : i32, i32
  }
  func.func @transform_4(%arg0: i32) -> (i32, i32) {
    %c0_i32 = arith.constant 0 : i32
    %c0_i32_0 = arith.constant 0 : i32
    %c0_i32_1 = arith.constant 0 : i32
    return %c0_i32, %c0_i32_0 : i32, i32
  }
  func.func @transform_5(%arg0: i32) -> (i32, i32) {
    %c0_i32 = arith.constant 0 : i32
    %c0_i32_0 = arith.constant 0 : i32
    return %arg0, %c0_i32 : i32, i32
  }
}

module attributes {stable_mosaic.version = 11 : i64} {
  func.func @_fused_layer_kernel(%arg0: i32, %arg1: memref<2xi32, #tpu.memory_space<smem>>, %arg2: memref<1x16x32xf32, #tpu.memory_space<vmem>>, %arg3: memref<1x16x16xf32, #tpu.memory_space<vmem>>, %arg4: memref<32x8xf32, #tpu.memory_space<vmem>>, %arg5: memref<1x8xf32, #tpu.memory_space<vmem>>, %arg6: memref<8x8xf32, #tpu.memory_space<vmem>>, %arg7: memref<1x8xf32, #tpu.memory_space<vmem>>, %arg8: memref<32x32xf32, #tpu.memory_space<vmem>>, %arg9: memref<1x32xf32, #tpu.memory_space<vmem>>, %arg10: memref<32x32xf32, #tpu.memory_space<vmem>>, %arg11: memref<1x32xf32, #tpu.memory_space<vmem>>, %arg12: memref<1x32xf32, #tpu.memory_space<vmem>>, %arg13: memref<1x32xf32, #tpu.memory_space<vmem>>, %arg14: memref<1x32xf32, #tpu.memory_space<vmem>>, %arg15: memref<1x32xf32, #tpu.memory_space<vmem>>, %arg16: memref<1x8x32xf32, #tpu.memory_space<vmem>>, %arg17: memref<1x8x8xf32, #tpu.memory_space<vmem>>, %arg18: memref<1x1x32xf32, #tpu.memory_space<vmem>>, %arg19: memref<1x1x1xf32, #tpu.memory_space<vmem>>, %arg20: memref<1x1x1xf32, #tpu.memory_space<vmem>>) attributes {dimension_semantics = [#tpu.dimension_semantics<parallel>], iteration_bounds = array<i64: 2>, scalar_prefetch = 1 : i64, scratch_operands = 0 : i64, tpu.core_type = #tpu.core_type<tc>, window_params = [{transform_indices = @transform_0, window_bounds = array<i64: 1, 16, 32>}, {transform_indices = @transform_1, window_bounds = array<i64: 1, 16, 16>}, {pipeline_mode = #tpu.pipeline_mode<synchronous>, transform_indices = @transform_2, window_bounds = array<i64: 32, 8>}, {pipeline_mode = #tpu.pipeline_mode<synchronous>, transform_indices = @transform_3, window_bounds = array<i64: 1, 8>}, {pipeline_mode = #tpu.pipeline_mode<synchronous>, transform_indices = @transform_4, window_bounds = array<i64: 8, 8>}, {pipeline_mode = #tpu.pipeline_mode<synchronous>, transform_indices = @transform_5, window_bounds = array<i64: 1, 8>}, {pipeline_mode = #tpu.pipeline_mode<synchronous>, transform_indices = @transform_6, window_bounds = array<i64: 32, 32>}, {pipeline_mode = #tpu.pipeline_mode<synchronous>, transform_indices = @transform_7, window_bounds = array<i64: 1, 32>}, {pipeline_mode = #tpu.pipeline_mode<synchronous>, transform_indices = @transform_8, window_bounds = array<i64: 32, 32>}, {pipeline_mode = #tpu.pipeline_mode<synchronous>, transform_indices = @transform_9, window_bounds = array<i64: 1, 32>}, {pipeline_mode = #tpu.pipeline_mode<synchronous>, transform_indices = @transform_10, window_bounds = array<i64: 1, 32>}, {pipeline_mode = #tpu.pipeline_mode<synchronous>, transform_indices = @transform_11, window_bounds = array<i64: 1, 32>}, {pipeline_mode = #tpu.pipeline_mode<synchronous>, transform_indices = @transform_12, window_bounds = array<i64: 1, 32>}, {pipeline_mode = #tpu.pipeline_mode<synchronous>, transform_indices = @transform_13, window_bounds = array<i64: 1, 32>}, {transform_indices = @transform_14, window_bounds = array<i64: 1, 8, 32>}, {transform_indices = @transform_15, window_bounds = array<i64: 1, 8, 8>}, {transform_indices = @transform_16, window_bounds = array<i64: 1, 1, 32>}, {transform_indices = @transform_17, window_bounds = array<i64: 1, 1, 1>}, {transform_indices = @transform_18, window_bounds = array<i64: 1, 1, 1>}]} {
    %c0 = arith.constant 0 : index
    %c0_0 = arith.constant 0 : index
    %c0_1 = arith.constant 0 : index
    %0 = vector.load %arg2[%c0, %c0_0, %c0_1] : memref<1x16x32xf32, #tpu.memory_space<vmem>>, vector<1x16x32xf32>
    %1 = vector.shape_cast %0 : vector<1x16x32xf32> to vector<16x32xf32>
    %c0_2 = arith.constant 0 : index
    %c0_3 = arith.constant 0 : index
    %c0_4 = arith.constant 0 : index
    %2 = vector.load %arg3[%c0_2, %c0_3, %c0_4] : memref<1x16x16xf32, #tpu.memory_space<vmem>>, vector<1x16x16xf32>
    %3 = vector.shape_cast %2 : vector<1x16x16xf32> to vector<16x16xf32>
    %4 = arith.truncf %3 : vector<16x16xf32> to vector<16x16xbf16>
    %5 = arith.truncf %1 : vector<16x32xf32> to vector<16x32xbf16>
    %cst = arith.constant dense<0.000000e+00> : vector<16x32xf32>
    %6 = tpu.matmul %4, %5, %cst {dimension_numbers = #tpu.dot_dimension_numbers<[1], [0], [0], [1], [0, 0, 1, 1], [], []>} : vector<16x16xbf16>, vector<16x32xbf16>, vector<16x32xf32> -> vector<16x32xf32>
    %7 = arith.addf %6, %1 : vector<16x32xf32>
    %8 = arith.truncf %7 : vector<16x32xf32> to vector<16x32xbf16>
    %c0_5 = arith.constant 0 : index
    %c0_6 = arith.constant 0 : index
    %9 = vector.load %arg4[%c0_5, %c0_6] : memref<32x8xf32, #tpu.memory_space<vmem>>, vector<32x8xf32>
    %10 = arith.truncf %9 : vector<32x8xf32> to vector<32x8xbf16>
    %cst_7 = arith.constant dense<0.000000e+00> : vector<16x8xf32>
    %11 = tpu.matmul %8, %10, %cst_7 {dimension_numbers = #tpu.dot_dimension_numbers<[1], [0], [0], [1], [0, 0, 1, 1], [], []>} : vector<16x32xbf16>, vector<32x8xbf16>, vector<16x8xf32> -> vector<16x8xf32>
    %c0_8 = arith.constant 0 : index
    %c0_9 = arith.constant 0 : index
    %12 = vector.load %arg5[%c0_8, %c0_9] : memref<1x8xf32, #tpu.memory_space<vmem>>, vector<1x8xf32>
    %13 = vector.broadcast %12 : vector<1x8xf32> to vector<16x8xf32>
    %14 = arith.addf %11, %13 : vector<16x8xf32>
    %cst_10 = arith.constant 0.000000e+00 : f32
    %15 = vector.broadcast %cst_10 : f32 to vector<16x8xf32>
    %16 = arith.maximumf %14, %15 : vector<16x8xf32>
    %17 = arith.truncf %16 : vector<16x8xf32> to vector<16x8xbf16>
    %c0_11 = arith.constant 0 : index
    %c0_12 = arith.constant 0 : index
    %18 = vector.load %arg6[%c0_11, %c0_12] : memref<8x8xf32, #tpu.memory_space<vmem>>, vector<8x8xf32>
    %19 = arith.truncf %18 : vector<8x8xf32> to vector<8x8xbf16>
    %cst_13 = arith.constant dense<0.000000e+00> : vector<16x8xf32>
    %20 = tpu.matmul %17, %19, %cst_13 {dimension_numbers = #tpu.dot_dimension_numbers<[1], [0], [0], [1], [0, 0, 1, 1], [], []>} : vector<16x8xbf16>, vector<8x8xbf16>, vector<16x8xf32> -> vector<16x8xf32>
    %c0_14 = arith.constant 0 : index
    %c0_15 = arith.constant 0 : index
    %21 = vector.load %arg7[%c0_14, %c0_15] : memref<1x8xf32, #tpu.memory_space<vmem>>, vector<1x8xf32>
    %22 = vector.broadcast %21 : vector<1x8xf32> to vector<16x8xf32>
    %23 = arith.addf %20, %22 : vector<16x8xf32>
    %c0_16 = arith.constant 0 : index
    %c0_17 = arith.constant 0 : index
    %24 = vector.load %arg8[%c0_16, %c0_17] : memref<32x32xf32, #tpu.memory_space<vmem>>, vector<32x32xf32>
    %25 = arith.truncf %24 : vector<32x32xf32> to vector<32x32xbf16>
    %cst_18 = arith.constant dense<0.000000e+00> : vector<16x32xf32>
    %26 = tpu.matmul %8, %25, %cst_18 {dimension_numbers = #tpu.dot_dimension_numbers<[1], [0], [0], [1], [0, 0, 1, 1], [], []>} : vector<16x32xbf16>, vector<32x32xbf16>, vector<16x32xf32> -> vector<16x32xf32>
    %c0_19 = arith.constant 0 : index
    %c0_20 = arith.constant 0 : index
    %27 = vector.load %arg9[%c0_19, %c0_20] : memref<1x32xf32, #tpu.memory_space<vmem>>, vector<1x32xf32>
    %28 = vector.broadcast %27 : vector<1x32xf32> to vector<16x32xf32>
    %29 = arith.addf %26, %28 : vector<16x32xf32>
    %cst_21 = arith.constant 0.000000e+00 : f32
    %30 = vector.broadcast %cst_21 : f32 to vector<16x32xf32>
    %31 = arith.maximumf %29, %30 : vector<16x32xf32>
    %32 = arith.truncf %31 : vector<16x32xf32> to vector<16x32xbf16>
    %c0_22 = arith.constant 0 : index
    %c0_23 = arith.constant 0 : index
    %33 = vector.load %arg10[%c0_22, %c0_23] : memref<32x32xf32, #tpu.memory_space<vmem>>, vector<32x32xf32>
    %34 = arith.truncf %33 : vector<32x32xf32> to vector<32x32xbf16>
    %cst_24 = arith.constant dense<0.000000e+00> : vector<16x32xf32>
    %35 = tpu.matmul %32, %34, %cst_24 {dimension_numbers = #tpu.dot_dimension_numbers<[1], [0], [0], [1], [0, 0, 1, 1], [], []>} : vector<16x32xbf16>, vector<32x32xbf16>, vector<16x32xf32> -> vector<16x32xf32>
    %c0_25 = arith.constant 0 : index
    %c0_26 = arith.constant 0 : index
    %36 = vector.load %arg11[%c0_25, %c0_26] : memref<1x32xf32, #tpu.memory_space<vmem>>, vector<1x32xf32>
    %37 = vector.broadcast %36 : vector<1x32xf32> to vector<16x32xf32>
    %38 = arith.addf %35, %37 : vector<16x32xf32>
    %39 = arith.index_cast %arg0 : i32 to index
    %40 = memref.load %arg1[%39] : memref<2xi32, #tpu.memory_space<smem>>
    %41 = tpu.iota {dimensions = array<i32: 0>} : vector<16x1xi32>
    %42 = vector.broadcast %40 : i32 to vector<16x1xi32>
    %43 = arith.cmpi slt, %41, %42 : vector<16x1xi32>
    %44 = arith.extui %43 : vector<16x1xi1> to vector<16x1xi32>
    %45 = arith.sitofp %44 : vector<16x1xi32> to vector<16x1xf32>
    %46 = vector.broadcast %45 : vector<16x1xf32> to vector<16x8xf32>
    %47 = arith.mulf %23, %46 : vector<16x8xf32>
    %48 = vector.broadcast %45 : vector<16x1xf32> to vector<16x32xf32>
    %49 = arith.mulf %38, %48 : vector<16x32xf32>
    %c0_27 = arith.constant 0 : index
    %c0_28 = arith.constant 0 : index
    %50 = vector.load %arg12[%c0_27, %c0_28] : memref<1x32xf32, #tpu.memory_space<vmem>>, vector<1x32xf32>
    %51 = vector.broadcast %50 : vector<1x32xf32> to vector<16x32xf32>
    %52 = arith.mulf %49, %51 : vector<16x32xf32>
    %c0_29 = arith.constant 0 : index
    %c0_30 = arith.constant 0 : index
    %53 = vector.load %arg13[%c0_29, %c0_30] : memref<1x32xf32, #tpu.memory_space<vmem>>, vector<1x32xf32>
    %54 = vector.broadcast %53 : vector<1x32xf32> to vector<16x32xf32>
    %55 = arith.addf %52, %54 : vector<16x32xf32>
    %cst_31 = arith.constant 0.000000e+00 : f32
    %56 = vector.broadcast %cst_31 : f32 to vector<16x32xf32>
    %57 = arith.maximumf %55, %56 : vector<16x32xf32>
    %cst_32 = arith.constant dense<0xFF800000> : vector<16xf32>
    %58 = vector.multi_reduction <maximumf>, %47, %cst_32 [1] : vector<16x8xf32> to vector<16xf32>
    %59 = vector.shape_cast %58 : vector<16xf32> to vector<16x1xf32>
    %60 = vector.broadcast %59 : vector<16x1xf32> to vector<16x8xf32>
    %61 = arith.subf %47, %60 : vector<16x8xf32>
    %62 = math.exp %61 : vector<16x8xf32>
    %cst_33 = arith.constant dense<0.000000e+00> : vector<16xf32>
    %63 = vector.multi_reduction <add>, %62, %cst_33 [1] : vector<16x8xf32> to vector<16xf32>
    %64 = vector.shape_cast %63 : vector<16xf32> to vector<16x1xf32>
    %65 = tpu.reciprocal %64 {approx = true} : vector<16x1xf32> -> vector<16x1xf32>
    %66 = vector.broadcast %65 : vector<16x1xf32> to vector<16x8xf32>
    %67 = arith.mulf %62, %66 : vector<16x8xf32>
    %68 = arith.truncf %67 : vector<16x8xf32> to vector<16x8xbf16>
    %69 = arith.truncf %57 : vector<16x32xf32> to vector<16x32xbf16>
    %cst_34 = arith.constant dense<0.000000e+00> : vector<8x32xf32>
    %70 = tpu.matmul %68, %69, %cst_34 {dimension_numbers = #tpu.dot_dimension_numbers<[0], [0], [1], [1], [0, 1, 1, 1], [], []>} : vector<16x8xbf16>, vector<16x32xbf16>, vector<8x32xf32> -> vector<8x32xf32>
    %cst_35 = arith.constant dense<0.000000e+00> : vector<16x8xf32>
    %71 = tpu.matmul %4, %68, %cst_35 {dimension_numbers = #tpu.dot_dimension_numbers<[1], [0], [0], [1], [0, 0, 1, 1], [], []>} : vector<16x16xbf16>, vector<16x8xbf16>, vector<16x8xf32> -> vector<16x8xf32>
    %72 = arith.truncf %71 : vector<16x8xf32> to vector<16x8xbf16>
    %cst_36 = arith.constant dense<0.000000e+00> : vector<8x8xf32>
    %73 = tpu.matmul %68, %72, %cst_36 {dimension_numbers = #tpu.dot_dimension_numbers<[0], [0], [1], [1], [0, 1, 1, 1], [], []>} : vector<16x8xbf16>, vector<16x8xbf16>, vector<8x8xf32> -> vector<8x8xf32>
    %c0_37 = arith.constant 0 : index
    %c0_38 = arith.constant 0 : index
    %c0_39 = arith.constant 0 : index
    %74 = vector.load %arg16[%c0_37, %c0_38, %c0_39] : memref<1x8x32xf32, #tpu.memory_space<vmem>>, vector<1x8x32xf32>
    %75 = vector.shape_cast %74 : vector<1x8x32xf32> to vector<8x32xf32>
    %76 = vector.shape_cast %70 : vector<8x32xf32> to vector<1x8x32xf32>
    tpu.vector_store %arg16[%c0_37, %c0_38, %c0_39], %76 {strides = array<i32>} : memref<1x8x32xf32, #tpu.memory_space<vmem>>, vector<1x8x32xf32>,
    %c0_40 = arith.constant 0 : index
    %c0_41 = arith.constant 0 : index
    %c0_42 = arith.constant 0 : index
    %77 = vector.load %arg17[%c0_40, %c0_41, %c0_42] : memref<1x8x8xf32, #tpu.memory_space<vmem>>, vector<1x8x8xf32>
    %78 = vector.shape_cast %77 : vector<1x8x8xf32> to vector<8x8xf32>
    %79 = vector.shape_cast %73 : vector<8x8xf32> to vector<1x8x8xf32>
    tpu.vector_store %arg17[%c0_40, %c0_41, %c0_42], %79 {strides = array<i32>} : memref<1x8x8xf32, #tpu.memory_space<vmem>>, vector<1x8x8xf32>,
    %cst_43 = arith.constant dense<0.000000e+00> : vector<8x8xf32>
    %80 = tpu.matmul %67, %67, %cst_43 {dimension_numbers = #tpu.dot_dimension_numbers<[0], [0], [1], [1], [0, 1, 1, 1], [], []>} : vector<16x8xf32>, vector<16x8xf32>, vector<8x8xf32> -> vector<8x8xf32>
    %81 = tpu.iota {dimensions = array<i32: 0>} : vector<8x8xi32>
    %82 = tpu.iota {dimensions = array<i32: 1>} : vector<8x8xi32>
    %83 = arith.cmpi eq, %81, %82 : vector<8x8xi32>
    %84 = arith.extui %83 : vector<8x8xi1> to vector<8x8xi32>
    %85 = arith.sitofp %84 : vector<8x8xi32> to vector<8x8xf32>
    %86 = arith.mulf %3, %3 : vector<16x16xf32>
    %87 = vector.shape_cast %86 : vector<16x16xf32> to vector<1x16x16xf32>
    %cst_44 = arith.constant dense<0.000000e+00> : vector<1xf32>
    %88 = vector.multi_reduction <add>, %87, %cst_44 [1, 2] : vector<1x16x16xf32> to vector<1xf32>
    %89 = vector.shape_cast %88 : vector<1xf32> to vector<1x1x1xf32>
    %90 = vector.extract %89[0, 0, 0] : f32 from vector<1x1x1xf32>
    %91 = vector.broadcast %90 : f32 to vector<1x1xf32>
    %92 = arith.mulf %73, %85 : vector<8x8xf32>
    %93 = vector.shape_cast %92 : vector<8x8xf32> to vector<1x8x8xf32>
    %cst_45 = arith.constant dense<0.000000e+00> : vector<1xf32>
    %94 = vector.multi_reduction <add>, %93, %cst_45 [1, 2] : vector<1x8x8xf32> to vector<1xf32>
    %95 = vector.shape_cast %94 : vector<1xf32> to vector<1x1x1xf32>
    %96 = vector.extract %95[0, 0, 0] : f32 from vector<1x1x1xf32>
    %97 = vector.broadcast %96 : f32 to vector<1x1xf32>
    %98 = arith.mulf %80, %80 : vector<8x8xf32>
    %99 = vector.shape_cast %98 : vector<8x8xf32> to vector<1x8x8xf32>
    %cst_46 = arith.constant dense<0.000000e+00> : vector<1xf32>
    %100 = vector.multi_reduction <add>, %99, %cst_46 [1, 2] : vector<1x8x8xf32> to vector<1xf32>
    %101 = vector.shape_cast %100 : vector<1xf32> to vector<1x1x1xf32>
    %102 = vector.extract %101[0, 0, 0] : f32 from vector<1x1x1xf32>
    %103 = vector.broadcast %102 : f32 to vector<1x1xf32>
    %cst_47 = arith.constant 2.000000e+00 : f32
    %104 = vector.broadcast %cst_47 : f32 to vector<1x1xf32>
    %105 = arith.mulf %104, %97 : vector<1x1xf32>
    %106 = arith.subf %91, %105 : vector<1x1xf32>
    %107 = arith.addf %106, %103 : vector<1x1xf32>
    %108 = vector.shape_cast %107 : vector<1x1xf32> to vector<1x1x1xf32>
    %c0_48 = arith.constant 0 : index
    %c0_49 = arith.constant 0 : index
    %c0_50 = arith.constant 0 : index
    %109 = vector.load %arg19[%c0_48, %c0_49, %c0_50] : memref<1x1x1xf32, #tpu.memory_space<vmem>>, vector<1x1x1xf32>
    tpu.vector_store %arg19[%c0_48, %c0_49, %c0_50], %108 {strides = array<i32>} : memref<1x1x1xf32, #tpu.memory_space<vmem>>, vector<1x1x1xf32>,
    %cst_51 = arith.constant 0.000000e+00 : f32
    %110 = vector.broadcast %cst_51 : f32 to vector<16x8xf32>
    %111 = arith.subf %110, %67 : vector<16x8xf32>
    %cst_52 = arith.constant 1.000000e-15 : f32
    %112 = vector.broadcast %cst_52 : f32 to vector<16x8xf32>
    %113 = arith.addf %67, %112 : vector<16x8xf32>
    %114 = math.log %113 : vector<16x8xf32>
    %115 = arith.mulf %111, %114 : vector<16x8xf32>
    %116 = vector.shape_cast %115 : vector<16x8xf32> to vector<1x16x8xf32>
    %cst_53 = arith.constant dense<0.000000e+00> : vector<1xf32>
    %117 = vector.multi_reduction <add>, %116, %cst_53 [1, 2] : vector<1x16x8xf32> to vector<1xf32>
    %118 = vector.shape_cast %117 : vector<1xf32> to vector<1x1x1xf32>
    %119 = vector.extract %118[0, 0, 0] : f32 from vector<1x1x1xf32>
    %120 = vector.broadcast %119 : f32 to vector<1x1xf32>
    %121 = vector.shape_cast %120 : vector<1x1xf32> to vector<1x1x1xf32>
    %c0_54 = arith.constant 0 : index
    %c0_55 = arith.constant 0 : index
    %c0_56 = arith.constant 0 : index
    %122 = vector.load %arg20[%c0_54, %c0_55, %c0_56] : memref<1x1x1xf32, #tpu.memory_space<vmem>>, vector<1x1x1xf32>
    tpu.vector_store %arg20[%c0_54, %c0_55, %c0_56], %121 {strides = array<i32>} : memref<1x1x1xf32, #tpu.memory_space<vmem>>, vector<1x1x1xf32>,
    %cst_57 = arith.constant dense<0.000000e+00> : vector<32xf32>
    %123 = vector.multi_reduction <add>, %70, %cst_57 [0] : vector<8x32xf32> to vector<32xf32>
    %124 = vector.shape_cast %123 : vector<32xf32> to vector<1x32xf32>
    %c0_58 = arith.constant 0 : index
    %c0_59 = arith.constant 0 : index
    %125 = vector.load %arg14[%c0_58, %c0_59] : memref<1x32xf32, #tpu.memory_space<vmem>>, vector<1x32xf32>
    %126 = arith.mulf %124, %125 : vector<1x32xf32>
    %c0_60 = arith.constant 0 : index
    %c0_61 = arith.constant 0 : index
    %127 = vector.load %arg15[%c0_60, %c0_61] : memref<1x32xf32, #tpu.memory_space<vmem>>, vector<1x32xf32>
    %128 = arith.addf %126, %127 : vector<1x32xf32>
    %cst_62 = arith.constant 0.000000e+00 : f32
    %129 = vector.broadcast %cst_62 : f32 to vector<1x32xf32>
    %130 = arith.maximumf %128, %129 : vector<1x32xf32>
    %c0_63 = arith.constant 0 : index
    %c0_64 = arith.constant 0 : index
    %c0_65 = arith.constant 0 : index
    %131 = vector.load %arg18[%c0_63, %c0_64, %c0_65] : memref<1x1x32xf32, #tpu.memory_space<vmem>>, vector<1x1x32xf32>
    %132 = vector.shape_cast %131 : vector<1x1x32xf32> to vector<1x32xf32>
    %133 = vector.shape_cast %130 : vector<1x32xf32> to vector<1x1x32xf32>
    tpu.vector_store %arg18[%c0_63, %c0_64, %c0_65], %133 {strides = array<i32>} : memref<1x1x32xf32, #tpu.memory_space<vmem>>, vector<1x1x32xf32>,
    return
  }
  func.func @transform_0(%arg0: i32, %arg1: memref<2xi32, #tpu.memory_space<smem>>) -> (i32, i32, i32) {
    %c0_i32 = arith.constant 0 : i32
    %c0_i32_0 = arith.constant 0 : i32
    %c0_i32_1 = arith.constant 0 : i32
    return %arg0, %c0_i32, %c0_i32_0 : i32, i32, i32
  }
  func.func @transform_1(%arg0: i32, %arg1: memref<2xi32, #tpu.memory_space<smem>>) -> (i32, i32, i32) {
    %c0_i32 = arith.constant 0 : i32
    %c0_i32_0 = arith.constant 0 : i32
    %c0_i32_1 = arith.constant 0 : i32
    return %arg0, %c0_i32, %c0_i32_0 : i32, i32, i32
  }
  func.func @transform_2(%arg0: i32, %arg1: memref<2xi32, #tpu.memory_space<smem>>) -> (i32, i32) {
    %c0_i32 = arith.constant 0 : i32
    %c0_i32_0 = arith.constant 0 : i32
    %c0_i32_1 = arith.constant 0 : i32
    return %c0_i32, %c0_i32_0 : i32, i32
  }
  func.func @transform_3(%arg0: i32, %arg1: memref<2xi32, #tpu.memory_space<smem>>) -> (i32, i32) {
    %c0_i32 = arith.constant 0 : i32
    %c0_i32_0 = arith.constant 0 : i32
    %c0_i32_1 = arith.constant 0 : i32
    return %c0_i32, %c0_i32_0 : i32, i32
  }
  func.func @transform_4(%arg0: i32, %arg1: memref<2xi32, #tpu.memory_space<smem>>) -> (i32, i32) {
    %c0_i32 = arith.constant 0 : i32
    %c0_i32_0 = arith.constant 0 : i32
    %c0_i32_1 = arith.constant 0 : i32
    return %c0_i32, %c0_i32_0 : i32, i32
  }
  func.func @transform_5(%arg0: i32, %arg1: memref<2xi32, #tpu.memory_space<smem>>) -> (i32, i32) {
    %c0_i32 = arith.constant 0 : i32
    %c0_i32_0 = arith.constant 0 : i32
    %c0_i32_1 = arith.constant 0 : i32
    return %c0_i32, %c0_i32_0 : i32, i32
  }
  func.func @transform_6(%arg0: i32, %arg1: memref<2xi32, #tpu.memory_space<smem>>) -> (i32, i32) {
    %c0_i32 = arith.constant 0 : i32
    %c0_i32_0 = arith.constant 0 : i32
    %c0_i32_1 = arith.constant 0 : i32
    return %c0_i32, %c0_i32_0 : i32, i32
  }
  func.func @transform_7(%arg0: i32, %arg1: memref<2xi32, #tpu.memory_space<smem>>) -> (i32, i32) {
    %c0_i32 = arith.constant 0 : i32
    %c0_i32_0 = arith.constant 0 : i32
    %c0_i32_1 = arith.constant 0 : i32
    return %c0_i32, %c0_i32_0 : i32, i32
  }
  func.func @transform_8(%arg0: i32, %arg1: memref<2xi32, #tpu.memory_space<smem>>) -> (i32, i32) {
    %c0_i32 = arith.constant 0 : i32
    %c0_i32_0 = arith.constant 0 : i32
    %c0_i32_1 = arith.constant 0 : i32
    return %c0_i32, %c0_i32_0 : i32, i32
  }
  func.func @transform_9(%arg0: i32, %arg1: memref<2xi32, #tpu.memory_space<smem>>) -> (i32, i32) {
    %c0_i32 = arith.constant 0 : i32
    %c0_i32_0 = arith.constant 0 : i32
    %c0_i32_1 = arith.constant 0 : i32
    return %c0_i32, %c0_i32_0 : i32, i32
  }
  func.func @transform_10(%arg0: i32, %arg1: memref<2xi32, #tpu.memory_space<smem>>) -> (i32, i32) {
    %c0_i32 = arith.constant 0 : i32
    %c0_i32_0 = arith.constant 0 : i32
    %c0_i32_1 = arith.constant 0 : i32
    return %c0_i32, %c0_i32_0 : i32, i32
  }
  func.func @transform_11(%arg0: i32, %arg1: memref<2xi32, #tpu.memory_space<smem>>) -> (i32, i32) {
    %c0_i32 = arith.constant 0 : i32
    %c0_i32_0 = arith.constant 0 : i32
    %c0_i32_1 = arith.constant 0 : i32
    return %c0_i32, %c0_i32_0 : i32, i32
  }
  func.func @transform_12(%arg0: i32, %arg1: memref<2xi32, #tpu.memory_space<smem>>) -> (i32, i32) {
    %c0_i32 = arith.constant 0 : i32
    %c0_i32_0 = arith.constant 0 : i32
    %c0_i32_1 = arith.constant 0 : i32
    return %c0_i32, %c0_i32_0 : i32, i32
  }
  func.func @transform_13(%arg0: i32, %arg1: memref<2xi32, #tpu.memory_space<smem>>) -> (i32, i32) {
    %c0_i32 = arith.constant 0 : i32
    %c0_i32_0 = arith.constant 0 : i32
    %c0_i32_1 = arith.constant 0 : i32
    return %c0_i32, %c0_i32_0 : i32, i32
  }
  func.func @transform_14(%arg0: i32, %arg1: memref<2xi32, #tpu.memory_space<smem>>) -> (i32, i32, i32) {
    %c0_i32 = arith.constant 0 : i32
    %c0_i32_0 = arith.constant 0 : i32
    %c0_i32_1 = arith.constant 0 : i32
    return %arg0, %c0_i32, %c0_i32_0 : i32, i32, i32
  }
  func.func @transform_15(%arg0: i32, %arg1: memref<2xi32, #tpu.memory_space<smem>>) -> (i32, i32, i32) {
    %c0_i32 = arith.constant 0 : i32
    %c0_i32_0 = arith.constant 0 : i32
    %c0_i32_1 = arith.constant 0 : i32
    return %arg0, %c0_i32, %c0_i32_0 : i32, i32, i32
  }
  func.func @transform_16(%arg0: i32, %arg1: memref<2xi32, #tpu.memory_space<smem>>) -> (i32, i32, i32) {
    %c0_i32 = arith.constant 0 : i32
    %c0_i32_0 = arith.constant 0 : i32
    %c0_i32_1 = arith.constant 0 : i32
    return %arg0, %c0_i32, %c0_i32_0 : i32, i32, i32
  }
  func.func @transform_17(%arg0: i32, %arg1: memref<2xi32, #tpu.memory_space<smem>>) -> (i32, i32, i32) {
    %c0_i32 = arith.constant 0 : i32
    %c0_i32_0 = arith.constant 0 : i32
    %c0_i32_1 = arith.constant 0 : i32
    return %arg0, %c0_i32, %c0_i32_0 : i32, i32, i32
  }
  func.func @transform_18(%arg0: i32, %arg1: memref<2xi32, #tpu.memory_space<smem>>) -> (i32, i32, i32) {
    %c0_i32 = arith.constant 0 : i32
    %c0_i32_0 = arith.constant 0 : i32
    %c0_i32_1 = arith.constant 0 : i32
    return %arg0, %c0_i32, %c0_i32_0 : i32, i32, i32
  }
}

module attributes {stable_mosaic.version = 11 : i64} {
  func.func @_fused_layer_kernel(%arg0: i32, %arg1: memref<1x8x32xf32, #tpu.memory_space<vmem>>, %arg2: memref<1x8x8xf32, #tpu.memory_space<vmem>>, %arg3: memref<32x4xf32, #tpu.memory_space<vmem>>, %arg4: memref<1x4xf32, #tpu.memory_space<vmem>>, %arg5: memref<4x4xf32, #tpu.memory_space<vmem>>, %arg6: memref<1x4xf32, #tpu.memory_space<vmem>>, %arg7: memref<32x32xf32, #tpu.memory_space<vmem>>, %arg8: memref<1x32xf32, #tpu.memory_space<vmem>>, %arg9: memref<32x32xf32, #tpu.memory_space<vmem>>, %arg10: memref<1x32xf32, #tpu.memory_space<vmem>>, %arg11: memref<1x32xf32, #tpu.memory_space<vmem>>, %arg12: memref<1x32xf32, #tpu.memory_space<vmem>>, %arg13: memref<1x32xf32, #tpu.memory_space<vmem>>, %arg14: memref<1x32xf32, #tpu.memory_space<vmem>>, %arg15: memref<1x4x32xf32, #tpu.memory_space<vmem>>, %arg16: memref<1x4x4xf32, #tpu.memory_space<vmem>>, %arg17: memref<1x1x32xf32, #tpu.memory_space<vmem>>, %arg18: memref<1x1x1xf32, #tpu.memory_space<vmem>>, %arg19: memref<1x1x1xf32, #tpu.memory_space<vmem>>) attributes {dimension_semantics = [#tpu.dimension_semantics<parallel>], iteration_bounds = array<i64: 2>, scalar_prefetch = 0 : i64, scratch_operands = 0 : i64, tpu.core_type = #tpu.core_type<tc>, window_params = [{transform_indices = @transform_0, window_bounds = array<i64: 1, 8, 32>}, {transform_indices = @transform_1, window_bounds = array<i64: 1, 8, 8>}, {pipeline_mode = #tpu.pipeline_mode<synchronous>, transform_indices = @transform_2, window_bounds = array<i64: 32, 4>}, {pipeline_mode = #tpu.pipeline_mode<synchronous>, transform_indices = @transform_3, window_bounds = array<i64: 1, 4>}, {pipeline_mode = #tpu.pipeline_mode<synchronous>, transform_indices = @transform_4, window_bounds = array<i64: 4, 4>}, {pipeline_mode = #tpu.pipeline_mode<synchronous>, transform_indices = @transform_5, window_bounds = array<i64: 1, 4>}, {pipeline_mode = #tpu.pipeline_mode<synchronous>, transform_indices = @transform_6, window_bounds = array<i64: 32, 32>}, {pipeline_mode = #tpu.pipeline_mode<synchronous>, transform_indices = @transform_7, window_bounds = array<i64: 1, 32>}, {pipeline_mode = #tpu.pipeline_mode<synchronous>, transform_indices = @transform_8, window_bounds = array<i64: 32, 32>}, {pipeline_mode = #tpu.pipeline_mode<synchronous>, transform_indices = @transform_9, window_bounds = array<i64: 1, 32>}, {pipeline_mode = #tpu.pipeline_mode<synchronous>, transform_indices = @transform_10, window_bounds = array<i64: 1, 32>}, {pipeline_mode = #tpu.pipeline_mode<synchronous>, transform_indices = @transform_11, window_bounds = array<i64: 1, 32>}, {pipeline_mode = #tpu.pipeline_mode<synchronous>, transform_indices = @transform_12, window_bounds = array<i64: 1, 32>}, {pipeline_mode = #tpu.pipeline_mode<synchronous>, transform_indices = @transform_13, window_bounds = array<i64: 1, 32>}, {transform_indices = @transform_14, window_bounds = array<i64: 1, 4, 32>}, {transform_indices = @transform_15, window_bounds = array<i64: 1, 4, 4>}, {transform_indices = @transform_16, window_bounds = array<i64: 1, 1, 32>}, {transform_indices = @transform_17, window_bounds = array<i64: 1, 1, 1>}, {transform_indices = @transform_18, window_bounds = array<i64: 1, 1, 1>}]} {
    %c0 = arith.constant 0 : index
    %c0_0 = arith.constant 0 : index
    %c0_1 = arith.constant 0 : index
    %0 = vector.load %arg1[%c0, %c0_0, %c0_1] : memref<1x8x32xf32, #tpu.memory_space<vmem>>, vector<1x8x32xf32>
    %1 = vector.shape_cast %0 : vector<1x8x32xf32> to vector<8x32xf32>
    %c0_2 = arith.constant 0 : index
    %c0_3 = arith.constant 0 : index
    %c0_4 = arith.constant 0 : index
    %2 = vector.load %arg2[%c0_2, %c0_3, %c0_4] : memref<1x8x8xf32, #tpu.memory_space<vmem>>, vector<1x8x8xf32>
    %3 = vector.shape_cast %2 : vector<1x8x8xf32> to vector<8x8xf32>
    %4 = arith.truncf %3 : vector<8x8xf32> to vector<8x8xbf16>
    %5 = arith.truncf %1 : vector<8x32xf32> to vector<8x32xbf16>
    %cst = arith.constant dense<0.000000e+00> : vector<8x32xf32>
    %6 = tpu.matmul %4, %5, %cst {dimension_numbers = #tpu.dot_dimension_numbers<[1], [0], [0], [1], [0, 0, 1, 1], [], []>} : vector<8x8xbf16>, vector<8x32xbf16>, vector<8x32xf32> -> vector<8x32xf32>
    %7 = arith.addf %6, %1 : vector<8x32xf32>
    %8 = arith.truncf %7 : vector<8x32xf32> to vector<8x32xbf16>
    %c0_5 = arith.constant 0 : index
    %c0_6 = arith.constant 0 : index
    %9 = vector.load %arg3[%c0_5, %c0_6] : memref<32x4xf32, #tpu.memory_space<vmem>>, vector<32x4xf32>
    %10 = arith.truncf %9 : vector<32x4xf32> to vector<32x4xbf16>
    %cst_7 = arith.constant dense<0.000000e+00> : vector<8x4xf32>
    %11 = tpu.matmul %8, %10, %cst_7 {dimension_numbers = #tpu.dot_dimension_numbers<[1], [0], [0], [1], [0, 0, 1, 1], [], []>} : vector<8x32xbf16>, vector<32x4xbf16>, vector<8x4xf32> -> vector<8x4xf32>
    %c0_8 = arith.constant 0 : index
    %c0_9 = arith.constant 0 : index
    %12 = vector.load %arg4[%c0_8, %c0_9] : memref<1x4xf32, #tpu.memory_space<vmem>>, vector<1x4xf32>
    %13 = vector.broadcast %12 : vector<1x4xf32> to vector<8x4xf32>
    %14 = arith.addf %11, %13 : vector<8x4xf32>
    %cst_10 = arith.constant 0.000000e+00 : f32
    %15 = vector.broadcast %cst_10 : f32 to vector<8x4xf32>
    %16 = arith.maximumf %14, %15 : vector<8x4xf32>
    %17 = arith.truncf %16 : vector<8x4xf32> to vector<8x4xbf16>
    %c0_11 = arith.constant 0 : index
    %c0_12 = arith.constant 0 : index
    %18 = vector.load %arg5[%c0_11, %c0_12] : memref<4x4xf32, #tpu.memory_space<vmem>>, vector<4x4xf32>
    %19 = arith.truncf %18 : vector<4x4xf32> to vector<4x4xbf16>
    %cst_13 = arith.constant dense<0.000000e+00> : vector<8x4xf32>
    %20 = tpu.matmul %17, %19, %cst_13 {dimension_numbers = #tpu.dot_dimension_numbers<[1], [0], [0], [1], [0, 0, 1, 1], [], []>} : vector<8x4xbf16>, vector<4x4xbf16>, vector<8x4xf32> -> vector<8x4xf32>
    %c0_14 = arith.constant 0 : index
    %c0_15 = arith.constant 0 : index
    %21 = vector.load %arg6[%c0_14, %c0_15] : memref<1x4xf32, #tpu.memory_space<vmem>>, vector<1x4xf32>
    %22 = vector.broadcast %21 : vector<1x4xf32> to vector<8x4xf32>
    %23 = arith.addf %20, %22 : vector<8x4xf32>
    %c0_16 = arith.constant 0 : index
    %c0_17 = arith.constant 0 : index
    %24 = vector.load %arg7[%c0_16, %c0_17] : memref<32x32xf32, #tpu.memory_space<vmem>>, vector<32x32xf32>
    %25 = arith.truncf %24 : vector<32x32xf32> to vector<32x32xbf16>
    %cst_18 = arith.constant dense<0.000000e+00> : vector<8x32xf32>
    %26 = tpu.matmul %8, %25, %cst_18 {dimension_numbers = #tpu.dot_dimension_numbers<[1], [0], [0], [1], [0, 0, 1, 1], [], []>} : vector<8x32xbf16>, vector<32x32xbf16>, vector<8x32xf32> -> vector<8x32xf32>
    %c0_19 = arith.constant 0 : index
    %c0_20 = arith.constant 0 : index
    %27 = vector.load %arg8[%c0_19, %c0_20] : memref<1x32xf32, #tpu.memory_space<vmem>>, vector<1x32xf32>
    %28 = vector.broadcast %27 : vector<1x32xf32> to vector<8x32xf32>
    %29 = arith.addf %26, %28 : vector<8x32xf32>
    %cst_21 = arith.constant 0.000000e+00 : f32
    %30 = vector.broadcast %cst_21 : f32 to vector<8x32xf32>
    %31 = arith.maximumf %29, %30 : vector<8x32xf32>
    %32 = arith.truncf %31 : vector<8x32xf32> to vector<8x32xbf16>
    %c0_22 = arith.constant 0 : index
    %c0_23 = arith.constant 0 : index
    %33 = vector.load %arg9[%c0_22, %c0_23] : memref<32x32xf32, #tpu.memory_space<vmem>>, vector<32x32xf32>
    %34 = arith.truncf %33 : vector<32x32xf32> to vector<32x32xbf16>
    %cst_24 = arith.constant dense<0.000000e+00> : vector<8x32xf32>
    %35 = tpu.matmul %32, %34, %cst_24 {dimension_numbers = #tpu.dot_dimension_numbers<[1], [0], [0], [1], [0, 0, 1, 1], [], []>} : vector<8x32xbf16>, vector<32x32xbf16>, vector<8x32xf32> -> vector<8x32xf32>
    %c0_25 = arith.constant 0 : index
    %c0_26 = arith.constant 0 : index
    %36 = vector.load %arg10[%c0_25, %c0_26] : memref<1x32xf32, #tpu.memory_space<vmem>>, vector<1x32xf32>
    %37 = vector.broadcast %36 : vector<1x32xf32> to vector<8x32xf32>
    %38 = arith.addf %35, %37 : vector<8x32xf32>
    %c0_27 = arith.constant 0 : index
    %c0_28 = arith.constant 0 : index
    %39 = vector.load %arg11[%c0_27, %c0_28] : memref<1x32xf32, #tpu.memory_space<vmem>>, vector<1x32xf32>
    %40 = vector.broadcast %39 : vector<1x32xf32> to vector<8x32xf32>
    %41 = arith.mulf %38, %40 : vector<8x32xf32>
    %c0_29 = arith.constant 0 : index
    %c0_30 = arith.constant 0 : index
    %42 = vector.load %arg12[%c0_29, %c0_30] : memref<1x32xf32, #tpu.memory_space<vmem>>, vector<1x32xf32>
    %43 = vector.broadcast %42 : vector<1x32xf32> to vector<8x32xf32>
    %44 = arith.addf %41, %43 : vector<8x32xf32>
    %cst_31 = arith.constant 0.000000e+00 : f32
    %45 = vector.broadcast %cst_31 : f32 to vector<8x32xf32>
    %46 = arith.maximumf %44, %45 : vector<8x32xf32>
    %cst_32 = arith.constant dense<0xFF800000> : vector<8xf32>
    %47 = vector.multi_reduction <maximumf>, %23, %cst_32 [1] : vector<8x4xf32> to vector<8xf32>
    %48 = vector.shape_cast %47 : vector<8xf32> to vector<8x1xf32>
    %49 = vector.broadcast %48 : vector<8x1xf32> to vector<8x4xf32>
    %50 = arith.subf %23, %49 : vector<8x4xf32>
    %51 = math.exp %50 : vector<8x4xf32>
    %cst_33 = arith.constant dense<0.000000e+00> : vector<8xf32>
    %52 = vector.multi_reduction <add>, %51, %cst_33 [1] : vector<8x4xf32> to vector<8xf32>
    %53 = vector.shape_cast %52 : vector<8xf32> to vector<8x1xf32>
    %54 = tpu.reciprocal %53 {approx = true} : vector<8x1xf32> -> vector<8x1xf32>
    %55 = vector.broadcast %54 : vector<8x1xf32> to vector<8x4xf32>
    %56 = arith.mulf %51, %55 : vector<8x4xf32>
    %57 = arith.truncf %56 : vector<8x4xf32> to vector<8x4xbf16>
    %58 = arith.truncf %46 : vector<8x32xf32> to vector<8x32xbf16>
    %cst_34 = arith.constant dense<0.000000e+00> : vector<4x32xf32>
    %59 = tpu.matmul %57, %58, %cst_34 {dimension_numbers = #tpu.dot_dimension_numbers<[0], [0], [1], [1], [0, 1, 1, 1], [], []>} : vector<8x4xbf16>, vector<8x32xbf16>, vector<4x32xf32> -> vector<4x32xf32>
    %cst_35 = arith.constant dense<0.000000e+00> : vector<8x4xf32>
    %60 = tpu.matmul %4, %57, %cst_35 {dimension_numbers = #tpu.dot_dimension_numbers<[1], [0], [0], [1], [0, 0, 1, 1], [], []>} : vector<8x8xbf16>, vector<8x4xbf16>, vector<8x4xf32> -> vector<8x4xf32>
    %61 = arith.truncf %60 : vector<8x4xf32> to vector<8x4xbf16>
    %cst_36 = arith.constant dense<0.000000e+00> : vector<4x4xf32>
    %62 = tpu.matmul %57, %61, %cst_36 {dimension_numbers = #tpu.dot_dimension_numbers<[0], [0], [1], [1], [0, 1, 1, 1], [], []>} : vector<8x4xbf16>, vector<8x4xbf16>, vector<4x4xf32> -> vector<4x4xf32>
    %c0_37 = arith.constant 0 : index
    %c0_38 = arith.constant 0 : index
    %c0_39 = arith.constant 0 : index
    %63 = vector.load %arg15[%c0_37, %c0_38, %c0_39] : memref<1x4x32xf32, #tpu.memory_space<vmem>>, vector<1x4x32xf32>
    %64 = vector.shape_cast %63 : vector<1x4x32xf32> to vector<4x32xf32>
    %65 = vector.shape_cast %59 : vector<4x32xf32> to vector<1x4x32xf32>
    tpu.vector_store %arg15[%c0_37, %c0_38, %c0_39], %65 {strides = array<i32>} : memref<1x4x32xf32, #tpu.memory_space<vmem>>, vector<1x4x32xf32>,
    %c0_40 = arith.constant 0 : index
    %c0_41 = arith.constant 0 : index
    %c0_42 = arith.constant 0 : index
    %66 = vector.load %arg16[%c0_40, %c0_41, %c0_42] : memref<1x4x4xf32, #tpu.memory_space<vmem>>, vector<1x4x4xf32>
    %67 = vector.shape_cast %66 : vector<1x4x4xf32> to vector<4x4xf32>
    %68 = vector.shape_cast %62 : vector<4x4xf32> to vector<1x4x4xf32>
    tpu.vector_store %arg16[%c0_40, %c0_41, %c0_42], %68 {strides = array<i32>} : memref<1x4x4xf32, #tpu.memory_space<vmem>>, vector<1x4x4xf32>,
    %cst_43 = arith.constant dense<0.000000e+00> : vector<4x4xf32>
    %69 = tpu.matmul %56, %56, %cst_43 {dimension_numbers = #tpu.dot_dimension_numbers<[0], [0], [1], [1], [0, 1, 1, 1], [], []>} : vector<8x4xf32>, vector<8x4xf32>, vector<4x4xf32> -> vector<4x4xf32>
    %70 = tpu.iota {dimensions = array<i32: 0>} : vector<4x4xi32>
    %71 = tpu.iota {dimensions = array<i32: 1>} : vector<4x4xi32>
    %72 = arith.cmpi eq, %70, %71 : vector<4x4xi32>
    %73 = arith.extui %72 : vector<4x4xi1> to vector<4x4xi32>
    %74 = arith.sitofp %73 : vector<4x4xi32> to vector<4x4xf32>
    %75 = arith.mulf %3, %3 : vector<8x8xf32>
    %76 = vector.shape_cast %75 : vector<8x8xf32> to vector<1x8x8xf32>
    %cst_44 = arith.constant dense<0.000000e+00> : vector<1xf32>
    %77 = vector.multi_reduction <add>, %76, %cst_44 [1, 2] : vector<1x8x8xf32> to vector<1xf32>
    %78 = vector.shape_cast %77 : vector<1xf32> to vector<1x1x1xf32>
    %79 = vector.extract %78[0, 0, 0] : f32 from vector<1x1x1xf32>
    %80 = vector.broadcast %79 : f32 to vector<1x1xf32>
    %81 = arith.mulf %62, %74 : vector<4x4xf32>
    %82 = vector.shape_cast %81 : vector<4x4xf32> to vector<1x4x4xf32>
    %cst_45 = arith.constant dense<0.000000e+00> : vector<1xf32>
    %83 = vector.multi_reduction <add>, %82, %cst_45 [1, 2] : vector<1x4x4xf32> to vector<1xf32>
    %84 = vector.shape_cast %83 : vector<1xf32> to vector<1x1x1xf32>
    %85 = vector.extract %84[0, 0, 0] : f32 from vector<1x1x1xf32>
    %86 = vector.broadcast %85 : f32 to vector<1x1xf32>
    %87 = arith.mulf %69, %69 : vector<4x4xf32>
    %88 = vector.shape_cast %87 : vector<4x4xf32> to vector<1x4x4xf32>
    %cst_46 = arith.constant dense<0.000000e+00> : vector<1xf32>
    %89 = vector.multi_reduction <add>, %88, %cst_46 [1, 2] : vector<1x4x4xf32> to vector<1xf32>
    %90 = vector.shape_cast %89 : vector<1xf32> to vector<1x1x1xf32>
    %91 = vector.extract %90[0, 0, 0] : f32 from vector<1x1x1xf32>
    %92 = vector.broadcast %91 : f32 to vector<1x1xf32>
    %cst_47 = arith.constant 2.000000e+00 : f32
    %93 = vector.broadcast %cst_47 : f32 to vector<1x1xf32>
    %94 = arith.mulf %93, %86 : vector<1x1xf32>
    %95 = arith.subf %80, %94 : vector<1x1xf32>
    %96 = arith.addf %95, %92 : vector<1x1xf32>
    %97 = vector.shape_cast %96 : vector<1x1xf32> to vector<1x1x1xf32>
    %c0_48 = arith.constant 0 : index
    %c0_49 = arith.constant 0 : index
    %c0_50 = arith.constant 0 : index
    %98 = vector.load %arg18[%c0_48, %c0_49, %c0_50] : memref<1x1x1xf32, #tpu.memory_space<vmem>>, vector<1x1x1xf32>
    tpu.vector_store %arg18[%c0_48, %c0_49, %c0_50], %97 {strides = array<i32>} : memref<1x1x1xf32, #tpu.memory_space<vmem>>, vector<1x1x1xf32>,
    %cst_51 = arith.constant 0.000000e+00 : f32
    %99 = vector.broadcast %cst_51 : f32 to vector<8x4xf32>
    %100 = arith.subf %99, %56 : vector<8x4xf32>
    %cst_52 = arith.constant 1.000000e-15 : f32
    %101 = vector.broadcast %cst_52 : f32 to vector<8x4xf32>
    %102 = arith.addf %56, %101 : vector<8x4xf32>
    %103 = math.log %102 : vector<8x4xf32>
    %104 = arith.mulf %100, %103 : vector<8x4xf32>
    %105 = vector.shape_cast %104 : vector<8x4xf32> to vector<1x8x4xf32>
    %cst_53 = arith.constant dense<0.000000e+00> : vector<1xf32>
    %106 = vector.multi_reduction <add>, %105, %cst_53 [1, 2] : vector<1x8x4xf32> to vector<1xf32>
    %107 = vector.shape_cast %106 : vector<1xf32> to vector<1x1x1xf32>
    %108 = vector.extract %107[0, 0, 0] : f32 from vector<1x1x1xf32>
    %109 = vector.broadcast %108 : f32 to vector<1x1xf32>
    %110 = vector.shape_cast %109 : vector<1x1xf32> to vector<1x1x1xf32>
    %c0_54 = arith.constant 0 : index
    %c0_55 = arith.constant 0 : index
    %c0_56 = arith.constant 0 : index
    %111 = vector.load %arg19[%c0_54, %c0_55, %c0_56] : memref<1x1x1xf32, #tpu.memory_space<vmem>>, vector<1x1x1xf32>
    tpu.vector_store %arg19[%c0_54, %c0_55, %c0_56], %110 {strides = array<i32>} : memref<1x1x1xf32, #tpu.memory_space<vmem>>, vector<1x1x1xf32>,
    %cst_57 = arith.constant dense<0.000000e+00> : vector<32xf32>
    %112 = vector.multi_reduction <add>, %59, %cst_57 [0] : vector<4x32xf32> to vector<32xf32>
    %113 = vector.shape_cast %112 : vector<32xf32> to vector<1x32xf32>
    %c0_58 = arith.constant 0 : index
    %c0_59 = arith.constant 0 : index
    %114 = vector.load %arg13[%c0_58, %c0_59] : memref<1x32xf32, #tpu.memory_space<vmem>>, vector<1x32xf32>
    %115 = arith.mulf %113, %114 : vector<1x32xf32>
    %c0_60 = arith.constant 0 : index
    %c0_61 = arith.constant 0 : index
    %116 = vector.load %arg14[%c0_60, %c0_61] : memref<1x32xf32, #tpu.memory_space<vmem>>, vector<1x32xf32>
    %117 = arith.addf %115, %116 : vector<1x32xf32>
    %cst_62 = arith.constant 0.000000e+00 : f32
    %118 = vector.broadcast %cst_62 : f32 to vector<1x32xf32>
    %119 = arith.maximumf %117, %118 : vector<1x32xf32>
    %c0_63 = arith.constant 0 : index
    %c0_64 = arith.constant 0 : index
    %c0_65 = arith.constant 0 : index
    %120 = vector.load %arg17[%c0_63, %c0_64, %c0_65] : memref<1x1x32xf32, #tpu.memory_space<vmem>>, vector<1x1x32xf32>
    %121 = vector.shape_cast %120 : vector<1x1x32xf32> to vector<1x32xf32>
    %122 = vector.shape_cast %119 : vector<1x32xf32> to vector<1x1x32xf32>
    tpu.vector_store %arg17[%c0_63, %c0_64, %c0_65], %122 {strides = array<i32>} : memref<1x1x32xf32, #tpu.memory_space<vmem>>, vector<1x1x32xf32>,
    return
  }
  func.func @transform_0(%arg0: i32) -> (i32, i32, i32) {
    %c0_i32 = arith.constant 0 : i32
    %c0_i32_0 = arith.constant 0 : i32
    %c0_i32_1 = arith.constant 0 : i32
    return %arg0, %c0_i32, %c0_i32_0 : i32, i32, i32
  }
  func.func @transform_1(%arg0: i32) -> (i32, i32, i32) {
    %c0_i32 = arith.constant 0 : i32
    %c0_i32_0 = arith.constant 0 : i32
    %c0_i32_1 = arith.constant 0 : i32
    return %arg0, %c0_i32, %c0_i32_0 : i32, i32, i32
  }
  func.func @transform_2(%arg0: i32) -> (i32, i32) {
    %c0_i32 = arith.constant 0 : i32
    %c0_i32_0 = arith.constant 0 : i32
    %c0_i32_1 = arith.constant 0 : i32
    return %c0_i32, %c0_i32_0 : i32, i32
  }
  func.func @transform_3(%arg0: i32) -> (i32, i32) {
    %c0_i32 = arith.constant 0 : i32
    %c0_i32_0 = arith.constant 0 : i32
    %c0_i32_1 = arith.constant 0 : i32
    return %c0_i32, %c0_i32_0 : i32, i32
  }
  func.func @transform_4(%arg0: i32) -> (i32, i32) {
    %c0_i32 = arith.constant 0 : i32
    %c0_i32_0 = arith.constant 0 : i32
    %c0_i32_1 = arith.constant 0 : i32
    return %c0_i32, %c0_i32_0 : i32, i32
  }
  func.func @transform_5(%arg0: i32) -> (i32, i32) {
    %c0_i32 = arith.constant 0 : i32
    %c0_i32_0 = arith.constant 0 : i32
    %c0_i32_1 = arith.constant 0 : i32
    return %c0_i32, %c0_i32_0 : i32, i32
  }
  func.func @transform_6(%arg0: i32) -> (i32, i32) {
    %c0_i32 = arith.constant 0 : i32
    %c0_i32_0 = arith.constant 0 : i32
    %c0_i32_1 = arith.constant 0 : i32
    return %c0_i32, %c0_i32_0 : i32, i32
  }
  func.func @transform_7(%arg0: i32) -> (i32, i32) {
    %c0_i32 = arith.constant 0 : i32
    %c0_i32_0 = arith.constant 0 : i32
    %c0_i32_1 = arith.constant 0 : i32
    return %c0_i32, %c0_i32_0 : i32, i32
  }
  func.func @transform_8(%arg0: i32) -> (i32, i32) {
    %c0_i32 = arith.constant 0 : i32
    %c0_i32_0 = arith.constant 0 : i32
    %c0_i32_1 = arith.constant 0 : i32
    return %c0_i32, %c0_i32_0 : i32, i32
  }
  func.func @transform_9(%arg0: i32) -> (i32, i32) {
    %c0_i32 = arith.constant 0 : i32
    %c0_i32_0 = arith.constant 0 : i32
    %c0_i32_1 = arith.constant 0 : i32
    return %c0_i32, %c0_i32_0 : i32, i32
  }
  func.func @transform_10(%arg0: i32) -> (i32, i32) {
    %c0_i32 = arith.constant 0 : i32
    %c0_i32_0 = arith.constant 0 : i32
    %c0_i32_1 = arith.constant 0 : i32
    return %c0_i32, %c0_i32_0 : i32, i32
  }
  func.func @transform_11(%arg0: i32) -> (i32, i32) {
    %c0_i32 = arith.constant 0 : i32
    %c0_i32_0 = arith.constant 0 : i32
    %c0_i32_1 = arith.constant 0 : i32
    return %c0_i32, %c0_i32_0 : i32, i32
  }
  func.func @transform_12(%arg0: i32) -> (i32, i32) {
    %c0_i32 = arith.constant 0 : i32
    %c0_i32_0 = arith.constant 0 : i32
    %c0_i32_1 = arith.constant 0 : i32
    return %c0_i32, %c0_i32_0 : i32, i32
  }
  func.func @transform_13(%arg0: i32) -> (i32, i32) {
    %c0_i32 = arith.constant 0 : i32
    %c0_i32_0 = arith.constant 0 : i32
    %c0_i32_1 = arith.constant 0 : i32
    return %c0_i32, %c0_i32_0 : i32, i32
  }
  func.func @transform_14(%arg0: i32) -> (i32, i32, i32) {
    %c0_i32 = arith.constant 0 : i32
    %c0_i32_0 = arith.constant 0 : i32
    %c0_i32_1 = arith.constant 0 : i32
    return %arg0, %c0_i32, %c0_i32_0 : i32, i32, i32
  }
  func.func @transform_15(%arg0: i32) -> (i32, i32, i32) {
    %c0_i32 = arith.constant 0 : i32
    %c0_i32_0 = arith.constant 0 : i32
    %c0_i32_1 = arith.constant 0 : i32
    return %arg0, %c0_i32, %c0_i32_0 : i32, i32, i32
  }
  func.func @transform_16(%arg0: i32) -> (i32, i32, i32) {
    %c0_i32 = arith.constant 0 : i32
    %c0_i32_0 = arith.constant 0 : i32
    %c0_i32_1 = arith.constant 0 : i32
    return %arg0, %c0_i32, %c0_i32_0 : i32, i32, i32
  }
  func.func @transform_17(%arg0: i32) -> (i32, i32, i32) {
    %c0_i32 = arith.constant 0 : i32
    %c0_i32_0 = arith.constant 0 : i32
    %c0_i32_1 = arith.constant 0 : i32
    return %arg0, %c0_i32, %c0_i32_0 : i32, i32, i32
  }
  func.func @transform_18(%arg0: i32) -> (i32, i32, i32) {
    %c0_i32 = arith.constant 0 : i32
    %c0_i32_0 = arith.constant 0 : i32
    %c0_i32_1 = arith.constant 0 : i32
    return %arg0, %c0_i32, %c0_i32_0 : i32, i32, i32
  }
}

module attributes {stable_mosaic.version = 11 : i64} {
  func.func @_fused_layer_kernel(%arg0: i32, %arg1: memref<1x4x32xf32, #tpu.memory_space<vmem>>, %arg2: memref<1x4x4xf32, #tpu.memory_space<vmem>>, %arg3: memref<32x2xf32, #tpu.memory_space<vmem>>, %arg4: memref<1x2xf32, #tpu.memory_space<vmem>>, %arg5: memref<2x2xf32, #tpu.memory_space<vmem>>, %arg6: memref<1x2xf32, #tpu.memory_space<vmem>>, %arg7: memref<32x32xf32, #tpu.memory_space<vmem>>, %arg8: memref<1x32xf32, #tpu.memory_space<vmem>>, %arg9: memref<32x32xf32, #tpu.memory_space<vmem>>, %arg10: memref<1x32xf32, #tpu.memory_space<vmem>>, %arg11: memref<1x32xf32, #tpu.memory_space<vmem>>, %arg12: memref<1x32xf32, #tpu.memory_space<vmem>>, %arg13: memref<1x32xf32, #tpu.memory_space<vmem>>, %arg14: memref<1x32xf32, #tpu.memory_space<vmem>>, %arg15: memref<1x2x32xf32, #tpu.memory_space<vmem>>, %arg16: memref<1x2x2xf32, #tpu.memory_space<vmem>>, %arg17: memref<1x1x32xf32, #tpu.memory_space<vmem>>, %arg18: memref<1x1x1xf32, #tpu.memory_space<vmem>>, %arg19: memref<1x1x1xf32, #tpu.memory_space<vmem>>) attributes {dimension_semantics = [#tpu.dimension_semantics<parallel>], iteration_bounds = array<i64: 2>, scalar_prefetch = 0 : i64, scratch_operands = 0 : i64, tpu.core_type = #tpu.core_type<tc>, window_params = [{transform_indices = @transform_0, window_bounds = array<i64: 1, 4, 32>}, {transform_indices = @transform_1, window_bounds = array<i64: 1, 4, 4>}, {pipeline_mode = #tpu.pipeline_mode<synchronous>, transform_indices = @transform_2, window_bounds = array<i64: 32, 2>}, {pipeline_mode = #tpu.pipeline_mode<synchronous>, transform_indices = @transform_3, window_bounds = array<i64: 1, 2>}, {pipeline_mode = #tpu.pipeline_mode<synchronous>, transform_indices = @transform_4, window_bounds = array<i64: 2, 2>}, {pipeline_mode = #tpu.pipeline_mode<synchronous>, transform_indices = @transform_5, window_bounds = array<i64: 1, 2>}, {pipeline_mode = #tpu.pipeline_mode<synchronous>, transform_indices = @transform_6, window_bounds = array<i64: 32, 32>}, {pipeline_mode = #tpu.pipeline_mode<synchronous>, transform_indices = @transform_7, window_bounds = array<i64: 1, 32>}, {pipeline_mode = #tpu.pipeline_mode<synchronous>, transform_indices = @transform_8, window_bounds = array<i64: 32, 32>}, {pipeline_mode = #tpu.pipeline_mode<synchronous>, transform_indices = @transform_9, window_bounds = array<i64: 1, 32>}, {pipeline_mode = #tpu.pipeline_mode<synchronous>, transform_indices = @transform_10, window_bounds = array<i64: 1, 32>}, {pipeline_mode = #tpu.pipeline_mode<synchronous>, transform_indices = @transform_11, window_bounds = array<i64: 1, 32>}, {pipeline_mode = #tpu.pipeline_mode<synchronous>, transform_indices = @transform_12, window_bounds = array<i64: 1, 32>}, {pipeline_mode = #tpu.pipeline_mode<synchronous>, transform_indices = @transform_13, window_bounds = array<i64: 1, 32>}, {transform_indices = @transform_14, window_bounds = array<i64: 1, 2, 32>}, {transform_indices = @transform_15, window_bounds = array<i64: 1, 2, 2>}, {transform_indices = @transform_16, window_bounds = array<i64: 1, 1, 32>}, {transform_indices = @transform_17, window_bounds = array<i64: 1, 1, 1>}, {transform_indices = @transform_18, window_bounds = array<i64: 1, 1, 1>}]} {
    %c0 = arith.constant 0 : index
    %c0_0 = arith.constant 0 : index
    %c0_1 = arith.constant 0 : index
    %0 = vector.load %arg1[%c0, %c0_0, %c0_1] : memref<1x4x32xf32, #tpu.memory_space<vmem>>, vector<1x4x32xf32>
    %1 = vector.shape_cast %0 : vector<1x4x32xf32> to vector<4x32xf32>
    %c0_2 = arith.constant 0 : index
    %c0_3 = arith.constant 0 : index
    %c0_4 = arith.constant 0 : index
    %2 = vector.load %arg2[%c0_2, %c0_3, %c0_4] : memref<1x4x4xf32, #tpu.memory_space<vmem>>, vector<1x4x4xf32>
    %3 = vector.shape_cast %2 : vector<1x4x4xf32> to vector<4x4xf32>
    %4 = arith.truncf %3 : vector<4x4xf32> to vector<4x4xbf16>
    %5 = arith.truncf %1 : vector<4x32xf32> to vector<4x32xbf16>
    %cst = arith.constant dense<0.000000e+00> : vector<4x32xf32>
    %6 = tpu.matmul %4, %5, %cst {dimension_numbers = #tpu.dot_dimension_numbers<[1], [0], [0], [1], [0, 0, 1, 1], [], []>} : vector<4x4xbf16>, vector<4x32xbf16>, vector<4x32xf32> -> vector<4x32xf32>
    %7 = arith.addf %6, %1 : vector<4x32xf32>
    %8 = arith.truncf %7 : vector<4x32xf32> to vector<4x32xbf16>
    %c0_5 = arith.constant 0 : index
    %c0_6 = arith.constant 0 : index
    %9 = vector.load %arg3[%c0_5, %c0_6] : memref<32x2xf32, #tpu.memory_space<vmem>>, vector<32x2xf32>
    %10 = arith.truncf %9 : vector<32x2xf32> to vector<32x2xbf16>
    %cst_7 = arith.constant dense<0.000000e+00> : vector<4x2xf32>
    %11 = tpu.matmul %8, %10, %cst_7 {dimension_numbers = #tpu.dot_dimension_numbers<[1], [0], [0], [1], [0, 0, 1, 1], [], []>} : vector<4x32xbf16>, vector<32x2xbf16>, vector<4x2xf32> -> vector<4x2xf32>
    %c0_8 = arith.constant 0 : index
    %c0_9 = arith.constant 0 : index
    %12 = vector.load %arg4[%c0_8, %c0_9] : memref<1x2xf32, #tpu.memory_space<vmem>>, vector<1x2xf32>
    %13 = vector.broadcast %12 : vector<1x2xf32> to vector<4x2xf32>
    %14 = arith.addf %11, %13 : vector<4x2xf32>
    %cst_10 = arith.constant 0.000000e+00 : f32
    %15 = vector.broadcast %cst_10 : f32 to vector<4x2xf32>
    %16 = arith.maximumf %14, %15 : vector<4x2xf32>
    %17 = arith.truncf %16 : vector<4x2xf32> to vector<4x2xbf16>
    %c0_11 = arith.constant 0 : index
    %c0_12 = arith.constant 0 : index
    %18 = vector.load %arg5[%c0_11, %c0_12] : memref<2x2xf32, #tpu.memory_space<vmem>>, vector<2x2xf32>
    %19 = arith.truncf %18 : vector<2x2xf32> to vector<2x2xbf16>
    %cst_13 = arith.constant dense<0.000000e+00> : vector<4x2xf32>
    %20 = tpu.matmul %17, %19, %cst_13 {dimension_numbers = #tpu.dot_dimension_numbers<[1], [0], [0], [1], [0, 0, 1, 1], [], []>} : vector<4x2xbf16>, vector<2x2xbf16>, vector<4x2xf32> -> vector<4x2xf32>
    %c0_14 = arith.constant 0 : index
    %c0_15 = arith.constant 0 : index
    %21 = vector.load %arg6[%c0_14, %c0_15] : memref<1x2xf32, #tpu.memory_space<vmem>>, vector<1x2xf32>
    %22 = vector.broadcast %21 : vector<1x2xf32> to vector<4x2xf32>
    %23 = arith.addf %20, %22 : vector<4x2xf32>
    %c0_16 = arith.constant 0 : index
    %c0_17 = arith.constant 0 : index
    %24 = vector.load %arg7[%c0_16, %c0_17] : memref<32x32xf32, #tpu.memory_space<vmem>>, vector<32x32xf32>
    %25 = arith.truncf %24 : vector<32x32xf32> to vector<32x32xbf16>
    %cst_18 = arith.constant dense<0.000000e+00> : vector<4x32xf32>
    %26 = tpu.matmul %8, %25, %cst_18 {dimension_numbers = #tpu.dot_dimension_numbers<[1], [0], [0], [1], [0, 0, 1, 1], [], []>} : vector<4x32xbf16>, vector<32x32xbf16>, vector<4x32xf32> -> vector<4x32xf32>
    %c0_19 = arith.constant 0 : index
    %c0_20 = arith.constant 0 : index
    %27 = vector.load %arg8[%c0_19, %c0_20] : memref<1x32xf32, #tpu.memory_space<vmem>>, vector<1x32xf32>
    %28 = vector.broadcast %27 : vector<1x32xf32> to vector<4x32xf32>
    %29 = arith.addf %26, %28 : vector<4x32xf32>
    %cst_21 = arith.constant 0.000000e+00 : f32
    %30 = vector.broadcast %cst_21 : f32 to vector<4x32xf32>
    %31 = arith.maximumf %29, %30 : vector<4x32xf32>
    %32 = arith.truncf %31 : vector<4x32xf32> to vector<4x32xbf16>
    %c0_22 = arith.constant 0 : index
    %c0_23 = arith.constant 0 : index
    %33 = vector.load %arg9[%c0_22, %c0_23] : memref<32x32xf32, #tpu.memory_space<vmem>>, vector<32x32xf32>
    %34 = arith.truncf %33 : vector<32x32xf32> to vector<32x32xbf16>
    %cst_24 = arith.constant dense<0.000000e+00> : vector<4x32xf32>
    %35 = tpu.matmul %32, %34, %cst_24 {dimension_numbers = #tpu.dot_dimension_numbers<[1], [0], [0], [1], [0, 0, 1, 1], [], []>} : vector<4x32xbf16>, vector<32x32xbf16>, vector<4x32xf32> -> vector<4x32xf32>
    %c0_25 = arith.constant 0 : index
    %c0_26 = arith.constant 0 : index
    %36 = vector.load %arg10[%c0_25, %c0_26] : memref<1x32xf32, #tpu.memory_space<vmem>>, vector<1x32xf32>
    %37 = vector.broadcast %36 : vector<1x32xf32> to vector<4x32xf32>
    %38 = arith.addf %35, %37 : vector<4x32xf32>
    %c0_27 = arith.constant 0 : index
    %c0_28 = arith.constant 0 : index
    %39 = vector.load %arg11[%c0_27, %c0_28] : memref<1x32xf32, #tpu.memory_space<vmem>>, vector<1x32xf32>
    %40 = vector.broadcast %39 : vector<1x32xf32> to vector<4x32xf32>
    %41 = arith.mulf %38, %40 : vector<4x32xf32>
    %c0_29 = arith.constant 0 : index
    %c0_30 = arith.constant 0 : index
    %42 = vector.load %arg12[%c0_29, %c0_30] : memref<1x32xf32, #tpu.memory_space<vmem>>, vector<1x32xf32>
    %43 = vector.broadcast %42 : vector<1x32xf32> to vector<4x32xf32>
    %44 = arith.addf %41, %43 : vector<4x32xf32>
    %cst_31 = arith.constant 0.000000e+00 : f32
    %45 = vector.broadcast %cst_31 : f32 to vector<4x32xf32>
    %46 = arith.maximumf %44, %45 : vector<4x32xf32>
    %cst_32 = arith.constant dense<0xFF800000> : vector<4xf32>
    %47 = vector.multi_reduction <maximumf>, %23, %cst_32 [1] : vector<4x2xf32> to vector<4xf32>
    %48 = vector.shape_cast %47 : vector<4xf32> to vector<4x1xf32>
    %49 = vector.broadcast %48 : vector<4x1xf32> to vector<4x2xf32>
    %50 = arith.subf %23, %49 : vector<4x2xf32>
    %51 = math.exp %50 : vector<4x2xf32>
    %cst_33 = arith.constant dense<0.000000e+00> : vector<4xf32>
    %52 = vector.multi_reduction <add>, %51, %cst_33 [1] : vector<4x2xf32> to vector<4xf32>
    %53 = vector.shape_cast %52 : vector<4xf32> to vector<4x1xf32>
    %54 = tpu.reciprocal %53 {approx = true} : vector<4x1xf32> -> vector<4x1xf32>
    %55 = vector.broadcast %54 : vector<4x1xf32> to vector<4x2xf32>
    %56 = arith.mulf %51, %55 : vector<4x2xf32>
    %57 = arith.truncf %56 : vector<4x2xf32> to vector<4x2xbf16>
    %58 = arith.truncf %46 : vector<4x32xf32> to vector<4x32xbf16>
    %cst_34 = arith.constant dense<0.000000e+00> : vector<2x32xf32>
    %59 = tpu.matmul %57, %58, %cst_34 {dimension_numbers = #tpu.dot_dimension_numbers<[0], [0], [1], [1], [0, 1, 1, 1], [], []>} : vector<4x2xbf16>, vector<4x32xbf16>, vector<2x32xf32> -> vector<2x32xf32>
    %cst_35 = arith.constant dense<0.000000e+00> : vector<4x2xf32>
    %60 = tpu.matmul %4, %57, %cst_35 {dimension_numbers = #tpu.dot_dimension_numbers<[1], [0], [0], [1], [0, 0, 1, 1], [], []>} : vector<4x4xbf16>, vector<4x2xbf16>, vector<4x2xf32> -> vector<4x2xf32>
    %61 = arith.truncf %60 : vector<4x2xf32> to vector<4x2xbf16>
    %cst_36 = arith.constant dense<0.000000e+00> : vector<2x2xf32>
    %62 = tpu.matmul %57, %61, %cst_36 {dimension_numbers = #tpu.dot_dimension_numbers<[0], [0], [1], [1], [0, 1, 1, 1], [], []>} : vector<4x2xbf16>, vector<4x2xbf16>, vector<2x2xf32> -> vector<2x2xf32>
    %c0_37 = arith.constant 0 : index
    %c0_38 = arith.constant 0 : index
    %c0_39 = arith.constant 0 : index
    %63 = vector.load %arg15[%c0_37, %c0_38, %c0_39] : memref<1x2x32xf32, #tpu.memory_space<vmem>>, vector<1x2x32xf32>
    %64 = vector.shape_cast %63 : vector<1x2x32xf32> to vector<2x32xf32>
    %65 = vector.shape_cast %59 : vector<2x32xf32> to vector<1x2x32xf32>
    tpu.vector_store %arg15[%c0_37, %c0_38, %c0_39], %65 {strides = array<i32>} : memref<1x2x32xf32, #tpu.memory_space<vmem>>, vector<1x2x32xf32>,
    %c0_40 = arith.constant 0 : index
    %c0_41 = arith.constant 0 : index
    %c0_42 = arith.constant 0 : index
    %66 = vector.load %arg16[%c0_40, %c0_41, %c0_42] : memref<1x2x2xf32, #tpu.memory_space<vmem>>, vector<1x2x2xf32>
    %67 = vector.shape_cast %66 : vector<1x2x2xf32> to vector<2x2xf32>
    %68 = vector.shape_cast %62 : vector<2x2xf32> to vector<1x2x2xf32>
    tpu.vector_store %arg16[%c0_40, %c0_41, %c0_42], %68 {strides = array<i32>} : memref<1x2x2xf32, #tpu.memory_space<vmem>>, vector<1x2x2xf32>,
    %cst_43 = arith.constant dense<0.000000e+00> : vector<2x2xf32>
    %69 = tpu.matmul %56, %56, %cst_43 {dimension_numbers = #tpu.dot_dimension_numbers<[0], [0], [1], [1], [0, 1, 1, 1], [], []>} : vector<4x2xf32>, vector<4x2xf32>, vector<2x2xf32> -> vector<2x2xf32>
    %70 = tpu.iota {dimensions = array<i32: 0>} : vector<2x2xi32>
    %71 = tpu.iota {dimensions = array<i32: 1>} : vector<2x2xi32>
    %72 = arith.cmpi eq, %70, %71 : vector<2x2xi32>
    %73 = arith.extui %72 : vector<2x2xi1> to vector<2x2xi32>
    %74 = arith.sitofp %73 : vector<2x2xi32> to vector<2x2xf32>
    %75 = arith.mulf %3, %3 : vector<4x4xf32>
    %76 = vector.shape_cast %75 : vector<4x4xf32> to vector<1x4x4xf32>
    %cst_44 = arith.constant dense<0.000000e+00> : vector<1xf32>
    %77 = vector.multi_reduction <add>, %76, %cst_44 [1, 2] : vector<1x4x4xf32> to vector<1xf32>
    %78 = vector.shape_cast %77 : vector<1xf32> to vector<1x1x1xf32>
    %79 = vector.extract %78[0, 0, 0] : f32 from vector<1x1x1xf32>
    %80 = vector.broadcast %79 : f32 to vector<1x1xf32>
    %81 = arith.mulf %62, %74 : vector<2x2xf32>
    %82 = vector.shape_cast %81 : vector<2x2xf32> to vector<1x2x2xf32>
    %cst_45 = arith.constant dense<0.000000e+00> : vector<1xf32>
    %83 = vector.multi_reduction <add>, %82, %cst_45 [1, 2] : vector<1x2x2xf32> to vector<1xf32>
    %84 = vector.shape_cast %83 : vector<1xf32> to vector<1x1x1xf32>
    %85 = vector.extract %84[0, 0, 0] : f32 from vector<1x1x1xf32>
    %86 = vector.broadcast %85 : f32 to vector<1x1xf32>
    %87 = arith.mulf %69, %69 : vector<2x2xf32>
    %88 = vector.shape_cast %87 : vector<2x2xf32> to vector<1x2x2xf32>
    %cst_46 = arith.constant dense<0.000000e+00> : vector<1xf32>
    %89 = vector.multi_reduction <add>, %88, %cst_46 [1, 2] : vector<1x2x2xf32> to vector<1xf32>
    %90 = vector.shape_cast %89 : vector<1xf32> to vector<1x1x1xf32>
    %91 = vector.extract %90[0, 0, 0] : f32 from vector<1x1x1xf32>
    %92 = vector.broadcast %91 : f32 to vector<1x1xf32>
    %cst_47 = arith.constant 2.000000e+00 : f32
    %93 = vector.broadcast %cst_47 : f32 to vector<1x1xf32>
    %94 = arith.mulf %93, %86 : vector<1x1xf32>
    %95 = arith.subf %80, %94 : vector<1x1xf32>
    %96 = arith.addf %95, %92 : vector<1x1xf32>
    %97 = vector.shape_cast %96 : vector<1x1xf32> to vector<1x1x1xf32>
    %c0_48 = arith.constant 0 : index
    %c0_49 = arith.constant 0 : index
    %c0_50 = arith.constant 0 : index
    %98 = vector.load %arg18[%c0_48, %c0_49, %c0_50] : memref<1x1x1xf32, #tpu.memory_space<vmem>>, vector<1x1x1xf32>
    tpu.vector_store %arg18[%c0_48, %c0_49, %c0_50], %97 {strides = array<i32>} : memref<1x1x1xf32, #tpu.memory_space<vmem>>, vector<1x1x1xf32>,
    %cst_51 = arith.constant 0.000000e+00 : f32
    %99 = vector.broadcast %cst_51 : f32 to vector<4x2xf32>
    %100 = arith.subf %99, %56 : vector<4x2xf32>
    %cst_52 = arith.constant 1.000000e-15 : f32
    %101 = vector.broadcast %cst_52 : f32 to vector<4x2xf32>
    %102 = arith.addf %56, %101 : vector<4x2xf32>
    %103 = math.log %102 : vector<4x2xf32>
    %104 = arith.mulf %100, %103 : vector<4x2xf32>
    %105 = vector.shape_cast %104 : vector<4x2xf32> to vector<1x4x2xf32>
    %cst_53 = arith.constant dense<0.000000e+00> : vector<1xf32>
    %106 = vector.multi_reduction <add>, %105, %cst_53 [1, 2] : vector<1x4x2xf32> to vector<1xf32>
    %107 = vector.shape_cast %106 : vector<1xf32> to vector<1x1x1xf32>
    %108 = vector.extract %107[0, 0, 0] : f32 from vector<1x1x1xf32>
    %109 = vector.broadcast %108 : f32 to vector<1x1xf32>
    %110 = vector.shape_cast %109 : vector<1x1xf32> to vector<1x1x1xf32>
    %c0_54 = arith.constant 0 : index
    %c0_55 = arith.constant 0 : index
    %c0_56 = arith.constant 0 : index
    %111 = vector.load %arg19[%c0_54, %c0_55, %c0_56] : memref<1x1x1xf32, #tpu.memory_space<vmem>>, vector<1x1x1xf32>
    tpu.vector_store %arg19[%c0_54, %c0_55, %c0_56], %110 {strides = array<i32>} : memref<1x1x1xf32, #tpu.memory_space<vmem>>, vector<1x1x1xf32>,
    %cst_57 = arith.constant dense<0.000000e+00> : vector<32xf32>
    %112 = vector.multi_reduction <add>, %59, %cst_57 [0] : vector<2x32xf32> to vector<32xf32>
    %113 = vector.shape_cast %112 : vector<32xf32> to vector<1x32xf32>
    %c0_58 = arith.constant 0 : index
    %c0_59 = arith.constant 0 : index
    %114 = vector.load %arg13[%c0_58, %c0_59] : memref<1x32xf32, #tpu.memory_space<vmem>>, vector<1x32xf32>
    %115 = arith.mulf %113, %114 : vector<1x32xf32>
    %c0_60 = arith.constant 0 : index
    %c0_61 = arith.constant 0 : index
    %116 = vector.load %arg14[%c0_60, %c0_61] : memref<1x32xf32, #tpu.memory_space<vmem>>, vector<1x32xf32>
    %117 = arith.addf %115, %116 : vector<1x32xf32>
    %cst_62 = arith.constant 0.000000e+00 : f32
    %118 = vector.broadcast %cst_62 : f32 to vector<1x32xf32>
    %119 = arith.maximumf %117, %118 : vector<1x32xf32>
    %c0_63 = arith.constant 0 : index
    %c0_64 = arith.constant 0 : index
    %c0_65 = arith.constant 0 : index
    %120 = vector.load %arg17[%c0_63, %c0_64, %c0_65] : memref<1x1x32xf32, #tpu.memory_space<vmem>>, vector<1x1x32xf32>
    %121 = vector.shape_cast %120 : vector<1x1x32xf32> to vector<1x32xf32>
    %122 = vector.shape_cast %119 : vector<1x32xf32> to vector<1x1x32xf32>
    tpu.vector_store %arg17[%c0_63, %c0_64, %c0_65], %122 {strides = array<i32>} : memref<1x1x32xf32, #tpu.memory_space<vmem>>, vector<1x1x32xf32>,
    return
  }
  func.func @transform_0(%arg0: i32) -> (i32, i32, i32) {
    %c0_i32 = arith.constant 0 : i32
    %c0_i32_0 = arith.constant 0 : i32
    %c0_i32_1 = arith.constant 0 : i32
    return %arg0, %c0_i32, %c0_i32_0 : i32, i32, i32
  }
  func.func @transform_1(%arg0: i32) -> (i32, i32, i32) {
    %c0_i32 = arith.constant 0 : i32
    %c0_i32_0 = arith.constant 0 : i32
    %c0_i32_1 = arith.constant 0 : i32
    return %arg0, %c0_i32, %c0_i32_0 : i32, i32, i32
  }
  func.func @transform_2(%arg0: i32) -> (i32, i32) {
    %c0_i32 = arith.constant 0 : i32
    %c0_i32_0 = arith.constant 0 : i32
    %c0_i32_1 = arith.constant 0 : i32
    return %c0_i32, %c0_i32_0 : i32, i32
  }
  func.func @transform_3(%arg0: i32) -> (i32, i32) {
    %c0_i32 = arith.constant 0 : i32
    %c0_i32_0 = arith.constant 0 : i32
    %c0_i32_1 = arith.constant 0 : i32
    return %c0_i32, %c0_i32_0 : i32, i32
  }
  func.func @transform_4(%arg0: i32) -> (i32, i32) {
    %c0_i32 = arith.constant 0 : i32
    %c0_i32_0 = arith.constant 0 : i32
    %c0_i32_1 = arith.constant 0 : i32
    return %c0_i32, %c0_i32_0 : i32, i32
  }
  func.func @transform_5(%arg0: i32) -> (i32, i32) {
    %c0_i32 = arith.constant 0 : i32
    %c0_i32_0 = arith.constant 0 : i32
    %c0_i32_1 = arith.constant 0 : i32
    return %c0_i32, %c0_i32_0 : i32, i32
  }
  func.func @transform_6(%arg0: i32) -> (i32, i32) {
    %c0_i32 = arith.constant 0 : i32
    %c0_i32_0 = arith.constant 0 : i32
    %c0_i32_1 = arith.constant 0 : i32
    return %c0_i32, %c0_i32_0 : i32, i32
  }
  func.func @transform_7(%arg0: i32) -> (i32, i32) {
    %c0_i32 = arith.constant 0 : i32
    %c0_i32_0 = arith.constant 0 : i32
    %c0_i32_1 = arith.constant 0 : i32
    return %c0_i32, %c0_i32_0 : i32, i32
  }
  func.func @transform_8(%arg0: i32) -> (i32, i32) {
    %c0_i32 = arith.constant 0 : i32
    %c0_i32_0 = arith.constant 0 : i32
    %c0_i32_1 = arith.constant 0 : i32
    return %c0_i32, %c0_i32_0 : i32, i32
  }
  func.func @transform_9(%arg0: i32) -> (i32, i32) {
    %c0_i32 = arith.constant 0 : i32
    %c0_i32_0 = arith.constant 0 : i32
    %c0_i32_1 = arith.constant 0 : i32
    return %c0_i32, %c0_i32_0 : i32, i32
  }
  func.func @transform_10(%arg0: i32) -> (i32, i32) {
    %c0_i32 = arith.constant 0 : i32
    %c0_i32_0 = arith.constant 0 : i32
    %c0_i32_1 = arith.constant 0 : i32
    return %c0_i32, %c0_i32_0 : i32, i32
  }
  func.func @transform_11(%arg0: i32) -> (i32, i32) {
    %c0_i32 = arith.constant 0 : i32
    %c0_i32_0 = arith.constant 0 : i32
    %c0_i32_1 = arith.constant 0 : i32
    return %c0_i32, %c0_i32_0 : i32, i32
  }
  func.func @transform_12(%arg0: i32) -> (i32, i32) {
    %c0_i32 = arith.constant 0 : i32
    %c0_i32_0 = arith.constant 0 : i32
    %c0_i32_1 = arith.constant 0 : i32
    return %c0_i32, %c0_i32_0 : i32, i32
  }
  func.func @transform_13(%arg0: i32) -> (i32, i32) {
    %c0_i32 = arith.constant 0 : i32
    %c0_i32_0 = arith.constant 0 : i32
    %c0_i32_1 = arith.constant 0 : i32
    return %c0_i32, %c0_i32_0 : i32, i32
  }
  func.func @transform_14(%arg0: i32) -> (i32, i32, i32) {
    %c0_i32 = arith.constant 0 : i32
    %c0_i32_0 = arith.constant 0 : i32
    %c0_i32_1 = arith.constant 0 : i32
    return %arg0, %c0_i32, %c0_i32_0 : i32, i32, i32
  }
  func.func @transform_15(%arg0: i32) -> (i32, i32, i32) {
    %c0_i32 = arith.constant 0 : i32
    %c0_i32_0 = arith.constant 0 : i32
    %c0_i32_1 = arith.constant 0 : i32
    return %arg0, %c0_i32, %c0_i32_0 : i32, i32, i32
  }
  func.func @transform_16(%arg0: i32) -> (i32, i32, i32) {
    %c0_i32 = arith.constant 0 : i32
    %c0_i32_0 = arith.constant 0 : i32
    %c0_i32_1 = arith.constant 0 : i32
    return %arg0, %c0_i32, %c0_i32_0 : i32, i32, i32
  }
  func.func @transform_17(%arg0: i32) -> (i32, i32, i32) {
    %c0_i32 = arith.constant 0 : i32
    %c0_i32_0 = arith.constant 0 : i32
    %c0_i32_1 = arith.constant 0 : i32
    return %arg0, %c0_i32, %c0_i32_0 : i32, i32, i32
  }
  func.func @transform_18(%arg0: i32) -> (i32, i32, i32) {
    %c0_i32 = arith.constant 0 : i32
    %c0_i32_0 = arith.constant 0 : i32
    %c0_i32_1 = arith.constant 0 : i32
    return %arg0, %c0_i32, %c0_i32_0 : i32, i32, i32
  }
}

module attributes {stable_mosaic.version = 11 : i64} {
  func.func @_linear_kernel(%arg0: i32, %arg1: memref<2x96xf32, #tpu.memory_space<vmem>>, %arg2: memref<96x3xf32, #tpu.memory_space<vmem>>, %arg3: memref<1x3xf32, #tpu.memory_space<vmem>>, %arg4: memref<2x3xf32, #tpu.memory_space<vmem>>) attributes {dimension_semantics = [#tpu.dimension_semantics<parallel>], iteration_bounds = array<i64: 1>, scalar_prefetch = 0 : i64, scratch_operands = 0 : i64, tpu.core_type = #tpu.core_type<tc>, window_params = [{transform_indices = @transform_0, window_bounds = array<i64: 2, 96>}, {pipeline_mode = #tpu.pipeline_mode<synchronous>, transform_indices = @transform_1, window_bounds = array<i64: 96, 3>}, {pipeline_mode = #tpu.pipeline_mode<synchronous>, transform_indices = @transform_2, window_bounds = array<i64: 1, 3>}, {transform_indices = @transform_3, window_bounds = array<i64: 2, 3>}]} {
    %c0 = arith.constant 0 : index
    %c0_0 = arith.constant 0 : index
    %0 = vector.load %arg1[%c0, %c0_0] : memref<2x96xf32, #tpu.memory_space<vmem>>, vector<2x96xf32>
    %1 = arith.truncf %0 : vector<2x96xf32> to vector<2x96xbf16>
    %c0_1 = arith.constant 0 : index
    %c0_2 = arith.constant 0 : index
    %2 = vector.load %arg2[%c0_1, %c0_2] : memref<96x3xf32, #tpu.memory_space<vmem>>, vector<96x3xf32>
    %3 = arith.truncf %2 : vector<96x3xf32> to vector<96x3xbf16>
    %cst = arith.constant dense<0.000000e+00> : vector<2x3xf32>
    %4 = tpu.matmul %1, %3, %cst {dimension_numbers = #tpu.dot_dimension_numbers<[1], [0], [0], [1], [0, 0, 1, 1], [], []>} : vector<2x96xbf16>, vector<96x3xbf16>, vector<2x3xf32> -> vector<2x3xf32>
    %c0_3 = arith.constant 0 : index
    %c0_4 = arith.constant 0 : index
    %5 = vector.load %arg3[%c0_3, %c0_4] : memref<1x3xf32, #tpu.memory_space<vmem>>, vector<1x3xf32>
    %6 = vector.broadcast %5 : vector<1x3xf32> to vector<2x3xf32>
    %7 = arith.addf %4, %6 : vector<2x3xf32>
    %c0_5 = arith.constant 0 : index
    %c0_6 = arith.constant 0 : index
    %8 = vector.load %arg4[%c0_5, %c0_6] : memref<2x3xf32, #tpu.memory_space<vmem>>, vector<2x3xf32>
    tpu.vector_store %arg4[%c0_5, %c0_6], %7 {strides = array<i32>} : memref<2x3xf32, #tpu.memory_space<vmem>>, vector<2x3xf32>,
    return
  }
  func.func @transform_0(%arg0: i32) -> (i32, i32) {
    %c0_i32 = arith.constant 0 : i32
    %c0_i32_0 = arith.constant 0 : i32
    return %arg0, %c0_i32 : i32, i32
  }
  func.func @transform_1(%arg0: i32) -> (i32, i32) {
    %c0_i32 = arith.constant 0 : i32
    %c0_i32_0 = arith.constant 0 : i32
    %c0_i32_1 = arith.constant 0 : i32
    return %c0_i32, %c0_i32_0 : i32, i32
  }
  func.func @transform_2(%arg0: i32) -> (i32, i32) {
    %c0_i32 = arith.constant 0 : i32
    %c0_i32_0 = arith.constant 0 : i32
    %c0_i32_1 = arith.constant 0 : i32
    return %c0_i32, %c0_i32_0 : i32, i32
  }
  func.func @transform_3(%arg0: i32) -> (i32, i32) {
    %c0_i32 = arith.constant 0 : i32
    %c0_i32_0 = arith.constant 0 : i32
    return %arg0, %c0_i32 : i32, i32
  }
}

</mosaic_0001>

<llo_original>
// kernel: densepool_forward.5
$region0: #{densepool_forward.5}
  #allocation0 [shape = 'u32[]', space=smem, size = 0x4, offset = 0x4, fixed_abs, tag = 'smem constant byte address 0x4 - core index']
  #allocation1 [shape = 'u32[144,128]{1,0:T(1,128)}', space=vmem, size = 0x12000, scoped, tag = 'internal scratch']
  %s0 = inlined_call_operand.vmem [shape: f32[32,4], index: 0, kind: input, shape index: {}]
  %s1 = inlined_call_operand.vmem [shape: f32[4,32], index: 1, kind: input, shape index: {}]
  %s2 = inlined_call_operand.vmem [shape: f32[1,32], index: 2, kind: input, shape index: {}]
  %s3 = inlined_call_operand.vmem [shape: f32[1,32], index: 3, kind: input, shape index: {}]
  %s4 = inlined_call_operand.vmem [shape: f32[1,32], index: 4, kind: input, shape index: {}]
  %s5 = inlined_call_operand.hbm [shape: f32[32,32], index: 5, kind: output, shape index: {}]
  %s6 = sld [smem:[#allocation0]]
  $region30: #{densepool_forward.5} parent=0
    _
  %s8 = ssub.s32 1, %s6
  %s9 = scalar_select 0, %s8, %s6
  $region1: #{densepool_forward.5} parent=0
    #allocation2 [shape = 'u8[16384]{0}', space=vmem, size = 0x4000, scoped, tag = 'output window, operand 0, single buffered']
    #allocation3 [shape = 's32[1]{0}', space=sflag, size = 0x4, scoped, tag = 'scoped memory for densepool_forward.5']
    %10 = vsyncpa [#allocation3], 0
    // Predicated region
    $region2: #{densepool_forward.5} parent=1 // pred_check
      _
    $region3: #{densepool_forward.5} parent=1 // pred_check_branch
      %12 = sbr.rel (0) target = $region5
    $region4: #{densepool_forward.5} parent=1 // pred_region
      _
    $region5: #{densepool_forward.5} parent=1 // pred_fallthru
      _
    // Predicated region
    $region6: #{densepool_forward.5} parent=1 // pred_check
      _
    $region7: #{densepool_forward.5} parent=1 // pred_check_branch
      %14 = sbr.rel (0) target = $region9
    $region8: #{densepool_forward.5} parent=1 // pred_region
      _
    $region9: #{densepool_forward.5} parent=1 // pred_fallthru
      _
    // Predicated region
    $region10: #{densepool_forward.5} parent=1 // pred_check
      _
    $region11: #{densepool_forward.5} parent=1 // pred_check_branch
      %16 = sbr.rel (0) target = $region13
    $region12: #{densepool_forward.5} parent=1 // pred_region
      _
    $region13: #{densepool_forward.5} parent=1 // pred_fallthru
      _
    // Predicated region
    $region14: #{densepool_forward.5} parent=1 // pred_check
      _
    $region15: #{densepool_forward.5} parent=1 // pred_check_branch
      %18 = sbr.rel (0) target = $region17
    $region16: #{densepool_forward.5} parent=1 // pred_region
      _
    $region17: #{densepool_forward.5} parent=1 // pred_fallthru
      _
    // Predicated region
    $region18: #{densepool_forward.5} parent=1 // pred_check
      _
    $region19: #{densepool_forward.5} parent=1 // pred_check_branch
      %20 = sbr.rel (0) target = $region21
    $region20: #{densepool_forward.5} parent=1 // pred_region
      _
    $region21: #{densepool_forward.5} parent=1 // pred_fallthru
      _
    %v22 = vld [vmem:[%s0] sm:$0xff]
    %v23 = vld [vmem:[%s0 + $0x8] sm:$0xff]
    %v24 = vld [vmem:[%s0 + $0x10] sm:$0xff]
    %v25 = vld [vmem:[%s0 + $0x18] sm:$0xff]
    %v26 = vpack.c.bf16 %v23, %v22
    %v27 = vpack.c.bf16 %v25, %v24
    %v28 = vld [vmem:[%s1] sm:$0xf]
    %v29 = vpack.c.bf16 %v28, %v28
    %v30 = vld [vmem:[%s2] sm:$0x1]
    %v32 = vlaneseq
    %v33 = vshrl.u32 %v32, 7
    %v34 = vsub.s32 0, %v33
    %v35 = vrot.slane %v30, %v34
    %vm37 = vcmask 31744
    %v39 = vsel %vm37, %v26, 0
    %v42 = vsel %vm37, %v27, 0
    %vm44 = vcmask 1041408
    %v46 = vsel %vm44, %v29, 0
    %48 = vmatprep.subr.bf16.mxu0 0
    %49 = vmatpush1.bf16.msra.mxu0 %v46
    %50 = vmatprep.subr.bf16.mxu0 0
    %51 = vmatpush1.bf16.msra.mxu0 0
    %52 = vmatprep.subr.bf16.mxu0 0
    %53 = vmatpush1.bf16.msra.mxu0 0
    %54 = vmatprep.subr.bf16.mxu0 0
    %55 = vmatpush1.bf16.msra.mxu0 0
    %56 = vmatprep.subr.bf16.mxu0 0
    %57 = vmatpush1.bf16.msra.mxu0 0
    %58 = vmatprep.subr.bf16.mxu0 0
    %59 = vmatpush1.bf16.msra.mxu0 0
    %60 = vmatprep.subr.bf16.mxu0 0
    %61 = vmatpush1.bf16.msra.mxu0 0
    %62 = vmatprep.subr.bf16.mxu0 0
    %63 = vmatpush1.bf16.msra.mxu0 0
    %64 = vmatprep.subr.bf16.mxu0 0
    %65 = vmatpush1.bf16.msra.mxu0 0
    %66 = vmatprep.subr.bf16.mxu0 0
    %67 = vmatpush1.bf16.msra.mxu0 0
    %68 = vmatprep.subr.bf16.mxu0 0
    %69 = vmatpush1.bf16.msra.mxu0 0
    %70 = vmatprep.subr.bf16.mxu0 0
    %71 = vmatpush1.bf16.msra.mxu0 0
    %72 = vmatprep.subr.bf16.mxu0 0
    %73 = vmatpush1.bf16.msra.mxu0 0
    %74 = vmatprep.subr.bf16.mxu0 0
    %75 = vmatpush1.bf16.msra.mxu0 0
    %76 = vmatprep.subr.bf16.mxu0 0
    %77 = vmatpush1.bf16.msra.mxu0 0
    %78 = vmatprep.subr.bf16.mxu0 0
    %79 = vmatpush1.bf16.msra.mxu0 0
    %80 = vmatprep.mubr.bf16.mxu0 0
    %81 = vmatmul.mubr.bf16.gmra.mrb[0].mxu0 %v39
    %v82 = vpop.f32.mrb[0].mxu0
    %v83 = vadd.f32 %v35, %v82
    %v84 = vpop.f32.mrb[0].mxu0
    %v85 = vpop.f32.mrb[0].mxu0
    %v86 = vadd.f32 %v35, %v85
    %v87 = vpop.f32.mrb[0].mxu0
    %88 = vmatprep.mubr.bf16.mxu0 0
    %89 = vmatmul.mubr.bf16.gmra.mrb[0].mxu0 %v42
    %v90 = vpop.f32.mrb[0].mxu0
    %v91 = vadd.f32 %v35, %v90
    %v92 = vpop.f32.mrb[0].mxu0
    %v93 = vpop.f32.mrb[0].mxu0
    %v94 = vadd.f32 %v35, %v93
    %v95 = vpop.f32.mrb[0].mxu0
    %96 = vdwg.mxu0
    %v97 = vld [vmem:[%s3] sm:$0x1]
    %v99 = vlaneseq
    %v100 = vshrl.u32 %v99, 7
    %v101 = vsub.s32 0, %v100
    %v102 = vrot.slane %v97, %v101
    %v104 = vmul.f32 %v83, %v102
    %v105 = vmul.f32 %v86, %v102
    %v106 = vmul.f32 %v91, %v102
    %v107 = vmul.f32 %v94, %v102
    %v108 = vld [vmem:[%s4] sm:$0x1]
    %v110 = vlaneseq
    %v111 = vshrl.u32 %v110, 7
    %v112 = vsub.s32 0, %v111
    %v113 = vrot.slane %v108, %v112
    %v115 = vadd.f32 %v104, %v113
    %v116 = vadd.f32 %v105, %v113
    %v117 = vadd.f32 %v106, %v113
    %v118 = vadd.f32 %v107, %v113
    %v119 = vmax.f32 %v115, 0.0
    %v120 = vmax.f32 %v116, 0.0
    %v121 = vmax.f32 %v117, 0.0
    %v122 = vmax.f32 %v118, 0.0
    %vm123 = vcmask 261120
    %124 = vst.msk [vmem:[#allocation2] sm:$0xff] %vm123, %v119
    %125 = vst.msk [vmem:[#allocation2 + $0x8] sm:$0xff] %vm123, %v120
    %126 = vst.msk [vmem:[#allocation2 + $0x10] sm:$0xff] %vm123, %v121
    %127 = vst.msk [vmem:[#allocation2 + $0x18] sm:$0xff] %vm123, %v122
    // Predicated region
    $region22: #{densepool_forward.5} parent=1 // pred_check
      _
    $region23: #{densepool_forward.5} parent=1 // pred_check_branch
      %129 = sbr.rel (0) target = $region25
    $region24: #{densepool_forward.5} parent=1 // pred_region
      %s131 = ssub.s32 512, 512
      %132 = vsyncadd [#allocation3], %s131
      %s133 = sshll.u32 [#allocation2], 4
      %s134 = int_to_ptr.vmem [resolvable:$true] %s133
      %139 = dma.vmem_to_hbm [thread:$0]  %s134, 512, %s5, [#allocation3], 128, 128, 8
    $region25: #{densepool_forward.5} parent=1 // pred_fallthru
      _
    // Predicated region
    $region26: #{densepool_forward.5} parent=1 // pred_check
      _
    $region27: #{densepool_forward.5} parent=1 // pred_check_branch
      %141 = sbr.rel (0) target = $region29
    $region28: #{densepool_forward.5} parent=1 // pred_region
      %142 = dma.done [#allocation3], 512
    $region29: #{densepool_forward.5} parent=1 // pred_fallthru
      _
    %143 = vsyncpa [#allocation3], 1

// kernel: densepool_forward.6
$region0: #{densepool_forward.6}
  #allocation0 [shape = 'u32[]', space=smem, size = 0x4, offset = 0x4, fixed_abs, tag = 'smem constant byte address 0x4 - core index']
  #allocation1 [shape = 'u32[144,128]{1,0:T(1,128)}', space=vmem, size = 0x12000, scoped, tag = 'internal scratch']
  #allocation2 [shape = 's32[1]{0}', space=sflag, size = 0x4, scoped, tag = 'scoped memory for densepool_forward.6']
  #allocation3 [shape = 'u8[512]{0}', space=smem, size = 0x200, scoped, tag = 'prefetched SMEM operand 0']
  %s0 = inlined_call_operand.hbm [shape: s32[2], index: 0, kind: input, shape index: {}]
  %s1 = inlined_call_operand.hbm [shape: f32[2,16,32], index: 1, kind: input, shape index: {}]
  %s2 = inlined_call_operand.hbm [shape: f32[2,16,16], index: 2, kind: input, shape index: {}]
  %s3 = inlined_call_operand.hbm [shape: f32[32,8], index: 3, kind: input, shape index: {}]
  %s4 = inlined_call_operand.hbm [shape: f32[1,8], index: 4, kind: input, shape index: {}]
  %s5 = inlined_call_operand.hbm [shape: f32[8,8], index: 5, kind: input, shape index: {}]
  %s6 = inlined_call_operand.hbm [shape: f32[1,8], index: 6, kind: input, shape index: {}]
  %s7 = inlined_call_operand.hbm [shape: f32[32,32], index: 7, kind: input, shape index: {}]
  %s8 = inlined_call_operand.hbm [shape: f32[1,32], index: 8, kind: input, shape index: {}]
  %s9 = inlined_call_operand.hbm [shape: f32[32,32], index: 9, kind: input, shape index: {}]
  %s10 = inlined_call_operand.hbm [shape: f32[1,32], index: 10, kind: input, shape index: {}]
  %s11 = inlined_call_operand.hbm [shape: f32[1,32], index: 11, kind: input, shape index: {}]
  %s12 = inlined_call_operand.hbm [shape: f32[1,32], index: 12, kind: input, shape index: {}]
  %s13 = inlined_call_operand.hbm [shape: f32[1,32], index: 13, kind: input, shape index: {}]
  %s14 = inlined_call_operand.hbm [shape: f32[1,32], index: 14, kind: input, shape index: {}]
  %s15 = inlined_call_operand.hbm [shape: f32[2,8,32], index: 15, kind: output, shape index: {0}]
  %s16 = inlined_call_operand.hbm [shape: f32[2,8,8], index: 16, kind: output, shape index: {1}]
  %s17 = inlined_call_operand.hbm [shape: f32[2,1,32], index: 17, kind: output, shape index: {2}]
  %s18 = inlined_call_operand.hbm [shape: f32[2,1,1], index: 18, kind: output, shape index: {3}]
  %s19 = inlined_call_operand.hbm [shape: f32[2,1,1], index: 19, kind: output, shape index: {4}]
  %20 = xla_tuple %s15, %s16, %s17, %s18, %s19
  %s21 = sld [smem:[#allocation0]]
  $region177: #{densepool_forward.6} parent=0
    _
  %s23 = ssub.s32 1, %s21
  %s24 = scalar_select 0, %s23, %s21
  %26 = dma.hbm_to_smem %s0, 16, [#allocation3], [#allocation2]
  %27 = dma.done [#allocation2], 16
  %28 = sfence
  $region1: #{densepool_forward.6} parent=0
    #allocation4 [shape = 'u8[16384]{0}', space=vmem, size = 0x4000, scoped, tag = 'input window, operand 1']
    #allocation5 [shape = 's32[2]{0}', space=sflag, size = 0x8, scoped, tag = 'scoped memory for densepool_forward.6']
    #allocation6 [shape = 's32[2]{0}', space=sflag, size = 0x8, scoped, tag = 'scoped memory for densepool_forward.6']
    #allocation7 [shape = 'u8[16384]{0}', space=vmem, size = 0x4000, scoped, tag = 'input window, operand 2']
    #allocation8 [shape = 's32[2]{0}', space=sflag, size = 0x8, scoped, tag = 'scoped memory for densepool_forward.6']
    #allocation9 [shape = 'u8[16384]{0}', space=vmem, size = 0x4000, scoped, tag = 'input window, operand 3, single buffered']
    #allocation10 [shape = 'u8[512]{0}', space=vmem, size = 0x400, scoped, tag = 'input window, operand 4, single buffered']
    #allocation11 [shape = 's32[1]{0}', space=sflag, size = 0x4, scoped, tag = 'scoped memory for densepool_forward.6']
    #allocation12 [shape = 'u8[4096]{0}', space=vmem, size = 0x1000, scoped, tag = 'input window, operand 5, single buffered']
    #allocation13 [shape = 'u8[512]{0}', space=vmem, size = 0x400, scoped, tag = 'input window, operand 6, single buffered']
    #allocation14 [shape = 's32[1]{0}', space=sflag, size = 0x4, scoped, tag = 'scoped memory for densepool_forward.6']
    #allocation15 [shape = 'u8[16384]{0}', space=vmem, size = 0x4000, scoped, tag = 'input window, operand 7, single buffered']
    #allocation16 [shape = 'u8[512]{0}', space=vmem, size = 0x400, scoped, tag = 'input window, operand 8, single buffered']
    #allocation17 [shape = 's32[1]{0}', space=sflag, size = 0x4, scoped, tag = 'scoped memory for densepool_forward.6']
    #allocation18 [shape = 'u8[16384]{0}', space=vmem, size = 0x4000, scoped, tag = 'input window, operand 9, single buffered']
    #allocation19 [shape = 'u8[512]{0}', space=vmem, size = 0x400, scoped, tag = 'input window, operand 10, single buffered']
    #allocation20 [shape = 's32[1]{0}', space=sflag, size = 0x4, scoped, tag = 'scoped memory for densepool_forward.6']
    #allocation21 [shape = 'u8[512]{0}', space=vmem, size = 0x400, scoped, tag = 'input window, operand 11, single buffered']
    #allocation22 [shape = 'u8[512]{0}', space=vmem, size = 0x400, scoped, tag = 'input window, operand 12, single buffered']
    #allocation23 [shape = 's32[1]{0}', space=sflag, size = 0x4, scoped, tag = 'scoped memory for densepool_forward.6']
    #allocation24 [shape = 'u8[512]{0}', space=vmem, size = 0x400, scoped, tag = 'input window, operand 13, single buffered']
    #allocation25 [shape = 'u8[512]{0}', space=vmem, size = 0x400, scoped, tag = 'input window, operand 14, single buffered']
    #allocation26 [shape = 's32[1]{0}', space=sflag, size = 0x4, scoped, tag = 'scoped memory for densepool_forward.6']
    #allocation27 [shape = 'u8[8192]{0}', space=vmem, size = 0x2000, scoped, tag = 'output window, operand 0']
    #allocation28 [shape = 'u8[8192]{0}', space=vmem, size = 0x2000, scoped, tag = 'output window, operand 1']
    #allocation29 [shape = 's32[2]{0}', space=sflag, size = 0x8, scoped, tag = 'scoped memory for densepool_forward.6']
    #allocation30 [shape = 'u8[1024]{0}', space=vmem, size = 0x400, scoped, tag = 'output window, operand 2']
    #allocation31 [shape = 'u8[1024]{0}', space=vmem, size = 0x400, scoped, tag = 'output window, operand 3']
    #allocation32 [shape = 's32[2]{0}', space=sflag, size = 0x8, scoped, tag = 'scoped memory for densepool_forward.6']
    #allocation33 [shape = 'u8[1024]{0}', space=vmem, size = 0x400, scoped, tag = 'output window, operand 4']
    %29 = vsyncpa [#allocation5], 0
    %s30 = scalar_lea.sflag [#allocation5], 1
    %31 = vsyncpa %s30, 0
    %32 = vsyncpa [#allocation8], 0
    %s33 = scalar_lea.sflag [#allocation8], 1
    %34 = vsyncpa %s33, 0
    %35 = vsyncpa [#allocation11], 0
    %36 = vsyncpa [#allocation14], 0
    %37 = vsyncpa [#allocation17], 0
    %38 = vsyncpa [#allocation20], 0
    %39 = vsyncpa [#allocation23], 0
    %40 = vsyncpa [#allocation26], 0
    %41 = vsyncpa [#allocation6], 0
    %s42 = scalar_lea.sflag [#allocation6], 1
    %43 = vsyncpa %s42, 0
    %44 = vsyncpa [#allocation29], 0
    %s45 = scalar_lea.sflag [#allocation29], 1
    %46 = vsyncpa %s45, 0
    %47 = vsyncpa [#allocation32], 0
    %s48 = scalar_lea.sflag [#allocation32], 1
    %49 = vsyncpa %s48, 0
    loop: start=0, step=1, limit=4
    $region2: #{densepool_forward.6} parent=1 // loop_pre_header
      _
    $region3: #{densepool_forward.6} parent=1 // loop_header
      %s51 = sphi 0, %s55
      %p52 = scmp.ge.s32.totalorder %s51, 4
      %s61 = sphi 0, %s63
      %s64 = sphi 0, %s61
      %s65 = sphi 0, %s64
      %s81 = sphi 0, %s65
      %s87 = sphi 0, %s89
      %s90 = sphi 0, %s87
      %s91 = sphi 0, %s90
      %s107 = sphi 0, %s91
      %s111 = sphi 0, %s111
      %s113 = sphi 0, %s111
      %s114 = sphi 0, %s113
      %s128 = sphi 0, %s114
      %s132 = sphi 0, %s132
      %s134 = sphi 0, %s132
      %s135 = sphi 0, %s134
      %s149 = sphi 0, %s135
      %s153 = sphi 0, %s153
      %s155 = sphi 0, %s153
      %s156 = sphi 0, %s155
      %s170 = sphi 0, %s156
      %s174 = sphi 0, %s174
      %s176 = sphi 0, %s174
      %s177 = sphi 0, %s176
      %s191 = sphi 0, %s177
      %s195 = sphi 0, %s195
      %s197 = sphi 0, %s195
      %s198 = sphi 0, %s197
      %s212 = sphi 0, %s198
      %s216 = sphi 0, %s216
      %s218 = sphi 0, %s216
      %s219 = sphi 0, %s218
      %s233 = sphi 0, %s219
      %s237 = sphi 0, %s237
      %s239 = sphi 0, %s237
      %s240 = sphi 0, %s239
      %s254 = sphi 0, %s240
      %s258 = sphi 0, %s258
      %s260 = sphi 0, %s258
      %s261 = sphi 0, %s260
      %s275 = sphi 0, %s261
      %s279 = sphi 0, %s279
      %s281 = sphi 0, %s279
      %s282 = sphi 0, %s281
      %s296 = sphi 0, %s282
      %s300 = sphi 0, %s300
      %s302 = sphi 0, %s300
      %s303 = sphi 0, %s302
      %s317 = sphi 0, %s303
      %s321 = sphi 0, %s321
      %s323 = sphi 0, %s321
      %s324 = sphi 0, %s323
      %s338 = sphi 0, %s324
      %s342 = sphi 0, %s342
      %s344 = sphi 0, %s342
      %s345 = sphi 0, %s344
      %s359 = sphi 0, %s345
      %s365 = sphi 0, %s367
      %s368 = sphi 0, %s365
      %s369 = sphi 0, %s368
      %s385 = sphi 0, %s369
      %s391 = sphi 0, %s393
      %s394 = sphi 0, %s391
      %s395 = sphi 0, %s394
      %s411 = sphi 0, %s395
      %s417 = sphi 0, %s419
      %s420 = sphi 0, %s417
      %s421 = sphi 0, %s420
      %s437 = sphi 0, %s421
      %s443 = sphi 0, %s445
      %s446 = sphi 0, %s443
      %s447 = sphi 0, %s446
      %s463 = sphi 0, %s447
      %s469 = sphi 0, %s471
      %s472 = sphi 0, %s469
      %s473 = sphi 0, %s472
      %s489 = sphi 0, %s473
    $region4: #{densepool_forward.6} parent=1 // loop_header_branch
      %54 = sbr.rel (%p52) target = $region8
    $region5: #{densepool_forward.6} parent=1 // loop_body
      %s56 = ssub.s32 %s51, 1
      %s57 = ssub.s32 %s51, 2
      %s58 = sadd.s32 %s51, 1
      %s59 = ssub.s32 %s51, %s58
      %p60 = scmp.eq.s32.totalorder %s59, 0
      %s62 = sadd.s32 %s61, 1
      %s63 = scalar_select %p60, %s61, %s62
      %p66 = pneg %p60
      %p67 = scmp.eq.s32.totalorder %s51, 1
      %p68 = por %p66, %p67
      %p69 = scmp.ne.s32.totalorder %s61, %s64
      %p70 = scmp.eq.s32.totalorder %s51, 0
      %p71 = por %p69, %p70
      %p72 = scmp.ne.s32.totalorder %s61, %s64
      %p73 = scmp.eq.s32.totalorder %s56, 1
      %p74 = por %p72, %p73
      %p75 = scmp.ne.s32.totalorder %s64, %s65
      %p76 = scmp.eq.s32.totalorder %s56, 0
      %p77 = por %p75, %p76
      %p78 = scmp.ne.s32.totalorder %s64, %s65
      %p79 = scmp.eq.s32.totalorder %s57, 1
      %p80 = por %p78, %p79
      %p82 = scmp.ne.s32.totalorder %s65, %s81
      %p83 = scmp.eq.s32.totalorder %s57, 0
      %p84 = por %p82, %p83
      %s85 = ssub.s32 %s51, %s58
      %p86 = scmp.eq.s32.totalorder %s85, 0
      %s88 = sadd.s32 %s87, 1
      %s89 = scalar_select %p86, %s87, %s88
      %p92 = pneg %p86
      %p93 = scmp.eq.s32.totalorder %s51, 1
      %p94 = por %p92, %p93
      %p95 = scmp.ne.s32.totalorder %s87, %s90
      %p96 = scmp.eq.s32.totalorder %s51, 0
      %p97 = por %p95, %p96
      %p98 = scmp.ne.s32.totalorder %s87, %s90
      %p99 = scmp.eq.s32.totalorder %s56, 1
      %p100 = por %p98, %p99
      %p101 = scmp.ne.s32.totalorder %s90, %s91
      %p102 = scmp.eq.s32.totalorder %s56, 0
      %p103 = por %p101, %p102
      %p104 = scmp.ne.s32.totalorder %s90, %s91
      %p105 = scmp.eq.s32.totalorder %s57, 1
      %p106 = por %p104, %p105
      %p108 = scmp.ne.s32.totalorder %s91, %s107
      %p109 = scmp.eq.s32.totalorder %s57, 0
      %p110 = por %p108, %p109
      %s112 = sadd.s32 %s111, 1
      %p115 = scmp.eq.s32.totalorder %s51, 1
      %p116 = scmp.ne.s32.totalorder %s111, %s113
      %p117 = scmp.eq.s32.totalorder %s51, 0
      %p118 = por %p116, %p117
      %p119 = scmp.ne.s32.totalorder %s111, %s113
      %p120 = scmp.eq.s32.totalorder %s56, 1
      %p121 = por %p119, %p120
      %p122 = scmp.ne.s32.totalorder %s113, %s114
      %p123 = scmp.eq.s32.totalorder %s56, 0
      %p124 = por %p122, %p123
      %p125 = scmp.ne.s32.totalorder %s113, %s114
      %p126 = scmp.eq.s32.totalorder %s57, 1
      %p127 = por %p125, %p126
      %p129 = scmp.ne.s32.totalorder %s114, %s128
      %p130 = scmp.eq.s32.totalorder %s57, 0
      %p131 = por %p129, %p130
      %s133 = sadd.s32 %s132, 1
      %p136 = scmp.eq.s32.totalorder %s51, 1
      %p137 = scmp.ne.s32.totalorder %s132, %s134
      %p138 = scmp.eq.s32.totalorder %s51, 0
      %p139 = por %p137, %p138
      %p140 = scmp.ne.s32.totalorder %s132, %s134
      %p141 = scmp.eq.s32.totalorder %s56, 1
      %p142 = por %p140, %p141
      %p143 = scmp.ne.s32.totalorder %s134, %s135
      %p144 = scmp.eq.s32.totalorder %s56, 0
      %p145 = por %p143, %p144
      %p146 = scmp.ne.s32.totalorder %s134, %s135
      %p147 = scmp.eq.s32.totalorder %s57, 1
      %p148 = por %p146, %p147
      %p150 = scmp.ne.s32.totalorder %s135, %s149
      %p151 = scmp.eq.s32.totalorder %s57, 0
      %p152 = por %p150, %p151
      %s154 = sadd.s32 %s153, 1
      %p157 = scmp.eq.s32.totalorder %s51, 1
      %p158 = scmp.ne.s32.totalorder %s153, %s155
      %p159 = scmp.eq.s32.totalorder %s51, 0
      %p160 = por %p158, %p159
      %p161 = scmp.ne.s32.totalorder %s153, %s155
      %p162 = scmp.eq.s32.totalorder %s56, 1
      %p163 = por %p161, %p162
      %p164 = scmp.ne.s32.totalorder %s155, %s156
      %p165 = scmp.eq.s32.totalorder %s56, 0
      %p166 = por %p164, %p165
      %p167 = scmp.ne.s32.totalorder %s155, %s156
      %p168 = scmp.eq.s32.totalorder %s57, 1
      %p169 = por %p167, %p168
      %p171 = scmp.ne.s32.totalorder %s156, %s170
      %p172 = scmp.eq.s32.totalorder %s57, 0
      %p173 = por %p171, %p172
      %s175 = sadd.s32 %s174, 1
      %p178 = scmp.eq.s32.totalorder %s51, 1
      %p179 = scmp.ne.s32.totalorder %s174, %s176
      %p180 = scmp.eq.s32.totalorder %s51, 0
      %p181 = por %p179, %p180
      %p182 = scmp.ne.s32.totalorder %s174, %s176
      %p183 = scmp.eq.s32.totalorder %s56, 1
      %p184 = por %p182, %p183
      %p185 = scmp.ne.s32.totalorder %s176, %s177
      %p186 = scmp.eq.s32.totalorder %s56, 0
      %p187 = por %p185, %p186
      %p188 = scmp.ne.s32.totalorder %s176, %s177
      %p189 = scmp.eq.s32.totalorder %s57, 1
      %p190 = por %p188, %p189
      %p192 = scmp.ne.s32.totalorder %s177, %s191
      %p193 = scmp.eq.s32.totalorder %s57, 0
      %p194 = por %p192, %p193
      %s196 = sadd.s32 %s195, 1
      %p199 = scmp.eq.s32.totalorder %s51, 1
      %p200 = scmp.ne.s32.totalorder %s195, %s197
      %p201 = scmp.eq.s32.totalorder %s51, 0
      %p202 = por %p200, %p201
      %p203 = scmp.ne.s32.totalorder %s195, %s197
      %p204 = scmp.eq.s32.totalorder %s56, 1
      %p205 = por %p203, %p204
      %p206 = scmp.ne.s32.totalorder %s197, %s198
      %p207 = scmp.eq.s32.totalorder %s56, 0
      %p208 = por %p206, %p207
      %p209 = scmp.ne.s32.totalorder %s197, %s198
      %p210 = scmp.eq.s32.totalorder %s57, 1
      %p211 = por %p209, %p210
      %p213 = scmp.ne.s32.totalorder %s198, %s212
      %p214 = scmp.eq.s32.totalorder %s57, 0
      %p215 = por %p213, %p214
      %s217 = sadd.s32 %s216, 1
      %p220 = scmp.eq.s32.totalorder %s51, 1
      %p221 = scmp.ne.s32.totalorder %s216, %s218
      %p222 = scmp.eq.s32.totalorder %s51, 0
      %p223 = por %p221, %p222
      %p224 = scmp.ne.s32.totalorder %s216, %s218
      %p225 = scmp.eq.s32.totalorder %s56, 1
      %p226 = por %p224, %p225
      %p227 = scmp.ne.s32.totalorder %s218, %s219
      %p228 = scmp.eq.s32.totalorder %s56, 0
      %p229 = por %p227, %p228
      %p230 = scmp.ne.s32.totalorder %s218, %s219
      %p231 = scmp.eq.s32.totalorder %s57, 1
      %p232 = por %p230, %p231
      %p234 = scmp.ne.s32.totalorder %s219, %s233
      %p235 = scmp.eq.s32.totalorder %s57, 0
      %p236 = por %p234, %p235
      %s238 = sadd.s32 %s237, 1
      %p241 = scmp.eq.s32.totalorder %s51, 1
      %p242 = scmp.ne.s32.totalorder %s237, %s239
      %p243 = scmp.eq.s32.totalorder %s51, 0
      %p244 = por %p242, %p243
      %p245 = scmp.ne.s32.totalorder %s237, %s239
      %p246 = scmp.eq.s32.totalorder %s56, 1
      %p247 = por %p245, %p246
      %p248 = scmp.ne.s32.totalorder %s239, %s240
      %p249 = scmp.eq.s32.totalorder %s56, 0
      %p250 = por %p248, %p249
      %p251 = scmp.ne.s32.totalorder %s239, %s240
      %p252 = scmp.eq.s32.totalorder %s57, 1
      %p253 = por %p251, %p252
      %p255 = scmp.ne.s32.totalorder %s240, %s254
      %p256 = scmp.eq.s32.totalorder %s57, 0
      %p257 = por %p255, %p256
      %s259 = sadd.s32 %s258, 1
      %p262 = scmp.eq.s32.totalorder %s51, 1
      %p263 = scmp.ne.s32.totalorder %s258, %s260
      %p264 = scmp.eq.s32.totalorder %s51, 0
      %p265 = por %p263, %p264
      %p266 = scmp.ne.s32.totalorder %s258, %s260
      %p267 = scmp.eq.s32.totalorder %s56, 1
      %p268 = por %p266, %p267
      %p269 = scmp.ne.s32.totalorder %s260, %s261
      %p270 = scmp.eq.s32.totalorder %s56, 0
      %p271 = por %p269, %p270
      %p272 = scmp.ne.s32.totalorder %s260, %s261
      %p273 = scmp.eq.s32.totalorder %s57, 1
      %p274 = por %p272, %p273
      %p276 = scmp.ne.s32.totalorder %s261, %s275
      %p277 = scmp.eq.s32.totalorder %s57, 0
      %p278 = por %p276, %p277
      %s280 = sadd.s32 %s279, 1
      %p283 = scmp.eq.s32.totalorder %s51, 1
      %p284 = scmp.ne.s32.totalorder %s279, %s281
      %p285 = scmp.eq.s32.totalorder %s51, 0
      %p286 = por %p284, %p285
      %p287 = scmp.ne.s32.totalorder %s279, %s281
      %p288 = scmp.eq.s32.totalorder %s56, 1
      %p289 = por %p287, %p288
      %p290 = scmp.ne.s32.totalorder %s281, %s282
      %p291 = scmp.eq.s32.totalorder %s56, 0
      %p292 = por %p290, %p291
      %p293 = scmp.ne.s32.totalorder %s281, %s282
      %p294 = scmp.eq.s32.totalorder %s57, 1
      %p295 = por %p293, %p294
      %p297 = scmp.ne.s32.totalorder %s282, %s296
      %p298 = scmp.eq.s32.totalorder %s57, 0
      %p299 = por %p297, %p298
      %s301 = sadd.s32 %s300, 1
      %p304 = scmp.eq.s32.totalorder %s51, 1
      %p305 = scmp.ne.s32.totalorder %s300, %s302
      %p306 = scmp.eq.s32.totalorder %s51, 0
      %p307 = por %p305, %p306
      %p308 = scmp.ne.s32.totalorder %s300, %s302
      %p309 = scmp.eq.s32.totalorder %s56, 1
      %p310 = por %p308, %p309
      %p311 = scmp.ne.s32.totalorder %s302, %s303
      %p312 = scmp.eq.s32.totalorder %s56, 0
      %p313 = por %p311, %p312
      %p314 = scmp.ne.s32.totalorder %s302, %s303
      %p315 = scmp.eq.s32.totalorder %s57, 1
      %p316 = por %p314, %p315
      %p318 = scmp.ne.s32.totalorder %s303, %s317
      %p319 = scmp.eq.s32.totalorder %s57, 0
      %p320 = por %p318, %p319
      %s322 = sadd.s32 %s321, 1
      %p325 = scmp.eq.s32.totalorder %s51, 1
      %p326 = scmp.ne.s32.totalorder %s321, %s323
      %p327 = scmp.eq.s32.totalorder %s51, 0
      %p328 = por %p326, %p327
      %p329 = scmp.ne.s32.totalorder %s321, %s323
      %p330 = scmp.eq.s32.totalorder %s56, 1
      %p331 = por %p329, %p330
      %p332 = scmp.ne.s32.totalorder %s323, %s324
      %p333 = scmp.eq.s32.totalorder %s56, 0
      %p334 = por %p332, %p333
      %p335 = scmp.ne.s32.totalorder %s323, %s324
      %p336 = scmp.eq.s32.totalorder %s57, 1
      %p337 = por %p335, %p336
      %p339 = scmp.ne.s32.totalorder %s324, %s338
      %p340 = scmp.eq.s32.totalorder %s57, 0
      %p341 = por %p339, %p340
      %s343 = sadd.s32 %s342, 1
      %p346 = scmp.eq.s32.totalorder %s51, 1
      %p347 = scmp.ne.s32.totalorder %s342, %s344
      %p348 = scmp.eq.s32.totalorder %s51, 0
      %p349 = por %p347, %p348
      %p350 = scmp.ne.s32.totalorder %s342, %s344
      %p351 = scmp.eq.s32.totalorder %s56, 1
      %p352 = por %p350, %p351
      %p353 = scmp.ne.s32.totalorder %s344, %s345
      %p354 = scmp.eq.s32.totalorder %s56, 0
      %p355 = por %p353, %p354
      %p356 = scmp.ne.s32.totalorder %s344, %s345
      %p357 = scmp.eq.s32.totalorder %s57, 1
      %p358 = por %p356, %p357
      %p360 = scmp.ne.s32.totalorder %s345, %s359
      %p361 = scmp.eq.s32.totalorder %s57, 0
      %p362 = por %p360, %p361
      %s363 = ssub.s32 %s51, %s58
      %p364 = scmp.eq.s32.totalorder %s363, 0
      %s366 = sadd.s32 %s365, 1
      %s367 = scalar_select %p364, %s365, %s366
      %p370 = pneg %p364
      %p371 = scmp.eq.s32.totalorder %s51, 1
      %p372 = por %p370, %p371
      %p373 = scmp.ne.s32.totalorder %s365, %s368
      %p374 = scmp.eq.s32.totalorder %s51, 0
      %p375 = por %p373, %p374
      %p376 = scmp.ne.s32.totalorder %s365, %s368
      %p377 = scmp.eq.s32.totalorder %s56, 1
      %p378 = por %p376, %p377
      %p379 = scmp.ne.s32.totalorder %s368, %s369
      %p380 = scmp.eq.s32.totalorder %s56, 0
      %p381 = por %p379, %p380
      %p382 = scmp.ne.s32.totalorder %s368, %s369
      %p383 = scmp.eq.s32.totalorder %s57, 1
      %p384 = por %p382, %p383
      %p386 = scmp.ne.s32.totalorder %s369, %s385
      %p387 = scmp.eq.s32.totalorder %s57, 0
      %p388 = por %p386, %p387
      %s389 = ssub.s32 %s51, %s58
      %p390 = scmp.eq.s32.totalorder %s389, 0
      %s392 = sadd.s32 %s391, 1
      %s393 = scalar_select %p390, %s391, %s392
      %p396 = pneg %p390
      %p397 = scmp.eq.s32.totalorder %s51, 1
      %p398 = por %p396, %p397
      %p399 = scmp.ne.s32.totalorder %s391, %s394
      %p400 = scmp.eq.s32.totalorder %s51, 0
      %p401 = por %p399, %p400
      %p402 = scmp.ne.s32.totalorder %s391, %s394
      %p403 = scmp.eq.s32.totalorder %s56, 1
      %p404 = por %p402, %p403
      %p405 = scmp.ne.s32.totalorder %s394, %s395
      %p406 = scmp.eq.s32.totalorder %s56, 0
      %p407 = por %p405, %p406
      %p408 = scmp.ne.s32.totalorder %s394, %s395
      %p409 = scmp.eq.s32.totalorder %s57, 1
      %p410 = por %p408, %p409
      %p412 = scmp.ne.s32.totalorder %s395, %s411
      %p413 = scmp.eq.s32.totalorder %s57, 0
      %p414 = por %p412, %p413
      %s415 = ssub.s32 %s51, %s58
      %p416 = scmp.eq.s32.totalorder %s415, 0
      %s418 = sadd.s32 %s417, 1
      %s419 = scalar_select %p416, %s417, %s418
      %p422 = pneg %p416
      %p423 = scmp.eq.s32.totalorder %s51, 1
      %p424 = por %p422, %p423
      %p425 = scmp.ne.s32.totalorder %s417, %s420
      %p426 = scmp.eq.s32.totalorder %s51, 0
      %p427 = por %p425, %p426
      %p428 = scmp.ne.s32.totalorder %s417, %s420
      %p429 = scmp.eq.s32.totalorder %s56, 1
      %p430 = por %p428, %p429
      %p431 = scmp.ne.s32.totalorder %s420, %s421
      %p432 = scmp.eq.s32.totalorder %s56, 0
      %p433 = por %p431, %p432
      %p434 = scmp.ne.s32.totalorder %s420, %s421
      %p435 = scmp.eq.s32.totalorder %s57, 1
      %p436 = por %p434, %p435
      %p438 = scmp.ne.s32.totalorder %s421, %s437
      %p439 = scmp.eq.s32.totalorder %s57, 0
      %p440 = por %p438, %p439
      %s441 = ssub.s32 %s51, %s58
      %p442 = scmp.eq.s32.totalorder %s441, 0
      %s444 = sadd.s32 %s443, 1
      %s445 = scalar_select %p442, %s443, %s444
      %p448 = pneg %p442
      %p449 = scmp.eq.s32.totalorder %s51, 1
      %p450 = por %p448, %p449
      %p451 = scmp.ne.s32.totalorder %s443, %s446
      %p452 = scmp.eq.s32.totalorder %s51, 0
      %p453 = por %p451, %p452
      %p454 = scmp.ne.s32.totalorder %s443, %s446
      %p455 = scmp.eq.s32.totalorder %s56, 1
      %p456 = por %p454, %p455
      %p457 = scmp.ne.s32.totalorder %s446, %s447
      %p458 = scmp.eq.s32.totalorder %s56, 0
      %p459 = por %p457, %p458
      %p460 = scmp.ne.s32.totalorder %s446, %s447
      %p461 = scmp.eq.s32.totalorder %s57, 1
      %p462 = por %p460, %p461
      %p464 = scmp.ne.s32.totalorder %s447, %s463
      %p465 = scmp.eq.s32.totalorder %s57, 0
      %p466 = por %p464, %p465
      %s467 = ssub.s32 %s51, %s58
      %p468 = scmp.eq.s32.totalorder %s467, 0
      %s470 = sadd.s32 %s469, 1
      %s471 = scalar_select %p468, %s469, %s470
      %p474 = pneg %p468
      %p475 = scmp.eq.s32.totalorder %s51, 1
      %p476 = por %p474, %p475
      %p477 = scmp.ne.s32.totalorder %s469, %s472
      %p478 = scmp.eq.s32.totalorder %s51, 0
      %p479 = por %p477, %p478
      %p480 = scmp.ne.s32.totalorder %s469, %s472
      %p481 = scmp.eq.s32.totalorder %s56, 1
      %p482 = por %p480, %p481
      %p483 = scmp.ne.s32.totalorder %s472, %s473
      %p484 = scmp.eq.s32.totalorder %s56, 0
      %p485 = por %p483, %p484
      %p486 = scmp.ne.s32.totalorder %s472, %s473
      %p487 = scmp.eq.s32.totalorder %s57, 1
      %p488 = por %p486, %p487
      %p490 = scmp.ne.s32.totalorder %s473, %s489
      %p491 = scmp.eq.s32.totalorder %s57, 0
      %p492 = por %p490, %p491
      %p493 = scmp.le.s32.totalorder 1, %s51
      %p494 = scmp.lt.s32.totalorder %s51, 3
      %p495 = pnand %p493, %p494
      %p496 = pneg %p495
      // Predicated region
      $region9: #{densepool_forward.6} parent=5 // pred_check
        _
      $region10: #{densepool_forward.6} parent=5 // pred_check_branch
        %498 = sbr.rel (%p495) target = $region12
      $region11: #{densepool_forward.6} parent=5 // pred_region
        %s499 = ssub.s32 %s51, 1
        // Predicated region
        $region13: #{densepool_forward.6} parent=11 // pred_check
          %p500 = pneg %p124
        $region14: #{densepool_forward.6} parent=11 // pred_check_branch
          %502 = sbr.rel (%p500) target = $region16
        $region15: #{densepool_forward.6} parent=11 // pred_region
          %s504 = ssub.s32 512, 512
          %505 = vsyncadd [#allocation8], %s504
          %s506 = sshll.u32 [#allocation9], 4
          %s507 = int_to_ptr.vmem [resolvable:$true] %s506
          %512 = dma.hbm_to_vmem [thread:$0]  %s3, 512, %s507, [#allocation8], 128, 128, 8
        $region16: #{densepool_forward.6} parent=11 // pred_fallthru
          _
        // Predicated region
        $region17: #{densepool_forward.6} parent=11 // pred_check
          %p513 = pneg %p145
        $region18: #{densepool_forward.6} parent=11 // pred_check_branch
          %515 = sbr.rel (%p513) target = $region20
        $region19: #{densepool_forward.6} parent=11 // pred_region
          %s517 = ssub.s32 16, 16
          %518 = vsyncadd [#allocation11], %s517
          %s520 = sshll.u32 [#allocation10], 4
          %s521 = int_to_ptr.vmem [resolvable:$true] %s520
          %523 = dma.hbm_to_vmem [thread:$0]  %s4, 16, %s521, [#allocation11]
        $region20: #{densepool_forward.6} parent=11 // pred_fallthru
          _
        // Predicated region
        $region21: #{densepool_forward.6} parent=11 // pred_check
          %p524 = pneg %p166
        $region22: #{densepool_forward.6} parent=11 // pred_check_branch
          %526 = sbr.rel (%p524) target = $region24
        $region23: #{densepool_forward.6} parent=11 // pred_region
          %s528 = ssub.s32 128, 128
          %529 = vsyncadd [#allocation11], %s528
          %s531 = sshll.u32 [#allocation12], 4
          %s532 = int_to_ptr.vmem [resolvable:$true] %s531
          %534 = dma.hbm_to_vmem [thread:$0]  %s5, 128, %s532, [#allocation11]
        $region24: #{densepool_forward.6} parent=11 // pred_fallthru
          _
        // Predicated region
        $region25: #{densepool_forward.6} parent=11 // pred_check
          %p535 = pneg %p187
        $region26: #{densepool_forward.6} parent=11 // pred_check_branch
          %537 = sbr.rel (%p535) target = $region28
        $region27: #{densepool_forward.6} parent=11 // pred_region
          %s539 = ssub.s32 16, 16
          %540 = vsyncadd [#allocation14], %s539
          %s542 = sshll.u32 [#allocation13], 4
          %s543 = int_to_ptr.vmem [resolvable:$true] %s542
          %545 = dma.hbm_to_vmem [thread:$0]  %s6, 16, %s543, [#allocation14]
        $region28: #{densepool_forward.6} parent=11 // pred_fallthru
          _
        // Predicated region
        $region29: #{densepool_forward.6} parent=11 // pred_check
          %p546 = pneg %p208
        $region30: #{densepool_forward.6} parent=11 // pred_check_branch
          %548 = sbr.rel (%p546) target = $region32
        $region31: #{densepool_forward.6} parent=11 // pred_region
          %s550 = ssub.s32 512, 512
          %551 = vsyncadd [#allocation14], %s550
          %s552 = sshll.u32 [#allocation15], 4
          %s553 = int_to_ptr.vmem [resolvable:$true] %s552
          %558 = dma.hbm_to_vmem [thread:$0]  %s7, 512, %s553, [#allocation14], 128, 128, 8
        $region32: #{densepool_forward.6} parent=11 // pred_fallthru
          _
        // Predicated region
        $region33: #{densepool_forward.6} parent=11 // pred_check
          %p559 = pneg %p229
        $region34: #{densepool_forward.6} parent=11 // pred_check_branch
          %561 = sbr.rel (%p559) target = $region36
        $region35: #{densepool_forward.6} parent=11 // pred_region
          %s563 = ssub.s32 16, 16
          %564 = vsyncadd [#allocation17], %s563
          %s566 = sshll.u32 [#allocation16], 4
          %s567 = int_to_ptr.vmem [resolvable:$true] %s566
          %569 = dma.hbm_to_vmem [thread:$0]  %s8, 16, %s567, [#allocation17]
        $region36: #{densepool_forward.6} parent=11 // pred_fallthru
          _
        // Predicated region
        $region37: #{densepool_forward.6} parent=11 // pred_check
          %p570 = pneg %p250
        $region38: #{densepool_forward.6} parent=11 // pred_check_branch
          %572 = sbr.rel (%p570) target = $region40
        $region39: #{densepool_forward.6} parent=11 // pred_region
          %s574 = ssub.s32 512, 512
          %575 = vsyncadd [#allocation17], %s574
          %s576 = sshll.u32 [#allocation18], 4
          %s577 = int_to_ptr.vmem [resolvable:$true] %s576
          %582 = dma.hbm_to_vmem [thread:$0]  %s9, 512, %s577, [#allocation17], 128, 128, 8
        $region40: #{densepool_forward.6} parent=11 // pred_fallthru
          _
        // Predicated region
        $region41: #{densepool_forward.6} parent=11 // pred_check
          %p583 = pneg %p271
        $region42: #{densepool_forward.6} parent=11 // pred_check_branch
          %585 = sbr.rel (%p583) target = $region44
        $region43: #{densepool_forward.6} parent=11 // pred_region
          %s587 = ssub.s32 16, 16
          %588 = vsyncadd [#allocation20], %s587
          %s590 = sshll.u32 [#allocation19], 4
          %s591 = int_to_ptr.vmem [resolvable:$true] %s590
          %593 = dma.hbm_to_vmem [thread:$0]  %s10, 16, %s591, [#allocation20]
        $region44: #{densepool_forward.6} parent=11 // pred_fallthru
          _
        // Predicated region
        $region45: #{densepool_forward.6} parent=11 // pred_check
          %p594 = pneg %p292
        $region46: #{densepool_forward.6} parent=11 // pred_check_branch
          %596 = sbr.rel (%p594) target = $region48
        $region47: #{densepool_forward.6} parent=11 // pred_region
          %s598 = ssub.s32 16, 16
          %599 = vsyncadd [#allocation20], %s598
          %s601 = sshll.u32 [#allocation21], 4
          %s602 = int_to_ptr.vmem [resolvable:$true] %s601
          %604 = dma.hbm_to_vmem [thread:$0]  %s11, 16, %s602, [#allocation20]
        $region48: #{densepool_forward.6} parent=11 // pred_fallthru
          _
        // Predicated region
        $region49: #{densepool_forward.6} parent=11 // pred_check
          %p605 = pneg %p313
        $region50: #{densepool_forward.6} parent=11 // pred_check_branch
          %607 = sbr.rel (%p605) target = $region52
        $region51: #{densepool_forward.6} parent=11 // pred_region
          %s609 = ssub.s32 16, 16
          %610 = vsyncadd [#allocation23], %s609
          %s612 = sshll.u32 [#allocation22], 4
          %s613 = int_to_ptr.vmem [resolvable:$true] %s612
          %615 = dma.hbm_to_vmem [thread:$0]  %s12, 16, %s613, [#allocation23]
        $region52: #{densepool_forward.6} parent=11 // pred_fallthru
          _
        // Predicated region
        $region53: #{densepool_forward.6} parent=11 // pred_check
          %p616 = pneg %p334
        $region54: #{densepool_forward.6} parent=11 // pred_check_branch
          %618 = sbr.rel (%p616) target = $region56
        $region55: #{densepool_forward.6} parent=11 // pred_region
          %s620 = ssub.s32 16, 16
          %621 = vsyncadd [#allocation23], %s620
          %s623 = sshll.u32 [#allocation24], 4
          %s624 = int_to_ptr.vmem [resolvable:$true] %s623
          %626 = dma.hbm_to_vmem [thread:$0]  %s13, 16, %s624, [#allocation23]
        $region56: #{densepool_forward.6} parent=11 // pred_fallthru
          _
        // Predicated region
        $region57: #{densepool_forward.6} parent=11 // pred_check
          %p627 = pneg %p355
        $region58: #{densepool_forward.6} parent=11 // pred_check_branch
          %629 = sbr.rel (%p627) target = $region60
        $region59: #{densepool_forward.6} parent=11 // pred_region
          %s631 = ssub.s32 16, 16
          %632 = vsyncadd [#allocation26], %s631
          %s634 = sshll.u32 [#allocation25], 4
          %s635 = int_to_ptr.vmem [resolvable:$true] %s634
          %637 = dma.hbm_to_vmem [thread:$0]  %s14, 16, %s635, [#allocation26]
        $region60: #{densepool_forward.6} parent=11 // pred_fallthru
          _
      $region12: #{densepool_forward.6} parent=5 // pred_fallthru
        _
      %p638 = scmp.lt.s32.totalorder %s51, 2
      // Predicated region
      $region61: #{densepool_forward.6} parent=5 // pred_check
        %p639 = pneg %p638
      $region62: #{densepool_forward.6} parent=5 // pred_check_branch
        %641 = sbr.rel (%p639) target = $region64
      $region63: #{densepool_forward.6} parent=5 // pred_region
        // Predicated region
        $region65: #{densepool_forward.6} parent=63 // pred_check
          %p642 = pneg %p71
        $region66: #{densepool_forward.6} parent=63 // pred_check_branch
          %644 = sbr.rel (%p642) target = $region68
        $region67: #{densepool_forward.6} parent=63 // pred_region
          %s645 = sand.u32 %s61, 1
          %s646 = scalar_lea.sflag [#allocation5], %s645
          %s647 = sand.u32 %s61, 1
          %s648 = smul.addr %s647, 16
          %s649 = scalar_lea.vmem [#allocation4], %s648
          %s651 = ssub.s32 256, 256
          %652 = vsyncadd %s646, %s651
          %s653 = smul.addr %s51, 2
          %s654 = smul.addr %s653, 128
          %s655 = scalar_lea.hbm %s1, %s654
          %s656 = sshll.u32 %s649, 4
          %s657 = int_to_ptr.vmem [resolvable:$true] %s656
          %662 = dma.hbm_to_vmem [thread:$0]  %s655, 256, %s657, %s646, 128, 128, 8
        $region68: #{densepool_forward.6} parent=63 // pred_fallthru
          _
        // Predicated region
        $region69: #{densepool_forward.6} parent=63 // pred_check
          %p663 = pneg %p97
        $region70: #{densepool_forward.6} parent=63 // pred_check_branch
          %665 = sbr.rel (%p663) target = $region72
        $region71: #{densepool_forward.6} parent=63 // pred_region
          %s666 = sand.u32 %s51, 1
          %s667 = scalar_lea.sflag [#allocation8], %s666
          %s668 = sand.u32 %s87, 1
          %s669 = smul.addr %s668, 16
          %s670 = scalar_lea.vmem [#allocation7], %s669
          %s672 = ssub.s32 256, 256
          %673 = vsyncadd %s667, %s672
          %s674 = smul.addr %s51, 2
          %s675 = smul.addr %s674, 128
          %s676 = scalar_lea.hbm %s2, %s675
          %s677 = sshll.u32 %s670, 4
          %s678 = int_to_ptr.vmem [resolvable:$true] %s677
          %683 = dma.hbm_to_vmem [thread:$0]  %s676, 256, %s678, %s667, 128, 128, 8
        $region72: #{densepool_forward.6} parent=63 // pred_fallthru
          _
      $region64: #{densepool_forward.6} parent=5 // pred_fallthru
        _
      %p684 = scmp.le.s32.totalorder 1, %s51
      %p685 = scmp.lt.s32.totalorder %s51, 3
      %p686 = pnand %p684, %p685
      %p687 = pneg %p686
      // Predicated region
      $region73: #{densepool_forward.6} parent=5 // pred_check
        _
      $region74: #{densepool_forward.6} parent=5 // pred_check_branch
        %689 = sbr.rel (%p686) target = $region76
      $region75: #{densepool_forward.6} parent=5 // pred_region
        %s690 = ssub.s32 %s51, 1
        %s691 = sand.u32 %s64, 1
        %s692 = scalar_lea.sflag [#allocation5], %s691
        %s693 = sand.u32 %s64, 1
        %s694 = smul.addr %s693, 16
        %s695 = scalar_lea.vmem [#allocation4], %s694
        // Predicated region
        $region77: #{densepool_forward.6} parent=75 // pred_check
          %p696 = pneg %p77
        $region78: #{densepool_forward.6} parent=75 // pred_check_branch
          %698 = sbr.rel (%p696) target = $region80
        $region79: #{densepool_forward.6} parent=75 // pred_region
          %699 = dma.done %s692, 256
        $region80: #{densepool_forward.6} parent=75 // pred_fallthru
          _
        %s700 = sand.u32 %s56, 1
        %s701 = scalar_lea.sflag [#allocation8], %s700
        %s702 = sand.u32 %s90, 1
        %s703 = smul.addr %s702, 16
        %s704 = scalar_lea.vmem [#allocation7], %s703
        // Predicated region
        $region81: #{densepool_forward.6} parent=75 // pred_check
          %p705 = pneg %p103
        $region82: #{densepool_forward.6} parent=75 // pred_check_branch
          %707 = sbr.rel (%p705) target = $region84
        $region83: #{densepool_forward.6} parent=75 // pred_region
          %708 = dma.done %s701, 256
        $region84: #{densepool_forward.6} parent=75 // pred_fallthru
          _
        // Predicated region
        $region85: #{densepool_forward.6} parent=75 // pred_check
          %p709 = pneg %p124
        $region86: #{densepool_forward.6} parent=75 // pred_check_branch
          %711 = sbr.rel (%p709) target = $region88
        $region87: #{densepool_forward.6} parent=75 // pred_region
          %712 = dma.done [#allocation8], 512
        $region88: #{densepool_forward.6} parent=75 // pred_fallthru
          _
        // Predicated region
        $region89: #{densepool_forward.6} parent=75 // pred_check
          %p713 = pneg %p145
        $region90: #{densepool_forward.6} parent=75 // pred_check_branch
          %715 = sbr.rel (%p713) target = $region92
        $region91: #{densepool_forward.6} parent=75 // pred_region
          %716 = dma.done [#allocation11], 16
        $region92: #{densepool_forward.6} parent=75 // pred_fallthru
          _
        // Predicated region
        $region93: #{densepool_forward.6} parent=75 // pred_check
          %p717 = pneg %p166
        $region94: #{densepool_forward.6} parent=75 // pred_check_branch
          %719 = sbr.rel (%p717) target = $region96
        $region95: #{densepool_forward.6} parent=75 // pred_region
          %720 = dma.done [#allocation11], 128
        $region96: #{densepool_forward.6} parent=75 // pred_fallthru
          _
        // Predicated region
        $region97: #{densepool_forward.6} parent=75 // pred_check
          %p721 = pneg %p187
        $region98: #{densepool_forward.6} parent=75 // pred_check_branch
          %723 = sbr.rel (%p721) target = $region100
        $region99: #{densepool_forward.6} parent=75 // pred_region
          %724 = dma.done [#allocation14], 16
        $region100: #{densepool_forward.6} parent=75 // pred_fallthru
          _
        // Predicated region
        $region101: #{densepool_forward.6} parent=75 // pred_check
          %p725 = pneg %p208
        $region102: #{densepool_forward.6} parent=75 // pred_check_branch
          %727 = sbr.rel (%p725) target = $region104
        $region103: #{densepool_forward.6} parent=75 // pred_region
          %728 = dma.done [#allocation14], 512
        $region104: #{densepool_forward.6} parent=75 // pred_fallthru
          _
        // Predicated region
        $region105: #{densepool_forward.6} parent=75 // pred_check
          %p729 = pneg %p229
        $region106: #{densepool_forward.6} parent=75 // pred_check_branch
          %731 = sbr.rel (%p729) target = $region108
        $region107: #{densepool_forward.6} parent=75 // pred_region
          %732 = dma.done [#allocation17], 16
        $region108: #{densepool_forward.6} parent=75 // pred_fallthru
          _
        // Predicated region
        $region109: #{densepool_forward.6} parent=75 // pred_check
          %p733 = pneg %p250
        $region110: #{densepool_forward.6} parent=75 // pred_check_branch
          %735 = sbr.rel (%p733) target = $region112
        $region111: #{densepool_forward.6} parent=75 // pred_region
          %736 = dma.done [#allocation17], 512
        $region112: #{densepool_forward.6} parent=75 // pred_fallthru
          _
        // Predicated region
        $region113: #{densepool_forward.6} parent=75 // pred_check
          %p737 = pneg %p271
        $region114: #{densepool_forward.6} parent=75 // pred_check_branch
          %739 = sbr.rel (%p737) target = $region116
        $region115: #{densepool_forward.6} parent=75 // pred_region
          %740 = dma.done [#allocation20], 16
        $region116: #{densepool_forward.6} parent=75 // pred_fallthru
          _
        // Predicated region
        $region117: #{densepool_forward.6} parent=75 // pred_check
          %p741 = pneg %p292
        $region118: #{densepool_forward.6} parent=75 // pred_check_branch
          %743 = sbr.rel (%p741) target = $region120
        $region119: #{densepool_forward.6} parent=75 // pred_region
          %744 = dma.done [#allocation20], 16
        $region120: #{densepool_forward.6} parent=75 // pred_fallthru
          _
        // Predicated region
        $region121: #{densepool_forward.6} parent=75 // pred_check
          %p745 = pneg %p313
        $region122: #{densepool_forward.6} parent=75 // pred_check_branch
          %747 = sbr.rel (%p745) target = $region124
        $region123: #{densepool_forward.6} parent=75 // pred_region
          %748 = dma.done [#allocation23], 16
        $region124: #{densepool_forward.6} parent=75 // pred_fallthru
          _
        // Predicated region
        $region125: #{densepool_forward.6} parent=75 // pred_check
          %p749 = pneg %p334
        $region126: #{densepool_forward.6} parent=75 // pred_check_branch
          %751 = sbr.rel (%p749) target = $region128
        $region127: #{densepool_forward.6} parent=75 // pred_region
          %752 = dma.done [#allocation23], 16
        $region128: #{densepool_forward.6} parent=75 // pred_fallthru
          _
        // Predicated region
        $region129: #{densepool_forward.6} parent=75 // pred_check
          %p753 = pneg %p355
        $region130: #{densepool_forward.6} parent=75 // pred_check_branch
          %755 = sbr.rel (%p753) target = $region132
        $region131: #{densepool_forward.6} parent=75 // pred_region
          %756 = dma.done [#allocation26], 16
        $region132: #{densepool_forward.6} parent=75 // pred_fallthru
          _
        %s757 = sand.u32 %s64, 1
        %s758 = scalar_lea.sflag [#allocation5], %s757
        %s759 = sand.u32 %s64, 1
        %s760 = smul.addr %s759, 16
        %s761 = scalar_lea.vmem [#allocation4], %s760
        %p762 = pneg %p77
        %p763 = pneg %p74
        %s764 = sand.u32 %s56, 1
        %s765 = scalar_lea.sflag [#allocation8], %s764
        %s766 = sand.u32 %s90, 1
        %s767 = smul.addr %s766, 16
        %s768 = scalar_lea.vmem [#allocation7], %s767
        %p769 = pneg %p103
        %p770 = pneg %p100
        %p771 = pneg %p124
        %p772 = pneg %p121
        %p773 = pneg %p145
        %p774 = pneg %p142
        %p775 = pneg %p166
        %p776 = pneg %p163
        %p777 = pneg %p187
        %p778 = pneg %p184
        %p779 = pneg %p208
        %p780 = pneg %p205
        %p781 = pneg %p229
        %p782 = pneg %p226
        %p783 = pneg %p250
        %p784 = pneg %p247
        %p785 = pneg %p271
        %p786 = pneg %p268
        %p787 = pneg %p292
        %p788 = pneg %p289
        %p789 = pneg %p313
        %p790 = pneg %p310
        %p791 = pneg %p334
        %p792 = pneg %p331
        %p793 = pneg %p355
        %p794 = pneg %p352
        %p795 = pneg %p381
        %p796 = pneg %p378
        %s797 = sand.u32 %s368, 1
        %s798 = scalar_lea.sflag [#allocation6], %s797
        %s799 = sand.u32 %s368, 1
        %s800 = smul.addr %s799, 8
        %s801 = scalar_lea.vmem [#allocation27], %s800
        %p802 = pneg %p407
        %p803 = pneg %p404
        %s804 = sand.u32 %s56, 1
        %s805 = scalar_lea.sflag [#allocation29], %s804
        %s806 = sand.u32 %s394, 1
        %s807 = smul.addr %s806, 8
        %s808 = scalar_lea.vmem [#allocation28], %s807
        %p809 = pneg %p433
        %p810 = pneg %p430
        %s811 = sand.u32 %s56, 1
        %s812 = scalar_lea.sflag [#allocation29], %s811
        %s813 = sand.u32 %s420, 1
        %s814 = scalar_lea.vmem [#allocation30], %s813
        %p815 = pneg %p459
        %p816 = pneg %p456
        %s817 = sand.u32 %s56, 1
        %s818 = scalar_lea.sflag [#allocation32], %s817
        %s819 = sand.u32 %s446, 1
        %s820 = scalar_lea.vmem [#allocation31], %s819
        %p821 = pneg %p485
        %p822 = pneg %p482
        %s823 = sand.u32 %s56, 1
        %s824 = scalar_lea.sflag [#allocation32], %s823
        %s825 = sand.u32 %s472, 1
        %s826 = scalar_lea.vmem [#allocation33], %s825
        %v828 = vld [vmem:[%s695] sm:$0xff]
        %v829 = vld [vmem:[%s695 + $0x8] sm:$0xff]
        %v830 = vld [vmem:[%s704] sm:$0xff]
        %v831 = vld [vmem:[%s704 + $0x8] sm:$0xff]
        %v832 = vpack.c.bf16 %v831, %v830
        %v833 = vpack.c.bf16 %v829, %v828
        %vm834 = vcmask 130048
        %v836 = vsel %vm834, %v832, 0
        %838 = vmatprep.subr.bf16.mxu0 0
        %839 = vmatpush1.bf16.msra.mxu0 %v833
        %840 = vmatprep.subr.bf16.mxu0 0
        %841 = vmatpush1.bf16.msra.mxu0 0
        %842 = vmatprep.subr.bf16.mxu0 0
        %843 = vmatpush1.bf16.msra.mxu0 0
        %844 = vmatprep.subr.bf16.mxu0 0
        %845 = vmatpush1.bf16.msra.mxu0 0
        %846 = vmatprep.subr.bf16.mxu0 0
        %847 = vmatpush1.bf16.msra.mxu0 0
        %848 = vmatprep.subr.bf16.mxu0 0
        %849 = vmatpush1.bf16.msra.mxu0 0
        %850 = vmatprep.subr.bf16.mxu0 0
        %851 = vmatpush1.bf16.msra.mxu0 0
        %852 = vmatprep.subr.bf16.mxu0 0
        %853 = vmatpush1.bf16.msra.mxu0 0
        %854 = vmatprep.subr.bf16.mxu0 0
        %855 = vmatpush1.bf16.msra.mxu0 0
        %856 = vmatprep.subr.bf16.mxu0 0
        %857 = vmatpush1.bf16.msra.mxu0 0
        %858 = vmatprep.subr.bf16.mxu0 0
        %859 = vmatpush1.bf16.msra.mxu0 0
        %860 = vmatprep.subr.bf16.mxu0 0
        %861 = vmatpush1.bf16.msra.mxu0 0
        %862 = vmatprep.subr.bf16.mxu0 0
        %863 = vmatpush1.bf16.msra.mxu0 0
        %864 = vmatprep.subr.bf16.mxu0 0
        %865 = vmatpush1.bf16.msra.mxu0 0
        %866 = vmatprep.subr.bf16.mxu0 0
        %867 = vmatpush1.bf16.msra.mxu0 0
        %868 = vmatprep.subr.bf16.mxu0 0
        %869 = vmatpush1.bf16.msra.mxu0 0
        %870 = vmatprep.mubr.bf16.mxu0 0
        %871 = vmatmul.mubr.bf16.gmra.mrb[0].mxu0 %v836
        %v872 = vpop.f32.mrb[0].mxu0
        %v873 = vadd.f32 %v828, %v872
        %v874 = vpop.f32.mrb[0].mxu0
        %v875 = vpop.f32.mrb[0].mxu0
        %v876 = vadd.f32 %v829, %v875
        %v877 = vpop.f32.mrb[0].mxu0
        %878 = vdwg.mxu0
        %v879 = vpack.c.bf16 %v876, %v873
        %v880 = vld [vmem:[#allocation9] sm:$0xff]
        %v881 = vld [vmem:[#allocation9 + $0x8] sm:$0xff]
        %v882 = vld [vmem:[#allocation9 + $0x10] sm:$0xff]
        %v883 = vld [vmem:[#allocation9 + $0x18] sm:$0xff]
        %v884 = vpack.c.bf16 %v881, %v880
        %v885 = vpack.c.bf16 %v883, %v882
        %v886 = vld [vmem:[#allocation10] sm:$0x1]
        %v888 = vlaneseq
        %v889 = vshrl.u32 %v888, 7
        %v890 = vsub.s32 0, %v889
        %v891 = vrot.slane %v886, %v890
        %vm893 = vcmask 261120
        %v895 = vsel %vm893, %v879, 0
        %897 = vmatprep.subr.bf16.mxu0 0
        %898 = vmatpush1.bf16.msra.mxu0 %v884
        %899 = vmatprep.subr.bf16.mxu0 0
        %900 = vmatpush1.bf16.msra.mxu0 %v885
        %901 = vmatprep.subr.bf16.mxu0 0
        %902 = vmatpush1.bf16.msra.mxu0 0
        %903 = vmatprep.subr.bf16.mxu0 0
        %904 = vmatpush1.bf16.msra.mxu0 0
        %905 = vmatprep.subr.bf16.mxu0 0
        %906 = vmatpush1.bf16.msra.mxu0 0
        %907 = vmatprep.subr.bf16.mxu0 0
        %908 = vmatpush1.bf16.msra.mxu0 0
        %909 = vmatprep.subr.bf16.mxu0 0
        %910 = vmatpush1.bf16.msra.mxu0 0
        %911 = vmatprep.subr.bf16.mxu0 0
        %912 = vmatpush1.bf16.msra.mxu0 0
        %913 = vmatprep.subr.bf16.mxu0 0
        %914 = vmatpush1.bf16.msra.mxu0 0
        %915 = vmatprep.subr.bf16.mxu0 0
        %916 = vmatpush1.bf16.msra.mxu0 0
        %917 = vmatprep.subr.bf16.mxu0 0
        %918 = vmatpush1.bf16.msra.mxu0 0
        %919 = vmatprep.subr.bf16.mxu0 0
        %920 = vmatpush1.bf16.msra.mxu0 0
        %921 = vmatprep.subr.bf16.mxu0 0
        %922 = vmatpush1.bf16.msra.mxu0 0
        %923 = vmatprep.subr.bf16.mxu0 0
        %924 = vmatpush1.bf16.msra.mxu0 0
        %925 = vmatprep.subr.bf16.mxu0 0
        %926 = vmatpush1.bf16.msra.mxu0 0
        %927 = vmatprep.subr.bf16.mxu0 0
        %928 = vmatpush1.bf16.msra.mxu0 0
        %929 = vmatprep.mubr.bf16.mxu0 0
        %930 = vmatmul.mubr.bf16.gmra.mrb[0].mxu0 %v895
        %v931 = vpop.f32.mrb[0].mxu0
        %v932 = vadd.f32 %v891, %v931
        %v933 = vpop.f32.mrb[0].mxu0
        %v934 = vpop.f32.mrb[0].mxu0
        %v935 = vadd.f32 %v891, %v934
        %v936 = vpop.f32.mrb[0].mxu0
        %937 = vdwg.mxu0
        %v938 = vmax.f32 %v932, 0.0
        %v939 = vmax.f32 %v935, 0.0
        %v940 = vpack.c.bf16 %v939, %v938
        %v941 = vld [vmem:[#allocation12] sm:$0xff]
        %v942 = vpack.c.bf16 %v941, %v941
        %v943 = vld [vmem:[#allocation13] sm:$0x1]
        %v945 = vlaneseq
        %v946 = vshrl.u32 %v945, 7
        %v947 = vsub.s32 0, %v946
        %v948 = vrot.slane %v943, %v947
        %vm950 = vcmask 64512
        %v952 = vsel %vm950, %v940, 0
        %vm954 = vcmask 1043456
        %v956 = vsel %vm954, %v942, 0
        %958 = vmatprep.subr.bf16.mxu0 0
        %959 = vmatpush1.bf16.msra.mxu0 %v956
        %960 = vmatprep.subr.bf16.mxu0 0
        %961 = vmatpush1.bf16.msra.mxu0 0
        %962 = vmatprep.subr.bf16.mxu0 0
        %963 = vmatpush1.bf16.msra.mxu0 0
        %964 = vmatprep.subr.bf16.mxu0 0
        %965 = vmatpush1.bf16.msra.mxu0 0
        %966 = vmatprep.subr.bf16.mxu0 0
        %967 = vmatpush1.bf16.msra.mxu0 0
        %968 = vmatprep.subr.bf16.mxu0 0
        %969 = vmatpush1.bf16.msra.mxu0 0
        %970 = vmatprep.subr.bf16.mxu0 0
        %971 = vmatpush1.bf16.msra.mxu0 0
        %972 = vmatprep.subr.bf16.mxu0 0
        %973 = vmatpush1.bf16.msra.mxu0 0
        %974 = vmatprep.subr.bf16.mxu0 0
        %975 = vmatpush1.bf16.msra.mxu0 0
        %976 = vmatprep.subr.bf16.mxu0 0
        %977 = vmatpush1.bf16.msra.mxu0 0
        %978 = vmatprep.subr.bf16.mxu0 0
        %979 = vmatpush1.bf16.msra.mxu0 0
        %980 = vmatprep.subr.bf16.mxu0 0
        %981 = vmatpush1.bf16.msra.mxu0 0
        %982 = vmatprep.subr.bf16.mxu0 0
        %983 = vmatpush1.bf16.msra.mxu0 0
        %984 = vmatprep.subr.bf16.mxu0 0
        %985 = vmatpush1.bf16.msra.mxu0 0
        %986 = vmatprep.subr.bf16.mxu0 0
        %987 = vmatpush1.bf16.msra.mxu0 0
        %988 = vmatprep.subr.bf16.mxu0 0
        %989 = vmatpush1.bf16.msra.mxu0 0
        %990 = vmatprep.mubr.bf16.mxu0 0
        %991 = vmatmul.mubr.bf16.gmra.mrb[0].mxu0 %v952
        %v992 = vpop.f32.mrb[0].mxu0
        %v993 = vadd.f32 %v948, %v992
        %v994 = vpop.f32.mrb[0].mxu0
        %v995 = vpop.f32.mrb[0].mxu0
        %v996 = vadd.f32 %v948, %v995
        %v997 = vpop.f32.mrb[0].mxu0
        %998 = vdwg.mxu0
        %v999 = vld [vmem:[#allocation15] sm:$0xff]
        %v1000 = vld [vmem:[#allocation15 + $0x8] sm:$0xff]
        %v1001 = vld [vmem:[#allocation15 + $0x10] sm:$0xff]
        %v1002 = vld [vmem:[#allocation15 + $0x18] sm:$0xff]
        %v1003 = vpack.c.bf16 %v1000, %v999
        %v1004 = vpack.c.bf16 %v1002, %v1001
        %v1005 = vld [vmem:[#allocation16] sm:$0x1]
        %v1007 = vlaneseq
        %v1008 = vshrl.u32 %v1007, 7
        %v1009 = vsub.s32 0, %v1008
        %v1010 = vrot.slane %v1005, %v1009
        %1012 = vmatprep.subr.bf16.mxu0 0
        %1013 = vmatpush1.bf16.msra.mxu0 %v1003
        %1014 = vmatprep.subr.bf16.mxu0 0
        %1015 = vmatpush1.bf16.msra.mxu0 %v1004
        %1016 = vmatprep.subr.bf16.mxu0 0
        %1017 = vmatpush1.bf16.msra.mxu0 0
        %1018 = vmatprep.subr.bf16.mxu0 0
        %1019 = vmatpush1.bf16.msra.mxu0 0
        %1020 = vmatprep.subr.bf16.mxu0 0
        %1021 = vmatpush1.bf16.msra.mxu0 0
        %1022 = vmatprep.subr.bf16.mxu0 0
        %1023 = vmatpush1.bf16.msra.mxu0 0
        %1024 = vmatprep.subr.bf16.mxu0 0
        %1025 = vmatpush1.bf16.msra.mxu0 0
        %1026 = vmatprep.subr.bf16.mxu0 0
        %1027 = vmatpush1.bf16.msra.mxu0 0
        %1028 = vmatprep.subr.bf16.mxu0 0
        %1029 = vmatpush1.bf16.msra.mxu0 0
        %1030 = vmatprep.subr.bf16.mxu0 0
        %1031 = vmatpush1.bf16.msra.mxu0 0
        %1032 = vmatprep.subr.bf16.mxu0 0
        %1033 = vmatpush1.bf16.msra.mxu0 0
        %1034 = vmatprep.subr.bf16.mxu0 0
        %1035 = vmatpush1.bf16.msra.mxu0 0
        %1036 = vmatprep.subr.bf16.mxu0 0
        %1037 = vmatpush1.bf16.msra.mxu0 0
        %1038 = vmatprep.subr.bf16.mxu0 0
        %1039 = vmatpush1.bf16.msra.mxu0 0
        %1040 = vmatprep.subr.bf16.mxu0 0
        %1041 = vmatpush1.bf16.msra.mxu0 0
        %1042 = vmatprep.subr.bf16.mxu0 0
        %1043 = vmatpush1.bf16.msra.mxu0 0
        %1044 = vmatprep.mubr.bf16.mxu0 0
        %1045 = vmatmul.mubr.bf16.gmra.mrb[0].mxu0 %v895
        %v1046 = vpop.f32.mrb[0].mxu0
        %v1047 = vadd.f32 %v1010, %v1046
        %v1048 = vpop.f32.mrb[0].mxu0
        %v1049 = vpop.f32.mrb[0].mxu0
        %v1050 = vadd.f32 %v1010, %v1049
        %v1051 = vpop.f32.mrb[0].mxu0
        %1052 = vdwg.mxu0
        %v1053 = vmax.f32 %v1047, 0.0
        %v1054 = vmax.f32 %v1050, 0.0
        %v1055 = vpack.c.bf16 %v1054, %v1053
        %v1056 = vld [vmem:[#allocation18] sm:$0xff]
        %v1057 = vld [vmem:[#allocation18 + $0x8] sm:$0xff]
        %v1058 = vld [vmem:[#allocation18 + $0x10] sm:$0xff]
        %v1059 = vld [vmem:[#allocation18 + $0x18] sm:$0xff]
        %v1060 = vpack.c.bf16 %v1057, %v1056
        %v1061 = vpack.c.bf16 %v1059, %v1058
        %v1062 = vld [vmem:[#allocation19] sm:$0x1]
        %v1064 = vlaneseq
        %v1065 = vshrl.u32 %v1064, 7
        %v1066 = vsub.s32 0, %v1065
        %v1067 = vrot.slane %v1062, %v1066
        %v1070 = vsel %vm893, %v1055, 0
        %1072 = vmatprep.subr.bf16.mxu0 0
        %1073 = vmatpush1.bf16.msra.mxu0 %v1060
        %1074 = vmatprep.subr.bf16.mxu0 0
        %1075 = vmatpush1.bf16.msra.mxu0 %v1061
        %1076 = vmatprep.subr.bf16.mxu0 0
        %1077 = vmatpush1.bf16.msra.mxu0 0
        %1078 = vmatprep.subr.bf16.mxu0 0
        %1079 = vmatpush1.bf16.msra.mxu0 0
        %1080 = vmatprep.subr.bf16.mxu0 0
        %1081 = vmatpush1.bf16.msra.mxu0 0
        %1082 = vmatprep.subr.bf16.mxu0 0
        %1083 = vmatpush1.bf16.msra.mxu0 0
        %1084 = vmatprep.subr.bf16.mxu0 0
        %1085 = vmatpush1.bf16.msra.mxu0 0
        %1086 = vmatprep.subr.bf16.mxu0 0
        %1087 = vmatpush1.bf16.msra.mxu0 0
        %1088 = vmatprep.subr.bf16.mxu0 0
        %1089 = vmatpush1.bf16.msra.mxu0 0
        %1090 = vmatprep.subr.bf16.mxu0 0
        %1091 = vmatpush1.bf16.msra.mxu0 0
        %1092 = vmatprep.subr.bf16.mxu0 0
        %1093 = vmatpush1.bf16.msra.mxu0 0
        %1094 = vmatprep.subr.bf16.mxu0 0
        %1095 = vmatpush1.bf16.msra.mxu0 0
        %1096 = vmatprep.subr.bf16.mxu0 0
        %1097 = vmatpush1.bf16.msra.mxu0 0
        %1098 = vmatprep.subr.bf16.mxu0 0
        %1099 = vmatpush1.bf16.msra.mxu0 0
        %1100 = vmatprep.subr.bf16.mxu0 0
        %1101 = vmatpush1.bf16.msra.mxu0 0
        %1102 = vmatprep.subr.bf16.mxu0 0
        %1103 = vmatpush1.bf16.msra.mxu0 0
        %1104 = vmatprep.mubr.bf16.mxu0 0
        %1105 = vmatmul.mubr.bf16.gmra.mrb[0].mxu0 %v1070
        %v1106 = vpop.f32.mrb[0].mxu0
        %v1107 = vadd.f32 %v1067, %v1106
        %v1108 = vpop.f32.mrb[0].mxu0
        %v1109 = vpop.f32.mrb[0].mxu0
        %v1110 = vadd.f32 %v1067, %v1109
        %v1111 = vpop.f32.mrb[0].mxu0
        %1112 = vdwg.mxu0
        %s1113 = sld [smem:[#allocation3 + %s56]]
        %v1114 = vlaneseq
        %v1115 = vshrl.u32 %v1114, 7
        %v1116 = vadd.s32 %v1115, 8
        %v1117 = vstv %s1113
        %vm1118 = vcmp.lt.s32.totalorder %v1115, %v1117
        %vm1119 = vcmp.lt.s32.totalorder %v1116, %v1117
        %v1120 = vsel %vm1118, 1, 0
        %v1121 = vsel %vm1119, 1, 0
        %v1122 = vcvt.s32.f32 %v1120
        %v1123 = vcvt.s32.f32 %v1121
        %v1124 = vmul.f32 %v993, %v1122
        %v1125 = vmul.f32 %v996, %v1123
        %v1126 = vmul.f32 %v1107, %v1122
        %v1127 = vmul.f32 %v1110, %v1123
        %v1128 = vld [vmem:[#allocation21] sm:$0x1]
        %v1130 = vlaneseq
        %v1131 = vshrl.u32 %v1130, 7
        %v1132 = vsub.s32 0, %v1131
        %v1133 = vrot.slane %v1128, %v1132
        %v1135 = vmul.f32 %v1126, %v1133
        %v1136 = vmul.f32 %v1127, %v1133
        %v1137 = vld [vmem:[#allocation22] sm:$0x1]
        %v1139 = vlaneseq
        %v1140 = vshrl.u32 %v1139, 7
        %v1141 = vsub.s32 0, %v1140
        %v1142 = vrot.slane %v1137, %v1141
        %v1144 = vadd.f32 %v1135, %v1142
        %v1145 = vadd.f32 %v1136, %v1142
        %v1146 = vmax.f32 %v1144, 0.0
        %v1147 = vmax.f32 %v1145, 0.0
        %v1148 = vsel %vm950, %v1124, -inf
        %1149 = vmax.xlane.f32.xlu0 %v1148
        %v1150 = vpop.xlane.xlu0 %1149
        %v1151 = vsel %vm950, %v1125, -inf
        %1152 = vmax.xlane.f32.xlu0 %v1151
        %v1153 = vpop.xlane.xlu0 %1152
        %v1154 = vsub.f32 %v1124, %v1150
        %v1155 = vsub.f32 %v1125, %v1153
        %v1156 = vmul.f32 %v1154, 1.442695
        %v1157 = vpow.pop %v1156
        %v1158 = vmul.f32 %v1155, 1.442695
        %v1159 = vpow.pop %v1158
        %v1160 = vsel %vm950, %v1157, 0.0
        %1161 = vadd.xlane.f32.xlu0 %v1160
        %v1162 = vpop.xlane.xlu0 %1161
        %v1163 = vsel %vm950, %v1159, 0.0
        %1164 = vadd.xlane.f32.xlu0 %v1163
        %v1165 = vpop.xlane.xlu0 %1164
        %v1166 = vrcp.pop %v1162
        %v1167 = vrcp.pop %v1165
        %v1168 = vmul.f32 %v1157, %v1166
        %v1169 = vmul.f32 %v1159, %v1167
        %v1170 = vpack.c.bf16 %v1169, %v1168
        %v1171 = vpack.c.bf16 %v1147, %v1146
        %1172 = vxpose.xlu0.c.b16.start [1/8] %v1170, 128
        %1173 = vxpose.xlu0.c.b16.cont [2/8] 0, 128
        %1174 = vxpose.xlu0.c.b16.cont [3/8] 0, 128
        %1175 = vxpose.xlu0.c.b16.cont [4/8] 0, 128
        %1176 = vxpose.xlu0.c.b16.cont [5/8] 0, 128
        %1177 = vxpose.xlu0.c.b16.cont [6/8] 0, 128
        %1178 = vxpose.xlu0.c.b16.cont [7/8] 0, 128
        %1179 = vxpose.xlu0.c.b16.end [8/8] 0, 128
        %v1180 = vpop.trf.xlu0
        %v1181 = vpop.trf.xlu0
        %v1182 = vpop.trf.xlu0
        %v1183 = vpop.trf.xlu0
        %v1184 = vpop.trf.xlu0
        %v1185 = vpop.trf.xlu0
        %v1186 = vpop.trf.xlu0
        %v1187 = vpop.trf.xlu0
        %v1189 = vsel %vm834, %v1180, 0
        %1191 = vmatprep.subr.bf16.mxu0 0
        %1192 = vmatpush1.bf16.msra.mxu0 %v1171
        %1193 = vmatprep.subr.bf16.mxu0 0
        %1194 = vmatpush1.bf16.msra.mxu0 0
        %1195 = vmatprep.subr.bf16.mxu0 0
        %1196 = vmatpush1.bf16.msra.mxu0 0
        %1197 = vmatprep.subr.bf16.mxu0 0
        %1198 = vmatpush1.bf16.msra.mxu0 0
        %1199 = vmatprep.subr.bf16.mxu0 0
        %1200 = vmatpush1.bf16.msra.mxu0 0
        %1201 = vmatprep.subr.bf16.mxu0 0
        %1202 = vmatpush1.bf16.msra.mxu0 0
        %1203 = vmatprep.subr.bf16.mxu0 0
        %1204 = vmatpush1.bf16.msra.mxu0 0
        %1205 = vmatprep.subr.bf16.mxu0 0
        %1206 = vmatpush1.bf16.msra.mxu0 0
        %1207 = vmatprep.subr.bf16.mxu0 0
        %1208 = vmatpush1.bf16.msra.mxu0 0
        %1209 = vmatprep.subr.bf16.mxu0 0
        %1210 = vmatpush1.bf16.msra.mxu0 0
        %1211 = vmatprep.subr.bf16.mxu0 0
        %1212 = vmatpush1.bf16.msra.mxu0 0
        %1213 = vmatprep.subr.bf16.mxu0 0
        %1214 = vmatpush1.bf16.msra.mxu0 0
        %1215 = vmatprep.subr.bf16.mxu0 0
        %1216 = vmatpush1.bf16.msra.mxu0 0
        %1217 = vmatprep.subr.bf16.mxu0 0
        %1218 = vmatpush1.bf16.msra.mxu0 0
        %1219 = vmatprep.subr.bf16.mxu0 0
        %1220 = vmatpush1.bf16.msra.mxu0 0
        %1221 = vmatprep.subr.bf16.mxu0 0
        %1222 = vmatpush1.bf16.msra.mxu0 0
        %1223 = vmatprep.mubr.bf16.mxu0 0
        %1224 = vmatmul.mubr.bf16.gmra.mrb[0].mxu0 %v1189
        %v1225 = vpop.f32.mrb[0].mxu0
        %v1226 = vadd.f32 0.0, %v1225
        %v1227 = vpop.f32.mrb[0].mxu0
        %v1228 = vpop.f32.mrb[0].mxu0
        %v1229 = vpop.f32.mrb[0].mxu0
        %1230 = vdwg.mxu0
        %1231 = vmatprep.subr.bf16.mxu0 0
        %1232 = vmatpush1.bf16.msra.mxu0 %v1170
        %1233 = vmatprep.subr.bf16.mxu0 0
        %1234 = vmatpush1.bf16.msra.mxu0 0
        %1235 = vmatprep.subr.bf16.mxu0 0
        %1236 = vmatpush1.bf16.msra.mxu0 0
        %1237 = vmatprep.subr.bf16.mxu0 0
        %1238 = vmatpush1.bf16.msra.mxu0 0
        %1239 = vmatprep.subr.bf16.mxu0 0
        %1240 = vmatpush1.bf16.msra.mxu0 0
        %1241 = vmatprep.subr.bf16.mxu0 0
        %1242 = vmatpush1.bf16.msra.mxu0 0
        %1243 = vmatprep.subr.bf16.mxu0 0
        %1244 = vmatpush1.bf16.msra.mxu0 0
        %1245 = vmatprep.subr.bf16.mxu0 0
        %1246 = vmatpush1.bf16.msra.mxu0 0
        %1247 = vmatprep.subr.bf16.mxu0 0
        %1248 = vmatpush1.bf16.msra.mxu0 0
        %1249 = vmatprep.subr.bf16.mxu0 0
        %1250 = vmatpush1.bf16.msra.mxu0 0
        %1251 = vmatprep.subr.bf16.mxu0 0
        %1252 = vmatpush1.bf16.msra.mxu0 0
        %1253 = vmatprep.subr.bf16.mxu0 0
        %1254 = vmatpush1.bf16.msra.mxu0 0
        %1255 = vmatprep.subr.bf16.mxu0 0
        %1256 = vmatpush1.bf16.msra.mxu0 0
        %1257 = vmatprep.subr.bf16.mxu0 0
        %1258 = vmatpush1.bf16.msra.mxu0 0
        %1259 = vmatprep.subr.bf16.mxu0 0
        %1260 = vmatpush1.bf16.msra.mxu0 0
        %1261 = vmatprep.subr.bf16.mxu0 0
        %1262 = vmatpush1.bf16.msra.mxu0 0
        %1263 = vmatprep.mubr.bf16.mxu0 0
        %1264 = vmatmul.mubr.bf16.gmra.mrb[0].mxu0 %v836
        %v1265 = vpop.f32.mrb[0].mxu0
        %v1266 = vadd.f32 0.0, %v1265
        %v1267 = vpop.f32.mrb[0].mxu0
        %v1268 = vpop.f32.mrb[0].mxu0
        %v1269 = vadd.f32 0.0, %v1268
        %v1270 = vpop.f32.mrb[0].mxu0
        %1271 = vdwg.mxu0
        %v1272 = vpack.c.bf16 %v1269, %v1266
        %1273 = vmatprep.subr.bf16.mxu0 0
        %1274 = vmatpush1.bf16.msra.mxu0 %v1272
        %1275 = vmatprep.subr.bf16.mxu0 0
        %1276 = vmatpush1.bf16.msra.mxu0 0
        %1277 = vmatprep.subr.bf16.mxu0 0
        %1278 = vmatpush1.bf16.msra.mxu0 0
        %1279 = vmatprep.subr.bf16.mxu0 0
        %1280 = vmatpush1.bf16.msra.mxu0 0
        %1281 = vmatprep.subr.bf16.mxu0 0
        %1282 = vmatpush1.bf16.msra.mxu0 0
        %1283 = vmatprep.subr.bf16.mxu0 0
        %1284 = vmatpush1.bf16.msra.mxu0 0
        %1285 = vmatprep.subr.bf16.mxu0 0
        %1286 = vmatpush1.bf16.msra.mxu0 0
        %1287 = vmatprep.subr.bf16.mxu0 0
        %1288 = vmatpush1.bf16.msra.mxu0 0
        %1289 = vmatprep.subr.bf16.mxu0 0
        %1290 = vmatpush1.bf16.msra.mxu0 0
        %1291 = vmatprep.subr.bf16.mxu0 0
        %1292 = vmatpush1.bf16.msra.mxu0 0
        %1293 = vmatprep.subr.bf16.mxu0 0
        %1294 = vmatpush1.bf16.msra.mxu0 0
        %1295 = vmatprep.subr.bf16.mxu0 0
        %1296 = vmatpush1.bf16.msra.mxu0 0
        %1297 = vmatprep.subr.bf16.mxu0 0
        %1298 = vmatpush1.bf16.msra.mxu0 0
        %1299 = vmatprep.subr.bf16.mxu0 0
        %1300 = vmatpush1.bf16.msra.mxu0 0
        %1301 = vmatprep.subr.bf16.mxu0 0
        %1302 = vmatpush1.bf16.msra.mxu0 0
        %1303 = vmatprep.subr.bf16.mxu0 0
        %1304 = vmatpush1.bf16.msra.mxu0 0
        %1305 = vmatprep.mubr.bf16.mxu0 0
        %1306 = vmatmul.mubr.bf16.gmra.mrb[0].mxu0 %v1189
        %v1307 = vpop.f32.mrb[0].mxu0
        %v1308 = vadd.f32 0.0, %v1307
        %v1309 = vpop.f32.mrb[0].mxu0
        %v1310 = vpop.f32.mrb[0].mxu0
        %v1311 = vpop.f32.mrb[0].mxu0
        %1312 = vdwg.mxu0
        %1313 = vst.msk [vmem:[%s801] sm:$0xff] %vm893, %v1226
        %1314 = vst.msk [vmem:[%s808] sm:$0xff] %vm950, %v1308
        %1315 = vxpose.xlu0.b32.start [1/16] %v1168, 128
        %1316 = vxpose.xlu0.b32.cont [2/16] %v1169, 128
        %1317 = vxpose.xlu0.b32.cont [3/16] 0.0, 128
        %1318 = vxpose.xlu0.b32.cont [4/16] 0.0, 128
        %1319 = vxpose.xlu0.b32.cont [5/16] 0.0, 128
        %1320 = vxpose.xlu0.b32.cont [6/16] 0.0, 128
        %1321 = vxpose.xlu0.b32.cont [7/16] 0.0, 128
        %1322 = vxpose.xlu0.b32.cont [8/16] 0.0, 128
        %1323 = vxpose.xlu0.b32.cont [9/16] 0.0, 128
        %1324 = vxpose.xlu0.b32.cont [10/16] 0.0, 128
        %1325 = vxpose.xlu0.b32.cont [11/16] 0.0, 128
        %1326 = vxpose.xlu0.b32.cont [12/16] 0.0, 128
        %1327 = vxpose.xlu0.b32.cont [13/16] 0.0, 128
        %1328 = vxpose.xlu0.b32.cont [14/16] 0.0, 128
        %1329 = vxpose.xlu0.b32.cont [15/16] 0.0, 128
        %1330 = vxpose.xlu0.b32.end [16/16] 0.0, 128
        %v1331 = vpop.trf.xlu0
        %v1332 = vpop.trf.xlu0
        %v1333 = vpop.trf.xlu0
        %v1334 = vpop.trf.xlu0
        %v1335 = vpop.trf.xlu0
        %v1336 = vpop.trf.xlu0
        %v1337 = vpop.trf.xlu0
        %v1338 = vpop.trf.xlu0
        %v1339 = vpop.trf.xlu0
        %v1340 = vpop.trf.xlu0
        %v1341 = vpop.trf.xlu0
        %v1342 = vpop.trf.xlu0
        %v1343 = vpop.trf.xlu0
        %v1344 = vpop.trf.xlu0
        %v1345 = vpop.trf.xlu0
        %v1346 = vpop.trf.xlu0
        %v1348 = vsel %vm834, %v1331, 0
        %1350 = vmatprep.subr.mxu0 0.0
        %1351 = vmatpush1.msra.mxu0 %v1168
        %1352 = vmatprep.subr.mxu0 0.0
        %1353 = vmatpush1.msra.mxu0 %v1169
        %1354 = vmatprep.subr.mxu0 0.0
        %1355 = vmatpush1.msra.mxu0 0.0
        %1356 = vmatprep.subr.mxu0 0.0
        %1357 = vmatpush1.msra.mxu0 0.0
        %1358 = vmatprep.subr.mxu0 0.0
        %1359 = vmatpush1.msra.mxu0 0.0
        %1360 = vmatprep.subr.mxu0 0.0
        %1361 = vmatpush1.msra.mxu0 0.0
        %1362 = vmatprep.subr.mxu0 0.0
        %1363 = vmatpush1.msra.mxu0 0.0
        %1364 = vmatprep.subr.mxu0 0.0
        %1365 = vmatpush1.msra.mxu0 0.0
        %1366 = vmatprep.subr.mxu0 0.0
        %1367 = vmatpush1.msra.mxu0 0.0
        %1368 = vmatprep.subr.mxu0 0.0
        %1369 = vmatpush1.msra.mxu0 0.0
        %1370 = vmatprep.subr.mxu0 0.0
        %1371 = vmatpush1.msra.mxu0 0.0
        %1372 = vmatprep.subr.mxu0 0.0
        %1373 = vmatpush1.msra.mxu0 0.0
        %1374 = vmatprep.subr.mxu0 0.0
        %1375 = vmatpush1.msra.mxu0 0.0
        %1376 = vmatprep.subr.mxu0 0.0
        %1377 = vmatpush1.msra.mxu0 0.0
        %1378 = vmatprep.subr.mxu0 0.0
        %1379 = vmatpush1.msra.mxu0 0.0
        %1380 = vmatprep.subr.mxu0 0.0
        %1381 = vmatpush1.msra.mxu0 0.0
        %1382 = vmatprep.subr.mxu0 0.0
        %1383 = vmatpush1.msra.mxu0 0.0
        %1384 = vmatprep.subr.mxu0 0.0
        %1385 = vmatpush1.msra.mxu0 0.0
        %1386 = vmatprep.subr.mxu0 0.0
        %1387 = vmatpush1.msra.mxu0 0.0
        %1388 = vmatprep.subr.mxu0 0.0
        %1389 = vmatpush1.msra.mxu0 0.0
        %1390 = vmatprep.subr.mxu0 0.0
        %1391 = vmatpush1.msra.mxu0 0.0
        %1392 = vmatprep.subr.mxu0 0.0
        %1393 = vmatpush1.msra.mxu0 0.0
        %1394 = vmatprep.subr.mxu0 0.0
        %1395 = vmatpush1.msra.mxu0 0.0
        %1396 = vmatprep.subr.mxu0 0.0
        %1397 = vmatpush1.msra.mxu0 0.0
        %1398 = vmatprep.subr.mxu0 0.0
        %1399 = vmatpush1.msra.mxu0 0.0
        %1400 = vmatprep.subr.mxu0 0.0
        %1401 = vmatpush1.msra.mxu0 0.0
        %1402 = vmatprep.subr.mxu0 0.0
        %1403 = vmatpush1.msra.mxu0 0.0
        %1404 = vmatprep.subr.mxu0 0.0
        %1405 = vmatpush1.msra.mxu0 0.0
        %1406 = vmatprep.subr.mxu0 0.0
        %1407 = vmatpush1.msra.mxu0 0.0
        %1408 = vmatprep.subr.mxu0 0.0
        %1409 = vmatpush1.msra.mxu0 0.0
        %1410 = vmatprep.subr.mxu0 0.0
        %1411 = vmatpush1.msra.mxu0 0.0
        %1412 = vmatprep.subr.mxu0 0.0
        %1413 = vmatpush1.msra.mxu0 0.0
        %1414 = vmatprep.mubr.f32.mxu0 0.0
        %1415 = vmatmul.mubr.f32.gmra.mrb[0].mxu0 %v1348
        %v1416 = vpop.f32.mrb[0].mxu0
        %v1417 = vadd.f32 0.0, %v1416
        %v1418 = vpop.f32.mrb[0].mxu0
        %1419 = vdwg.mxu0
        %v1420 = vlaneseq
        %v1421 = vand.u32 %v1420, 127
        %vm1422 = vcmp.eq.s32.totalorder %v1115, %v1421
        %v1423 = vsel %vm1422, 1, 0
        %v1424 = vcvt.s32.f32 %v1423
        %v1425 = vmul.f32 %v830, %v830
        %v1426 = vmul.f32 %v831, %v831
        %v1427 = vsel %vm834, %v1425, 0.0
        %v1428 = vsel %vm834, %v1426, 0.0
        %v1429 = vadd.f32 %v1427, %v1428
        %1430 = vadd.xlane.f32.xlu0 %v1429
        %v1431 = vpop.xlane.xlu0 %1430
        %v1432 = vrot.slane %v1431, 4
        %v1433 = vadd.f32 %v1431, %v1432
        %v1434 = vrot.slane %v1433, 2
        %v1435 = vadd.f32 %v1433, %v1434
        %v1436 = vrot.slane %v1435, 1
        %v1437 = vadd.f32 %v1435, %v1436
        %s1438 = vtos %v1437
        %v1439 = vstv %s1438
        %v1440 = vmul.f32 %v1308, %v1424
        %v1441 = vsel %vm950, %v1440, 0.0
        %1442 = vadd.xlane.f32.xlu0 %v1441
        %v1443 = vpop.xlane.xlu0 %1442
        %v1444 = vrot.slane %v1443, 4
        %v1445 = vadd.f32 %v1443, %v1444
        %v1446 = vrot.slane %v1445, 2
        %v1447 = vadd.f32 %v1445, %v1446
        %v1448 = vrot.slane %v1447, 1
        %v1449 = vadd.f32 %v1447, %v1448
        %s1450 = vtos %v1449
        %v1451 = vstv %s1450
        %v1452 = vmul.f32 %v1417, %v1417
        %v1453 = vsel %vm950, %v1452, 0.0
        %1454 = vadd.xlane.f32.xlu0 %v1453
        %v1455 = vpop.xlane.xlu0 %1454
        %v1456 = vrot.slane %v1455, 4
        %v1457 = vadd.f32 %v1455, %v1456
        %v1458 = vrot.slane %v1457, 2
        %v1459 = vadd.f32 %v1457, %v1458
        %v1460 = vrot.slane %v1459, 1
        %v1461 = vadd.f32 %v1459, %v1460
        %s1462 = vtos %v1461
        %v1463 = vstv %s1462
        %v1464 = vmul.f32 %v1451, 2.0
        %v1465 = vsub.f32 %v1439, %v1464
        %v1466 = vadd.f32 %v1465, %v1463
        %vm1467 = vcmask 0
        %1468 = vst.msk [vmem:[%s820] sm:$0x1] %vm1467, %v1466
        %v1469 = vsub.f32 0.0, %v1168
        %v1470 = vsub.f32 0.0, %v1169
        %v1471 = vadd.f32 %v1168, 1e-15
        %v1472 = vadd.f32 %v1169, 1e-15
        %v1473 = vlog2.pop %v1471
        %v1474 = vmul.f32 %v1473, 0.6931472
        %v1475 = vlog2.pop %v1472
        %v1476 = vmul.f32 %v1475, 0.6931472
        %v1477 = vmul.f32 %v1469, %v1474
        %v1478 = vmul.f32 %v1470, %v1476
        %v1479 = vsel %vm950, %v1477, 0.0
        %v1480 = vsel %vm950, %v1478, 0.0
        %v1481 = vadd.f32 %v1479, %v1480
        %1482 = vadd.xlane.f32.xlu0 %v1481
        %v1483 = vpop.xlane.xlu0 %1482
        %v1484 = vrot.slane %v1483, 4
        %v1485 = vadd.f32 %v1483, %v1484
        %v1486 = vrot.slane %v1485, 2
        %v1487 = vadd.f32 %v1485, %v1486
        %v1488 = vrot.slane %v1487, 1
        %v1489 = vadd.f32 %v1487, %v1488
        %s1490 = vtos %v1489
        %v1491 = vstv %s1490
        %1492 = vst.msk [vmem:[%s826] sm:$0x1] %vm1467, %v1491
        %v1493 = vsel %vm893, %v1226, 0.0
        %v1494 = vrot.slane %v1493, 4
        %v1495 = vadd.f32 %v1493, %v1494
        %v1496 = vrot.slane %v1495, 2
        %v1497 = vadd.f32 %v1495, %v1496
        %v1498 = vrot.slane %v1497, 1
        %v1499 = vadd.f32 %v1497, %v1498
        %v1500 = vld [vmem:[#allocation24] sm:$0x1]
        %v1501 = vmul.f32 %v1499, %v1500
        %v1502 = vld [vmem:[#allocation25] sm:$0x1]
        %v1503 = vadd.f32 %v1501, %v1502
        %v1504 = vmax.f32 %v1503, 0.0
        %vm1505 = vcmask 253952
        %1506 = vst.msk [vmem:[%s814] sm:$0x1] %vm1505, %v1504
        %s1507 = sand.u32 %s368, 1
        %s1508 = scalar_lea.sflag [#allocation6], %s1507
        %s1509 = sand.u32 %s368, 1
        %s1510 = smul.addr %s1509, 8
        %s1511 = scalar_lea.vmem [#allocation27], %s1510
        %s1512 = sand.u32 %s56, 1
        %s1513 = scalar_lea.sflag [#allocation29], %s1512
        %s1514 = sand.u32 %s394, 1
        %s1515 = smul.addr %s1514, 8
        %s1516 = scalar_lea.vmem [#allocation28], %s1515
        %s1517 = sand.u32 %s56, 1
        %s1518 = scalar_lea.sflag [#allocation29], %s1517
        %s1519 = sand.u32 %s420, 1
        %s1520 = scalar_lea.vmem [#allocation30], %s1519
        %s1521 = sand.u32 %s56, 1
        %s1522 = scalar_lea.sflag [#allocation32], %s1521
        %s1523 = sand.u32 %s446, 1
        %s1524 = scalar_lea.vmem [#allocation31], %s1523
        %s1525 = sand.u32 %s56, 1
        %s1526 = scalar_lea.sflag [#allocation32], %s1525
        %s1527 = sand.u32 %s472, 1
        %s1528 = scalar_lea.vmem [#allocation33], %s1527
        // Predicated region
        $region133: #{densepool_forward.6} parent=75 // pred_check
          %p1529 = pneg %p378
        $region134: #{densepool_forward.6} parent=75 // pred_check_branch
          %1531 = sbr.rel (%p1529) target = $region136
        $region135: #{densepool_forward.6} parent=75 // pred_region
          %s1533 = ssub.s32 128, 128
          %1534 = vsyncadd %s1508, %s1533
          %s1535 = smul.addr %s56, 128
          %s1536 = scalar_lea.hbm %s15, %s1535
          %s1538 = sshll.u32 %s1511, 4
          %s1539 = int_to_ptr.vmem [resolvable:$true] %s1538
          %1541 = dma.vmem_to_hbm [thread:$0]  %s1539, 128, %s1536, %s1508
        $region136: #{densepool_forward.6} parent=75 // pred_fallthru
          _
        // Predicated region
        $region137: #{densepool_forward.6} parent=75 // pred_check
          %p1542 = pneg %p404
        $region138: #{densepool_forward.6} parent=75 // pred_check_branch
          %1544 = sbr.rel (%p1542) target = $region140
        $region139: #{densepool_forward.6} parent=75 // pred_region
          %s1546 = ssub.s32 128, 128
          %1547 = vsyncadd %s1513, %s1546
          %s1548 = smul.addr %s56, 128
          %s1549 = scalar_lea.hbm %s16, %s1548
          %s1551 = sshll.u32 %s1516, 4
          %s1552 = int_to_ptr.vmem [resolvable:$true] %s1551
          %1554 = dma.vmem_to_hbm [thread:$0]  %s1552, 128, %s1549, %s1513
        $region140: #{densepool_forward.6} parent=75 // pred_fallthru
          _
        // Predicated region
        $region141: #{densepool_forward.6} parent=75 // pred_check
          %p1555 = pneg %p430
        $region142: #{densepool_forward.6} parent=75 // pred_check_branch
          %1557 = sbr.rel (%p1555) target = $region144
        $region143: #{densepool_forward.6} parent=75 // pred_region
          %s1559 = ssub.s32 16, 16
          %1560 = vsyncadd %s1518, %s1559
          %s1561 = smul.addr %s56, 16
          %s1562 = scalar_lea.hbm %s17, %s1561
          %s1564 = sshll.u32 %s1520, 4
          %s1565 = int_to_ptr.vmem [resolvable:$true] %s1564
          %1567 = dma.vmem_to_hbm [thread:$0]  %s1565, 16, %s1562, %s1518
        $region144: #{densepool_forward.6} parent=75 // pred_fallthru
          _
        // Predicated region
        $region145: #{densepool_forward.6} parent=75 // pred_check
          %p1568 = pneg %p456
        $region146: #{densepool_forward.6} parent=75 // pred_check_branch
          %1570 = sbr.rel (%p1568) target = $region148
        $region147: #{densepool_forward.6} parent=75 // pred_region
          %s1572 = ssub.s32 16, 16
          %1573 = vsyncadd %s1522, %s1572
          %s1574 = smul.addr %s56, 16
          %s1575 = scalar_lea.hbm %s18, %s1574
          %s1577 = sshll.u32 %s1524, 4
          %s1578 = int_to_ptr.vmem [resolvable:$true] %s1577
          %1580 = dma.vmem_to_hbm [thread:$0]  %s1578, 16, %s1575, %s1522
        $region148: #{densepool_forward.6} parent=75 // pred_fallthru
          _
        // Predicated region
        $region149: #{densepool_forward.6} parent=75 // pred_check
          %p1581 = pneg %p482
        $region150: #{densepool_forward.6} parent=75 // pred_check_branch
          %1583 = sbr.rel (%p1581) target = $region152
        $region151: #{densepool_forward.6} parent=75 // pred_region
          %s1585 = ssub.s32 16, 16
          %1586 = vsyncadd %s1526, %s1585
          %s1587 = smul.addr %s56, 16
          %s1588 = scalar_lea.hbm %s19, %s1587
          %s1590 = sshll.u32 %s1528, 4
          %s1591 = int_to_ptr.vmem [resolvable:$true] %s1590
          %1593 = dma.vmem_to_hbm [thread:$0]  %s1591, 16, %s1588, %s1526
        $region152: #{densepool_forward.6} parent=75 // pred_fallthru
          _
      $region76: #{densepool_forward.6} parent=5 // pred_fallthru
        _
      %p1594 = scmp.le.s32.totalorder 2, %s51
      // Predicated region
      $region153: #{densepool_forward.6} parent=5 // pred_check
        %p1595 = pneg %p1594
      $region154: #{densepool_forward.6} parent=5 // pred_check_branch
        %1597 = sbr.rel (%p1595) target = $region156
      $region155: #{densepool_forward.6} parent=5 // pred_region
        %s1598 = ssub.s32 %s51, 2
        // Predicated region
        $region157: #{densepool_forward.6} parent=155 // pred_check
          %p1599 = pneg %p384
        $region158: #{densepool_forward.6} parent=155 // pred_check_branch
          %1601 = sbr.rel (%p1599) target = $region160
        $region159: #{densepool_forward.6} parent=155 // pred_region
          %s1602 = sand.u32 %s369, 1
          %s1603 = scalar_lea.sflag [#allocation6], %s1602
          %s1604 = sand.u32 %s369, 1
          %s1605 = smul.addr %s1604, 8
          %s1606 = scalar_lea.vmem [#allocation27], %s1605
          %1607 = dma.done %s1603, 128
        $region160: #{densepool_forward.6} parent=155 // pred_fallthru
          _
        // Predicated region
        $region161: #{densepool_forward.6} parent=155 // pred_check
          %p1608 = pneg %p410
        $region162: #{densepool_forward.6} parent=155 // pred_check_branch
          %1610 = sbr.rel (%p1608) target = $region164
        $region163: #{densepool_forward.6} parent=155 // pred_region
          %s1611 = sand.u32 %s57, 1
          %s1612 = scalar_lea.sflag [#allocation29], %s1611
          %s1613 = sand.u32 %s395, 1
          %s1614 = smul.addr %s1613, 8
          %s1615 = scalar_lea.vmem [#allocation28], %s1614
          %1616 = dma.done %s1612, 128
        $region164: #{densepool_forward.6} parent=155 // pred_fallthru
          _
        // Predicated region
        $region165: #{densepool_forward.6} parent=155 // pred_check
          %p1617 = pneg %p436
        $region166: #{densepool_forward.6} parent=155 // pred_check_branch
          %1619 = sbr.rel (%p1617) target = $region168
        $region167: #{densepool_forward.6} parent=155 // pred_region
          %s1620 = sand.u32 %s57, 1
          %s1621 = scalar_lea.sflag [#allocation29], %s1620
          %s1622 = sand.u32 %s421, 1
          %s1623 = scalar_lea.vmem [#allocation30], %s1622
          %1624 = dma.done %s1621, 16
        $region168: #{densepool_forward.6} parent=155 // pred_fallthru
          _
        // Predicated region
        $region169: #{densepool_forward.6} parent=155 // pred_check
          %p1625 = pneg %p462
        $region170: #{densepool_forward.6} parent=155 // pred_check_branch
          %1627 = sbr.rel (%p1625) target = $region172
        $region171: #{densepool_forward.6} parent=155 // pred_region
          %s1628 = sand.u32 %s57, 1
          %s1629 = scalar_lea.sflag [#allocation32], %s1628
          %s1630 = sand.u32 %s447, 1
          %s1631 = scalar_lea.vmem [#allocation31], %s1630
          %1632 = dma.done %s1629, 16
        $region172: #{densepool_forward.6} parent=155 // pred_fallthru
          _
        // Predicated region
        $region173: #{densepool_forward.6} parent=155 // pred_check
          %p1633 = pneg %p488
        $region174: #{densepool_forward.6} parent=155 // pred_check_branch
          %1635 = sbr.rel (%p1633) target = $region176
        $region175: #{densepool_forward.6} parent=155 // pred_region
          %s1636 = sand.u32 %s57, 1
          %s1637 = scalar_lea.sflag [#allocation32], %s1636
          %s1638 = sand.u32 %s473, 1
          %s1639 = scalar_lea.vmem [#allocation33], %s1638
          %1640 = dma.done %s1637, 16
        $region176: #{densepool_forward.6} parent=155 // pred_fallthru
          _
      $region156: #{densepool_forward.6} parent=5 // pred_fallthru
        _
    $region6: #{densepool_forward.6} parent=1 // loop_footer
      %s55 = sadd.s32 1, %s51
    $region7: #{densepool_forward.6} parent=1 // loop_footer_branch
      %50 = sbr.rel target = $region3
    $region8: #{densepool_forward.6} parent=1 // loop_exit
      _
    %1641 = vsyncpa [#allocation5], 1
    %s1642 = scalar_lea.sflag [#allocation5], 1
    %1643 = vsyncpa %s1642, 1
    %1644 = vsyncpa [#allocation8], 1
    %s1645 = scalar_lea.sflag [#allocation8], 1
    %1646 = vsyncpa %s1645, 1
    %1647 = vsyncpa [#allocation11], 1
    %1648 = vsyncpa [#allocation14], 1
    %1649 = vsyncpa [#allocation17], 1
    %1650 = vsyncpa [#allocation20], 1
    %1651 = vsyncpa [#allocation23], 1
    %1652 = vsyncpa [#allocation26], 1
    %1653 = vsyncpa [#allocation6], 1
    %s1654 = scalar_lea.sflag [#allocation6], 1
    %1655 = vsyncpa %s1654, 1
    %1656 = vsyncpa [#allocation29], 1
    %s1657 = scalar_lea.sflag [#allocation29], 1
    %1658 = vsyncpa %s1657, 1
    %1659 = vsyncpa [#allocation32], 1
    %s1660 = scalar_lea.sflag [#allocation32], 1
    %1661 = vsyncpa %s1660, 1

// kernel: densepool_forward.8
$region0: #{densepool_forward.8}
  #allocation0 [shape = 'u32[]', space=smem, size = 0x4, offset = 0x4, fixed_abs, tag = 'smem constant byte address 0x4 - core index']
  #allocation1 [shape = 'u32[144,128]{1,0:T(1,128)}', space=vmem, size = 0x12000, scoped, tag = 'internal scratch']
  %s0 = inlined_call_operand.hbm [shape: f32[2,4,32], index: 0, kind: input, shape index: {}]
  %s1 = inlined_call_operand.hbm [shape: f32[2,4,4], index: 1, kind: input, shape index: {}]
  %s2 = inlined_call_operand.hbm [shape: f32[32,2], index: 2, kind: input, shape index: {}]
  %s3 = inlined_call_operand.hbm [shape: f32[1,2], index: 3, kind: input, shape index: {}]
  %s4 = inlined_call_operand.hbm [shape: f32[2,2], index: 4, kind: input, shape index: {}]
  %s5 = inlined_call_operand.hbm [shape: f32[1,2], index: 5, kind: input, shape index: {}]
  %s6 = inlined_call_operand.hbm [shape: f32[32,32], index: 6, kind: input, shape index: {}]
  %s7 = inlined_call_operand.hbm [shape: f32[1,32], index: 7, kind: input, shape index: {}]
  %s8 = inlined_call_operand.hbm [shape: f32[32,32], index: 8, kind: input, shape index: {}]
  %s9 = inlined_call_operand.hbm [shape: f32[1,32], index: 9, kind: input, shape index: {}]
  %s10 = inlined_call_operand.hbm [shape: f32[1,32], index: 10, kind: input, shape index: {}]
  %s11 = inlined_call_operand.hbm [shape: f32[1,32], index: 11, kind: input, shape index: {}]
  %s12 = inlined_call_operand.hbm [shape: f32[1,32], index: 12, kind: input, shape index: {}]
  %s13 = inlined_call_operand.hbm [shape: f32[1,32], index: 13, kind: input, shape index: {}]
  %s14 = inlined_call_operand.hbm [shape: f32[2,2,32], index: 14, kind: output, shape index: {0}]
  %s15 = inlined_call_operand.hbm [shape: f32[2,2,2], index: 15, kind: output, shape index: {1}]
  %s16 = inlined_call_operand.hbm [shape: f32[2,1,32], index: 16, kind: output, shape index: {2}]
  %s17 = inlined_call_operand.hbm [shape: f32[2,1,1], index: 17, kind: output, shape index: {3}]
  %s18 = inlined_call_operand.hbm [shape: f32[2,1,1], index: 18, kind: output, shape index: {4}]
  %19 = xla_tuple %s14, %s15, %s16, %s17, %s18
  %s20 = sld [smem:[#allocation0]]
  $region177: #{densepool_forward.8} parent=0
    _
  %s22 = ssub.s32 1, %s20
  %s23 = scalar_select 0, %s22, %s20
  $region1: #{densepool_forward.8} parent=0
    #allocation2 [shape = 'u8[4096]{0}', space=vmem, size = 0x1000, scoped, tag = 'input window, operand 0']
    #allocation3 [shape = 's32[2]{0}', space=sflag, size = 0x8, scoped, tag = 'scoped memory for densepool_forward.8']
    #allocation4 [shape = 's32[2]{0}', space=sflag, size = 0x8, scoped, tag = 'scoped memory for densepool_forward.8']
    #allocation5 [shape = 'u8[4096]{0}', space=vmem, size = 0x1000, scoped, tag = 'input window, operand 1']
    #allocation6 [shape = 's32[2]{0}', space=sflag, size = 0x8, scoped, tag = 'scoped memory for densepool_forward.8']
    #allocation7 [shape = 'u8[16384]{0}', space=vmem, size = 0x4000, scoped, tag = 'input window, operand 2, single buffered']
    #allocation8 [shape = 'u8[512]{0}', space=vmem, size = 0x400, scoped, tag = 'input window, operand 3, single buffered']
    #allocation9 [shape = 's32[1]{0}', space=sflag, size = 0x4, scoped, tag = 'scoped memory for densepool_forward.8']
    #allocation10 [shape = 'u8[1024]{0}', space=vmem, size = 0x400, scoped, tag = 'input window, operand 4, single buffered']
    #allocation11 [shape = 'u8[512]{0}', space=vmem, size = 0x400, scoped, tag = 'input window, operand 5, single buffered']
    #allocation12 [shape = 's32[1]{0}', space=sflag, size = 0x4, scoped, tag = 'scoped memory for densepool_forward.8']
    #allocation13 [shape = 'u8[16384]{0}', space=vmem, size = 0x4000, scoped, tag = 'input window, operand 6, single buffered']
    #allocation14 [shape = 'u8[512]{0}', space=vmem, size = 0x400, scoped, tag = 'input window, operand 7, single buffered']
    #allocation15 [shape = 's32[1]{0}', space=sflag, size = 0x4, scoped, tag = 'scoped memory for densepool_forward.8']
    #allocation16 [shape = 'u8[16384]{0}', space=vmem, size = 0x4000, scoped, tag = 'input window, operand 8, single buffered']
    #allocation17 [shape = 'u8[512]{0}', space=vmem, size = 0x400, scoped, tag = 'input window, operand 9, single buffered']
    #allocation18 [shape = 's32[1]{0}', space=sflag, size = 0x4, scoped, tag = 'scoped memory for densepool_forward.8']
    #allocation19 [shape = 'u8[512]{0}', space=vmem, size = 0x400, scoped, tag = 'input window, operand 10, single buffered']
    #allocation20 [shape = 'u8[512]{0}', space=vmem, size = 0x400, scoped, tag = 'input window, operand 11, single buffered']
    #allocation21 [shape = 's32[1]{0}', space=sflag, size = 0x4, scoped, tag = 'scoped memory for densepool_forward.8']
    #allocation22 [shape = 'u8[512]{0}', space=vmem, size = 0x400, scoped, tag = 'input window, operand 12, single buffered']
    #allocation23 [shape = 'u8[512]{0}', space=vmem, size = 0x400, scoped, tag = 'input window, operand 13, single buffered']
    #allocation24 [shape = 's32[1]{0}', space=sflag, size = 0x4, scoped, tag = 'scoped memory for densepool_forward.8']
    #allocation25 [shape = 'u8[2048]{0}', space=vmem, size = 0x800, scoped, tag = 'output window, operand 0']
    #allocation26 [shape = 'u8[2048]{0}', space=vmem, size = 0x800, scoped, tag = 'output window, operand 1']
    #allocation27 [shape = 's32[2]{0}', space=sflag, size = 0x8, scoped, tag = 'scoped memory for densepool_forward.8']
    #allocation28 [shape = 'u8[1024]{0}', space=vmem, size = 0x400, scoped, tag = 'output window, operand 2']
    #allocation29 [shape = 'u8[1024]{0}', space=vmem, size = 0x400, scoped, tag = 'output window, operand 3']
    #allocation30 [shape = 's32[2]{0}', space=sflag, size = 0x8, scoped, tag = 'scoped memory for densepool_forward.8']
    #allocation31 [shape = 'u8[1024]{0}', space=vmem, size = 0x400, scoped, tag = 'output window, operand 4']
    %24 = vsyncpa [#allocation3], 0
    %s25 = scalar_lea.sflag [#allocation3], 1
    %26 = vsyncpa %s25, 0
    %27 = vsyncpa [#allocation6], 0
    %s28 = scalar_lea.sflag [#allocation6], 1
    %29 = vsyncpa %s28, 0
    %30 = vsyncpa [#allocation9], 0
    %31 = vsyncpa [#allocation12], 0
    %32 = vsyncpa [#allocation15], 0
    %33 = vsyncpa [#allocation18], 0
    %34 = vsyncpa [#allocation21], 0
    %35 = vsyncpa [#allocation24], 0
    %36 = vsyncpa [#allocation4], 0
    %s37 = scalar_lea.sflag [#allocation4], 1
    %38 = vsyncpa %s37, 0
    %39 = vsyncpa [#allocation27], 0
    %s40 = scalar_lea.sflag [#allocation27], 1
    %41 = vsyncpa %s40, 0
    %42 = vsyncpa [#allocation30], 0
    %s43 = scalar_lea.sflag [#allocation30], 1
    %44 = vsyncpa %s43, 0
    loop: start=0, step=1, limit=4
    $region2: #{densepool_forward.8} parent=1 // loop_pre_header
      _
    $region3: #{densepool_forward.8} parent=1 // loop_header
      %s46 = sphi 0, %s50
      %p47 = scmp.ge.s32.totalorder %s46, 4
      %s56 = sphi 0, %s58
      %s59 = sphi 0, %s56
      %s60 = sphi 0, %s59
      %s76 = sphi 0, %s60
      %s82 = sphi 0, %s84
      %s85 = sphi 0, %s82
      %s86 = sphi 0, %s85
      %s102 = sphi 0, %s86
      %s106 = sphi 0, %s106
      %s108 = sphi 0, %s106
      %s109 = sphi 0, %s108
      %s123 = sphi 0, %s109
      %s127 = sphi 0, %s127
      %s129 = sphi 0, %s127
      %s130 = sphi 0, %s129
      %s144 = sphi 0, %s130
      %s148 = sphi 0, %s148
      %s150 = sphi 0, %s148
      %s151 = sphi 0, %s150
      %s165 = sphi 0, %s151
      %s169 = sphi 0, %s169
      %s171 = sphi 0, %s169
      %s172 = sphi 0, %s171
      %s186 = sphi 0, %s172
      %s190 = sphi 0, %s190
      %s192 = sphi 0, %s190
      %s193 = sphi 0, %s192
      %s207 = sphi 0, %s193
      %s211 = sphi 0, %s211
      %s213 = sphi 0, %s211
      %s214 = sphi 0, %s213
      %s228 = sphi 0, %s214
      %s232 = sphi 0, %s232
      %s234 = sphi 0, %s232
      %s235 = sphi 0, %s234
      %s249 = sphi 0, %s235
      %s253 = sphi 0, %s253
      %s255 = sphi 0, %s253
      %s256 = sphi 0, %s255
      %s270 = sphi 0, %s256
      %s274 = sphi 0, %s274
      %s276 = sphi 0, %s274
      %s277 = sphi 0, %s276
      %s291 = sphi 0, %s277
      %s295 = sphi 0, %s295
      %s297 = sphi 0, %s295
      %s298 = sphi 0, %s297
      %s312 = sphi 0, %s298
      %s316 = sphi 0, %s316
      %s318 = sphi 0, %s316
      %s319 = sphi 0, %s318
      %s333 = sphi 0, %s319
      %s337 = sphi 0, %s337
      %s339 = sphi 0, %s337
      %s340 = sphi 0, %s339
      %s354 = sphi 0, %s340
      %s360 = sphi 0, %s362
      %s363 = sphi 0, %s360
      %s364 = sphi 0, %s363
      %s380 = sphi 0, %s364
      %s386 = sphi 0, %s388
      %s389 = sphi 0, %s386
      %s390 = sphi 0, %s389
      %s406 = sphi 0, %s390
      %s412 = sphi 0, %s414
      %s415 = sphi 0, %s412
      %s416 = sphi 0, %s415
      %s432 = sphi 0, %s416
      %s438 = sphi 0, %s440
      %s441 = sphi 0, %s438
      %s442 = sphi 0, %s441
      %s458 = sphi 0, %s442
      %s464 = sphi 0, %s466
      %s467 = sphi 0, %s464
      %s468 = sphi 0, %s467
      %s484 = sphi 0, %s468
    $region4: #{densepool_forward.8} parent=1 // loop_header_branch
      %49 = sbr.rel (%p47) target = $region8
    $region5: #{densepool_forward.8} parent=1 // loop_body
      %s51 = ssub.s32 %s46, 1
      %s52 = ssub.s32 %s46, 2
      %s53 = sadd.s32 %s46, 1
      %s54 = ssub.s32 %s46, %s53
      %p55 = scmp.eq.s32.totalorder %s54, 0
      %s57 = sadd.s32 %s56, 1
      %s58 = scalar_select %p55, %s56, %s57
      %p61 = pneg %p55
      %p62 = scmp.eq.s32.totalorder %s46, 1
      %p63 = por %p61, %p62
      %p64 = scmp.ne.s32.totalorder %s56, %s59
      %p65 = scmp.eq.s32.totalorder %s46, 0
      %p66 = por %p64, %p65
      %p67 = scmp.ne.s32.totalorder %s56, %s59
      %p68 = scmp.eq.s32.totalorder %s51, 1
      %p69 = por %p67, %p68
      %p70 = scmp.ne.s32.totalorder %s59, %s60
      %p71 = scmp.eq.s32.totalorder %s51, 0
      %p72 = por %p70, %p71
      %p73 = scmp.ne.s32.totalorder %s59, %s60
      %p74 = scmp.eq.s32.totalorder %s52, 1
      %p75 = por %p73, %p74
      %p77 = scmp.ne.s32.totalorder %s60, %s76
      %p78 = scmp.eq.s32.totalorder %s52, 0
      %p79 = por %p77, %p78
      %s80 = ssub.s32 %s46, %s53
      %p81 = scmp.eq.s32.totalorder %s80, 0
      %s83 = sadd.s32 %s82, 1
      %s84 = scalar_select %p81, %s82, %s83
      %p87 = pneg %p81
      %p88 = scmp.eq.s32.totalorder %s46, 1
      %p89 = por %p87, %p88
      %p90 = scmp.ne.s32.totalorder %s82, %s85
      %p91 = scmp.eq.s32.totalorder %s46, 0
      %p92 = por %p90, %p91
      %p93 = scmp.ne.s32.totalorder %s82, %s85
      %p94 = scmp.eq.s32.totalorder %s51, 1
      %p95 = por %p93, %p94
      %p96 = scmp.ne.s32.totalorder %s85, %s86
      %p97 = scmp.eq.s32.totalorder %s51, 0
      %p98 = por %p96, %p97
      %p99 = scmp.ne.s32.totalorder %s85, %s86
      %p100 = scmp.eq.s32.totalorder %s52, 1
      %p101 = por %p99, %p100
      %p103 = scmp.ne.s32.totalorder %s86, %s102
      %p104 = scmp.eq.s32.totalorder %s52, 0
      %p105 = por %p103, %p104
      %s107 = sadd.s32 %s106, 1
      %p110 = scmp.eq.s32.totalorder %s46, 1
      %p111 = scmp.ne.s32.totalorder %s106, %s108
      %p112 = scmp.eq.s32.totalorder %s46, 0
      %p113 = por %p111, %p112
      %p114 = scmp.ne.s32.totalorder %s106, %s108
      %p115 = scmp.eq.s32.totalorder %s51, 1
      %p116 = por %p114, %p115
      %p117 = scmp.ne.s32.totalorder %s108, %s109
      %p118 = scmp.eq.s32.totalorder %s51, 0
      %p119 = por %p117, %p118
      %p120 = scmp.ne.s32.totalorder %s108, %s109
      %p121 = scmp.eq.s32.totalorder %s52, 1
      %p122 = por %p120, %p121
      %p124 = scmp.ne.s32.totalorder %s109, %s123
      %p125 = scmp.eq.s32.totalorder %s52, 0
      %p126 = por %p124, %p125
      %s128 = sadd.s32 %s127, 1
      %p131 = scmp.eq.s32.totalorder %s46, 1
      %p132 = scmp.ne.s32.totalorder %s127, %s129
      %p133 = scmp.eq.s32.totalorder %s46, 0
      %p134 = por %p132, %p133
      %p135 = scmp.ne.s32.totalorder %s127, %s129
      %p136 = scmp.eq.s32.totalorder %s51, 1
      %p137 = por %p135, %p136
      %p138 = scmp.ne.s32.totalorder %s129, %s130
      %p139 = scmp.eq.s32.totalorder %s51, 0
      %p140 = por %p138, %p139
      %p141 = scmp.ne.s32.totalorder %s129, %s130
      %p142 = scmp.eq.s32.totalorder %s52, 1
      %p143 = por %p141, %p142
      %p145 = scmp.ne.s32.totalorder %s130, %s144
      %p146 = scmp.eq.s32.totalorder %s52, 0
      %p147 = por %p145, %p146
      %s149 = sadd.s32 %s148, 1
      %p152 = scmp.eq.s32.totalorder %s46, 1
      %p153 = scmp.ne.s32.totalorder %s148, %s150
      %p154 = scmp.eq.s32.totalorder %s46, 0
      %p155 = por %p153, %p154
      %p156 = scmp.ne.s32.totalorder %s148, %s150
      %p157 = scmp.eq.s32.totalorder %s51, 1
      %p158 = por %p156, %p157
      %p159 = scmp.ne.s32.totalorder %s150, %s151
      %p160 = scmp.eq.s32.totalorder %s51, 0
      %p161 = por %p159, %p160
      %p162 = scmp.ne.s32.totalorder %s150, %s151
      %p163 = scmp.eq.s32.totalorder %s52, 1
      %p164 = por %p162, %p163
      %p166 = scmp.ne.s32.totalorder %s151, %s165
      %p167 = scmp.eq.s32.totalorder %s52, 0
      %p168 = por %p166, %p167
      %s170 = sadd.s32 %s169, 1
      %p173 = scmp.eq.s32.totalorder %s46, 1
      %p174 = scmp.ne.s32.totalorder %s169, %s171
      %p175 = scmp.eq.s32.totalorder %s46, 0
      %p176 = por %p174, %p175
      %p177 = scmp.ne.s32.totalorder %s169, %s171
      %p178 = scmp.eq.s32.totalorder %s51, 1
      %p179 = por %p177, %p178
      %p180 = scmp.ne.s32.totalorder %s171, %s172
      %p181 = scmp.eq.s32.totalorder %s51, 0
      %p182 = por %p180, %p181
      %p183 = scmp.ne.s32.totalorder %s171, %s172
      %p184 = scmp.eq.s32.totalorder %s52, 1
      %p185 = por %p183, %p184
      %p187 = scmp.ne.s32.totalorder %s172, %s186
      %p188 = scmp.eq.s32.totalorder %s52, 0
      %p189 = por %p187, %p188
      %s191 = sadd.s32 %s190, 1
      %p194 = scmp.eq.s32.totalorder %s46, 1
      %p195 = scmp.ne.s32.totalorder %s190, %s192
      %p196 = scmp.eq.s32.totalorder %s46, 0
      %p197 = por %p195, %p196
      %p198 = scmp.ne.s32.totalorder %s190, %s192
      %p199 = scmp.eq.s32.totalorder %s51, 1
      %p200 = por %p198, %p199
      %p201 = scmp.ne.s32.totalorder %s192, %s193
      %p202 = scmp.eq.s32.totalorder %s51, 0
      %p203 = por %p201, %p202
      %p204 = scmp.ne.s32.totalorder %s192, %s193
      %p205 = scmp.eq.s32.totalorder %s52, 1
      %p206 = por %p204, %p205
      %p208 = scmp.ne.s32.totalorder %s193, %s207
      %p209 = scmp.eq.s32.totalorder %s52, 0
      %p210 = por %p208, %p209
      %s212 = sadd.s32 %s211, 1
      %p215 = scmp.eq.s32.totalorder %s46, 1
      %p216 = scmp.ne.s32.totalorder %s211, %s213
      %p217 = scmp.eq.s32.totalorder %s46, 0
      %p218 = por %p216, %p217
      %p219 = scmp.ne.s32.totalorder %s211, %s213
      %p220 = scmp.eq.s32.totalorder %s51, 1
      %p221 = por %p219, %p220
      %p222 = scmp.ne.s32.totalorder %s213, %s214
      %p223 = scmp.eq.s32.totalorder %s51, 0
      %p224 = por %p222, %p223
      %p225 = scmp.ne.s32.totalorder %s213, %s214
      %p226 = scmp.eq.s32.totalorder %s52, 1
      %p227 = por %p225, %p226
      %p229 = scmp.ne.s32.totalorder %s214, %s228
      %p230 = scmp.eq.s32.totalorder %s52, 0
      %p231 = por %p229, %p230
      %s233 = sadd.s32 %s232, 1
      %p236 = scmp.eq.s32.totalorder %s46, 1
      %p237 = scmp.ne.s32.totalorder %s232, %s234
      %p238 = scmp.eq.s32.totalorder %s46, 0
      %p239 = por %p237, %p238
      %p240 = scmp.ne.s32.totalorder %s232, %s234
      %p241 = scmp.eq.s32.totalorder %s51, 1
      %p242 = por %p240, %p241
      %p243 = scmp.ne.s32.totalorder %s234, %s235
      %p244 = scmp.eq.s32.totalorder %s51, 0
      %p245 = por %p243, %p244
      %p246 = scmp.ne.s32.totalorder %s234, %s235
      %p247 = scmp.eq.s32.totalorder %s52, 1
      %p248 = por %p246, %p247
      %p250 = scmp.ne.s32.totalorder %s235, %s249
      %p251 = scmp.eq.s32.totalorder %s52, 0
      %p252 = por %p250, %p251
      %s254 = sadd.s32 %s253, 1
      %p257 = scmp.eq.s32.totalorder %s46, 1
      %p258 = scmp.ne.s32.totalorder %s253, %s255
      %p259 = scmp.eq.s32.totalorder %s46, 0
      %p260 = por %p258, %p259
      %p261 = scmp.ne.s32.totalorder %s253, %s255
      %p262 = scmp.eq.s32.totalorder %s51, 1
      %p263 = por %p261, %p262
      %p264 = scmp.ne.s32.totalorder %s255, %s256
      %p265 = scmp.eq.s32.totalorder %s51, 0
      %p266 = por %p264, %p265
      %p267 = scmp.ne.s32.totalorder %s255, %s256
      %p268 = scmp.eq.s32.totalorder %s52, 1
      %p269 = por %p267, %p268
      %p271 = scmp.ne.s32.totalorder %s256, %s270
      %p272 = scmp.eq.s32.totalorder %s52, 0
      %p273 = por %p271, %p272
      %s275 = sadd.s32 %s274, 1
      %p278 = scmp.eq.s32.totalorder %s46, 1
      %p279 = scmp.ne.s32.totalorder %s274, %s276
      %p280 = scmp.eq.s32.totalorder %s46, 0
      %p281 = por %p279, %p280
      %p282 = scmp.ne.s32.totalorder %s274, %s276
      %p283 = scmp.eq.s32.totalorder %s51, 1
      %p284 = por %p282, %p283
      %p285 = scmp.ne.s32.totalorder %s276, %s277
      %p286 = scmp.eq.s32.totalorder %s51, 0
      %p287 = por %p285, %p286
      %p288 = scmp.ne.s32.totalorder %s276, %s277
      %p289 = scmp.eq.s32.totalorder %s52, 1
      %p290 = por %p288, %p289
      %p292 = scmp.ne.s32.totalorder %s277, %s291
      %p293 = scmp.eq.s32.totalorder %s52, 0
      %p294 = por %p292, %p293
      %s296 = sadd.s32 %s295, 1
      %p299 = scmp.eq.s32.totalorder %s46, 1
      %p300 = scmp.ne.s32.totalorder %s295, %s297
      %p301 = scmp.eq.s32.totalorder %s46, 0
      %p302 = por %p300, %p301
      %p303 = scmp.ne.s32.totalorder %s295, %s297
      %p304 = scmp.eq.s32.totalorder %s51, 1
      %p305 = por %p303, %p304
      %p306 = scmp.ne.s32.totalorder %s297, %s298
      %p307 = scmp.eq.s32.totalorder %s51, 0
      %p308 = por %p306, %p307
      %p309 = scmp.ne.s32.totalorder %s297, %s298
      %p310 = scmp.eq.s32.totalorder %s52, 1
      %p311 = por %p309, %p310
      %p313 = scmp.ne.s32.totalorder %s298, %s312
      %p314 = scmp.eq.s32.totalorder %s52, 0
      %p315 = por %p313, %p314
      %s317 = sadd.s32 %s316, 1
      %p320 = scmp.eq.s32.totalorder %s46, 1
      %p321 = scmp.ne.s32.totalorder %s316, %s318
      %p322 = scmp.eq.s32.totalorder %s46, 0
      %p323 = por %p321, %p322
      %p324 = scmp.ne.s32.totalorder %s316, %s318
      %p325 = scmp.eq.s32.totalorder %s51, 1
      %p326 = por %p324, %p325
      %p327 = scmp.ne.s32.totalorder %s318, %s319
      %p328 = scmp.eq.s32.totalorder %s51, 0
      %p329 = por %p327, %p328
      %p330 = scmp.ne.s32.totalorder %s318, %s319
      %p331 = scmp.eq.s32.totalorder %s52, 1
      %p332 = por %p330, %p331
      %p334 = scmp.ne.s32.totalorder %s319, %s333
      %p335 = scmp.eq.s32.totalorder %s52, 0
      %p336 = por %p334, %p335
      %s338 = sadd.s32 %s337, 1
      %p341 = scmp.eq.s32.totalorder %s46, 1
      %p342 = scmp.ne.s32.totalorder %s337, %s339
      %p343 = scmp.eq.s32.totalorder %s46, 0
      %p344 = por %p342, %p343
      %p345 = scmp.ne.s32.totalorder %s337, %s339
      %p346 = scmp.eq.s32.totalorder %s51, 1
      %p347 = por %p345, %p346
      %p348 = scmp.ne.s32.totalorder %s339, %s340
      %p349 = scmp.eq.s32.totalorder %s51, 0
      %p350 = por %p348, %p349
      %p351 = scmp.ne.s32.totalorder %s339, %s340
      %p352 = scmp.eq.s32.totalorder %s52, 1
      %p353 = por %p351, %p352
      %p355 = scmp.ne.s32.totalorder %s340, %s354
      %p356 = scmp.eq.s32.totalorder %s52, 0
      %p357 = por %p355, %p356
      %s358 = ssub.s32 %s46, %s53
      %p359 = scmp.eq.s32.totalorder %s358, 0
      %s361 = sadd.s32 %s360, 1
      %s362 = scalar_select %p359, %s360, %s361
      %p365 = pneg %p359
      %p366 = scmp.eq.s32.totalorder %s46, 1
      %p367 = por %p365, %p366
      %p368 = scmp.ne.s32.totalorder %s360, %s363
      %p369 = scmp.eq.s32.totalorder %s46, 0
      %p370 = por %p368, %p369
      %p371 = scmp.ne.s32.totalorder %s360, %s363
      %p372 = scmp.eq.s32.totalorder %s51, 1
      %p373 = por %p371, %p372
      %p374 = scmp.ne.s32.totalorder %s363, %s364
      %p375 = scmp.eq.s32.totalorder %s51, 0
      %p376 = por %p374, %p375
      %p377 = scmp.ne.s32.totalorder %s363, %s364
      %p378 = scmp.eq.s32.totalorder %s52, 1
      %p379 = por %p377, %p378
      %p381 = scmp.ne.s32.totalorder %s364, %s380
      %p382 = scmp.eq.s32.totalorder %s52, 0
      %p383 = por %p381, %p382
      %s384 = ssub.s32 %s46, %s53
      %p385 = scmp.eq.s32.totalorder %s384, 0
      %s387 = sadd.s32 %s386, 1
      %s388 = scalar_select %p385, %s386, %s387
      %p391 = pneg %p385
      %p392 = scmp.eq.s32.totalorder %s46, 1
      %p393 = por %p391, %p392
      %p394 = scmp.ne.s32.totalorder %s386, %s389
      %p395 = scmp.eq.s32.totalorder %s46, 0
      %p396 = por %p394, %p395
      %p397 = scmp.ne.s32.totalorder %s386, %s389
      %p398 = scmp.eq.s32.totalorder %s51, 1
      %p399 = por %p397, %p398
      %p400 = scmp.ne.s32.totalorder %s389, %s390
      %p401 = scmp.eq.s32.totalorder %s51, 0
      %p402 = por %p400, %p401
      %p403 = scmp.ne.s32.totalorder %s389, %s390
      %p404 = scmp.eq.s32.totalorder %s52, 1
      %p405 = por %p403, %p404
      %p407 = scmp.ne.s32.totalorder %s390, %s406
      %p408 = scmp.eq.s32.totalorder %s52, 0
      %p409 = por %p407, %p408
      %s410 = ssub.s32 %s46, %s53
      %p411 = scmp.eq.s32.totalorder %s410, 0
      %s413 = sadd.s32 %s412, 1
      %s414 = scalar_select %p411, %s412, %s413
      %p417 = pneg %p411
      %p418 = scmp.eq.s32.totalorder %s46, 1
      %p419 = por %p417, %p418
      %p420 = scmp.ne.s32.totalorder %s412, %s415
      %p421 = scmp.eq.s32.totalorder %s46, 0
      %p422 = por %p420, %p421
      %p423 = scmp.ne.s32.totalorder %s412, %s415
      %p424 = scmp.eq.s32.totalorder %s51, 1
      %p425 = por %p423, %p424
      %p426 = scmp.ne.s32.totalorder %s415, %s416
      %p427 = scmp.eq.s32.totalorder %s51, 0
      %p428 = por %p426, %p427
      %p429 = scmp.ne.s32.totalorder %s415, %s416
      %p430 = scmp.eq.s32.totalorder %s52, 1
      %p431 = por %p429, %p430
      %p433 = scmp.ne.s32.totalorder %s416, %s432
      %p434 = scmp.eq.s32.totalorder %s52, 0
      %p435 = por %p433, %p434
      %s436 = ssub.s32 %s46, %s53
      %p437 = scmp.eq.s32.totalorder %s436, 0
      %s439 = sadd.s32 %s438, 1
      %s440 = scalar_select %p437, %s438, %s439
      %p443 = pneg %p437
      %p444 = scmp.eq.s32.totalorder %s46, 1
      %p445 = por %p443, %p444
      %p446 = scmp.ne.s32.totalorder %s438, %s441
      %p447 = scmp.eq.s32.totalorder %s46, 0
      %p448 = por %p446, %p447
      %p449 = scmp.ne.s32.totalorder %s438, %s441
      %p450 = scmp.eq.s32.totalorder %s51, 1
      %p451 = por %p449, %p450
      %p452 = scmp.ne.s32.totalorder %s441, %s442
      %p453 = scmp.eq.s32.totalorder %s51, 0
      %p454 = por %p452, %p453
      %p455 = scmp.ne.s32.totalorder %s441, %s442
      %p456 = scmp.eq.s32.totalorder %s52, 1
      %p457 = por %p455, %p456
      %p459 = scmp.ne.s32.totalorder %s442, %s458
      %p460 = scmp.eq.s32.totalorder %s52, 0
      %p461 = por %p459, %p460
      %s462 = ssub.s32 %s46, %s53
      %p463 = scmp.eq.s32.totalorder %s462, 0
      %s465 = sadd.s32 %s464, 1
      %s466 = scalar_select %p463, %s464, %s465
      %p469 = pneg %p463
      %p470 = scmp.eq.s32.totalorder %s46, 1
      %p471 = por %p469, %p470
      %p472 = scmp.ne.s32.totalorder %s464, %s467
      %p473 = scmp.eq.s32.totalorder %s46, 0
      %p474 = por %p472, %p473
      %p475 = scmp.ne.s32.totalorder %s464, %s467
      %p476 = scmp.eq.s32.totalorder %s51, 1
      %p477 = por %p475, %p476
      %p478 = scmp.ne.s32.totalorder %s467, %s468
      %p479 = scmp.eq.s32.totalorder %s51, 0
      %p480 = por %p478, %p479
      %p481 = scmp.ne.s32.totalorder %s467, %s468
      %p482 = scmp.eq.s32.totalorder %s52, 1
      %p483 = por %p481, %p482
      %p485 = scmp.ne.s32.totalorder %s468, %s484
      %p486 = scmp.eq.s32.totalorder %s52, 0
      %p487 = por %p485, %p486
      %p488 = scmp.le.s32.totalorder 1, %s46
      %p489 = scmp.lt.s32.totalorder %s46, 3
      %p490 = pnand %p488, %p489
      %p491 = pneg %p490
      // Predicated region
      $region9: #{densepool_forward.8} parent=5 // pred_check
        _
      $region10: #{densepool_forward.8} parent=5 // pred_check_branch
        %493 = sbr.rel (%p490) target = $region12
      $region11: #{densepool_forward.8} parent=5 // pred_region
        %s494 = ssub.s32 %s46, 1
        // Predicated region
        $region13: #{densepool_forward.8} parent=11 // pred_check
          %p495 = pneg %p119
        $region14: #{densepool_forward.8} parent=11 // pred_check_branch
          %497 = sbr.rel (%p495) target = $region16
        $region15: #{densepool_forward.8} parent=11 // pred_region
          %s499 = ssub.s32 512, 512
          %500 = vsyncadd [#allocation6], %s499
          %s501 = sshll.u32 [#allocation7], 4
          %s502 = int_to_ptr.vmem [resolvable:$true] %s501
          %507 = dma.hbm_to_vmem [thread:$0]  %s2, 512, %s502, [#allocation6], 128, 128, 8
        $region16: #{densepool_forward.8} parent=11 // pred_fallthru
          _
        // Predicated region
        $region17: #{densepool_forward.8} parent=11 // pred_check
          %p508 = pneg %p140
        $region18: #{densepool_forward.8} parent=11 // pred_check_branch
          %510 = sbr.rel (%p508) target = $region20
        $region19: #{densepool_forward.8} parent=11 // pred_region
          %s512 = ssub.s32 16, 16
          %513 = vsyncadd [#allocation9], %s512
          %s515 = sshll.u32 [#allocation8], 4
          %s516 = int_to_ptr.vmem [resolvable:$true] %s515
          %518 = dma.hbm_to_vmem [thread:$0]  %s3, 16, %s516, [#allocation9]
        $region20: #{densepool_forward.8} parent=11 // pred_fallthru
          _
        // Predicated region
        $region21: #{densepool_forward.8} parent=11 // pred_check
          %p519 = pneg %p161
        $region22: #{densepool_forward.8} parent=11 // pred_check_branch
          %521 = sbr.rel (%p519) target = $region24
        $region23: #{densepool_forward.8} parent=11 // pred_region
          %s523 = ssub.s32 32, 32
          %524 = vsyncadd [#allocation9], %s523
          %s526 = sshll.u32 [#allocation10], 4
          %s527 = int_to_ptr.vmem [resolvable:$true] %s526
          %529 = dma.hbm_to_vmem [thread:$0]  %s4, 32, %s527, [#allocation9]
        $region24: #{densepool_forward.8} parent=11 // pred_fallthru
          _
        // Predicated region
        $region25: #{densepool_forward.8} parent=11 // pred_check
          %p530 = pneg %p182
        $region26: #{densepool_forward.8} parent=11 // pred_check_branch
          %532 = sbr.rel (%p530) target = $region28
        $region27: #{densepool_forward.8} parent=11 // pred_region
          %s534 = ssub.s32 16, 16
          %535 = vsyncadd [#allocation12], %s534
          %s537 = sshll.u32 [#allocation11], 4
          %s538 = int_to_ptr.vmem [resolvable:$true] %s537
          %540 = dma.hbm_to_vmem [thread:$0]  %s5, 16, %s538, [#allocation12]
        $region28: #{densepool_forward.8} parent=11 // pred_fallthru
          _
        // Predicated region
        $region29: #{densepool_forward.8} parent=11 // pred_check
          %p541 = pneg %p203
        $region30: #{densepool_forward.8} parent=11 // pred_check_branch
          %543 = sbr.rel (%p541) target = $region32
        $region31: #{densepool_forward.8} parent=11 // pred_region
          %s545 = ssub.s32 512, 512
          %546 = vsyncadd [#allocation12], %s545
          %s547 = sshll.u32 [#allocation13], 4
          %s548 = int_to_ptr.vmem [resolvable:$true] %s547
          %553 = dma.hbm_to_vmem [thread:$0]  %s6, 512, %s548, [#allocation12], 128, 128, 8
        $region32: #{densepool_forward.8} parent=11 // pred_fallthru
          _
        // Predicated region
        $region33: #{densepool_forward.8} parent=11 // pred_check
          %p554 = pneg %p224
        $region34: #{densepool_forward.8} parent=11 // pred_check_branch
          %556 = sbr.rel (%p554) target = $region36
        $region35: #{densepool_forward.8} parent=11 // pred_region
          %s558 = ssub.s32 16, 16
          %559 = vsyncadd [#allocation15], %s558
          %s561 = sshll.u32 [#allocation14], 4
          %s562 = int_to_ptr.vmem [resolvable:$true] %s561
          %564 = dma.hbm_to_vmem [thread:$0]  %s7, 16, %s562, [#allocation15]
        $region36: #{densepool_forward.8} parent=11 // pred_fallthru
          _
        // Predicated region
        $region37: #{densepool_forward.8} parent=11 // pred_check
          %p565 = pneg %p245
        $region38: #{densepool_forward.8} parent=11 // pred_check_branch
          %567 = sbr.rel (%p565) target = $region40
        $region39: #{densepool_forward.8} parent=11 // pred_region
          %s569 = ssub.s32 512, 512
          %570 = vsyncadd [#allocation15], %s569
          %s571 = sshll.u32 [#allocation16], 4
          %s572 = int_to_ptr.vmem [resolvable:$true] %s571
          %577 = dma.hbm_to_vmem [thread:$0]  %s8, 512, %s572, [#allocation15], 128, 128, 8
        $region40: #{densepool_forward.8} parent=11 // pred_fallthru
          _
        // Predicated region
        $region41: #{densepool_forward.8} parent=11 // pred_check
          %p578 = pneg %p266
        $region42: #{densepool_forward.8} parent=11 // pred_check_branch
          %580 = sbr.rel (%p578) target = $region44
        $region43: #{densepool_forward.8} parent=11 // pred_region
          %s582 = ssub.s32 16, 16
          %583 = vsyncadd [#allocation18], %s582
          %s585 = sshll.u32 [#allocation17], 4
          %s586 = int_to_ptr.vmem [resolvable:$true] %s585
          %588 = dma.hbm_to_vmem [thread:$0]  %s9, 16, %s586, [#allocation18]
        $region44: #{densepool_forward.8} parent=11 // pred_fallthru
          _
        // Predicated region
        $region45: #{densepool_forward.8} parent=11 // pred_check
          %p589 = pneg %p287
        $region46: #{densepool_forward.8} parent=11 // pred_check_branch
          %591 = sbr.rel (%p589) target = $region48
        $region47: #{densepool_forward.8} parent=11 // pred_region
          %s593 = ssub.s32 16, 16
          %594 = vsyncadd [#allocation18], %s593
          %s596 = sshll.u32 [#allocation19], 4
          %s597 = int_to_ptr.vmem [resolvable:$true] %s596
          %599 = dma.hbm_to_vmem [thread:$0]  %s10, 16, %s597, [#allocation18]
        $region48: #{densepool_forward.8} parent=11 // pred_fallthru
          _
        // Predicated region
        $region49: #{densepool_forward.8} parent=11 // pred_check
          %p600 = pneg %p308
        $region50: #{densepool_forward.8} parent=11 // pred_check_branch
          %602 = sbr.rel (%p600) target = $region52
        $region51: #{densepool_forward.8} parent=11 // pred_region
          %s604 = ssub.s32 16, 16
          %605 = vsyncadd [#allocation21], %s604
          %s607 = sshll.u32 [#allocation20], 4
          %s608 = int_to_ptr.vmem [resolvable:$true] %s607
          %610 = dma.hbm_to_vmem [thread:$0]  %s11, 16, %s608, [#allocation21]
        $region52: #{densepool_forward.8} parent=11 // pred_fallthru
          _
        // Predicated region
        $region53: #{densepool_forward.8} parent=11 // pred_check
          %p611 = pneg %p329
        $region54: #{densepool_forward.8} parent=11 // pred_check_branch
          %613 = sbr.rel (%p611) target = $region56
        $region55: #{densepool_forward.8} parent=11 // pred_region
          %s615 = ssub.s32 16, 16
          %616 = vsyncadd [#allocation21], %s615
          %s618 = sshll.u32 [#allocation22], 4
          %s619 = int_to_ptr.vmem [resolvable:$true] %s618
          %621 = dma.hbm_to_vmem [thread:$0]  %s12, 16, %s619, [#allocation21]
        $region56: #{densepool_forward.8} parent=11 // pred_fallthru
          _
        // Predicated region
        $region57: #{densepool_forward.8} parent=11 // pred_check
          %p622 = pneg %p350
        $region58: #{densepool_forward.8} parent=11 // pred_check_branch
          %624 = sbr.rel (%p622) target = $region60
        $region59: #{densepool_forward.8} parent=11 // pred_region
          %s626 = ssub.s32 16, 16
          %627 = vsyncadd [#allocation24], %s626
          %s629 = sshll.u32 [#allocation23], 4
          %s630 = int_to_ptr.vmem [resolvable:$true] %s629
          %632 = dma.hbm_to_vmem [thread:$0]  %s13, 16, %s630, [#allocation24]
        $region60: #{densepool_forward.8} parent=11 // pred_fallthru
          _
      $region12: #{densepool_forward.8} parent=5 // pred_fallthru
        _
      %p633 = scmp.lt.s32.totalorder %s46, 2
      // Predicated region
      $region61: #{densepool_forward.8} parent=5 // pred_check
        %p634 = pneg %p633
      $region62: #{densepool_forward.8} parent=5 // pred_check_branch
        %636 = sbr.rel (%p634) target = $region64
      $region63: #{densepool_forward.8} parent=5 // pred_region
        // Predicated region
        $region65: #{densepool_forward.8} parent=63 // pred_check
          %p637 = pneg %p66
        $region66: #{densepool_forward.8} parent=63 // pred_check_branch
          %639 = sbr.rel (%p637) target = $region68
        $region67: #{densepool_forward.8} parent=63 // pred_region
          %s640 = sand.u32 %s56, 1
          %s641 = scalar_lea.sflag [#allocation3], %s640
          %s642 = sand.u32 %s56, 1
          %s643 = smul.addr %s642, 4
          %s644 = scalar_lea.vmem [#allocation2], %s643
          %s646 = ssub.s32 64, 64
          %647 = vsyncadd %s641, %s646
          %s648 = smul.addr %s46, 64
          %s649 = scalar_lea.hbm %s0, %s648
          %s651 = sshll.u32 %s644, 4
          %s652 = int_to_ptr.vmem [resolvable:$true] %s651
          %654 = dma.hbm_to_vmem [thread:$0]  %s649, 64, %s652, %s641
        $region68: #{densepool_forward.8} parent=63 // pred_fallthru
          _
        // Predicated region
        $region69: #{densepool_forward.8} parent=63 // pred_check
          %p655 = pneg %p92
        $region70: #{densepool_forward.8} parent=63 // pred_check_branch
          %657 = sbr.rel (%p655) target = $region72
        $region71: #{densepool_forward.8} parent=63 // pred_region
          %s658 = sand.u32 %s46, 1
          %s659 = scalar_lea.sflag [#allocation6], %s658
          %s660 = sand.u32 %s82, 1
          %s661 = smul.addr %s660, 4
          %s662 = scalar_lea.vmem [#allocation5], %s661
          %s664 = ssub.s32 64, 64
          %665 = vsyncadd %s659, %s664
          %s666 = smul.addr %s46, 64
          %s667 = scalar_lea.hbm %s1, %s666
          %s669 = sshll.u32 %s662, 4
          %s670 = int_to_ptr.vmem [resolvable:$true] %s669
          %672 = dma.hbm_to_vmem [thread:$0]  %s667, 64, %s670, %s659
        $region72: #{densepool_forward.8} parent=63 // pred_fallthru
          _
      $region64: #{densepool_forward.8} parent=5 // pred_fallthru
        _
      %p673 = scmp.le.s32.totalorder 1, %s46
      %p674 = scmp.lt.s32.totalorder %s46, 3
      %p675 = pnand %p673, %p674
      %p676 = pneg %p675
      // Predicated region
      $region73: #{densepool_forward.8} parent=5 // pred_check
        _
      $region74: #{densepool_forward.8} parent=5 // pred_check_branch
        %678 = sbr.rel (%p675) target = $region76
      $region75: #{densepool_forward.8} parent=5 // pred_region
        %s679 = ssub.s32 %s46, 1
        %s680 = sand.u32 %s59, 1
        %s681 = scalar_lea.sflag [#allocation3], %s680
        %s682 = sand.u32 %s59, 1
        %s683 = smul.addr %s682, 4
        %s684 = scalar_lea.vmem [#allocation2], %s683
        // Predicated region
        $region77: #{densepool_forward.8} parent=75 // pred_check
          %p685 = pneg %p72
        $region78: #{densepool_forward.8} parent=75 // pred_check_branch
          %687 = sbr.rel (%p685) target = $region80
        $region79: #{densepool_forward.8} parent=75 // pred_region
          %688 = dma.done %s681, 64
        $region80: #{densepool_forward.8} parent=75 // pred_fallthru
          _
        %s689 = sand.u32 %s51, 1
        %s690 = scalar_lea.sflag [#allocation6], %s689
        %s691 = sand.u32 %s85, 1
        %s692 = smul.addr %s691, 4
        %s693 = scalar_lea.vmem [#allocation5], %s692
        // Predicated region
        $region81: #{densepool_forward.8} parent=75 // pred_check
          %p694 = pneg %p98
        $region82: #{densepool_forward.8} parent=75 // pred_check_branch
          %696 = sbr.rel (%p694) target = $region84
        $region83: #{densepool_forward.8} parent=75 // pred_region
          %697 = dma.done %s690, 64
        $region84: #{densepool_forward.8} parent=75 // pred_fallthru
          _
        // Predicated region
        $region85: #{densepool_forward.8} parent=75 // pred_check
          %p698 = pneg %p119
        $region86: #{densepool_forward.8} parent=75 // pred_check_branch
          %700 = sbr.rel (%p698) target = $region88
        $region87: #{densepool_forward.8} parent=75 // pred_region
          %701 = dma.done [#allocation6], 512
        $region88: #{densepool_forward.8} parent=75 // pred_fallthru
          _
        // Predicated region
        $region89: #{densepool_forward.8} parent=75 // pred_check
          %p702 = pneg %p140
        $region90: #{densepool_forward.8} parent=75 // pred_check_branch
          %704 = sbr.rel (%p702) target = $region92
        $region91: #{densepool_forward.8} parent=75 // pred_region
          %705 = dma.done [#allocation9], 16
        $region92: #{densepool_forward.8} parent=75 // pred_fallthru
          _
        // Predicated region
        $region93: #{densepool_forward.8} parent=75 // pred_check
          %p706 = pneg %p161
        $region94: #{densepool_forward.8} parent=75 // pred_check_branch
          %708 = sbr.rel (%p706) target = $region96
        $region95: #{densepool_forward.8} parent=75 // pred_region
          %709 = dma.done [#allocation9], 32
        $region96: #{densepool_forward.8} parent=75 // pred_fallthru
          _
        // Predicated region
        $region97: #{densepool_forward.8} parent=75 // pred_check
          %p710 = pneg %p182
        $region98: #{densepool_forward.8} parent=75 // pred_check_branch
          %712 = sbr.rel (%p710) target = $region100
        $region99: #{densepool_forward.8} parent=75 // pred_region
          %713 = dma.done [#allocation12], 16
        $region100: #{densepool_forward.8} parent=75 // pred_fallthru
          _
        // Predicated region
        $region101: #{densepool_forward.8} parent=75 // pred_check
          %p714 = pneg %p203
        $region102: #{densepool_forward.8} parent=75 // pred_check_branch
          %716 = sbr.rel (%p714) target = $region104
        $region103: #{densepool_forward.8} parent=75 // pred_region
          %717 = dma.done [#allocation12], 512
        $region104: #{densepool_forward.8} parent=75 // pred_fallthru
          _
        // Predicated region
        $region105: #{densepool_forward.8} parent=75 // pred_check
          %p718 = pneg %p224
        $region106: #{densepool_forward.8} parent=75 // pred_check_branch
          %720 = sbr.rel (%p718) target = $region108
        $region107: #{densepool_forward.8} parent=75 // pred_region
          %721 = dma.done [#allocation15], 16
        $region108: #{densepool_forward.8} parent=75 // pred_fallthru
          _
        // Predicated region
        $region109: #{densepool_forward.8} parent=75 // pred_check
          %p722 = pneg %p245
        $region110: #{densepool_forward.8} parent=75 // pred_check_branch
          %724 = sbr.rel (%p722) target = $region112
        $region111: #{densepool_forward.8} parent=75 // pred_region
          %725 = dma.done [#allocation15], 512
        $region112: #{densepool_forward.8} parent=75 // pred_fallthru
          _
        // Predicated region
        $region113: #{densepool_forward.8} parent=75 // pred_check
          %p726 = pneg %p266
        $region114: #{densepool_forward.8} parent=75 // pred_check_branch
          %728 = sbr.rel (%p726) target = $region116
        $region115: #{densepool_forward.8} parent=75 // pred_region
          %729 = dma.done [#allocation18], 16
        $region116: #{densepool_forward.8} parent=75 // pred_fallthru
          _
        // Predicated region
        $region117: #{densepool_forward.8} parent=75 // pred_check
          %p730 = pneg %p287
        $region118: #{densepool_forward.8} parent=75 // pred_check_branch
          %732 = sbr.rel (%p730) target = $region120
        $region119: #{densepool_forward.8} parent=75 // pred_region
          %733 = dma.done [#allocation18], 16
        $region120: #{densepool_forward.8} parent=75 // pred_fallthru
          _
        // Predicated region
        $region121: #{densepool_forward.8} parent=75 // pred_check
          %p734 = pneg %p308
        $region122: #{densepool_forward.8} parent=75 // pred_check_branch
          %736 = sbr.rel (%p734) target = $region124
        $region123: #{densepool_forward.8} parent=75 // pred_region
          %737 = dma.done [#allocation21], 16
        $region124: #{densepool_forward.8} parent=75 // pred_fallthru
          _
        // Predicated region
        $region125: #{densepool_forward.8} parent=75 // pred_check
          %p738 = pneg %p329
        $region126: #{densepool_forward.8} parent=75 // pred_check_branch
          %740 = sbr.rel (%p738) target = $region128
        $region127: #{densepool_forward.8} parent=75 // pred_region
          %741 = dma.done [#allocation21], 16
        $region128: #{densepool_forward.8} parent=75 // pred_fallthru
          _
        // Predicated region
        $region129: #{densepool_forward.8} parent=75 // pred_check
          %p742 = pneg %p350
        $region130: #{densepool_forward.8} parent=75 // pred_check_branch
          %744 = sbr.rel (%p742) target = $region132
        $region131: #{densepool_forward.8} parent=75 // pred_region
          %745 = dma.done [#allocation24], 16
        $region132: #{densepool_forward.8} parent=75 // pred_fallthru
          _
        %s746 = sand.u32 %s59, 1
        %s747 = scalar_lea.sflag [#allocation3], %s746
        %s748 = sand.u32 %s59, 1
        %s749 = smul.addr %s748, 4
        %s750 = scalar_lea.vmem [#allocation2], %s749
        %p751 = pneg %p72
        %p752 = pneg %p69
        %s753 = sand.u32 %s51, 1
        %s754 = scalar_lea.sflag [#allocation6], %s753
        %s755 = sand.u32 %s85, 1
        %s756 = smul.addr %s755, 4
        %s757 = scalar_lea.vmem [#allocation5], %s756
        %p758 = pneg %p98
        %p759 = pneg %p95
        %p760 = pneg %p119
        %p761 = pneg %p116
        %p762 = pneg %p140
        %p763 = pneg %p137
        %p764 = pneg %p161
        %p765 = pneg %p158
        %p766 = pneg %p182
        %p767 = pneg %p179
        %p768 = pneg %p203
        %p769 = pneg %p200
        %p770 = pneg %p224
        %p771 = pneg %p221
        %p772 = pneg %p245
        %p773 = pneg %p242
        %p774 = pneg %p266
        %p775 = pneg %p263
        %p776 = pneg %p287
        %p777 = pneg %p284
        %p778 = pneg %p308
        %p779 = pneg %p305
        %p780 = pneg %p329
        %p781 = pneg %p326
        %p782 = pneg %p350
        %p783 = pneg %p347
        %p784 = pneg %p376
        %p785 = pneg %p373
        %s786 = sand.u32 %s363, 1
        %s787 = scalar_lea.sflag [#allocation4], %s786
        %s788 = sand.u32 %s363, 1
        %s789 = smul.addr %s788, 2
        %s790 = scalar_lea.vmem [#allocation25], %s789
        %p791 = pneg %p402
        %p792 = pneg %p399
        %s793 = sand.u32 %s51, 1
        %s794 = scalar_lea.sflag [#allocation27], %s793
        %s795 = sand.u32 %s389, 1
        %s796 = smul.addr %s795, 2
        %s797 = scalar_lea.vmem [#allocation26], %s796
        %p798 = pneg %p428
        %p799 = pneg %p425
        %s800 = sand.u32 %s51, 1
        %s801 = scalar_lea.sflag [#allocation27], %s800
        %s802 = sand.u32 %s415, 1
        %s803 = scalar_lea.vmem [#allocation28], %s802
        %p804 = pneg %p454
        %p805 = pneg %p451
        %s806 = sand.u32 %s51, 1
        %s807 = scalar_lea.sflag [#allocation30], %s806
        %s808 = sand.u32 %s441, 1
        %s809 = scalar_lea.vmem [#allocation29], %s808
        %p810 = pneg %p480
        %p811 = pneg %p477
        %s812 = sand.u32 %s51, 1
        %s813 = scalar_lea.sflag [#allocation30], %s812
        %s814 = sand.u32 %s467, 1
        %s815 = scalar_lea.vmem [#allocation31], %s814
        %v817 = vld [vmem:[%s684] sm:$0xf]
        %v818 = vld [vmem:[%s693] sm:$0xf]
        %v819 = vpack.c.bf16 %v818, %v818
        %v820 = vpack.c.bf16 %v817, %v817
        %vm821 = vcmask 31744
        %v823 = vsel %vm821, %v819, 0
        %vm825 = vcmask 1041408
        %v827 = vsel %vm825, %v820, 0
        %829 = vmatprep.subr.bf16.mxu0 0
        %830 = vmatpush1.bf16.msra.mxu0 %v827
        %831 = vmatprep.subr.bf16.mxu0 0
        %832 = vmatpush1.bf16.msra.mxu0 0
        %833 = vmatprep.subr.bf16.mxu0 0
        %834 = vmatpush1.bf16.msra.mxu0 0
        %835 = vmatprep.subr.bf16.mxu0 0
        %836 = vmatpush1.bf16.msra.mxu0 0
        %837 = vmatprep.subr.bf16.mxu0 0
        %838 = vmatpush1.bf16.msra.mxu0 0
        %839 = vmatprep.subr.bf16.mxu0 0
        %840 = vmatpush1.bf16.msra.mxu0 0
        %841 = vmatprep.subr.bf16.mxu0 0
        %842 = vmatpush1.bf16.msra.mxu0 0
        %843 = vmatprep.subr.bf16.mxu0 0
        %844 = vmatpush1.bf16.msra.mxu0 0
        %845 = vmatprep.subr.bf16.mxu0 0
        %846 = vmatpush1.bf16.msra.mxu0 0
        %847 = vmatprep.subr.bf16.mxu0 0
        %848 = vmatpush1.bf16.msra.mxu0 0
        %849 = vmatprep.subr.bf16.mxu0 0
        %850 = vmatpush1.bf16.msra.mxu0 0
        %851 = vmatprep.subr.bf16.mxu0 0
        %852 = vmatpush1.bf16.msra.mxu0 0
        %853 = vmatprep.subr.bf16.mxu0 0
        %854 = vmatpush1.bf16.msra.mxu0 0
        %855 = vmatprep.subr.bf16.mxu0 0
        %856 = vmatpush1.bf16.msra.mxu0 0
        %857 = vmatprep.subr.bf16.mxu0 0
        %858 = vmatpush1.bf16.msra.mxu0 0
        %859 = vmatprep.subr.bf16.mxu0 0
        %860 = vmatpush1.bf16.msra.mxu0 0
        %861 = vmatprep.mubr.bf16.mxu0 0
        %862 = vmatmul.mubr.bf16.gmra.mrb[0].mxu0 %v823
        %v863 = vpop.f32.mrb[0].mxu0
        %v864 = vadd.f32 %v817, %v863
        %v865 = vpop.f32.mrb[0].mxu0
        %v866 = vpop.f32.mrb[0].mxu0
        %v867 = vpop.f32.mrb[0].mxu0
        %868 = vdwg.mxu0
        %v869 = vpack.c.bf16 %v864, %v864
        %v870 = vld [vmem:[#allocation7] sm:$0xff]
        %v871 = vld [vmem:[#allocation7 + $0x8] sm:$0xff]
        %v872 = vld [vmem:[#allocation7 + $0x10] sm:$0xff]
        %v873 = vld [vmem:[#allocation7 + $0x18] sm:$0xff]
        %v874 = vpack.c.bf16 %v871, %v870
        %v875 = vpack.c.bf16 %v873, %v872
        %v876 = vld [vmem:[#allocation8] sm:$0x1]
        %v878 = vlaneseq
        %v879 = vshrl.u32 %v878, 7
        %v880 = vsub.s32 0, %v879
        %v881 = vrot.slane %v876, %v880
        %vm883 = vcmask 261120
        %v885 = vsel %vm883, %v869, 0
        %887 = vmatprep.subr.bf16.mxu0 0
        %888 = vmatpush1.bf16.msra.mxu0 %v874
        %889 = vmatprep.subr.bf16.mxu0 0
        %890 = vmatpush1.bf16.msra.mxu0 %v875
        %891 = vmatprep.subr.bf16.mxu0 0
        %892 = vmatpush1.bf16.msra.mxu0 0
        %893 = vmatprep.subr.bf16.mxu0 0
        %894 = vmatpush1.bf16.msra.mxu0 0
        %895 = vmatprep.subr.bf16.mxu0 0
        %896 = vmatpush1.bf16.msra.mxu0 0
        %897 = vmatprep.subr.bf16.mxu0 0
        %898 = vmatpush1.bf16.msra.mxu0 0
        %899 = vmatprep.subr.bf16.mxu0 0
        %900 = vmatpush1.bf16.msra.mxu0 0
        %901 = vmatprep.subr.bf16.mxu0 0
        %902 = vmatpush1.bf16.msra.mxu0 0
        %903 = vmatprep.subr.bf16.mxu0 0
        %904 = vmatpush1.bf16.msra.mxu0 0
        %905 = vmatprep.subr.bf16.mxu0 0
        %906 = vmatpush1.bf16.msra.mxu0 0
        %907 = vmatprep.subr.bf16.mxu0 0
        %908 = vmatpush1.bf16.msra.mxu0 0
        %909 = vmatprep.subr.bf16.mxu0 0
        %910 = vmatpush1.bf16.msra.mxu0 0
        %911 = vmatprep.subr.bf16.mxu0 0
        %912 = vmatpush1.bf16.msra.mxu0 0
        %913 = vmatprep.subr.bf16.mxu0 0
        %914 = vmatpush1.bf16.msra.mxu0 0
        %915 = vmatprep.subr.bf16.mxu0 0
        %916 = vmatpush1.bf16.msra.mxu0 0
        %917 = vmatprep.subr.bf16.mxu0 0
        %918 = vmatpush1.bf16.msra.mxu0 0
        %919 = vmatprep.mubr.bf16.mxu0 0
        %920 = vmatmul.mubr.bf16.gmra.mrb[0].mxu0 %v885
        %v921 = vpop.f32.mrb[0].mxu0
        %v922 = vadd.f32 %v881, %v921
        %v923 = vpop.f32.mrb[0].mxu0
        %v924 = vpop.f32.mrb[0].mxu0
        %v925 = vpop.f32.mrb[0].mxu0
        %926 = vdwg.mxu0
        %v927 = vmax.f32 %v922, 0.0
        %v928 = vpack.c.bf16 %v927, %v927
        %v929 = vld [vmem:[#allocation10] sm:$0x3]
        %v930 = vpack.c.bf16 %v929, %v929
        %v931 = vld [vmem:[#allocation11] sm:$0x1]
        %v933 = vlaneseq
        %v934 = vshrl.u32 %v933, 7
        %v935 = vsub.s32 0, %v934
        %v936 = vrot.slane %v931, %v935
        %vm938 = vcmask 15360
        %v940 = vsel %vm938, %v928, 0
        %vm942 = vcmask 1040384
        %v944 = vsel %vm942, %v930, 0
        %946 = vmatprep.subr.bf16.mxu0 0
        %947 = vmatpush1.bf16.msra.mxu0 %v944
        %948 = vmatprep.subr.bf16.mxu0 0
        %949 = vmatpush1.bf16.msra.mxu0 0
        %950 = vmatprep.subr.bf16.mxu0 0
        %951 = vmatpush1.bf16.msra.mxu0 0
        %952 = vmatprep.subr.bf16.mxu0 0
        %953 = vmatpush1.bf16.msra.mxu0 0
        %954 = vmatprep.subr.bf16.mxu0 0
        %955 = vmatpush1.bf16.msra.mxu0 0
        %956 = vmatprep.subr.bf16.mxu0 0
        %957 = vmatpush1.bf16.msra.mxu0 0
        %958 = vmatprep.subr.bf16.mxu0 0
        %959 = vmatpush1.bf16.msra.mxu0 0
        %960 = vmatprep.subr.bf16.mxu0 0
        %961 = vmatpush1.bf16.msra.mxu0 0
        %962 = vmatprep.subr.bf16.mxu0 0
        %963 = vmatpush1.bf16.msra.mxu0 0
        %964 = vmatprep.subr.bf16.mxu0 0
        %965 = vmatpush1.bf16.msra.mxu0 0
        %966 = vmatprep.subr.bf16.mxu0 0
        %967 = vmatpush1.bf16.msra.mxu0 0
        %968 = vmatprep.subr.bf16.mxu0 0
        %969 = vmatpush1.bf16.msra.mxu0 0
        %970 = vmatprep.subr.bf16.mxu0 0
        %971 = vmatpush1.bf16.msra.mxu0 0
        %972 = vmatprep.subr.bf16.mxu0 0
        %973 = vmatpush1.bf16.msra.mxu0 0
        %974 = vmatprep.subr.bf16.mxu0 0
        %975 = vmatpush1.bf16.msra.mxu0 0
        %976 = vmatprep.subr.bf16.mxu0 0
        %977 = vmatpush1.bf16.msra.mxu0 0
        %978 = vmatprep.mubr.bf16.mxu0 0
        %979 = vmatmul.mubr.bf16.gmra.mrb[0].mxu0 %v940
        %v980 = vpop.f32.mrb[0].mxu0
        %v981 = vadd.f32 %v936, %v980
        %v982 = vpop.f32.mrb[0].mxu0
        %v983 = vpop.f32.mrb[0].mxu0
        %v984 = vpop.f32.mrb[0].mxu0
        %985 = vdwg.mxu0
        %v986 = vld [vmem:[#allocation13] sm:$0xff]
        %v987 = vld [vmem:[#allocation13 + $0x8] sm:$0xff]
        %v988 = vld [vmem:[#allocation13 + $0x10] sm:$0xff]
        %v989 = vld [vmem:[#allocation13 + $0x18] sm:$0xff]
        %v990 = vpack.c.bf16 %v987, %v986
        %v991 = vpack.c.bf16 %v989, %v988
        %v992 = vld [vmem:[#allocation14] sm:$0x1]
        %v994 = vlaneseq
        %v995 = vshrl.u32 %v994, 7
        %v996 = vsub.s32 0, %v995
        %v997 = vrot.slane %v992, %v996
        %999 = vmatprep.subr.bf16.mxu0 0
        %1000 = vmatpush1.bf16.msra.mxu0 %v990
        %1001 = vmatprep.subr.bf16.mxu0 0
        %1002 = vmatpush1.bf16.msra.mxu0 %v991
        %1003 = vmatprep.subr.bf16.mxu0 0
        %1004 = vmatpush1.bf16.msra.mxu0 0
        %1005 = vmatprep.subr.bf16.mxu0 0
        %1006 = vmatpush1.bf16.msra.mxu0 0
        %1007 = vmatprep.subr.bf16.mxu0 0
        %1008 = vmatpush1.bf16.msra.mxu0 0
        %1009 = vmatprep.subr.bf16.mxu0 0
        %1010 = vmatpush1.bf16.msra.mxu0 0
        %1011 = vmatprep.subr.bf16.mxu0 0
        %1012 = vmatpush1.bf16.msra.mxu0 0
        %1013 = vmatprep.subr.bf16.mxu0 0
        %1014 = vmatpush1.bf16.msra.mxu0 0
        %1015 = vmatprep.subr.bf16.mxu0 0
        %1016 = vmatpush1.bf16.msra.mxu0 0
        %1017 = vmatprep.subr.bf16.mxu0 0
        %1018 = vmatpush1.bf16.msra.mxu0 0
        %1019 = vmatprep.subr.bf16.mxu0 0
        %1020 = vmatpush1.bf16.msra.mxu0 0
        %1021 = vmatprep.subr.bf16.mxu0 0
        %1022 = vmatpush1.bf16.msra.mxu0 0
        %1023 = vmatprep.subr.bf16.mxu0 0
        %1024 = vmatpush1.bf16.msra.mxu0 0
        %1025 = vmatprep.subr.bf16.mxu0 0
        %1026 = vmatpush1.bf16.msra.mxu0 0
        %1027 = vmatprep.subr.bf16.mxu0 0
        %1028 = vmatpush1.bf16.msra.mxu0 0
        %1029 = vmatprep.subr.bf16.mxu0 0
        %1030 = vmatpush1.bf16.msra.mxu0 0
        %1031 = vmatprep.mubr.bf16.mxu0 0
        %1032 = vmatmul.mubr.bf16.gmra.mrb[0].mxu0 %v885
        %v1033 = vpop.f32.mrb[0].mxu0
        %v1034 = vadd.f32 %v997, %v1033
        %v1035 = vpop.f32.mrb[0].mxu0
        %v1036 = vpop.f32.mrb[0].mxu0
        %v1037 = vpop.f32.mrb[0].mxu0
        %1038 = vdwg.mxu0
        %v1039 = vmax.f32 %v1034, 0.0
        %v1040 = vpack.c.bf16 %v1039, %v1039
        %v1041 = vld [vmem:[#allocation16] sm:$0xff]
        %v1042 = vld [vmem:[#allocation16 + $0x8] sm:$0xff]
        %v1043 = vld [vmem:[#allocation16 + $0x10] sm:$0xff]
        %v1044 = vld [vmem:[#allocation16 + $0x18] sm:$0xff]
        %v1045 = vpack.c.bf16 %v1042, %v1041
        %v1046 = vpack.c.bf16 %v1044, %v1043
        %v1047 = vld [vmem:[#allocation17] sm:$0x1]
        %v1049 = vlaneseq
        %v1050 = vshrl.u32 %v1049, 7
        %v1051 = vsub.s32 0, %v1050
        %v1052 = vrot.slane %v1047, %v1051
        %v1055 = vsel %vm883, %v1040, 0
        %1057 = vmatprep.subr.bf16.mxu0 0
        %1058 = vmatpush1.bf16.msra.mxu0 %v1045
        %1059 = vmatprep.subr.bf16.mxu0 0
        %1060 = vmatpush1.bf16.msra.mxu0 %v1046
        %1061 = vmatprep.subr.bf16.mxu0 0
        %1062 = vmatpush1.bf16.msra.mxu0 0
        %1063 = vmatprep.subr.bf16.mxu0 0
        %1064 = vmatpush1.bf16.msra.mxu0 0
        %1065 = vmatprep.subr.bf16.mxu0 0
        %1066 = vmatpush1.bf16.msra.mxu0 0
        %1067 = vmatprep.subr.bf16.mxu0 0
        %1068 = vmatpush1.bf16.msra.mxu0 0
        %1069 = vmatprep.subr.bf16.mxu0 0
        %1070 = vmatpush1.bf16.msra.mxu0 0
        %1071 = vmatprep.subr.bf16.mxu0 0
        %1072 = vmatpush1.bf16.msra.mxu0 0
        %1073 = vmatprep.subr.bf16.mxu0 0
        %1074 = vmatpush1.bf16.msra.mxu0 0
        %1075 = vmatprep.subr.bf16.mxu0 0
        %1076 = vmatpush1.bf16.msra.mxu0 0
        %1077 = vmatprep.subr.bf16.mxu0 0
        %1078 = vmatpush1.bf16.msra.mxu0 0
        %1079 = vmatprep.subr.bf16.mxu0 0
        %1080 = vmatpush1.bf16.msra.mxu0 0
        %1081 = vmatprep.subr.bf16.mxu0 0
        %1082 = vmatpush1.bf16.msra.mxu0 0
        %1083 = vmatprep.subr.bf16.mxu0 0
        %1084 = vmatpush1.bf16.msra.mxu0 0
        %1085 = vmatprep.subr.bf16.mxu0 0
        %1086 = vmatpush1.bf16.msra.mxu0 0
        %1087 = vmatprep.subr.bf16.mxu0 0
        %1088 = vmatpush1.bf16.msra.mxu0 0
        %1089 = vmatprep.mubr.bf16.mxu0 0
        %1090 = vmatmul.mubr.bf16.gmra.mrb[0].mxu0 %v1055
        %v1091 = vpop.f32.mrb[0].mxu0
        %v1092 = vadd.f32 %v1052, %v1091
        %v1093 = vpop.f32.mrb[0].mxu0
        %v1094 = vpop.f32.mrb[0].mxu0
        %v1095 = vpop.f32.mrb[0].mxu0
        %1096 = vdwg.mxu0
        %v1097 = vld [vmem:[#allocation19] sm:$0x1]
        %v1099 = vlaneseq
        %v1100 = vshrl.u32 %v1099, 7
        %v1101 = vsub.s32 0, %v1100
        %v1102 = vrot.slane %v1097, %v1101
        %v1104 = vmul.f32 %v1092, %v1102
        %v1105 = vld [vmem:[#allocation20] sm:$0x1]
        %v1107 = vlaneseq
        %v1108 = vshrl.u32 %v1107, 7
        %v1109 = vsub.s32 0, %v1108
        %v1110 = vrot.slane %v1105, %v1109
        %v1112 = vadd.f32 %v1104, %v1110
        %v1113 = vmax.f32 %v1112, 0.0
        %vm1114 = vcmask 11264
        %v1115 = vsel %vm1114, %v981, -inf
        %1116 = vmax.xlane.f32.xlu0 %v1115
        %v1117 = vpop.xlane.xlu0 %1116
        %v1118 = vsub.f32 %v981, %v1117
        %v1119 = vmul.f32 %v1118, 1.442695
        %v1120 = vpow.pop %v1119
        %v1121 = vsel %vm1114, %v1120, 0.0
        %1122 = vadd.xlane.f32.xlu0 %v1121
        %v1123 = vpop.xlane.xlu0 %1122
        %v1124 = vrcp.pop %v1123
        %v1125 = vmul.f32 %v1120, %v1124
        %v1126 = vpack.c.bf16 %v1125, %v1125
        %v1127 = vpack.c.bf16 %v1113, %v1113
        %1128 = vxpose.xlu0.c.b16.start [1/8] %v1126, 128
        %1129 = vxpose.xlu0.c.b16.cont [2/8] 0, 128
        %1130 = vxpose.xlu0.c.b16.cont [3/8] 0, 128
        %1131 = vxpose.xlu0.c.b16.cont [4/8] 0, 128
        %1132 = vxpose.xlu0.c.b16.cont [5/8] 0, 128
        %1133 = vxpose.xlu0.c.b16.cont [6/8] 0, 128
        %1134 = vxpose.xlu0.c.b16.cont [7/8] 0, 128
        %1135 = vxpose.xlu0.c.b16.end [8/8] 0, 128
        %v1136 = vpop.trf.xlu0
        %v1137 = vpop.trf.xlu0
        %v1138 = vpop.trf.xlu0
        %v1139 = vpop.trf.xlu0
        %v1140 = vpop.trf.xlu0
        %v1141 = vpop.trf.xlu0
        %v1142 = vpop.trf.xlu0
        %v1143 = vpop.trf.xlu0
        %v1145 = vsel %vm821, %v1136, 0
        %v1148 = vsel %vm825, %v1127, 0
        %1150 = vmatprep.subr.bf16.mxu0 0
        %1151 = vmatpush1.bf16.msra.mxu0 %v1148
        %1152 = vmatprep.subr.bf16.mxu0 0
        %1153 = vmatpush1.bf16.msra.mxu0 0
        %1154 = vmatprep.subr.bf16.mxu0 0
        %1155 = vmatpush1.bf16.msra.mxu0 0
        %1156 = vmatprep.subr.bf16.mxu0 0
        %1157 = vmatpush1.bf16.msra.mxu0 0
        %1158 = vmatprep.subr.bf16.mxu0 0
        %1159 = vmatpush1.bf16.msra.mxu0 0
        %1160 = vmatprep.subr.bf16.mxu0 0
        %1161 = vmatpush1.bf16.msra.mxu0 0
        %1162 = vmatprep.subr.bf16.mxu0 0
        %1163 = vmatpush1.bf16.msra.mxu0 0
        %1164 = vmatprep.subr.bf16.mxu0 0
        %1165 = vmatpush1.bf16.msra.mxu0 0
        %1166 = vmatprep.subr.bf16.mxu0 0
        %1167 = vmatpush1.bf16.msra.mxu0 0
        %1168 = vmatprep.subr.bf16.mxu0 0
        %1169 = vmatpush1.bf16.msra.mxu0 0
        %1170 = vmatprep.subr.bf16.mxu0 0
        %1171 = vmatpush1.bf16.msra.mxu0 0
        %1172 = vmatprep.subr.bf16.mxu0 0
        %1173 = vmatpush1.bf16.msra.mxu0 0
        %1174 = vmatprep.subr.bf16.mxu0 0
        %1175 = vmatpush1.bf16.msra.mxu0 0
        %1176 = vmatprep.subr.bf16.mxu0 0
        %1177 = vmatpush1.bf16.msra.mxu0 0
        %1178 = vmatprep.subr.bf16.mxu0 0
        %1179 = vmatpush1.bf16.msra.mxu0 0
        %1180 = vmatprep.subr.bf16.mxu0 0
        %1181 = vmatpush1.bf16.msra.mxu0 0
        %1182 = vmatprep.mubr.bf16.mxu0 0
        %1183 = vmatmul.mubr.bf16.gmra.mrb[0].mxu0 %v1145
        %v1184 = vpop.f32.mrb[0].mxu0
        %v1185 = vadd.f32 0.0, %v1184
        %v1186 = vpop.f32.mrb[0].mxu0
        %v1187 = vpop.f32.mrb[0].mxu0
        %v1188 = vpop.f32.mrb[0].mxu0
        %1189 = vdwg.mxu0
        %v1191 = vsel %vm825, %v1126, 0
        %1193 = vmatprep.subr.bf16.mxu0 0
        %1194 = vmatpush1.bf16.msra.mxu0 %v1191
        %1195 = vmatprep.subr.bf16.mxu0 0
        %1196 = vmatpush1.bf16.msra.mxu0 0
        %1197 = vmatprep.subr.bf16.mxu0 0
        %1198 = vmatpush1.bf16.msra.mxu0 0
        %1199 = vmatprep.subr.bf16.mxu0 0
        %1200 = vmatpush1.bf16.msra.mxu0 0
        %1201 = vmatprep.subr.bf16.mxu0 0
        %1202 = vmatpush1.bf16.msra.mxu0 0
        %1203 = vmatprep.subr.bf16.mxu0 0
        %1204 = vmatpush1.bf16.msra.mxu0 0
        %1205 = vmatprep.subr.bf16.mxu0 0
        %1206 = vmatpush1.bf16.msra.mxu0 0
        %1207 = vmatprep.subr.bf16.mxu0 0
        %1208 = vmatpush1.bf16.msra.mxu0 0
        %1209 = vmatprep.subr.bf16.mxu0 0
        %1210 = vmatpush1.bf16.msra.mxu0 0
        %1211 = vmatprep.subr.bf16.mxu0 0
        %1212 = vmatpush1.bf16.msra.mxu0 0
        %1213 = vmatprep.subr.bf16.mxu0 0
        %1214 = vmatpush1.bf16.msra.mxu0 0
        %1215 = vmatprep.subr.bf16.mxu0 0
        %1216 = vmatpush1.bf16.msra.mxu0 0
        %1217 = vmatprep.subr.bf16.mxu0 0
        %1218 = vmatpush1.bf16.msra.mxu0 0
        %1219 = vmatprep.subr.bf16.mxu0 0
        %1220 = vmatpush1.bf16.msra.mxu0 0
        %1221 = vmatprep.subr.bf16.mxu0 0
        %1222 = vmatpush1.bf16.msra.mxu0 0
        %1223 = vmatprep.subr.bf16.mxu0 0
        %1224 = vmatpush1.bf16.msra.mxu0 0
        %1225 = vmatprep.mubr.bf16.mxu0 0
        %1226 = vmatmul.mubr.bf16.gmra.mrb[0].mxu0 %v823
        %v1227 = vpop.f32.mrb[0].mxu0
        %v1228 = vadd.f32 0.0, %v1227
        %v1229 = vpop.f32.mrb[0].mxu0
        %v1230 = vpop.f32.mrb[0].mxu0
        %v1231 = vpop.f32.mrb[0].mxu0
        %1232 = vdwg.mxu0
        %v1233 = vpack.c.bf16 %v1228, %v1228
        %v1235 = vsel %vm825, %v1233, 0
        %1237 = vmatprep.subr.bf16.mxu0 0
        %1238 = vmatpush1.bf16.msra.mxu0 %v1235
        %1239 = vmatprep.subr.bf16.mxu0 0
        %1240 = vmatpush1.bf16.msra.mxu0 0
        %1241 = vmatprep.subr.bf16.mxu0 0
        %1242 = vmatpush1.bf16.msra.mxu0 0
        %1243 = vmatprep.subr.bf16.mxu0 0
        %1244 = vmatpush1.bf16.msra.mxu0 0
        %1245 = vmatprep.subr.bf16.mxu0 0
        %1246 = vmatpush1.bf16.msra.mxu0 0
        %1247 = vmatprep.subr.bf16.mxu0 0
        %1248 = vmatpush1.bf16.msra.mxu0 0
        %1249 = vmatprep.subr.bf16.mxu0 0
        %1250 = vmatpush1.bf16.msra.mxu0 0
        %1251 = vmatprep.subr.bf16.mxu0 0
        %1252 = vmatpush1.bf16.msra.mxu0 0
        %1253 = vmatprep.subr.bf16.mxu0 0
        %1254 = vmatpush1.bf16.msra.mxu0 0
        %1255 = vmatprep.subr.bf16.mxu0 0
        %1256 = vmatpush1.bf16.msra.mxu0 0
        %1257 = vmatprep.subr.bf16.mxu0 0
        %1258 = vmatpush1.bf16.msra.mxu0 0
        %1259 = vmatprep.subr.bf16.mxu0 0
        %1260 = vmatpush1.bf16.msra.mxu0 0
        %1261 = vmatprep.subr.bf16.mxu0 0
        %1262 = vmatpush1.bf16.msra.mxu0 0
        %1263 = vmatprep.subr.bf16.mxu0 0
        %1264 = vmatpush1.bf16.msra.mxu0 0
        %1265 = vmatprep.subr.bf16.mxu0 0
        %1266 = vmatpush1.bf16.msra.mxu0 0
        %1267 = vmatprep.subr.bf16.mxu0 0
        %1268 = vmatpush1.bf16.msra.mxu0 0
        %1269 = vmatprep.mubr.bf16.mxu0 0
        %1270 = vmatmul.mubr.bf16.gmra.mrb[0].mxu0 %v1145
        %v1271 = vpop.f32.mrb[0].mxu0
        %v1272 = vadd.f32 0.0, %v1271
        %v1273 = vpop.f32.mrb[0].mxu0
        %v1274 = vpop.f32.mrb[0].mxu0
        %v1275 = vpop.f32.mrb[0].mxu0
        %1276 = vdwg.mxu0
        %vm1277 = vcmask 254976
        %1278 = vst.msk [vmem:[%s790] sm:$0x3] %vm1277, %v1185
        %vm1279 = vcmask 9216
        %1280 = vst.msk [vmem:[%s797] sm:$0x3] %vm1279, %v1272
        %1281 = vxpose.xlu0.b32.start [1/16] %v1125, 128
        %1282 = vxpose.xlu0.b32.cont [2/16] 0.0, 128
        %1283 = vxpose.xlu0.b32.cont [3/16] 0.0, 128
        %1284 = vxpose.xlu0.b32.cont [4/16] 0.0, 128
        %1285 = vxpose.xlu0.b32.cont [5/16] 0.0, 128
        %1286 = vxpose.xlu0.b32.cont [6/16] 0.0, 128
        %1287 = vxpose.xlu0.b32.cont [7/16] 0.0, 128
        %1288 = vxpose.xlu0.b32.cont [8/16] 0.0, 128
        %1289 = vxpose.xlu0.b32.cont [9/16] 0.0, 128
        %1290 = vxpose.xlu0.b32.cont [10/16] 0.0, 128
        %1291 = vxpose.xlu0.b32.cont [11/16] 0.0, 128
        %1292 = vxpose.xlu0.b32.cont [12/16] 0.0, 128
        %1293 = vxpose.xlu0.b32.cont [13/16] 0.0, 128
        %1294 = vxpose.xlu0.b32.cont [14/16] 0.0, 128
        %1295 = vxpose.xlu0.b32.cont [15/16] 0.0, 128
        %1296 = vxpose.xlu0.b32.end [16/16] 0.0, 128
        %v1297 = vpop.trf.xlu0
        %v1298 = vpop.trf.xlu0
        %v1299 = vpop.trf.xlu0
        %v1300 = vpop.trf.xlu0
        %v1301 = vpop.trf.xlu0
        %v1302 = vpop.trf.xlu0
        %v1303 = vpop.trf.xlu0
        %v1304 = vpop.trf.xlu0
        %v1305 = vpop.trf.xlu0
        %v1306 = vpop.trf.xlu0
        %v1307 = vpop.trf.xlu0
        %v1308 = vpop.trf.xlu0
        %v1309 = vpop.trf.xlu0
        %v1310 = vpop.trf.xlu0
        %v1311 = vpop.trf.xlu0
        %v1312 = vpop.trf.xlu0
        %v1314 = vsel %vm821, %v1297, 0
        %vm1316 = vcmask 1043456
        %v1318 = vsel %vm1316, %v1125, 0
        %1320 = vmatprep.subr.mxu0 0.0
        %1321 = vmatpush1.msra.mxu0 %v1318
        %1322 = vmatprep.subr.mxu0 0.0
        %1323 = vmatpush1.msra.mxu0 0.0
        %1324 = vmatprep.subr.mxu0 0.0
        %1325 = vmatpush1.msra.mxu0 0.0
        %1326 = vmatprep.subr.mxu0 0.0
        %1327 = vmatpush1.msra.mxu0 0.0
        %1328 = vmatprep.subr.mxu0 0.0
        %1329 = vmatpush1.msra.mxu0 0.0
        %1330 = vmatprep.subr.mxu0 0.0
        %1331 = vmatpush1.msra.mxu0 0.0
        %1332 = vmatprep.subr.mxu0 0.0
        %1333 = vmatpush1.msra.mxu0 0.0
        %1334 = vmatprep.subr.mxu0 0.0
        %1335 = vmatpush1.msra.mxu0 0.0
        %1336 = vmatprep.subr.mxu0 0.0
        %1337 = vmatpush1.msra.mxu0 0.0
        %1338 = vmatprep.subr.mxu0 0.0
        %1339 = vmatpush1.msra.mxu0 0.0
        %1340 = vmatprep.subr.mxu0 0.0
        %1341 = vmatpush1.msra.mxu0 0.0
        %1342 = vmatprep.subr.mxu0 0.0
        %1343 = vmatpush1.msra.mxu0 0.0
        %1344 = vmatprep.subr.mxu0 0.0
        %1345 = vmatpush1.msra.mxu0 0.0
        %1346 = vmatprep.subr.mxu0 0.0
        %1347 = vmatpush1.msra.mxu0 0.0
        %1348 = vmatprep.subr.mxu0 0.0
        %1349 = vmatpush1.msra.mxu0 0.0
        %1350 = vmatprep.subr.mxu0 0.0
        %1351 = vmatpush1.msra.mxu0 0.0
        %1352 = vmatprep.subr.mxu0 0.0
        %1353 = vmatpush1.msra.mxu0 0.0
        %1354 = vmatprep.subr.mxu0 0.0
        %1355 = vmatpush1.msra.mxu0 0.0
        %1356 = vmatprep.subr.mxu0 0.0
        %1357 = vmatpush1.msra.mxu0 0.0
        %1358 = vmatprep.subr.mxu0 0.0
        %1359 = vmatpush1.msra.mxu0 0.0
        %1360 = vmatprep.subr.mxu0 0.0
        %1361 = vmatpush1.msra.mxu0 0.0
        %1362 = vmatprep.subr.mxu0 0.0
        %1363 = vmatpush1.msra.mxu0 0.0
        %1364 = vmatprep.subr.mxu0 0.0
        %1365 = vmatpush1.msra.mxu0 0.0
        %1366 = vmatprep.subr.mxu0 0.0
        %1367 = vmatpush1.msra.mxu0 0.0
        %1368 = vmatprep.subr.mxu0 0.0
        %1369 = vmatpush1.msra.mxu0 0.0
        %1370 = vmatprep.subr.mxu0 0.0
        %1371 = vmatpush1.msra.mxu0 0.0
        %1372 = vmatprep.subr.mxu0 0.0
        %1373 = vmatpush1.msra.mxu0 0.0
        %1374 = vmatprep.subr.mxu0 0.0
        %1375 = vmatpush1.msra.mxu0 0.0
        %1376 = vmatprep.subr.mxu0 0.0
        %1377 = vmatpush1.msra.mxu0 0.0
        %1378 = vmatprep.subr.mxu0 0.0
        %1379 = vmatpush1.msra.mxu0 0.0
        %1380 = vmatprep.subr.mxu0 0.0
        %1381 = vmatpush1.msra.mxu0 0.0
        %1382 = vmatprep.subr.mxu0 0.0
        %1383 = vmatpush1.msra.mxu0 0.0
        %1384 = vmatprep.mubr.f32.mxu0 0.0
        %1385 = vmatmul.mubr.f32.gmra.mrb[0].mxu0 %v1314
        %v1386 = vpop.f32.mrb[0].mxu0
        %v1387 = vadd.f32 0.0, %v1386
        %v1388 = vpop.f32.mrb[0].mxu0
        %1389 = vdwg.mxu0
        %v1390 = vlaneseq
        %v1391 = vshrl.u32 %v1390, 7
        %v1392 = vlaneseq
        %v1393 = vand.u32 %v1392, 127
        %vm1394 = vcmp.eq.s32.totalorder %v1391, %v1393
        %v1395 = vsel %vm1394, 1, 0
        %v1396 = vcvt.s32.f32 %v1395
        %v1397 = vmul.f32 %v818, %v818
        %vm1398 = vcmask 27648
        %v1399 = vsel %vm1398, %v1397, 0.0
        %1400 = vadd.xlane.f32.xlu0 %v1399
        %v1401 = vpop.xlane.xlu0 %1400
        %v1402 = vrot.slane %v1401, 4
        %v1403 = vadd.f32 %v1401, %v1402
        %v1404 = vrot.slane %v1403, 2
        %v1405 = vadd.f32 %v1403, %v1404
        %v1406 = vrot.slane %v1405, 1
        %v1407 = vadd.f32 %v1405, %v1406
        %s1408 = vtos %v1407
        %v1409 = vstv %s1408
        %v1410 = vmul.f32 %v1272, %v1396
        %v1411 = vsel %vm1279, %v1410, 0.0
        %1412 = vadd.xlane.f32.xlu0 %v1411
        %v1413 = vpop.xlane.xlu0 %1412
        %v1414 = vrot.slane %v1413, 4
        %v1415 = vadd.f32 %v1413, %v1414
        %v1416 = vrot.slane %v1415, 2
        %v1417 = vadd.f32 %v1415, %v1416
        %v1418 = vrot.slane %v1417, 1
        %v1419 = vadd.f32 %v1417, %v1418
        %s1420 = vtos %v1419
        %v1421 = vstv %s1420
        %v1422 = vmul.f32 %v1387, %v1387
        %v1423 = vsel %vm1279, %v1422, 0.0
        %1424 = vadd.xlane.f32.xlu0 %v1423
        %v1425 = vpop.xlane.xlu0 %1424
        %v1426 = vrot.slane %v1425, 4
        %v1427 = vadd.f32 %v1425, %v1426
        %v1428 = vrot.slane %v1427, 2
        %v1429 = vadd.f32 %v1427, %v1428
        %v1430 = vrot.slane %v1429, 1
        %v1431 = vadd.f32 %v1429, %v1430
        %s1432 = vtos %v1431
        %v1433 = vstv %s1432
        %v1434 = vmul.f32 %v1421, 2.0
        %v1435 = vsub.f32 %v1409, %v1434
        %v1436 = vadd.f32 %v1435, %v1433
        %vm1437 = vcmask 0
        %1438 = vst.msk [vmem:[%s809] sm:$0x1] %vm1437, %v1436
        %v1439 = vsub.f32 0.0, %v1125
        %v1440 = vadd.f32 %v1125, 1e-15
        %v1441 = vlog2.pop %v1440
        %v1442 = vmul.f32 %v1441, 0.6931472
        %v1443 = vmul.f32 %v1439, %v1442
        %v1444 = vsel %vm1114, %v1443, 0.0
        %1445 = vadd.xlane.f32.xlu0 %v1444
        %v1446 = vpop.xlane.xlu0 %1445
        %v1447 = vrot.slane %v1446, 4
        %v1448 = vadd.f32 %v1446, %v1447
        %v1449 = vrot.slane %v1448, 2
        %v1450 = vadd.f32 %v1448, %v1449
        %v1451 = vrot.slane %v1450, 1
        %v1452 = vadd.f32 %v1450, %v1451
        %s1453 = vtos %v1452
        %v1454 = vstv %s1453
        %1455 = vst.msk [vmem:[%s815] sm:$0x1] %vm1437, %v1454
        %v1456 = vsel %vm1277, %v1185, 0.0
        %v1457 = vrot.slane %v1456, 4
        %v1458 = vadd.f32 %v1456, %v1457
        %v1459 = vrot.slane %v1458, 2
        %v1460 = vadd.f32 %v1458, %v1459
        %v1461 = vrot.slane %v1460, 1
        %v1462 = vadd.f32 %v1460, %v1461
        %v1463 = vld [vmem:[#allocation22] sm:$0x1]
        %v1464 = vmul.f32 %v1462, %v1463
        %v1465 = vld [vmem:[#allocation23] sm:$0x1]
        %v1466 = vadd.f32 %v1464, %v1465
        %v1467 = vmax.f32 %v1466, 0.0
        %vm1468 = vcmask 253952
        %1469 = vst.msk [vmem:[%s803] sm:$0x1] %vm1468, %v1467
        %s1470 = sand.u32 %s363, 1
        %s1471 = scalar_lea.sflag [#allocation4], %s1470
        %s1472 = sand.u32 %s363, 1
        %s1473 = smul.addr %s1472, 2
        %s1474 = scalar_lea.vmem [#allocation25], %s1473
        %s1475 = sand.u32 %s51, 1
        %s1476 = scalar_lea.sflag [#allocation27], %s1475
        %s1477 = sand.u32 %s389, 1
        %s1478 = smul.addr %s1477, 2
        %s1479 = scalar_lea.vmem [#allocation26], %s1478
        %s1480 = sand.u32 %s51, 1
        %s1481 = scalar_lea.sflag [#allocation27], %s1480
        %s1482 = sand.u32 %s415, 1
        %s1483 = scalar_lea.vmem [#allocation28], %s1482
        %s1484 = sand.u32 %s51, 1
        %s1485 = scalar_lea.sflag [#allocation30], %s1484
        %s1486 = sand.u32 %s441, 1
        %s1487 = scalar_lea.vmem [#allocation29], %s1486
        %s1488 = sand.u32 %s51, 1
        %s1489 = scalar_lea.sflag [#allocation30], %s1488
        %s1490 = sand.u32 %s467, 1
        %s1491 = scalar_lea.vmem [#allocation31], %s1490
        // Predicated region
        $region133: #{densepool_forward.8} parent=75 // pred_check
          %p1492 = pneg %p373
        $region134: #{densepool_forward.8} parent=75 // pred_check_branch
          %1494 = sbr.rel (%p1492) target = $region136
        $region135: #{densepool_forward.8} parent=75 // pred_region
          %s1496 = ssub.s32 32, 32
          %1497 = vsyncadd %s1471, %s1496
          %s1498 = smul.addr %s51, 32
          %s1499 = scalar_lea.hbm %s14, %s1498
          %s1501 = sshll.u32 %s1474, 4
          %s1502 = int_to_ptr.vmem [resolvable:$true] %s1501
          %1504 = dma.vmem_to_hbm [thread:$0]  %s1502, 32, %s1499, %s1471
        $region136: #{densepool_forward.8} parent=75 // pred_fallthru
          _
        // Predicated region
        $region137: #{densepool_forward.8} parent=75 // pred_check
          %p1505 = pneg %p399
        $region138: #{densepool_forward.8} parent=75 // pred_check_branch
          %1507 = sbr.rel (%p1505) target = $region140
        $region139: #{densepool_forward.8} parent=75 // pred_region
          %s1509 = ssub.s32 32, 32
          %1510 = vsyncadd %s1476, %s1509
          %s1511 = smul.addr %s51, 32
          %s1512 = scalar_lea.hbm %s15, %s1511
          %s1514 = sshll.u32 %s1479, 4
          %s1515 = int_to_ptr.vmem [resolvable:$true] %s1514
          %1517 = dma.vmem_to_hbm [thread:$0]  %s1515, 32, %s1512, %s1476
        $region140: #{densepool_forward.8} parent=75 // pred_fallthru
          _
        // Predicated region
        $region141: #{densepool_forward.8} parent=75 // pred_check
          %p1518 = pneg %p425
        $region142: #{densepool_forward.8} parent=75 // pred_check_branch
          %1520 = sbr.rel (%p1518) target = $region144
        $region143: #{densepool_forward.8} parent=75 // pred_region
          %s1522 = ssub.s32 16, 16
          %1523 = vsyncadd %s1481, %s1522
          %s1524 = smul.addr %s51, 16
          %s1525 = scalar_lea.hbm %s16, %s1524
          %s1527 = sshll.u32 %s1483, 4
          %s1528 = int_to_ptr.vmem [resolvable:$true] %s1527
          %1530 = dma.vmem_to_hbm [thread:$0]  %s1528, 16, %s1525, %s1481
        $region144: #{densepool_forward.8} parent=75 // pred_fallthru
          _
        // Predicated region
        $region145: #{densepool_forward.8} parent=75 // pred_check
          %p1531 = pneg %p451
        $region146: #{densepool_forward.8} parent=75 // pred_check_branch
          %1533 = sbr.rel (%p1531) target = $region148
        $region147: #{densepool_forward.8} parent=75 // pred_region
          %s1535 = ssub.s32 16, 16
          %1536 = vsyncadd %s1485, %s1535
          %s1537 = smul.addr %s51, 16
          %s1538 = scalar_lea.hbm %s17, %s1537
          %s1540 = sshll.u32 %s1487, 4
          %s1541 = int_to_ptr.vmem [resolvable:$true] %s1540
          %1543 = dma.vmem_to_hbm [thread:$0]  %s1541, 16, %s1538, %s1485
        $region148: #{densepool_forward.8} parent=75 // pred_fallthru
          _
        // Predicated region
        $region149: #{densepool_forward.8} parent=75 // pred_check
          %p1544 = pneg %p477
        $region150: #{densepool_forward.8} parent=75 // pred_check_branch
          %1546 = sbr.rel (%p1544) target = $region152
        $region151: #{densepool_forward.8} parent=75 // pred_region
          %s1548 = ssub.s32 16, 16
          %1549 = vsyncadd %s1489, %s1548
          %s1550 = smul.addr %s51, 16
          %s1551 = scalar_lea.hbm %s18, %s1550
          %s1553 = sshll.u32 %s1491, 4
          %s1554 = int_to_ptr.vmem [resolvable:$true] %s1553
          %1556 = dma.vmem_to_hbm [thread:$0]  %s1554, 16, %s1551, %s1489
        $region152: #{densepool_forward.8} parent=75 // pred_fallthru
          _
      $region76: #{densepool_forward.8} parent=5 // pred_fallthru
        _
      %p1557 = scmp.le.s32.totalorder 2, %s46
      // Predicated region
      $region153: #{densepool_forward.8} parent=5 // pred_check
        %p1558 = pneg %p1557
      $region154: #{densepool_forward.8} parent=5 // pred_check_branch
        %1560 = sbr.rel (%p1558) target = $region156
      $region155: #{densepool_forward.8} parent=5 // pred_region
        %s1561 = ssub.s32 %s46, 2
        // Predicated region
        $region157: #{densepool_forward.8} parent=155 // pred_check
          %p1562 = pneg %p379
        $region158: #{densepool_forward.8} parent=155 // pred_check_branch
          %1564 = sbr.rel (%p1562) target = $region160
        $region159: #{densepool_forward.8} parent=155 // pred_region
          %s1565 = sand.u32 %s364, 1
          %s1566 = scalar_lea.sflag [#allocation4], %s1565
          %s1567 = sand.u32 %s364, 1
          %s1568 = smul.addr %s1567, 2
          %s1569 = scalar_lea.vmem [#allocation25], %s1568
          %1570 = dma.done %s1566, 32
        $region160: #{densepool_forward.8} parent=155 // pred_fallthru
          _
        // Predicated region
        $region161: #{densepool_forward.8} parent=155 // pred_check
          %p1571 = pneg %p405
        $region162: #{densepool_forward.8} parent=155 // pred_check_branch
          %1573 = sbr.rel (%p1571) target = $region164
        $region163: #{densepool_forward.8} parent=155 // pred_region
          %s1574 = sand.u32 %s52, 1
          %s1575 = scalar_lea.sflag [#allocation27], %s1574
          %s1576 = sand.u32 %s390, 1
          %s1577 = smul.addr %s1576, 2
          %s1578 = scalar_lea.vmem [#allocation26], %s1577
          %1579 = dma.done %s1575, 32
        $region164: #{densepool_forward.8} parent=155 // pred_fallthru
          _
        // Predicated region
        $region165: #{densepool_forward.8} parent=155 // pred_check
          %p1580 = pneg %p431
        $region166: #{densepool_forward.8} parent=155 // pred_check_branch
          %1582 = sbr.rel (%p1580) target = $region168
        $region167: #{densepool_forward.8} parent=155 // pred_region
          %s1583 = sand.u32 %s52, 1
          %s1584 = scalar_lea.sflag [#allocation27], %s1583
          %s1585 = sand.u32 %s416, 1
          %s1586 = scalar_lea.vmem [#allocation28], %s1585
          %1587 = dma.done %s1584, 16
        $region168: #{densepool_forward.8} parent=155 // pred_fallthru
          _
        // Predicated region
        $region169: #{densepool_forward.8} parent=155 // pred_check
          %p1588 = pneg %p457
        $region170: #{densepool_forward.8} parent=155 // pred_check_branch
          %1590 = sbr.rel (%p1588) target = $region172
        $region171: #{densepool_forward.8} parent=155 // pred_region
          %s1591 = sand.u32 %s52, 1
          %s1592 = scalar_lea.sflag [#allocation30], %s1591
          %s1593 = sand.u32 %s442, 1
          %s1594 = scalar_lea.vmem [#allocation29], %s1593
          %1595 = dma.done %s1592, 16
        $region172: #{densepool_forward.8} parent=155 // pred_fallthru
          _
        // Predicated region
        $region173: #{densepool_forward.8} parent=155 // pred_check
          %p1596 = pneg %p483
        $region174: #{densepool_forward.8} parent=155 // pred_check_branch
          %1598 = sbr.rel (%p1596) target = $region176
        $region175: #{densepool_forward.8} parent=155 // pred_region
          %s1599 = sand.u32 %s52, 1
          %s1600 = scalar_lea.sflag [#allocation30], %s1599
          %s1601 = sand.u32 %s468, 1
          %s1602 = scalar_lea.vmem [#allocation31], %s1601
          %1603 = dma.done %s1600, 16
        $region176: #{densepool_forward.8} parent=155 // pred_fallthru
          _
      $region156: #{densepool_forward.8} parent=5 // pred_fallthru
        _
    $region6: #{densepool_forward.8} parent=1 // loop_footer
      %s50 = sadd.s32 1, %s46
    $region7: #{densepool_forward.8} parent=1 // loop_footer_branch
      %45 = sbr.rel target = $region3
    $region8: #{densepool_forward.8} parent=1 // loop_exit
      _
    %1604 = vsyncpa [#allocation3], 1
    %s1605 = scalar_lea.sflag [#allocation3], 1
    %1606 = vsyncpa %s1605, 1
    %1607 = vsyncpa [#allocation6], 1
    %s1608 = scalar_lea.sflag [#allocation6], 1
    %1609 = vsyncpa %s1608, 1
    %1610 = vsyncpa [#allocation9], 1
    %1611 = vsyncpa [#allocation12], 1
    %1612 = vsyncpa [#allocation15], 1
    %1613 = vsyncpa [#allocation18], 1
    %1614 = vsyncpa [#allocation21], 1
    %1615 = vsyncpa [#allocation24], 1
    %1616 = vsyncpa [#allocation4], 1
    %s1617 = scalar_lea.sflag [#allocation4], 1
    %1618 = vsyncpa %s1617, 1
    %1619 = vsyncpa [#allocation27], 1
    %s1620 = scalar_lea.sflag [#allocation27], 1
    %1621 = vsyncpa %s1620, 1
    %1622 = vsyncpa [#allocation30], 1
    %s1623 = scalar_lea.sflag [#allocation30], 1
    %1624 = vsyncpa %s1623, 1

// kernel: densepool_forward.7
$region0: #{densepool_forward.7}
  #allocation0 [shape = 'u32[]', space=smem, size = 0x4, offset = 0x4, fixed_abs, tag = 'smem constant byte address 0x4 - core index']
  #allocation1 [shape = 'u32[144,128]{1,0:T(1,128)}', space=vmem, size = 0x12000, scoped, tag = 'internal scratch']
  %s0 = inlined_call_operand.hbm [shape: f32[2,8,32], index: 0, kind: input, shape index: {}]
  %s1 = inlined_call_operand.hbm [shape: f32[2,8,8], index: 1, kind: input, shape index: {}]
  %s2 = inlined_call_operand.hbm [shape: f32[32,4], index: 2, kind: input, shape index: {}]
  %s3 = inlined_call_operand.hbm [shape: f32[1,4], index: 3, kind: input, shape index: {}]
  %s4 = inlined_call_operand.hbm [shape: f32[4,4], index: 4, kind: input, shape index: {}]
  %s5 = inlined_call_operand.hbm [shape: f32[1,4], index: 5, kind: input, shape index: {}]
  %s6 = inlined_call_operand.hbm [shape: f32[32,32], index: 6, kind: input, shape index: {}]
  %s7 = inlined_call_operand.hbm [shape: f32[1,32], index: 7, kind: input, shape index: {}]
  %s8 = inlined_call_operand.hbm [shape: f32[32,32], index: 8, kind: input, shape index: {}]
  %s9 = inlined_call_operand.hbm [shape: f32[1,32], index: 9, kind: input, shape index: {}]
  %s10 = inlined_call_operand.hbm [shape: f32[1,32], index: 10, kind: input, shape index: {}]
  %s11 = inlined_call_operand.hbm [shape: f32[1,32], index: 11, kind: input, shape index: {}]
  %s12 = inlined_call_operand.hbm [shape: f32[1,32], index: 12, kind: input, shape index: {}]
  %s13 = inlined_call_operand.hbm [shape: f32[1,32], index: 13, kind: input, shape index: {}]
  %s14 = inlined_call_operand.hbm [shape: f32[2,4,32], index: 14, kind: output, shape index: {0}]
  %s15 = inlined_call_operand.hbm [shape: f32[2,4,4], index: 15, kind: output, shape index: {1}]
  %s16 = inlined_call_operand.hbm [shape: f32[2,1,32], index: 16, kind: output, shape index: {2}]
  %s17 = inlined_call_operand.hbm [shape: f32[2,1,1], index: 17, kind: output, shape index: {3}]
  %s18 = inlined_call_operand.hbm [shape: f32[2,1,1], index: 18, kind: output, shape index: {4}]
  %19 = xla_tuple %s14, %s15, %s16, %s17, %s18
  %s20 = sld [smem:[#allocation0]]
  $region177: #{densepool_forward.7} parent=0
    _
  %s22 = ssub.s32 1, %s20
  %s23 = scalar_select 0, %s22, %s20
  $region1: #{densepool_forward.7} parent=0
    #allocation2 [shape = 'u8[8192]{0}', space=vmem, size = 0x2000, scoped, tag = 'input window, operand 0']
    #allocation3 [shape = 's32[2]{0}', space=sflag, size = 0x8, scoped, tag = 'scoped memory for densepool_forward.7']
    #allocation4 [shape = 's32[2]{0}', space=sflag, size = 0x8, scoped, tag = 'scoped memory for densepool_forward.7']
    #allocation5 [shape = 'u8[8192]{0}', space=vmem, size = 0x2000, scoped, tag = 'input window, operand 1']
    #allocation6 [shape = 's32[2]{0}', space=sflag, size = 0x8, scoped, tag = 'scoped memory for densepool_forward.7']
    #allocation7 [shape = 'u8[16384]{0}', space=vmem, size = 0x4000, scoped, tag = 'input window, operand 2, single buffered']
    #allocation8 [shape = 'u8[512]{0}', space=vmem, size = 0x400, scoped, tag = 'input window, operand 3, single buffered']
    #allocation9 [shape = 's32[1]{0}', space=sflag, size = 0x4, scoped, tag = 'scoped memory for densepool_forward.7']
    #allocation10 [shape = 'u8[2048]{0}', space=vmem, size = 0x800, scoped, tag = 'input window, operand 4, single buffered']
    #allocation11 [shape = 'u8[512]{0}', space=vmem, size = 0x400, scoped, tag = 'input window, operand 5, single buffered']
    #allocation12 [shape = 's32[1]{0}', space=sflag, size = 0x4, scoped, tag = 'scoped memory for densepool_forward.7']
    #allocation13 [shape = 'u8[16384]{0}', space=vmem, size = 0x4000, scoped, tag = 'input window, operand 6, single buffered']
    #allocation14 [shape = 'u8[512]{0}', space=vmem, size = 0x400, scoped, tag = 'input window, operand 7, single buffered']
    #allocation15 [shape = 's32[1]{0}', space=sflag, size = 0x4, scoped, tag = 'scoped memory for densepool_forward.7']
    #allocation16 [shape = 'u8[16384]{0}', space=vmem, size = 0x4000, scoped, tag = 'input window, operand 8, single buffered']
    #allocation17 [shape = 'u8[512]{0}', space=vmem, size = 0x400, scoped, tag = 'input window, operand 9, single buffered']
    #allocation18 [shape = 's32[1]{0}', space=sflag, size = 0x4, scoped, tag = 'scoped memory for densepool_forward.7']
    #allocation19 [shape = 'u8[512]{0}', space=vmem, size = 0x400, scoped, tag = 'input window, operand 10, single buffered']
    #allocation20 [shape = 'u8[512]{0}', space=vmem, size = 0x400, scoped, tag = 'input window, operand 11, single buffered']
    #allocation21 [shape = 's32[1]{0}', space=sflag, size = 0x4, scoped, tag = 'scoped memory for densepool_forward.7']
    #allocation22 [shape = 'u8[512]{0}', space=vmem, size = 0x400, scoped, tag = 'input window, operand 12, single buffered']
    #allocation23 [shape = 'u8[512]{0}', space=vmem, size = 0x400, scoped, tag = 'input window, operand 13, single buffered']
    #allocation24 [shape = 's32[1]{0}', space=sflag, size = 0x4, scoped, tag = 'scoped memory for densepool_forward.7']
    #allocation25 [shape = 'u8[4096]{0}', space=vmem, size = 0x1000, scoped, tag = 'output window, operand 0']
    #allocation26 [shape = 'u8[4096]{0}', space=vmem, size = 0x1000, scoped, tag = 'output window, operand 1']
    #allocation27 [shape = 's32[2]{0}', space=sflag, size = 0x8, scoped, tag = 'scoped memory for densepool_forward.7']
    #allocation28 [shape = 'u8[1024]{0}', space=vmem, size = 0x400, scoped, tag = 'output window, operand 2']
    #allocation29 [shape = 'u8[1024]{0}', space=vmem, size = 0x400, scoped, tag = 'output window, operand 3']
    #allocation30 [shape = 's32[2]{0}', space=sflag, size = 0x8, scoped, tag = 'scoped memory for densepool_forward.7']
    #allocation31 [shape = 'u8[1024]{0}', space=vmem, size = 0x400, scoped, tag = 'output window, operand 4']
    %24 = vsyncpa [#allocation3], 0
    %s25 = scalar_lea.sflag [#allocation3], 1
    %26 = vsyncpa %s25, 0
    %27 = vsyncpa [#allocation6], 0
    %s28 = scalar_lea.sflag [#allocation6], 1
    %29 = vsyncpa %s28, 0
    %30 = vsyncpa [#allocation9], 0
    %31 = vsyncpa [#allocation12], 0
    %32 = vsyncpa [#allocation15], 0
    %33 = vsyncpa [#allocation18], 0
    %34 = vsyncpa [#allocation21], 0
    %35 = vsyncpa [#allocation24], 0
    %36 = vsyncpa [#allocation4], 0
    %s37 = scalar_lea.sflag [#allocation4], 1
    %38 = vsyncpa %s37, 0
    %39 = vsyncpa [#allocation27], 0
    %s40 = scalar_lea.sflag [#allocation27], 1
    %41 = vsyncpa %s40, 0
    %42 = vsyncpa [#allocation30], 0
    %s43 = scalar_lea.sflag [#allocation30], 1
    %44 = vsyncpa %s43, 0
    loop: start=0, step=1, limit=4
    $region2: #{densepool_forward.7} parent=1 // loop_pre_header
      _
    $region3: #{densepool_forward.7} parent=1 // loop_header
      %s46 = sphi 0, %s50
      %p47 = scmp.ge.s32.totalorder %s46, 4
      %s56 = sphi 0, %s58
      %s59 = sphi 0, %s56
      %s60 = sphi 0, %s59
      %s76 = sphi 0, %s60
      %s82 = sphi 0, %s84
      %s85 = sphi 0, %s82
      %s86 = sphi 0, %s85
      %s102 = sphi 0, %s86
      %s106 = sphi 0, %s106
      %s108 = sphi 0, %s106
      %s109 = sphi 0, %s108
      %s123 = sphi 0, %s109
      %s127 = sphi 0, %s127
      %s129 = sphi 0, %s127
      %s130 = sphi 0, %s129
      %s144 = sphi 0, %s130
      %s148 = sphi 0, %s148
      %s150 = sphi 0, %s148
      %s151 = sphi 0, %s150
      %s165 = sphi 0, %s151
      %s169 = sphi 0, %s169
      %s171 = sphi 0, %s169
      %s172 = sphi 0, %s171
      %s186 = sphi 0, %s172
      %s190 = sphi 0, %s190
      %s192 = sphi 0, %s190
      %s193 = sphi 0, %s192
      %s207 = sphi 0, %s193
      %s211 = sphi 0, %s211
      %s213 = sphi 0, %s211
      %s214 = sphi 0, %s213
      %s228 = sphi 0, %s214
      %s232 = sphi 0, %s232
      %s234 = sphi 0, %s232
      %s235 = sphi 0, %s234
      %s249 = sphi 0, %s235
      %s253 = sphi 0, %s253
      %s255 = sphi 0, %s253
      %s256 = sphi 0, %s255
      %s270 = sphi 0, %s256
      %s274 = sphi 0, %s274
      %s276 = sphi 0, %s274
      %s277 = sphi 0, %s276
      %s291 = sphi 0, %s277
      %s295 = sphi 0, %s295
      %s297 = sphi 0, %s295
      %s298 = sphi 0, %s297
      %s312 = sphi 0, %s298
      %s316 = sphi 0, %s316
      %s318 = sphi 0, %s316
      %s319 = sphi 0, %s318
      %s333 = sphi 0, %s319
      %s337 = sphi 0, %s337
      %s339 = sphi 0, %s337
      %s340 = sphi 0, %s339
      %s354 = sphi 0, %s340
      %s360 = sphi 0, %s362
      %s363 = sphi 0, %s360
      %s364 = sphi 0, %s363
      %s380 = sphi 0, %s364
      %s386 = sphi 0, %s388
      %s389 = sphi 0, %s386
      %s390 = sphi 0, %s389
      %s406 = sphi 0, %s390
      %s412 = sphi 0, %s414
      %s415 = sphi 0, %s412
      %s416 = sphi 0, %s415
      %s432 = sphi 0, %s416
      %s438 = sphi 0, %s440
      %s441 = sphi 0, %s438
      %s442 = sphi 0, %s441
      %s458 = sphi 0, %s442
      %s464 = sphi 0, %s466
      %s467 = sphi 0, %s464
      %s468 = sphi 0, %s467
      %s484 = sphi 0, %s468
    $region4: #{densepool_forward.7} parent=1 // loop_header_branch
      %49 = sbr.rel (%p47) target = $region8
    $region5: #{densepool_forward.7} parent=1 // loop_body
      %s51 = ssub.s32 %s46, 1
      %s52 = ssub.s32 %s46, 2
      %s53 = sadd.s32 %s46, 1
      %s54 = ssub.s32 %s46, %s53
      %p55 = scmp.eq.s32.totalorder %s54, 0
      %s57 = sadd.s32 %s56, 1
      %s58 = scalar_select %p55, %s56, %s57
      %p61 = pneg %p55
      %p62 = scmp.eq.s32.totalorder %s46, 1
      %p63 = por %p61, %p62
      %p64 = scmp.ne.s32.totalorder %s56, %s59
      %p65 = scmp.eq.s32.totalorder %s46, 0
      %p66 = por %p64, %p65
      %p67 = scmp.ne.s32.totalorder %s56, %s59
      %p68 = scmp.eq.s32.totalorder %s51, 1
      %p69 = por %p67, %p68
      %p70 = scmp.ne.s32.totalorder %s59, %s60
      %p71 = scmp.eq.s32.totalorder %s51, 0
      %p72 = por %p70, %p71
      %p73 = scmp.ne.s32.totalorder %s59, %s60
      %p74 = scmp.eq.s32.totalorder %s52, 1
      %p75 = por %p73, %p74
      %p77 = scmp.ne.s32.totalorder %s60, %s76
      %p78 = scmp.eq.s32.totalorder %s52, 0
      %p79 = por %p77, %p78
      %s80 = ssub.s32 %s46, %s53
      %p81 = scmp.eq.s32.totalorder %s80, 0
      %s83 = sadd.s32 %s82, 1
      %s84 = scalar_select %p81, %s82, %s83
      %p87 = pneg %p81
      %p88 = scmp.eq.s32.totalorder %s46, 1
      %p89 = por %p87, %p88
      %p90 = scmp.ne.s32.totalorder %s82, %s85
      %p91 = scmp.eq.s32.totalorder %s46, 0
      %p92 = por %p90, %p91
      %p93 = scmp.ne.s32.totalorder %s82, %s85
      %p94 = scmp.eq.s32.totalorder %s51, 1
      %p95 = por %p93, %p94
      %p96 = scmp.ne.s32.totalorder %s85, %s86
      %p97 = scmp.eq.s32.totalorder %s51, 0
      %p98 = por %p96, %p97
      %p99 = scmp.ne.s32.totalorder %s85, %s86
      %p100 = scmp.eq.s32.totalorder %s52, 1
      %p101 = por %p99, %p100
      %p103 = scmp.ne.s32.totalorder %s86, %s102
      %p104 = scmp.eq.s32.totalorder %s52, 0
      %p105 = por %p103, %p104
      %s107 = sadd.s32 %s106, 1
      %p110 = scmp.eq.s32.totalorder %s46, 1
      %p111 = scmp.ne.s32.totalorder %s106, %s108
      %p112 = scmp.eq.s32.totalorder %s46, 0
      %p113 = por %p111, %p112
      %p114 = scmp.ne.s32.totalorder %s106, %s108
      %p115 = scmp.eq.s32.totalorder %s51, 1
      %p116 = por %p114, %p115
      %p117 = scmp.ne.s32.totalorder %s108, %s109
      %p118 = scmp.eq.s32.totalorder %s51, 0
      %p119 = por %p117, %p118
      %p120 = scmp.ne.s32.totalorder %s108, %s109
      %p121 = scmp.eq.s32.totalorder %s52, 1
      %p122 = por %p120, %p121
      %p124 = scmp.ne.s32.totalorder %s109, %s123
      %p125 = scmp.eq.s32.totalorder %s52, 0
      %p126 = por %p124, %p125
      %s128 = sadd.s32 %s127, 1
      %p131 = scmp.eq.s32.totalorder %s46, 1
      %p132 = scmp.ne.s32.totalorder %s127, %s129
      %p133 = scmp.eq.s32.totalorder %s46, 0
      %p134 = por %p132, %p133
      %p135 = scmp.ne.s32.totalorder %s127, %s129
      %p136 = scmp.eq.s32.totalorder %s51, 1
      %p137 = por %p135, %p136
      %p138 = scmp.ne.s32.totalorder %s129, %s130
      %p139 = scmp.eq.s32.totalorder %s51, 0
      %p140 = por %p138, %p139
      %p141 = scmp.ne.s32.totalorder %s129, %s130
      %p142 = scmp.eq.s32.totalorder %s52, 1
      %p143 = por %p141, %p142
      %p145 = scmp.ne.s32.totalorder %s130, %s144
      %p146 = scmp.eq.s32.totalorder %s52, 0
      %p147 = por %p145, %p146
      %s149 = sadd.s32 %s148, 1
      %p152 = scmp.eq.s32.totalorder %s46, 1
      %p153 = scmp.ne.s32.totalorder %s148, %s150
      %p154 = scmp.eq.s32.totalorder %s46, 0
      %p155 = por %p153, %p154
      %p156 = scmp.ne.s32.totalorder %s148, %s150
      %p157 = scmp.eq.s32.totalorder %s51, 1
      %p158 = por %p156, %p157
      %p159 = scmp.ne.s32.totalorder %s150, %s151
      %p160 = scmp.eq.s32.totalorder %s51, 0
      %p161 = por %p159, %p160
      %p162 = scmp.ne.s32.totalorder %s150, %s151
      %p163 = scmp.eq.s32.totalorder %s52, 1
      %p164 = por %p162, %p163
      %p166 = scmp.ne.s32.totalorder %s151, %s165
      %p167 = scmp.eq.s32.totalorder %s52, 0
      %p168 = por %p166, %p167
      %s170 = sadd.s32 %s169, 1
      %p173 = scmp.eq.s32.totalorder %s46, 1
      %p174 = scmp.ne.s32.totalorder %s169, %s171
      %p175 = scmp.eq.s32.totalorder %s46, 0
      %p176 = por %p174, %p175
      %p177 = scmp.ne.s32.totalorder %s169, %s171
      %p178 = scmp.eq.s32.totalorder %s51, 1
      %p179 = por %p177, %p178
      %p180 = scmp.ne.s32.totalorder %s171, %s172
      %p181 = scmp.eq.s32.totalorder %s51, 0
      %p182 = por %p180, %p181
      %p183 = scmp.ne.s32.totalorder %s171, %s172
      %p184 = scmp.eq.s32.totalorder %s52, 1
      %p185 = por %p183, %p184
      %p187 = scmp.ne.s32.totalorder %s172, %s186
      %p188 = scmp.eq.s32.totalorder %s52, 0
      %p189 = por %p187, %p188
      %s191 = sadd.s32 %s190, 1
      %p194 = scmp.eq.s32.totalorder %s46, 1
      %p195 = scmp.ne.s32.totalorder %s190, %s192
      %p196 = scmp.eq.s32.totalorder %s46, 0
      %p197 = por %p195, %p196
      %p198 = scmp.ne.s32.totalorder %s190, %s192
      %p199 = scmp.eq.s32.totalorder %s51, 1
      %p200 = por %p198, %p199
      %p201 = scmp.ne.s32.totalorder %s192, %s193
      %p202 = scmp.eq.s32.totalorder %s51, 0
      %p203 = por %p201, %p202
      %p204 = scmp.ne.s32.totalorder %s192, %s193
      %p205 = scmp.eq.s32.totalorder %s52, 1
      %p206 = por %p204, %p205
      %p208 = scmp.ne.s32.totalorder %s193, %s207
      %p209 = scmp.eq.s32.totalorder %s52, 0
      %p210 = por %p208, %p209
      %s212 = sadd.s32 %s211, 1
      %p215 = scmp.eq.s32.totalorder %s46, 1
      %p216 = scmp.ne.s32.totalorder %s211, %s213
      %p217 = scmp.eq.s32.totalorder %s46, 0
      %p218 = por %p216, %p217
      %p219 = scmp.ne.s32.totalorder %s211, %s213
      %p220 = scmp.eq.s32.totalorder %s51, 1
      %p221 = por %p219, %p220
      %p222 = scmp.ne.s32.totalorder %s213, %s214
      %p223 = scmp.eq.s32.totalorder %s51, 0
      %p224 = por %p222, %p223
      %p225 = scmp.ne.s32.totalorder %s213, %s214
      %p226 = scmp.eq.s32.totalorder %s52, 1
      %p227 = por %p225, %p226
      %p229 = scmp.ne.s32.totalorder %s214, %s228
      %p230 = scmp.eq.s32.totalorder %s52, 0
      %p231 = por %p229, %p230
      %s233 = sadd.s32 %s232, 1
      %p236 = scmp.eq.s32.totalorder %s46, 1
      %p237 = scmp.ne.s32.totalorder %s232, %s234
      %p238 = scmp.eq.s32.totalorder %s46, 0
      %p239 = por %p237, %p238
      %p240 = scmp.ne.s32.totalorder %s232, %s234
      %p241 = scmp.eq.s32.totalorder %s51, 1
      %p242 = por %p240, %p241
      %p243 = scmp.ne.s32.totalorder %s234, %s235
      %p244 = scmp.eq.s32.totalorder %s51, 0
      %p245 = por %p243, %p244
      %p246 = scmp.ne.s32.totalorder %s234, %s235
      %p247 = scmp.eq.s32.totalorder %s52, 1
      %p248 = por %p246, %p247
      %p250 = scmp.ne.s32.totalorder %s235, %s249
      %p251 = scmp.eq.s32.totalorder %s52, 0
      %p252 = por %p250, %p251
      %s254 = sadd.s32 %s253, 1
      %p257 = scmp.eq.s32.totalorder %s46, 1
      %p258 = scmp.ne.s32.totalorder %s253, %s255
      %p259 = scmp.eq.s32.totalorder %s46, 0
      %p260 = por %p258, %p259
      %p261 = scmp.ne.s32.totalorder %s253, %s255
      %p262 = scmp.eq.s32.totalorder %s51, 1
      %p263 = por %p261, %p262
      %p264 = scmp.ne.s32.totalorder %s255, %s256
      %p265 = scmp.eq.s32.totalorder %s51, 0
      %p266 = por %p264, %p265
      %p267 = scmp.ne.s32.totalorder %s255, %s256
      %p268 = scmp.eq.s32.totalorder %s52, 1
      %p269 = por %p267, %p268
      %p271 = scmp.ne.s32.totalorder %s256, %s270
      %p272 = scmp.eq.s32.totalorder %s52, 0
      %p273 = por %p271, %p272
      %s275 = sadd.s32 %s274, 1
      %p278 = scmp.eq.s32.totalorder %s46, 1
      %p279 = scmp.ne.s32.totalorder %s274, %s276
      %p280 = scmp.eq.s32.totalorder %s46, 0
      %p281 = por %p279, %p280
      %p282 = scmp.ne.s32.totalorder %s274, %s276
      %p283 = scmp.eq.s32.totalorder %s51, 1
      %p284 = por %p282, %p283
      %p285 = scmp.ne.s32.totalorder %s276, %s277
      %p286 = scmp.eq.s32.totalorder %s51, 0
      %p287 = por %p285, %p286
      %p288 = scmp.ne.s32.totalorder %s276, %s277
      %p289 = scmp.eq.s32.totalorder %s52, 1
      %p290 = por %p288, %p289
      %p292 = scmp.ne.s32.totalorder %s277, %s291
      %p293 = scmp.eq.s32.totalorder %s52, 0
      %p294 = por %p292, %p293
      %s296 = sadd.s32 %s295, 1
      %p299 = scmp.eq.s32.totalorder %s46, 1
      %p300 = scmp.ne.s32.totalorder %s295, %s297
      %p301 = scmp.eq.s32.totalorder %s46, 0
      %p302 = por %p300, %p301
      %p303 = scmp.ne.s32.totalorder %s295, %s297
      %p304 = scmp.eq.s32.totalorder %s51, 1
      %p305 = por %p303, %p304
      %p306 = scmp.ne.s32.totalorder %s297, %s298
      %p307 = scmp.eq.s32.totalorder %s51, 0
      %p308 = por %p306, %p307
      %p309 = scmp.ne.s32.totalorder %s297, %s298
      %p310 = scmp.eq.s32.totalorder %s52, 1
      %p311 = por %p309, %p310
      %p313 = scmp.ne.s32.totalorder %s298, %s312
      %p314 = scmp.eq.s32.totalorder %s52, 0
      %p315 = por %p313, %p314
      %s317 = sadd.s32 %s316, 1
      %p320 = scmp.eq.s32.totalorder %s46, 1
      %p321 = scmp.ne.s32.totalorder %s316, %s318
      %p322 = scmp.eq.s32.totalorder %s46, 0
      %p323 = por %p321, %p322
      %p324 = scmp.ne.s32.totalorder %s316, %s318
      %p325 = scmp.eq.s32.totalorder %s51, 1
      %p326 = por %p324, %p325
      %p327 = scmp.ne.s32.totalorder %s318, %s319
      %p328 = scmp.eq.s32.totalorder %s51, 0
      %p329 = por %p327, %p328
      %p330 = scmp.ne.s32.totalorder %s318, %s319
      %p331 = scmp.eq.s32.totalorder %s52, 1
      %p332 = por %p330, %p331
      %p334 = scmp.ne.s32.totalorder %s319, %s333
      %p335 = scmp.eq.s32.totalorder %s52, 0
      %p336 = por %p334, %p335
      %s338 = sadd.s32 %s337, 1
      %p341 = scmp.eq.s32.totalorder %s46, 1
      %p342 = scmp.ne.s32.totalorder %s337, %s339
      %p343 = scmp.eq.s32.totalorder %s46, 0
      %p344 = por %p342, %p343
      %p345 = scmp.ne.s32.totalorder %s337, %s339
      %p346 = scmp.eq.s32.totalorder %s51, 1
      %p347 = por %p345, %p346
      %p348 = scmp.ne.s32.totalorder %s339, %s340
      %p349 = scmp.eq.s32.totalorder %s51, 0
      %p350 = por %p348, %p349
      %p351 = scmp.ne.s32.totalorder %s339, %s340
      %p352 = scmp.eq.s32.totalorder %s52, 1
      %p353 = por %p351, %p352
      %p355 = scmp.ne.s32.totalorder %s340, %s354
      %p356 = scmp.eq.s32.totalorder %s52, 0
      %p357 = por %p355, %p356
      %s358 = ssub.s32 %s46, %s53
      %p359 = scmp.eq.s32.totalorder %s358, 0
      %s361 = sadd.s32 %s360, 1
      %s362 = scalar_select %p359, %s360, %s361
      %p365 = pneg %p359
      %p366 = scmp.eq.s32.totalorder %s46, 1
      %p367 = por %p365, %p366
      %p368 = scmp.ne.s32.totalorder %s360, %s363
      %p369 = scmp.eq.s32.totalorder %s46, 0
      %p370 = por %p368, %p369
      %p371 = scmp.ne.s32.totalorder %s360, %s363
      %p372 = scmp.eq.s32.totalorder %s51, 1
      %p373 = por %p371, %p372
      %p374 = scmp.ne.s32.totalorder %s363, %s364
      %p375 = scmp.eq.s32.totalorder %s51, 0
      %p376 = por %p374, %p375
      %p377 = scmp.ne.s32.totalorder %s363, %s364
      %p378 = scmp.eq.s32.totalorder %s52, 1
      %p379 = por %p377, %p378
      %p381 = scmp.ne.s32.totalorder %s364, %s380
      %p382 = scmp.eq.s32.totalorder %s52, 0
      %p383 = por %p381, %p382
      %s384 = ssub.s32 %s46, %s53
      %p385 = scmp.eq.s32.totalorder %s384, 0
      %s387 = sadd.s32 %s386, 1
      %s388 = scalar_select %p385, %s386, %s387
      %p391 = pneg %p385
      %p392 = scmp.eq.s32.totalorder %s46, 1
      %p393 = por %p391, %p392
      %p394 = scmp.ne.s32.totalorder %s386, %s389
      %p395 = scmp.eq.s32.totalorder %s46, 0
      %p396 = por %p394, %p395
      %p397 = scmp.ne.s32.totalorder %s386, %s389
      %p398 = scmp.eq.s32.totalorder %s51, 1
      %p399 = por %p397, %p398
      %p400 = scmp.ne.s32.totalorder %s389, %s390
      %p401 = scmp.eq.s32.totalorder %s51, 0
      %p402 = por %p400, %p401
      %p403 = scmp.ne.s32.totalorder %s389, %s390
      %p404 = scmp.eq.s32.totalorder %s52, 1
      %p405 = por %p403, %p404
      %p407 = scmp.ne.s32.totalorder %s390, %s406
      %p408 = scmp.eq.s32.totalorder %s52, 0
      %p409 = por %p407, %p408
      %s410 = ssub.s32 %s46, %s53
      %p411 = scmp.eq.s32.totalorder %s410, 0
      %s413 = sadd.s32 %s412, 1
      %s414 = scalar_select %p411, %s412, %s413
      %p417 = pneg %p411
      %p418 = scmp.eq.s32.totalorder %s46, 1
      %p419 = por %p417, %p418
      %p420 = scmp.ne.s32.totalorder %s412, %s415
      %p421 = scmp.eq.s32.totalorder %s46, 0
      %p422 = por %p420, %p421
      %p423 = scmp.ne.s32.totalorder %s412, %s415
      %p424 = scmp.eq.s32.totalorder %s51, 1
      %p425 = por %p423, %p424
      %p426 = scmp.ne.s32.totalorder %s415, %s416
      %p427 = scmp.eq.s32.totalorder %s51, 0
      %p428 = por %p426, %p427
      %p429 = scmp.ne.s32.totalorder %s415, %s416
      %p430 = scmp.eq.s32.totalorder %s52, 1
      %p431 = por %p429, %p430
      %p433 = scmp.ne.s32.totalorder %s416, %s432
      %p434 = scmp.eq.s32.totalorder %s52, 0
      %p435 = por %p433, %p434
      %s436 = ssub.s32 %s46, %s53
      %p437 = scmp.eq.s32.totalorder %s436, 0
      %s439 = sadd.s32 %s438, 1
      %s440 = scalar_select %p437, %s438, %s439
      %p443 = pneg %p437
      %p444 = scmp.eq.s32.totalorder %s46, 1
      %p445 = por %p443, %p444
      %p446 = scmp.ne.s32.totalorder %s438, %s441
      %p447 = scmp.eq.s32.totalorder %s46, 0
      %p448 = por %p446, %p447
      %p449 = scmp.ne.s32.totalorder %s438, %s441
      %p450 = scmp.eq.s32.totalorder %s51, 1
      %p451 = por %p449, %p450
      %p452 = scmp.ne.s32.totalorder %s441, %s442
      %p453 = scmp.eq.s32.totalorder %s51, 0
      %p454 = por %p452, %p453
      %p455 = scmp.ne.s32.totalorder %s441, %s442
      %p456 = scmp.eq.s32.totalorder %s52, 1
      %p457 = por %p455, %p456
      %p459 = scmp.ne.s32.totalorder %s442, %s458
      %p460 = scmp.eq.s32.totalorder %s52, 0
      %p461 = por %p459, %p460
      %s462 = ssub.s32 %s46, %s53
      %p463 = scmp.eq.s32.totalorder %s462, 0
      %s465 = sadd.s32 %s464, 1
      %s466 = scalar_select %p463, %s464, %s465
      %p469 = pneg %p463
      %p470 = scmp.eq.s32.totalorder %s46, 1
      %p471 = por %p469, %p470
      %p472 = scmp.ne.s32.totalorder %s464, %s467
      %p473 = scmp.eq.s32.totalorder %s46, 0
      %p474 = por %p472, %p473
      %p475 = scmp.ne.s32.totalorder %s464, %s467
      %p476 = scmp.eq.s32.totalorder %s51, 1
      %p477 = por %p475, %p476
      %p478 = scmp.ne.s32.totalorder %s467, %s468
      %p479 = scmp.eq.s32.totalorder %s51, 0
      %p480 = por %p478, %p479
      %p481 = scmp.ne.s32.totalorder %s467, %s468
      %p482 = scmp.eq.s32.totalorder %s52, 1
      %p483 = por %p481, %p482
      %p485 = scmp.ne.s32.totalorder %s468, %s484
      %p486 = scmp.eq.s32.totalorder %s52, 0
      %p487 = por %p485, %p486
      %p488 = scmp.le.s32.totalorder 1, %s46
      %p489 = scmp.lt.s32.totalorder %s46, 3
      %p490 = pnand %p488, %p489
      %p491 = pneg %p490
      // Predicated region
      $region9: #{densepool_forward.7} parent=5 // pred_check
        _
      $region10: #{densepool_forward.7} parent=5 // pred_check_branch
        %493 = sbr.rel (%p490) target = $region12
      $region11: #{densepool_forward.7} parent=5 // pred_region
        %s494 = ssub.s32 %s46, 1
        // Predicated region
        $region13: #{densepool_forward.7} parent=11 // pred_check
          %p495 = pneg %p119
        $region14: #{densepool_forward.7} parent=11 // pred_check_branch
          %497 = sbr.rel (%p495) target = $region16
        $region15: #{densepool_forward.7} parent=11 // pred_region
          %s499 = ssub.s32 512, 512
          %500 = vsyncadd [#allocation6], %s499
          %s501 = sshll.u32 [#allocation7], 4
          %s502 = int_to_ptr.vmem [resolvable:$true] %s501
          %507 = dma.hbm_to_vmem [thread:$0]  %s2, 512, %s502, [#allocation6], 128, 128, 8
        $region16: #{densepool_forward.7} parent=11 // pred_fallthru
          _
        // Predicated region
        $region17: #{densepool_forward.7} parent=11 // pred_check
          %p508 = pneg %p140
        $region18: #{densepool_forward.7} parent=11 // pred_check_branch
          %510 = sbr.rel (%p508) target = $region20
        $region19: #{densepool_forward.7} parent=11 // pred_region
          %s512 = ssub.s32 16, 16
          %513 = vsyncadd [#allocation9], %s512
          %s515 = sshll.u32 [#allocation8], 4
          %s516 = int_to_ptr.vmem [resolvable:$true] %s515
          %518 = dma.hbm_to_vmem [thread:$0]  %s3, 16, %s516, [#allocation9]
        $region20: #{densepool_forward.7} parent=11 // pred_fallthru
          _
        // Predicated region
        $region21: #{densepool_forward.7} parent=11 // pred_check
          %p519 = pneg %p161
        $region22: #{densepool_forward.7} parent=11 // pred_check_branch
          %521 = sbr.rel (%p519) target = $region24
        $region23: #{densepool_forward.7} parent=11 // pred_region
          %s523 = ssub.s32 64, 64
          %524 = vsyncadd [#allocation9], %s523
          %s526 = sshll.u32 [#allocation10], 4
          %s527 = int_to_ptr.vmem [resolvable:$true] %s526
          %529 = dma.hbm_to_vmem [thread:$0]  %s4, 64, %s527, [#allocation9]
        $region24: #{densepool_forward.7} parent=11 // pred_fallthru
          _
        // Predicated region
        $region25: #{densepool_forward.7} parent=11 // pred_check
          %p530 = pneg %p182
        $region26: #{densepool_forward.7} parent=11 // pred_check_branch
          %532 = sbr.rel (%p530) target = $region28
        $region27: #{densepool_forward.7} parent=11 // pred_region
          %s534 = ssub.s32 16, 16
          %535 = vsyncadd [#allocation12], %s534
          %s537 = sshll.u32 [#allocation11], 4
          %s538 = int_to_ptr.vmem [resolvable:$true] %s537
          %540 = dma.hbm_to_vmem [thread:$0]  %s5, 16, %s538, [#allocation12]
        $region28: #{densepool_forward.7} parent=11 // pred_fallthru
          _
        // Predicated region
        $region29: #{densepool_forward.7} parent=11 // pred_check
          %p541 = pneg %p203
        $region30: #{densepool_forward.7} parent=11 // pred_check_branch
          %543 = sbr.rel (%p541) target = $region32
        $region31: #{densepool_forward.7} parent=11 // pred_region
          %s545 = ssub.s32 512, 512
          %546 = vsyncadd [#allocation12], %s545
          %s547 = sshll.u32 [#allocation13], 4
          %s548 = int_to_ptr.vmem [resolvable:$true] %s547
          %553 = dma.hbm_to_vmem [thread:$0]  %s6, 512, %s548, [#allocation12], 128, 128, 8
        $region32: #{densepool_forward.7} parent=11 // pred_fallthru
          _
        // Predicated region
        $region33: #{densepool_forward.7} parent=11 // pred_check
          %p554 = pneg %p224
        $region34: #{densepool_forward.7} parent=11 // pred_check_branch
          %556 = sbr.rel (%p554) target = $region36
        $region35: #{densepool_forward.7} parent=11 // pred_region
          %s558 = ssub.s32 16, 16
          %559 = vsyncadd [#allocation15], %s558
          %s561 = sshll.u32 [#allocation14], 4
          %s562 = int_to_ptr.vmem [resolvable:$true] %s561
          %564 = dma.hbm_to_vmem [thread:$0]  %s7, 16, %s562, [#allocation15]
        $region36: #{densepool_forward.7} parent=11 // pred_fallthru
          _
        // Predicated region
        $region37: #{densepool_forward.7} parent=11 // pred_check
          %p565 = pneg %p245
        $region38: #{densepool_forward.7} parent=11 // pred_check_branch
          %567 = sbr.rel (%p565) target = $region40
        $region39: #{densepool_forward.7} parent=11 // pred_region
          %s569 = ssub.s32 512, 512
          %570 = vsyncadd [#allocation15], %s569
          %s571 = sshll.u32 [#allocation16], 4
          %s572 = int_to_ptr.vmem [resolvable:$true] %s571
          %577 = dma.hbm_to_vmem [thread:$0]  %s8, 512, %s572, [#allocation15], 128, 128, 8
        $region40: #{densepool_forward.7} parent=11 // pred_fallthru
          _
        // Predicated region
        $region41: #{densepool_forward.7} parent=11 // pred_check
          %p578 = pneg %p266
        $region42: #{densepool_forward.7} parent=11 // pred_check_branch
          %580 = sbr.rel (%p578) target = $region44
        $region43: #{densepool_forward.7} parent=11 // pred_region
          %s582 = ssub.s32 16, 16
          %583 = vsyncadd [#allocation18], %s582
          %s585 = sshll.u32 [#allocation17], 4
          %s586 = int_to_ptr.vmem [resolvable:$true] %s585
          %588 = dma.hbm_to_vmem [thread:$0]  %s9, 16, %s586, [#allocation18]
        $region44: #{densepool_forward.7} parent=11 // pred_fallthru
          _
        // Predicated region
        $region45: #{densepool_forward.7} parent=11 // pred_check
          %p589 = pneg %p287
        $region46: #{densepool_forward.7} parent=11 // pred_check_branch
          %591 = sbr.rel (%p589) target = $region48
        $region47: #{densepool_forward.7} parent=11 // pred_region
          %s593 = ssub.s32 16, 16
          %594 = vsyncadd [#allocation18], %s593
          %s596 = sshll.u32 [#allocation19], 4
          %s597 = int_to_ptr.vmem [resolvable:$true] %s596
          %599 = dma.hbm_to_vmem [thread:$0]  %s10, 16, %s597, [#allocation18]
        $region48: #{densepool_forward.7} parent=11 // pred_fallthru
          _
        // Predicated region
        $region49: #{densepool_forward.7} parent=11 // pred_check
          %p600 = pneg %p308
        $region50: #{densepool_forward.7} parent=11 // pred_check_branch
          %602 = sbr.rel (%p600) target = $region52
        $region51: #{densepool_forward.7} parent=11 // pred_region
          %s604 = ssub.s32 16, 16
          %605 = vsyncadd [#allocation21], %s604
          %s607 = sshll.u32 [#allocation20], 4
          %s608 = int_to_ptr.vmem [resolvable:$true] %s607
          %610 = dma.hbm_to_vmem [thread:$0]  %s11, 16, %s608, [#allocation21]
        $region52: #{densepool_forward.7} parent=11 // pred_fallthru
          _
        // Predicated region
        $region53: #{densepool_forward.7} parent=11 // pred_check
          %p611 = pneg %p329
        $region54: #{densepool_forward.7} parent=11 // pred_check_branch
          %613 = sbr.rel (%p611) target = $region56
        $region55: #{densepool_forward.7} parent=11 // pred_region
          %s615 = ssub.s32 16, 16
          %616 = vsyncadd [#allocation21], %s615
          %s618 = sshll.u32 [#allocation22], 4
          %s619 = int_to_ptr.vmem [resolvable:$true] %s618
          %621 = dma.hbm_to_vmem [thread:$0]  %s12, 16, %s619, [#allocation21]
        $region56: #{densepool_forward.7} parent=11 // pred_fallthru
          _
        // Predicated region
        $region57: #{densepool_forward.7} parent=11 // pred_check
          %p622 = pneg %p350
        $region58: #{densepool_forward.7} parent=11 // pred_check_branch
          %624 = sbr.rel (%p622) target = $region60
        $region59: #{densepool_forward.7} parent=11 // pred_region
          %s626 = ssub.s32 16, 16
          %627 = vsyncadd [#allocation24], %s626
          %s629 = sshll.u32 [#allocation23], 4
          %s630 = int_to_ptr.vmem [resolvable:$true] %s629
          %632 = dma.hbm_to_vmem [thread:$0]  %s13, 16, %s630, [#allocation24]
        $region60: #{densepool_forward.7} parent=11 // pred_fallthru
          _
      $region12: #{densepool_forward.7} parent=5 // pred_fallthru
        _
      %p633 = scmp.lt.s32.totalorder %s46, 2
      // Predicated region
      $region61: #{densepool_forward.7} parent=5 // pred_check
        %p634 = pneg %p633
      $region62: #{densepool_forward.7} parent=5 // pred_check_branch
        %636 = sbr.rel (%p634) target = $region64
      $region63: #{densepool_forward.7} parent=5 // pred_region
        // Predicated region
        $region65: #{densepool_forward.7} parent=63 // pred_check
          %p637 = pneg %p66
        $region66: #{densepool_forward.7} parent=63 // pred_check_branch
          %639 = sbr.rel (%p637) target = $region68
        $region67: #{densepool_forward.7} parent=63 // pred_region
          %s640 = sand.u32 %s56, 1
          %s641 = scalar_lea.sflag [#allocation3], %s640
          %s642 = sand.u32 %s56, 1
          %s643 = smul.addr %s642, 8
          %s644 = scalar_lea.vmem [#allocation2], %s643
          %s646 = ssub.s32 128, 128
          %647 = vsyncadd %s641, %s646
          %s648 = smul.addr %s46, 128
          %s649 = scalar_lea.hbm %s0, %s648
          %s651 = sshll.u32 %s644, 4
          %s652 = int_to_ptr.vmem [resolvable:$true] %s651
          %654 = dma.hbm_to_vmem [thread:$0]  %s649, 128, %s652, %s641
        $region68: #{densepool_forward.7} parent=63 // pred_fallthru
          _
        // Predicated region
        $region69: #{densepool_forward.7} parent=63 // pred_check
          %p655 = pneg %p92
        $region70: #{densepool_forward.7} parent=63 // pred_check_branch
          %657 = sbr.rel (%p655) target = $region72
        $region71: #{densepool_forward.7} parent=63 // pred_region
          %s658 = sand.u32 %s46, 1
          %s659 = scalar_lea.sflag [#allocation6], %s658
          %s660 = sand.u32 %s82, 1
          %s661 = smul.addr %s660, 8
          %s662 = scalar_lea.vmem [#allocation5], %s661
          %s664 = ssub.s32 128, 128
          %665 = vsyncadd %s659, %s664
          %s666 = smul.addr %s46, 128
          %s667 = scalar_lea.hbm %s1, %s666
          %s669 = sshll.u32 %s662, 4
          %s670 = int_to_ptr.vmem [resolvable:$true] %s669
          %672 = dma.hbm_to_vmem [thread:$0]  %s667, 128, %s670, %s659
        $region72: #{densepool_forward.7} parent=63 // pred_fallthru
          _
      $region64: #{densepool_forward.7} parent=5 // pred_fallthru
        _
      %p673 = scmp.le.s32.totalorder 1, %s46
      %p674 = scmp.lt.s32.totalorder %s46, 3
      %p675 = pnand %p673, %p674
      %p676 = pneg %p675
      // Predicated region
      $region73: #{densepool_forward.7} parent=5 // pred_check
        _
      $region74: #{densepool_forward.7} parent=5 // pred_check_branch
        %678 = sbr.rel (%p675) target = $region76
      $region75: #{densepool_forward.7} parent=5 // pred_region
        %s679 = ssub.s32 %s46, 1
        %s680 = sand.u32 %s59, 1
        %s681 = scalar_lea.sflag [#allocation3], %s680
        %s682 = sand.u32 %s59, 1
        %s683 = smul.addr %s682, 8
        %s684 = scalar_lea.vmem [#allocation2], %s683
        // Predicated region
        $region77: #{densepool_forward.7} parent=75 // pred_check
          %p685 = pneg %p72
        $region78: #{densepool_forward.7} parent=75 // pred_check_branch
          %687 = sbr.rel (%p685) target = $region80
        $region79: #{densepool_forward.7} parent=75 // pred_region
          %688 = dma.done %s681, 128
        $region80: #{densepool_forward.7} parent=75 // pred_fallthru
          _
        %s689 = sand.u32 %s51, 1
        %s690 = scalar_lea.sflag [#allocation6], %s689
        %s691 = sand.u32 %s85, 1
        %s692 = smul.addr %s691, 8
        %s693 = scalar_lea.vmem [#allocation5], %s692
        // Predicated region
        $region81: #{densepool_forward.7} parent=75 // pred_check
          %p694 = pneg %p98
        $region82: #{densepool_forward.7} parent=75 // pred_check_branch
          %696 = sbr.rel (%p694) target = $region84
        $region83: #{densepool_forward.7} parent=75 // pred_region
          %697 = dma.done %s690, 128
        $region84: #{densepool_forward.7} parent=75 // pred_fallthru
          _
        // Predicated region
        $region85: #{densepool_forward.7} parent=75 // pred_check
          %p698 = pneg %p119
        $region86: #{densepool_forward.7} parent=75 // pred_check_branch
          %700 = sbr.rel (%p698) target = $region88
        $region87: #{densepool_forward.7} parent=75 // pred_region
          %701 = dma.done [#allocation6], 512
        $region88: #{densepool_forward.7} parent=75 // pred_fallthru
          _
        // Predicated region
        $region89: #{densepool_forward.7} parent=75 // pred_check
          %p702 = pneg %p140
        $region90: #{densepool_forward.7} parent=75 // pred_check_branch
          %704 = sbr.rel (%p702) target = $region92
        $region91: #{densepool_forward.7} parent=75 // pred_region
          %705 = dma.done [#allocation9], 16
        $region92: #{densepool_forward.7} parent=75 // pred_fallthru
          _
        // Predicated region
        $region93: #{densepool_forward.7} parent=75 // pred_check
          %p706 = pneg %p161
        $region94: #{densepool_forward.7} parent=75 // pred_check_branch
          %708 = sbr.rel (%p706) target = $region96
        $region95: #{densepool_forward.7} parent=75 // pred_region
          %709 = dma.done [#allocation9], 64
        $region96: #{densepool_forward.7} parent=75 // pred_fallthru
          _
        // Predicated region
        $region97: #{densepool_forward.7} parent=75 // pred_check
          %p710 = pneg %p182
        $region98: #{densepool_forward.7} parent=75 // pred_check_branch
          %712 = sbr.rel (%p710) target = $region100
        $region99: #{densepool_forward.7} parent=75 // pred_region
          %713 = dma.done [#allocation12], 16
        $region100: #{densepool_forward.7} parent=75 // pred_fallthru
          _
        // Predicated region
        $region101: #{densepool_forward.7} parent=75 // pred_check
          %p714 = pneg %p203
        $region102: #{densepool_forward.7} parent=75 // pred_check_branch
          %716 = sbr.rel (%p714) target = $region104
        $region103: #{densepool_forward.7} parent=75 // pred_region
          %717 = dma.done [#allocation12], 512
        $region104: #{densepool_forward.7} parent=75 // pred_fallthru
          _
        // Predicated region
        $region105: #{densepool_forward.7} parent=75 // pred_check
          %p718 = pneg %p224
        $region106: #{densepool_forward.7} parent=75 // pred_check_branch
          %720 = sbr.rel (%p718) target = $region108
        $region107: #{densepool_forward.7} parent=75 // pred_region
          %721 = dma.done [#allocation15], 16
        $region108: #{densepool_forward.7} parent=75 // pred_fallthru
          _
        // Predicated region
        $region109: #{densepool_forward.7} parent=75 // pred_check
          %p722 = pneg %p245
        $region110: #{densepool_forward.7} parent=75 // pred_check_branch
          %724 = sbr.rel (%p722) target = $region112
        $region111: #{densepool_forward.7} parent=75 // pred_region
          %725 = dma.done [#allocation15], 512
        $region112: #{densepool_forward.7} parent=75 // pred_fallthru
          _
        // Predicated region
        $region113: #{densepool_forward.7} parent=75 // pred_check
          %p726 = pneg %p266
        $region114: #{densepool_forward.7} parent=75 // pred_check_branch
          %728 = sbr.rel (%p726) target = $region116
        $region115: #{densepool_forward.7} parent=75 // pred_region
          %729 = dma.done [#allocation18], 16
        $region116: #{densepool_forward.7} parent=75 // pred_fallthru
          _
        // Predicated region
        $region117: #{densepool_forward.7} parent=75 // pred_check
          %p730 = pneg %p287
        $region118: #{densepool_forward.7} parent=75 // pred_check_branch
          %732 = sbr.rel (%p730) target = $region120
        $region119: #{densepool_forward.7} parent=75 // pred_region
          %733 = dma.done [#allocation18], 16
        $region120: #{densepool_forward.7} parent=75 // pred_fallthru
          _
        // Predicated region
        $region121: #{densepool_forward.7} parent=75 // pred_check
          %p734 = pneg %p308
        $region122: #{densepool_forward.7} parent=75 // pred_check_branch
          %736 = sbr.rel (%p734) target = $region124
        $region123: #{densepool_forward.7} parent=75 // pred_region
          %737 = dma.done [#allocation21], 16
        $region124: #{densepool_forward.7} parent=75 // pred_fallthru
          _
        // Predicated region
        $region125: #{densepool_forward.7} parent=75 // pred_check
          %p738 = pneg %p329
        $region126: #{densepool_forward.7} parent=75 // pred_check_branch
          %740 = sbr.rel (%p738) target = $region128
        $region127: #{densepool_forward.7} parent=75 // pred_region
          %741 = dma.done [#allocation21], 16
        $region128: #{densepool_forward.7} parent=75 // pred_fallthru
          _
        // Predicated region
        $region129: #{densepool_forward.7} parent=75 // pred_check
          %p742 = pneg %p350
        $region130: #{densepool_forward.7} parent=75 // pred_check_branch
          %744 = sbr.rel (%p742) target = $region132
        $region131: #{densepool_forward.7} parent=75 // pred_region
          %745 = dma.done [#allocation24], 16
        $region132: #{densepool_forward.7} parent=75 // pred_fallthru
          _
        %s746 = sand.u32 %s59, 1
        %s747 = scalar_lea.sflag [#allocation3], %s746
        %s748 = sand.u32 %s59, 1
        %s749 = smul.addr %s748, 8
        %s750 = scalar_lea.vmem [#allocation2], %s749
        %p751 = pneg %p72
        %p752 = pneg %p69
        %s753 = sand.u32 %s51, 1
        %s754 = scalar_lea.sflag [#allocation6], %s753
        %s755 = sand.u32 %s85, 1
        %s756 = smul.addr %s755, 8
        %s757 = scalar_lea.vmem [#allocation5], %s756
        %p758 = pneg %p98
        %p759 = pneg %p95
        %p760 = pneg %p119
        %p761 = pneg %p116
        %p762 = pneg %p140
        %p763 = pneg %p137
        %p764 = pneg %p161
        %p765 = pneg %p158
        %p766 = pneg %p182
        %p767 = pneg %p179
        %p768 = pneg %p203
        %p769 = pneg %p200
        %p770 = pneg %p224
        %p771 = pneg %p221
        %p772 = pneg %p245
        %p773 = pneg %p242
        %p774 = pneg %p266
        %p775 = pneg %p263
        %p776 = pneg %p287
        %p777 = pneg %p284
        %p778 = pneg %p308
        %p779 = pneg %p305
        %p780 = pneg %p329
        %p781 = pneg %p326
        %p782 = pneg %p350
        %p783 = pneg %p347
        %p784 = pneg %p376
        %p785 = pneg %p373
        %s786 = sand.u32 %s363, 1
        %s787 = scalar_lea.sflag [#allocation4], %s786
        %s788 = sand.u32 %s363, 1
        %s789 = smul.addr %s788, 4
        %s790 = scalar_lea.vmem [#allocation25], %s789
        %p791 = pneg %p402
        %p792 = pneg %p399
        %s793 = sand.u32 %s51, 1
        %s794 = scalar_lea.sflag [#allocation27], %s793
        %s795 = sand.u32 %s389, 1
        %s796 = smul.addr %s795, 4
        %s797 = scalar_lea.vmem [#allocation26], %s796
        %p798 = pneg %p428
        %p799 = pneg %p425
        %s800 = sand.u32 %s51, 1
        %s801 = scalar_lea.sflag [#allocation27], %s800
        %s802 = sand.u32 %s415, 1
        %s803 = scalar_lea.vmem [#allocation28], %s802
        %p804 = pneg %p454
        %p805 = pneg %p451
        %s806 = sand.u32 %s51, 1
        %s807 = scalar_lea.sflag [#allocation30], %s806
        %s808 = sand.u32 %s441, 1
        %s809 = scalar_lea.vmem [#allocation29], %s808
        %p810 = pneg %p480
        %p811 = pneg %p477
        %s812 = sand.u32 %s51, 1
        %s813 = scalar_lea.sflag [#allocation30], %s812
        %s814 = sand.u32 %s467, 1
        %s815 = scalar_lea.vmem [#allocation31], %s814
        %v817 = vld [vmem:[%s684] sm:$0xff]
        %v818 = vld [vmem:[%s693] sm:$0xff]
        %v819 = vpack.c.bf16 %v818, %v818
        %v820 = vpack.c.bf16 %v817, %v817
        %vm821 = vcmask 64512
        %v823 = vsel %vm821, %v819, 0
        %vm825 = vcmask 1043456
        %v827 = vsel %vm825, %v820, 0
        %829 = vmatprep.subr.bf16.mxu0 0
        %830 = vmatpush1.bf16.msra.mxu0 %v827
        %831 = vmatprep.subr.bf16.mxu0 0
        %832 = vmatpush1.bf16.msra.mxu0 0
        %833 = vmatprep.subr.bf16.mxu0 0
        %834 = vmatpush1.bf16.msra.mxu0 0
        %835 = vmatprep.subr.bf16.mxu0 0
        %836 = vmatpush1.bf16.msra.mxu0 0
        %837 = vmatprep.subr.bf16.mxu0 0
        %838 = vmatpush1.bf16.msra.mxu0 0
        %839 = vmatprep.subr.bf16.mxu0 0
        %840 = vmatpush1.bf16.msra.mxu0 0
        %841 = vmatprep.subr.bf16.mxu0 0
        %842 = vmatpush1.bf16.msra.mxu0 0
        %843 = vmatprep.subr.bf16.mxu0 0
        %844 = vmatpush1.bf16.msra.mxu0 0
        %845 = vmatprep.subr.bf16.mxu0 0
        %846 = vmatpush1.bf16.msra.mxu0 0
        %847 = vmatprep.subr.bf16.mxu0 0
        %848 = vmatpush1.bf16.msra.mxu0 0
        %849 = vmatprep.subr.bf16.mxu0 0
        %850 = vmatpush1.bf16.msra.mxu0 0
        %851 = vmatprep.subr.bf16.mxu0 0
        %852 = vmatpush1.bf16.msra.mxu0 0
        %853 = vmatprep.subr.bf16.mxu0 0
        %854 = vmatpush1.bf16.msra.mxu0 0
        %855 = vmatprep.subr.bf16.mxu0 0
        %856 = vmatpush1.bf16.msra.mxu0 0
        %857 = vmatprep.subr.bf16.mxu0 0
        %858 = vmatpush1.bf16.msra.mxu0 0
        %859 = vmatprep.subr.bf16.mxu0 0
        %860 = vmatpush1.bf16.msra.mxu0 0
        %861 = vmatprep.mubr.bf16.mxu0 0
        %862 = vmatmul.mubr.bf16.gmra.mrb[0].mxu0 %v823
        %v863 = vpop.f32.mrb[0].mxu0
        %v864 = vadd.f32 %v817, %v863
        %v865 = vpop.f32.mrb[0].mxu0
        %v866 = vpop.f32.mrb[0].mxu0
        %v867 = vpop.f32.mrb[0].mxu0
        %868 = vdwg.mxu0
        %v869 = vpack.c.bf16 %v864, %v864
        %v870 = vld [vmem:[#allocation7] sm:$0xff]
        %v871 = vld [vmem:[#allocation7 + $0x8] sm:$0xff]
        %v872 = vld [vmem:[#allocation7 + $0x10] sm:$0xff]
        %v873 = vld [vmem:[#allocation7 + $0x18] sm:$0xff]
        %v874 = vpack.c.bf16 %v871, %v870
        %v875 = vpack.c.bf16 %v873, %v872
        %v876 = vld [vmem:[#allocation8] sm:$0x1]
        %v878 = vlaneseq
        %v879 = vshrl.u32 %v878, 7
        %v880 = vsub.s32 0, %v879
        %v881 = vrot.slane %v876, %v880
        %vm883 = vcmask 261120
        %v885 = vsel %vm883, %v869, 0
        %887 = vmatprep.subr.bf16.mxu0 0
        %888 = vmatpush1.bf16.msra.mxu0 %v874
        %889 = vmatprep.subr.bf16.mxu0 0
        %890 = vmatpush1.bf16.msra.mxu0 %v875
        %891 = vmatprep.subr.bf16.mxu0 0
        %892 = vmatpush1.bf16.msra.mxu0 0
        %893 = vmatprep.subr.bf16.mxu0 0
        %894 = vmatpush1.bf16.msra.mxu0 0
        %895 = vmatprep.subr.bf16.mxu0 0
        %896 = vmatpush1.bf16.msra.mxu0 0
        %897 = vmatprep.subr.bf16.mxu0 0
        %898 = vmatpush1.bf16.msra.mxu0 0
        %899 = vmatprep.subr.bf16.mxu0 0
        %900 = vmatpush1.bf16.msra.mxu0 0
        %901 = vmatprep.subr.bf16.mxu0 0
        %902 = vmatpush1.bf16.msra.mxu0 0
        %903 = vmatprep.subr.bf16.mxu0 0
        %904 = vmatpush1.bf16.msra.mxu0 0
        %905 = vmatprep.subr.bf16.mxu0 0
        %906 = vmatpush1.bf16.msra.mxu0 0
        %907 = vmatprep.subr.bf16.mxu0 0
        %908 = vmatpush1.bf16.msra.mxu0 0
        %909 = vmatprep.subr.bf16.mxu0 0
        %910 = vmatpush1.bf16.msra.mxu0 0
        %911 = vmatprep.subr.bf16.mxu0 0
        %912 = vmatpush1.bf16.msra.mxu0 0
        %913 = vmatprep.subr.bf16.mxu0 0
        %914 = vmatpush1.bf16.msra.mxu0 0
        %915 = vmatprep.subr.bf16.mxu0 0
        %916 = vmatpush1.bf16.msra.mxu0 0
        %917 = vmatprep.subr.bf16.mxu0 0
        %918 = vmatpush1.bf16.msra.mxu0 0
        %919 = vmatprep.mubr.bf16.mxu0 0
        %920 = vmatmul.mubr.bf16.gmra.mrb[0].mxu0 %v885
        %v921 = vpop.f32.mrb[0].mxu0
        %v922 = vadd.f32 %v881, %v921
        %v923 = vpop.f32.mrb[0].mxu0
        %v924 = vpop.f32.mrb[0].mxu0
        %v925 = vpop.f32.mrb[0].mxu0
        %926 = vdwg.mxu0
        %v927 = vmax.f32 %v922, 0.0
        %v928 = vpack.c.bf16 %v927, %v927
        %v929 = vld [vmem:[#allocation10] sm:$0xf]
        %v930 = vpack.c.bf16 %v929, %v929
        %v931 = vld [vmem:[#allocation11] sm:$0x1]
        %v933 = vlaneseq
        %v934 = vshrl.u32 %v933, 7
        %v935 = vsub.s32 0, %v934
        %v936 = vrot.slane %v931, %v935
        %vm938 = vcmask 31744
        %v940 = vsel %vm938, %v928, 0
        %vm942 = vcmask 1041408
        %v944 = vsel %vm942, %v930, 0
        %946 = vmatprep.subr.bf16.mxu0 0
        %947 = vmatpush1.bf16.msra.mxu0 %v944
        %948 = vmatprep.subr.bf16.mxu0 0
        %949 = vmatpush1.bf16.msra.mxu0 0
        %950 = vmatprep.subr.bf16.mxu0 0
        %951 = vmatpush1.bf16.msra.mxu0 0
        %952 = vmatprep.subr.bf16.mxu0 0
        %953 = vmatpush1.bf16.msra.mxu0 0
        %954 = vmatprep.subr.bf16.mxu0 0
        %955 = vmatpush1.bf16.msra.mxu0 0
        %956 = vmatprep.subr.bf16.mxu0 0
        %957 = vmatpush1.bf16.msra.mxu0 0
        %958 = vmatprep.subr.bf16.mxu0 0
        %959 = vmatpush1.bf16.msra.mxu0 0
        %960 = vmatprep.subr.bf16.mxu0 0
        %961 = vmatpush1.bf16.msra.mxu0 0
        %962 = vmatprep.subr.bf16.mxu0 0
        %963 = vmatpush1.bf16.msra.mxu0 0
        %964 = vmatprep.subr.bf16.mxu0 0
        %965 = vmatpush1.bf16.msra.mxu0 0
        %966 = vmatprep.subr.bf16.mxu0 0
        %967 = vmatpush1.bf16.msra.mxu0 0
        %968 = vmatprep.subr.bf16.mxu0 0
        %969 = vmatpush1.bf16.msra.mxu0 0
        %970 = vmatprep.subr.bf16.mxu0 0
        %971 = vmatpush1.bf16.msra.mxu0 0
        %972 = vmatprep.subr.bf16.mxu0 0
        %973 = vmatpush1.bf16.msra.mxu0 0
        %974 = vmatprep.subr.bf16.mxu0 0
        %975 = vmatpush1.bf16.msra.mxu0 0
        %976 = vmatprep.subr.bf16.mxu0 0
        %977 = vmatpush1.bf16.msra.mxu0 0
        %978 = vmatprep.mubr.bf16.mxu0 0
        %979 = vmatmul.mubr.bf16.gmra.mrb[0].mxu0 %v940
        %v980 = vpop.f32.mrb[0].mxu0
        %v981 = vadd.f32 %v936, %v980
        %v982 = vpop.f32.mrb[0].mxu0
        %v983 = vpop.f32.mrb[0].mxu0
        %v984 = vpop.f32.mrb[0].mxu0
        %985 = vdwg.mxu0
        %v986 = vld [vmem:[#allocation13] sm:$0xff]
        %v987 = vld [vmem:[#allocation13 + $0x8] sm:$0xff]
        %v988 = vld [vmem:[#allocation13 + $0x10] sm:$0xff]
        %v989 = vld [vmem:[#allocation13 + $0x18] sm:$0xff]
        %v990 = vpack.c.bf16 %v987, %v986
        %v991 = vpack.c.bf16 %v989, %v988
        %v992 = vld [vmem:[#allocation14] sm:$0x1]
        %v994 = vlaneseq
        %v995 = vshrl.u32 %v994, 7
        %v996 = vsub.s32 0, %v995
        %v997 = vrot.slane %v992, %v996
        %999 = vmatprep.subr.bf16.mxu0 0
        %1000 = vmatpush1.bf16.msra.mxu0 %v990
        %1001 = vmatprep.subr.bf16.mxu0 0
        %1002 = vmatpush1.bf16.msra.mxu0 %v991
        %1003 = vmatprep.subr.bf16.mxu0 0
        %1004 = vmatpush1.bf16.msra.mxu0 0
        %1005 = vmatprep.subr.bf16.mxu0 0
        %1006 = vmatpush1.bf16.msra.mxu0 0
        %1007 = vmatprep.subr.bf16.mxu0 0
        %1008 = vmatpush1.bf16.msra.mxu0 0
        %1009 = vmatprep.subr.bf16.mxu0 0
        %1010 = vmatpush1.bf16.msra.mxu0 0
        %1011 = vmatprep.subr.bf16.mxu0 0
        %1012 = vmatpush1.bf16.msra.mxu0 0
        %1013 = vmatprep.subr.bf16.mxu0 0
        %1014 = vmatpush1.bf16.msra.mxu0 0
        %1015 = vmatprep.subr.bf16.mxu0 0
        %1016 = vmatpush1.bf16.msra.mxu0 0
        %1017 = vmatprep.subr.bf16.mxu0 0
        %1018 = vmatpush1.bf16.msra.mxu0 0
        %1019 = vmatprep.subr.bf16.mxu0 0
        %1020 = vmatpush1.bf16.msra.mxu0 0
        %1021 = vmatprep.subr.bf16.mxu0 0
        %1022 = vmatpush1.bf16.msra.mxu0 0
        %1023 = vmatprep.subr.bf16.mxu0 0
        %1024 = vmatpush1.bf16.msra.mxu0 0
        %1025 = vmatprep.subr.bf16.mxu0 0
        %1026 = vmatpush1.bf16.msra.mxu0 0
        %1027 = vmatprep.subr.bf16.mxu0 0
        %1028 = vmatpush1.bf16.msra.mxu0 0
        %1029 = vmatprep.subr.bf16.mxu0 0
        %1030 = vmatpush1.bf16.msra.mxu0 0
        %1031 = vmatprep.mubr.bf16.mxu0 0
        %1032 = vmatmul.mubr.bf16.gmra.mrb[0].mxu0 %v885
        %v1033 = vpop.f32.mrb[0].mxu0
        %v1034 = vadd.f32 %v997, %v1033
        %v1035 = vpop.f32.mrb[0].mxu0
        %v1036 = vpop.f32.mrb[0].mxu0
        %v1037 = vpop.f32.mrb[0].mxu0
        %1038 = vdwg.mxu0
        %v1039 = vmax.f32 %v1034, 0.0
        %v1040 = vpack.c.bf16 %v1039, %v1039
        %v1041 = vld [vmem:[#allocation16] sm:$0xff]
        %v1042 = vld [vmem:[#allocation16 + $0x8] sm:$0xff]
        %v1043 = vld [vmem:[#allocation16 + $0x10] sm:$0xff]
        %v1044 = vld [vmem:[#allocation16 + $0x18] sm:$0xff]
        %v1045 = vpack.c.bf16 %v1042, %v1041
        %v1046 = vpack.c.bf16 %v1044, %v1043
        %v1047 = vld [vmem:[#allocation17] sm:$0x1]
        %v1049 = vlaneseq
        %v1050 = vshrl.u32 %v1049, 7
        %v1051 = vsub.s32 0, %v1050
        %v1052 = vrot.slane %v1047, %v1051
        %v1055 = vsel %vm883, %v1040, 0
        %1057 = vmatprep.subr.bf16.mxu0 0
        %1058 = vmatpush1.bf16.msra.mxu0 %v1045
        %1059 = vmatprep.subr.bf16.mxu0 0
        %1060 = vmatpush1.bf16.msra.mxu0 %v1046
        %1061 = vmatprep.subr.bf16.mxu0 0
        %1062 = vmatpush1.bf16.msra.mxu0 0
        %1063 = vmatprep.subr.bf16.mxu0 0
        %1064 = vmatpush1.bf16.msra.mxu0 0
        %1065 = vmatprep.subr.bf16.mxu0 0
        %1066 = vmatpush1.bf16.msra.mxu0 0
        %1067 = vmatprep.subr.bf16.mxu0 0
        %1068 = vmatpush1.bf16.msra.mxu0 0
        %1069 = vmatprep.subr.bf16.mxu0 0
        %1070 = vmatpush1.bf16.msra.mxu0 0
        %1071 = vmatprep.subr.bf16.mxu0 0
        %1072 = vmatpush1.bf16.msra.mxu0 0
        %1073 = vmatprep.subr.bf16.mxu0 0
        %1074 = vmatpush1.bf16.msra.mxu0 0
        %1075 = vmatprep.subr.bf16.mxu0 0
        %1076 = vmatpush1.bf16.msra.mxu0 0
        %1077 = vmatprep.subr.bf16.mxu0 0
        %1078 = vmatpush1.bf16.msra.mxu0 0
        %1079 = vmatprep.subr.bf16.mxu0 0
        %1080 = vmatpush1.bf16.msra.mxu0 0
        %1081 = vmatprep.subr.bf16.mxu0 0
        %1082 = vmatpush1.bf16.msra.mxu0 0
        %1083 = vmatprep.subr.bf16.mxu0 0
        %1084 = vmatpush1.bf16.msra.mxu0 0
        %1085 = vmatprep.subr.bf16.mxu0 0
        %1086 = vmatpush1.bf16.msra.mxu0 0
        %1087 = vmatprep.subr.bf16.mxu0 0
        %1088 = vmatpush1.bf16.msra.mxu0 0
        %1089 = vmatprep.mubr.bf16.mxu0 0
        %1090 = vmatmul.mubr.bf16.gmra.mrb[0].mxu0 %v1055
        %v1091 = vpop.f32.mrb[0].mxu0
        %v1092 = vadd.f32 %v1052, %v1091
        %v1093 = vpop.f32.mrb[0].mxu0
        %v1094 = vpop.f32.mrb[0].mxu0
        %v1095 = vpop.f32.mrb[0].mxu0
        %1096 = vdwg.mxu0
        %v1097 = vld [vmem:[#allocation19] sm:$0x1]
        %v1099 = vlaneseq
        %v1100 = vshrl.u32 %v1099, 7
        %v1101 = vsub.s32 0, %v1100
        %v1102 = vrot.slane %v1097, %v1101
        %v1104 = vmul.f32 %v1092, %v1102
        %v1105 = vld [vmem:[#allocation20] sm:$0x1]
        %v1107 = vlaneseq
        %v1108 = vshrl.u32 %v1107, 7
        %v1109 = vsub.s32 0, %v1108
        %v1110 = vrot.slane %v1105, %v1109
        %v1112 = vadd.f32 %v1104, %v1110
        %v1113 = vmax.f32 %v1112, 0.0
        %v1114 = vsel %vm938, %v981, -inf
        %1115 = vmax.xlane.f32.xlu0 %v1114
        %v1116 = vpop.xlane.xlu0 %1115
        %v1117 = vsub.f32 %v981, %v1116
        %v1118 = vmul.f32 %v1117, 1.442695
        %v1119 = vpow.pop %v1118
        %v1120 = vsel %vm938, %v1119, 0.0
        %1121 = vadd.xlane.f32.xlu0 %v1120
        %v1122 = vpop.xlane.xlu0 %1121
        %v1123 = vrcp.pop %v1122
        %v1124 = vmul.f32 %v1119, %v1123
        %v1125 = vpack.c.bf16 %v1124, %v1124
        %v1126 = vpack.c.bf16 %v1113, %v1113
        %1127 = vxpose.xlu0.c.b16.start [1/8] %v1125, 128
        %1128 = vxpose.xlu0.c.b16.cont [2/8] 0, 128
        %1129 = vxpose.xlu0.c.b16.cont [3/8] 0, 128
        %1130 = vxpose.xlu0.c.b16.cont [4/8] 0, 128
        %1131 = vxpose.xlu0.c.b16.cont [5/8] 0, 128
        %1132 = vxpose.xlu0.c.b16.cont [6/8] 0, 128
        %1133 = vxpose.xlu0.c.b16.cont [7/8] 0, 128
        %1134 = vxpose.xlu0.c.b16.end [8/8] 0, 128
        %v1135 = vpop.trf.xlu0
        %v1136 = vpop.trf.xlu0
        %v1137 = vpop.trf.xlu0
        %v1138 = vpop.trf.xlu0
        %v1139 = vpop.trf.xlu0
        %v1140 = vpop.trf.xlu0
        %v1141 = vpop.trf.xlu0
        %v1142 = vpop.trf.xlu0
        %v1144 = vsel %vm821, %v1135, 0
        %v1147 = vsel %vm825, %v1126, 0
        %1149 = vmatprep.subr.bf16.mxu0 0
        %1150 = vmatpush1.bf16.msra.mxu0 %v1147
        %1151 = vmatprep.subr.bf16.mxu0 0
        %1152 = vmatpush1.bf16.msra.mxu0 0
        %1153 = vmatprep.subr.bf16.mxu0 0
        %1154 = vmatpush1.bf16.msra.mxu0 0
        %1155 = vmatprep.subr.bf16.mxu0 0
        %1156 = vmatpush1.bf16.msra.mxu0 0
        %1157 = vmatprep.subr.bf16.mxu0 0
        %1158 = vmatpush1.bf16.msra.mxu0 0
        %1159 = vmatprep.subr.bf16.mxu0 0
        %1160 = vmatpush1.bf16.msra.mxu0 0
        %1161 = vmatprep.subr.bf16.mxu0 0
        %1162 = vmatpush1.bf16.msra.mxu0 0
        %1163 = vmatprep.subr.bf16.mxu0 0
        %1164 = vmatpush1.bf16.msra.mxu0 0
        %1165 = vmatprep.subr.bf16.mxu0 0
        %1166 = vmatpush1.bf16.msra.mxu0 0
        %1167 = vmatprep.subr.bf16.mxu0 0
        %1168 = vmatpush1.bf16.msra.mxu0 0
        %1169 = vmatprep.subr.bf16.mxu0 0
        %1170 = vmatpush1.bf16.msra.mxu0 0
        %1171 = vmatprep.subr.bf16.mxu0 0
        %1172 = vmatpush1.bf16.msra.mxu0 0
        %1173 = vmatprep.subr.bf16.mxu0 0
        %1174 = vmatpush1.bf16.msra.mxu0 0
        %1175 = vmatprep.subr.bf16.mxu0 0
        %1176 = vmatpush1.bf16.msra.mxu0 0
        %1177 = vmatprep.subr.bf16.mxu0 0
        %1178 = vmatpush1.bf16.msra.mxu0 0
        %1179 = vmatprep.subr.bf16.mxu0 0
        %1180 = vmatpush1.bf16.msra.mxu0 0
        %1181 = vmatprep.mubr.bf16.mxu0 0
        %1182 = vmatmul.mubr.bf16.gmra.mrb[0].mxu0 %v1144
        %v1183 = vpop.f32.mrb[0].mxu0
        %v1184 = vadd.f32 0.0, %v1183
        %v1185 = vpop.f32.mrb[0].mxu0
        %v1186 = vpop.f32.mrb[0].mxu0
        %v1187 = vpop.f32.mrb[0].mxu0
        %1188 = vdwg.mxu0
        %v1190 = vsel %vm825, %v1125, 0
        %1192 = vmatprep.subr.bf16.mxu0 0
        %1193 = vmatpush1.bf16.msra.mxu0 %v1190
        %1194 = vmatprep.subr.bf16.mxu0 0
        %1195 = vmatpush1.bf16.msra.mxu0 0
        %1196 = vmatprep.subr.bf16.mxu0 0
        %1197 = vmatpush1.bf16.msra.mxu0 0
        %1198 = vmatprep.subr.bf16.mxu0 0
        %1199 = vmatpush1.bf16.msra.mxu0 0
        %1200 = vmatprep.subr.bf16.mxu0 0
        %1201 = vmatpush1.bf16.msra.mxu0 0
        %1202 = vmatprep.subr.bf16.mxu0 0
        %1203 = vmatpush1.bf16.msra.mxu0 0
        %1204 = vmatprep.subr.bf16.mxu0 0
        %1205 = vmatpush1.bf16.msra.mxu0 0
        %1206 = vmatprep.subr.bf16.mxu0 0
        %1207 = vmatpush1.bf16.msra.mxu0 0
        %1208 = vmatprep.subr.bf16.mxu0 0
        %1209 = vmatpush1.bf16.msra.mxu0 0
        %1210 = vmatprep.subr.bf16.mxu0 0
        %1211 = vmatpush1.bf16.msra.mxu0 0
        %1212 = vmatprep.subr.bf16.mxu0 0
        %1213 = vmatpush1.bf16.msra.mxu0 0
        %1214 = vmatprep.subr.bf16.mxu0 0
        %1215 = vmatpush1.bf16.msra.mxu0 0
        %1216 = vmatprep.subr.bf16.mxu0 0
        %1217 = vmatpush1.bf16.msra.mxu0 0
        %1218 = vmatprep.subr.bf16.mxu0 0
        %1219 = vmatpush1.bf16.msra.mxu0 0
        %1220 = vmatprep.subr.bf16.mxu0 0
        %1221 = vmatpush1.bf16.msra.mxu0 0
        %1222 = vmatprep.subr.bf16.mxu0 0
        %1223 = vmatpush1.bf16.msra.mxu0 0
        %1224 = vmatprep.mubr.bf16.mxu0 0
        %1225 = vmatmul.mubr.bf16.gmra.mrb[0].mxu0 %v823
        %v1226 = vpop.f32.mrb[0].mxu0
        %v1227 = vadd.f32 0.0, %v1226
        %v1228 = vpop.f32.mrb[0].mxu0
        %v1229 = vpop.f32.mrb[0].mxu0
        %v1230 = vpop.f32.mrb[0].mxu0
        %1231 = vdwg.mxu0
        %v1232 = vpack.c.bf16 %v1227, %v1227
        %v1234 = vsel %vm825, %v1232, 0
        %1236 = vmatprep.subr.bf16.mxu0 0
        %1237 = vmatpush1.bf16.msra.mxu0 %v1234
        %1238 = vmatprep.subr.bf16.mxu0 0
        %1239 = vmatpush1.bf16.msra.mxu0 0
        %1240 = vmatprep.subr.bf16.mxu0 0
        %1241 = vmatpush1.bf16.msra.mxu0 0
        %1242 = vmatprep.subr.bf16.mxu0 0
        %1243 = vmatpush1.bf16.msra.mxu0 0
        %1244 = vmatprep.subr.bf16.mxu0 0
        %1245 = vmatpush1.bf16.msra.mxu0 0
        %1246 = vmatprep.subr.bf16.mxu0 0
        %1247 = vmatpush1.bf16.msra.mxu0 0
        %1248 = vmatprep.subr.bf16.mxu0 0
        %1249 = vmatpush1.bf16.msra.mxu0 0
        %1250 = vmatprep.subr.bf16.mxu0 0
        %1251 = vmatpush1.bf16.msra.mxu0 0
        %1252 = vmatprep.subr.bf16.mxu0 0
        %1253 = vmatpush1.bf16.msra.mxu0 0
        %1254 = vmatprep.subr.bf16.mxu0 0
        %1255 = vmatpush1.bf16.msra.mxu0 0
        %1256 = vmatprep.subr.bf16.mxu0 0
        %1257 = vmatpush1.bf16.msra.mxu0 0
        %1258 = vmatprep.subr.bf16.mxu0 0
        %1259 = vmatpush1.bf16.msra.mxu0 0
        %1260 = vmatprep.subr.bf16.mxu0 0
        %1261 = vmatpush1.bf16.msra.mxu0 0
        %1262 = vmatprep.subr.bf16.mxu0 0
        %1263 = vmatpush1.bf16.msra.mxu0 0
        %1264 = vmatprep.subr.bf16.mxu0 0
        %1265 = vmatpush1.bf16.msra.mxu0 0
        %1266 = vmatprep.subr.bf16.mxu0 0
        %1267 = vmatpush1.bf16.msra.mxu0 0
        %1268 = vmatprep.mubr.bf16.mxu0 0
        %1269 = vmatmul.mubr.bf16.gmra.mrb[0].mxu0 %v1144
        %v1270 = vpop.f32.mrb[0].mxu0
        %v1271 = vadd.f32 0.0, %v1270
        %v1272 = vpop.f32.mrb[0].mxu0
        %v1273 = vpop.f32.mrb[0].mxu0
        %v1274 = vpop.f32.mrb[0].mxu0
        %1275 = vdwg.mxu0
        %vm1276 = vcmask 257024
        %1277 = vst.msk [vmem:[%s790] sm:$0xf] %vm1276, %v1184
        %vm1278 = vcmask 27648
        %1279 = vst.msk [vmem:[%s797] sm:$0xf] %vm1278, %v1271
        %1280 = vxpose.xlu0.b32.start [1/16] %v1124, 128
        %1281 = vxpose.xlu0.b32.cont [2/16] 0.0, 128
        %1282 = vxpose.xlu0.b32.cont [3/16] 0.0, 128
        %1283 = vxpose.xlu0.b32.cont [4/16] 0.0, 128
        %1284 = vxpose.xlu0.b32.cont [5/16] 0.0, 128
        %1285 = vxpose.xlu0.b32.cont [6/16] 0.0, 128
        %1286 = vxpose.xlu0.b32.cont [7/16] 0.0, 128
        %1287 = vxpose.xlu0.b32.cont [8/16] 0.0, 128
        %1288 = vxpose.xlu0.b32.cont [9/16] 0.0, 128
        %1289 = vxpose.xlu0.b32.cont [10/16] 0.0, 128
        %1290 = vxpose.xlu0.b32.cont [11/16] 0.0, 128
        %1291 = vxpose.xlu0.b32.cont [12/16] 0.0, 128
        %1292 = vxpose.xlu0.b32.cont [13/16] 0.0, 128
        %1293 = vxpose.xlu0.b32.cont [14/16] 0.0, 128
        %1294 = vxpose.xlu0.b32.cont [15/16] 0.0, 128
        %1295 = vxpose.xlu0.b32.end [16/16] 0.0, 128
        %v1296 = vpop.trf.xlu0
        %v1297 = vpop.trf.xlu0
        %v1298 = vpop.trf.xlu0
        %v1299 = vpop.trf.xlu0
        %v1300 = vpop.trf.xlu0
        %v1301 = vpop.trf.xlu0
        %v1302 = vpop.trf.xlu0
        %v1303 = vpop.trf.xlu0
        %v1304 = vpop.trf.xlu0
        %v1305 = vpop.trf.xlu0
        %v1306 = vpop.trf.xlu0
        %v1307 = vpop.trf.xlu0
        %v1308 = vpop.trf.xlu0
        %v1309 = vpop.trf.xlu0
        %v1310 = vpop.trf.xlu0
        %v1311 = vpop.trf.xlu0
        %v1313 = vsel %vm821, %v1296, 0
        %1315 = vmatprep.subr.mxu0 0.0
        %1316 = vmatpush1.msra.mxu0 %v1124
        %1317 = vmatprep.subr.mxu0 0.0
        %1318 = vmatpush1.msra.mxu0 0.0
        %1319 = vmatprep.subr.mxu0 0.0
        %1320 = vmatpush1.msra.mxu0 0.0
        %1321 = vmatprep.subr.mxu0 0.0
        %1322 = vmatpush1.msra.mxu0 0.0
        %1323 = vmatprep.subr.mxu0 0.0
        %1324 = vmatpush1.msra.mxu0 0.0
        %1325 = vmatprep.subr.mxu0 0.0
        %1326 = vmatpush1.msra.mxu0 0.0
        %1327 = vmatprep.subr.mxu0 0.0
        %1328 = vmatpush1.msra.mxu0 0.0
        %1329 = vmatprep.subr.mxu0 0.0
        %1330 = vmatpush1.msra.mxu0 0.0
        %1331 = vmatprep.subr.mxu0 0.0
        %1332 = vmatpush1.msra.mxu0 0.0
        %1333 = vmatprep.subr.mxu0 0.0
        %1334 = vmatpush1.msra.mxu0 0.0
        %1335 = vmatprep.subr.mxu0 0.0
        %1336 = vmatpush1.msra.mxu0 0.0
        %1337 = vmatprep.subr.mxu0 0.0
        %1338 = vmatpush1.msra.mxu0 0.0
        %1339 = vmatprep.subr.mxu0 0.0
        %1340 = vmatpush1.msra.mxu0 0.0
        %1341 = vmatprep.subr.mxu0 0.0
        %1342 = vmatpush1.msra.mxu0 0.0
        %1343 = vmatprep.subr.mxu0 0.0
        %1344 = vmatpush1.msra.mxu0 0.0
        %1345 = vmatprep.subr.mxu0 0.0
        %1346 = vmatpush1.msra.mxu0 0.0
        %1347 = vmatprep.subr.mxu0 0.0
        %1348 = vmatpush1.msra.mxu0 0.0
        %1349 = vmatprep.subr.mxu0 0.0
        %1350 = vmatpush1.msra.mxu0 0.0
        %1351 = vmatprep.subr.mxu0 0.0
        %1352 = vmatpush1.msra.mxu0 0.0
        %1353 = vmatprep.subr.mxu0 0.0
        %1354 = vmatpush1.msra.mxu0 0.0
        %1355 = vmatprep.subr.mxu0 0.0
        %1356 = vmatpush1.msra.mxu0 0.0
        %1357 = vmatprep.subr.mxu0 0.0
        %1358 = vmatpush1.msra.mxu0 0.0
        %1359 = vmatprep.subr.mxu0 0.0
        %1360 = vmatpush1.msra.mxu0 0.0
        %1361 = vmatprep.subr.mxu0 0.0
        %1362 = vmatpush1.msra.mxu0 0.0
        %1363 = vmatprep.subr.mxu0 0.0
        %1364 = vmatpush1.msra.mxu0 0.0
        %1365 = vmatprep.subr.mxu0 0.0
        %1366 = vmatpush1.msra.mxu0 0.0
        %1367 = vmatprep.subr.mxu0 0.0
        %1368 = vmatpush1.msra.mxu0 0.0
        %1369 = vmatprep.subr.mxu0 0.0
        %1370 = vmatpush1.msra.mxu0 0.0
        %1371 = vmatprep.subr.mxu0 0.0
        %1372 = vmatpush1.msra.mxu0 0.0
        %1373 = vmatprep.subr.mxu0 0.0
        %1374 = vmatpush1.msra.mxu0 0.0
        %1375 = vmatprep.subr.mxu0 0.0
        %1376 = vmatpush1.msra.mxu0 0.0
        %1377 = vmatprep.subr.mxu0 0.0
        %1378 = vmatpush1.msra.mxu0 0.0
        %1379 = vmatprep.mubr.f32.mxu0 0.0
        %1380 = vmatmul.mubr.f32.gmra.mrb[0].mxu0 %v1313
        %v1381 = vpop.f32.mrb[0].mxu0
        %v1382 = vadd.f32 0.0, %v1381
        %v1383 = vpop.f32.mrb[0].mxu0
        %1384 = vdwg.mxu0
        %v1385 = vlaneseq
        %v1386 = vshrl.u32 %v1385, 7
        %v1387 = vlaneseq
        %v1388 = vand.u32 %v1387, 127
        %vm1389 = vcmp.eq.s32.totalorder %v1386, %v1388
        %v1390 = vsel %vm1389, 1, 0
        %v1391 = vcvt.s32.f32 %v1390
        %v1392 = vmul.f32 %v818, %v818
        %v1393 = vsel %vm821, %v1392, 0.0
        %1394 = vadd.xlane.f32.xlu0 %v1393
        %v1395 = vpop.xlane.xlu0 %1394
        %v1396 = vrot.slane %v1395, 4
        %v1397 = vadd.f32 %v1395, %v1396
        %v1398 = vrot.slane %v1397, 2
        %v1399 = vadd.f32 %v1397, %v1398
        %v1400 = vrot.slane %v1399, 1
        %v1401 = vadd.f32 %v1399, %v1400
        %s1402 = vtos %v1401
        %v1403 = vstv %s1402
        %v1404 = vmul.f32 %v1271, %v1391
        %v1405 = vsel %vm1278, %v1404, 0.0
        %1406 = vadd.xlane.f32.xlu0 %v1405
        %v1407 = vpop.xlane.xlu0 %1406
        %v1408 = vrot.slane %v1407, 4
        %v1409 = vadd.f32 %v1407, %v1408
        %v1410 = vrot.slane %v1409, 2
        %v1411 = vadd.f32 %v1409, %v1410
        %v1412 = vrot.slane %v1411, 1
        %v1413 = vadd.f32 %v1411, %v1412
        %s1414 = vtos %v1413
        %v1415 = vstv %s1414
        %v1416 = vmul.f32 %v1382, %v1382
        %v1417 = vsel %vm1278, %v1416, 0.0
        %1418 = vadd.xlane.f32.xlu0 %v1417
        %v1419 = vpop.xlane.xlu0 %1418
        %v1420 = vrot.slane %v1419, 4
        %v1421 = vadd.f32 %v1419, %v1420
        %v1422 = vrot.slane %v1421, 2
        %v1423 = vadd.f32 %v1421, %v1422
        %v1424 = vrot.slane %v1423, 1
        %v1425 = vadd.f32 %v1423, %v1424
        %s1426 = vtos %v1425
        %v1427 = vstv %s1426
        %v1428 = vmul.f32 %v1415, 2.0
        %v1429 = vsub.f32 %v1403, %v1428
        %v1430 = vadd.f32 %v1429, %v1427
        %vm1431 = vcmask 0
        %1432 = vst.msk [vmem:[%s809] sm:$0x1] %vm1431, %v1430
        %v1433 = vsub.f32 0.0, %v1124
        %v1434 = vadd.f32 %v1124, 1e-15
        %v1435 = vlog2.pop %v1434
        %v1436 = vmul.f32 %v1435, 0.6931472
        %v1437 = vmul.f32 %v1433, %v1436
        %v1438 = vsel %vm938, %v1437, 0.0
        %1439 = vadd.xlane.f32.xlu0 %v1438
        %v1440 = vpop.xlane.xlu0 %1439
        %v1441 = vrot.slane %v1440, 4
        %v1442 = vadd.f32 %v1440, %v1441
        %v1443 = vrot.slane %v1442, 2
        %v1444 = vadd.f32 %v1442, %v1443
        %v1445 = vrot.slane %v1444, 1
        %v1446 = vadd.f32 %v1444, %v1445
        %s1447 = vtos %v1446
        %v1448 = vstv %s1447
        %1449 = vst.msk [vmem:[%s815] sm:$0x1] %vm1431, %v1448
        %v1450 = vsel %vm1276, %v1184, 0.0
        %v1451 = vrot.slane %v1450, 4
        %v1452 = vadd.f32 %v1450, %v1451
        %v1453 = vrot.slane %v1452, 2
        %v1454 = vadd.f32 %v1452, %v1453
        %v1455 = vrot.slane %v1454, 1
        %v1456 = vadd.f32 %v1454, %v1455
        %v1457 = vld [vmem:[#allocation22] sm:$0x1]
        %v1458 = vmul.f32 %v1456, %v1457
        %v1459 = vld [vmem:[#allocation23] sm:$0x1]
        %v1460 = vadd.f32 %v1458, %v1459
        %v1461 = vmax.f32 %v1460, 0.0
        %vm1462 = vcmask 253952
        %1463 = vst.msk [vmem:[%s803] sm:$0x1] %vm1462, %v1461
        %s1464 = sand.u32 %s363, 1
        %s1465 = scalar_lea.sflag [#allocation4], %s1464
        %s1466 = sand.u32 %s363, 1
        %s1467 = smul.addr %s1466, 4
        %s1468 = scalar_lea.vmem [#allocation25], %s1467
        %s1469 = sand.u32 %s51, 1
        %s1470 = scalar_lea.sflag [#allocation27], %s1469
        %s1471 = sand.u32 %s389, 1
        %s1472 = smul.addr %s1471, 4
        %s1473 = scalar_lea.vmem [#allocation26], %s1472
        %s1474 = sand.u32 %s51, 1
        %s1475 = scalar_lea.sflag [#allocation27], %s1474
        %s1476 = sand.u32 %s415, 1
        %s1477 = scalar_lea.vmem [#allocation28], %s1476
        %s1478 = sand.u32 %s51, 1
        %s1479 = scalar_lea.sflag [#allocation30], %s1478
        %s1480 = sand.u32 %s441, 1
        %s1481 = scalar_lea.vmem [#allocation29], %s1480
        %s1482 = sand.u32 %s51, 1
        %s1483 = scalar_lea.sflag [#allocation30], %s1482
        %s1484 = sand.u32 %s467, 1
        %s1485 = scalar_lea.vmem [#allocation31], %s1484
        // Predicated region
        $region133: #{densepool_forward.7} parent=75 // pred_check
          %p1486 = pneg %p373
        $region134: #{densepool_forward.7} parent=75 // pred_check_branch
          %1488 = sbr.rel (%p1486) target = $region136
        $region135: #{densepool_forward.7} parent=75 // pred_region
          %s1490 = ssub.s32 64, 64
          %1491 = vsyncadd %s1465, %s1490
          %s1492 = smul.addr %s51, 64
          %s1493 = scalar_lea.hbm %s14, %s1492
          %s1495 = sshll.u32 %s1468, 4
          %s1496 = int_to_ptr.vmem [resolvable:$true] %s1495
          %1498 = dma.vmem_to_hbm [thread:$0]  %s1496, 64, %s1493, %s1465
        $region136: #{densepool_forward.7} parent=75 // pred_fallthru
          _
        // Predicated region
        $region137: #{densepool_forward.7} parent=75 // pred_check
          %p1499 = pneg %p399
        $region138: #{densepool_forward.7} parent=75 // pred_check_branch
          %1501 = sbr.rel (%p1499) target = $region140
        $region139: #{densepool_forward.7} parent=75 // pred_region
          %s1503 = ssub.s32 64, 64
          %1504 = vsyncadd %s1470, %s1503
          %s1505 = smul.addr %s51, 64
          %s1506 = scalar_lea.hbm %s15, %s1505
          %s1508 = sshll.u32 %s1473, 4
          %s1509 = int_to_ptr.vmem [resolvable:$true] %s1508
          %1511 = dma.vmem_to_hbm [thread:$0]  %s1509, 64, %s1506, %s1470
        $region140: #{densepool_forward.7} parent=75 // pred_fallthru
          _
        // Predicated region
        $region141: #{densepool_forward.7} parent=75 // pred_check
          %p1512 = pneg %p425
        $region142: #{densepool_forward.7} parent=75 // pred_check_branch
          %1514 = sbr.rel (%p1512) target = $region144
        $region143: #{densepool_forward.7} parent=75 // pred_region
          %s1516 = ssub.s32 16, 16
          %1517 = vsyncadd %s1475, %s1516
          %s1518 = smul.addr %s51, 16
          %s1519 = scalar_lea.hbm %s16, %s1518
          %s1521 = sshll.u32 %s1477, 4
          %s1522 = int_to_ptr.vmem [resolvable:$true] %s1521
          %1524 = dma.vmem_to_hbm [thread:$0]  %s1522, 16, %s1519, %s1475
        $region144: #{densepool_forward.7} parent=75 // pred_fallthru
          _
        // Predicated region
        $region145: #{densepool_forward.7} parent=75 // pred_check
          %p1525 = pneg %p451
        $region146: #{densepool_forward.7} parent=75 // pred_check_branch
          %1527 = sbr.rel (%p1525) target = $region148
        $region147: #{densepool_forward.7} parent=75 // pred_region
          %s1529 = ssub.s32 16, 16
          %1530 = vsyncadd %s1479, %s1529
          %s1531 = smul.addr %s51, 16
          %s1532 = scalar_lea.hbm %s17, %s1531
          %s1534 = sshll.u32 %s1481, 4
          %s1535 = int_to_ptr.vmem [resolvable:$true] %s1534
          %1537 = dma.vmem_to_hbm [thread:$0]  %s1535, 16, %s1532, %s1479
        $region148: #{densepool_forward.7} parent=75 // pred_fallthru
          _
        // Predicated region
        $region149: #{densepool_forward.7} parent=75 // pred_check
          %p1538 = pneg %p477
        $region150: #{densepool_forward.7} parent=75 // pred_check_branch
          %1540 = sbr.rel (%p1538) target = $region152
        $region151: #{densepool_forward.7} parent=75 // pred_region
          %s1542 = ssub.s32 16, 16
          %1543 = vsyncadd %s1483, %s1542
          %s1544 = smul.addr %s51, 16
          %s1545 = scalar_lea.hbm %s18, %s1544
          %s1547 = sshll.u32 %s1485, 4
          %s1548 = int_to_ptr.vmem [resolvable:$true] %s1547
          %1550 = dma.vmem_to_hbm [thread:$0]  %s1548, 16, %s1545, %s1483
        $region152: #{densepool_forward.7} parent=75 // pred_fallthru
          _
      $region76: #{densepool_forward.7} parent=5 // pred_fallthru
        _
      %p1551 = scmp.le.s32.totalorder 2, %s46
      // Predicated region
      $region153: #{densepool_forward.7} parent=5 // pred_check
        %p1552 = pneg %p1551
      $region154: #{densepool_forward.7} parent=5 // pred_check_branch
        %1554 = sbr.rel (%p1552) target = $region156
      $region155: #{densepool_forward.7} parent=5 // pred_region
        %s1555 = ssub.s32 %s46, 2
        // Predicated region
        $region157: #{densepool_forward.7} parent=155 // pred_check
          %p1556 = pneg %p379
        $region158: #{densepool_forward.7} parent=155 // pred_check_branch
          %1558 = sbr.rel (%p1556) target = $region160
        $region159: #{densepool_forward.7} parent=155 // pred_region
          %s1559 = sand.u32 %s364, 1
          %s1560 = scalar_lea.sflag [#allocation4], %s1559
          %s1561 = sand.u32 %s364, 1
          %s1562 = smul.addr %s1561, 4
          %s1563 = scalar_lea.vmem [#allocation25], %s1562
          %1564 = dma.done %s1560, 64
        $region160: #{densepool_forward.7} parent=155 // pred_fallthru
          _
        // Predicated region
        $region161: #{densepool_forward.7} parent=155 // pred_check
          %p1565 = pneg %p405
        $region162: #{densepool_forward.7} parent=155 // pred_check_branch
          %1567 = sbr.rel (%p1565) target = $region164
        $region163: #{densepool_forward.7} parent=155 // pred_region
          %s1568 = sand.u32 %s52, 1
          %s1569 = scalar_lea.sflag [#allocation27], %s1568
          %s1570 = sand.u32 %s390, 1
          %s1571 = smul.addr %s1570, 4
          %s1572 = scalar_lea.vmem [#allocation26], %s1571
          %1573 = dma.done %s1569, 64
        $region164: #{densepool_forward.7} parent=155 // pred_fallthru
          _
        // Predicated region
        $region165: #{densepool_forward.7} parent=155 // pred_check
          %p1574 = pneg %p431
        $region166: #{densepool_forward.7} parent=155 // pred_check_branch
          %1576 = sbr.rel (%p1574) target = $region168
        $region167: #{densepool_forward.7} parent=155 // pred_region
          %s1577 = sand.u32 %s52, 1
          %s1578 = scalar_lea.sflag [#allocation27], %s1577
          %s1579 = sand.u32 %s416, 1
          %s1580 = scalar_lea.vmem [#allocation28], %s1579
          %1581 = dma.done %s1578, 16
        $region168: #{densepool_forward.7} parent=155 // pred_fallthru
          _
        // Predicated region
        $region169: #{densepool_forward.7} parent=155 // pred_check
          %p1582 = pneg %p457
        $region170: #{densepool_forward.7} parent=155 // pred_check_branch
          %1584 = sbr.rel (%p1582) target = $region172
        $region171: #{densepool_forward.7} parent=155 // pred_region
          %s1585 = sand.u32 %s52, 1
          %s1586 = scalar_lea.sflag [#allocation30], %s1585
          %s1587 = sand.u32 %s442, 1
          %s1588 = scalar_lea.vmem [#allocation29], %s1587
          %1589 = dma.done %s1586, 16
        $region172: #{densepool_forward.7} parent=155 // pred_fallthru
          _
        // Predicated region
        $region173: #{densepool_forward.7} parent=155 // pred_check
          %p1590 = pneg %p483
        $region174: #{densepool_forward.7} parent=155 // pred_check_branch
          %1592 = sbr.rel (%p1590) target = $region176
        $region175: #{densepool_forward.7} parent=155 // pred_region
          %s1593 = sand.u32 %s52, 1
          %s1594 = scalar_lea.sflag [#allocation30], %s1593
          %s1595 = sand.u32 %s468, 1
          %s1596 = scalar_lea.vmem [#allocation31], %s1595
          %1597 = dma.done %s1594, 16
        $region176: #{densepool_forward.7} parent=155 // pred_fallthru
          _
      $region156: #{densepool_forward.7} parent=5 // pred_fallthru
        _
    $region6: #{densepool_forward.7} parent=1 // loop_footer
      %s50 = sadd.s32 1, %s46
    $region7: #{densepool_forward.7} parent=1 // loop_footer_branch
      %45 = sbr.rel target = $region3
    $region8: #{densepool_forward.7} parent=1 // loop_exit
      _
    %1598 = vsyncpa [#allocation3], 1
    %s1599 = scalar_lea.sflag [#allocation3], 1
    %1600 = vsyncpa %s1599, 1
    %1601 = vsyncpa [#allocation6], 1
    %s1602 = scalar_lea.sflag [#allocation6], 1
    %1603 = vsyncpa %s1602, 1
    %1604 = vsyncpa [#allocation9], 1
    %1605 = vsyncpa [#allocation12], 1
    %1606 = vsyncpa [#allocation15], 1
    %1607 = vsyncpa [#allocation18], 1
    %1608 = vsyncpa [#allocation21], 1
    %1609 = vsyncpa [#allocation24], 1
    %1610 = vsyncpa [#allocation4], 1
    %s1611 = scalar_lea.sflag [#allocation4], 1
    %1612 = vsyncpa %s1611, 1
    %1613 = vsyncpa [#allocation27], 1
    %s1614 = scalar_lea.sflag [#allocation27], 1
    %1615 = vsyncpa %s1614, 1
    %1616 = vsyncpa [#allocation30], 1
    %s1617 = scalar_lea.sflag [#allocation30], 1
    %1618 = vsyncpa %s1617, 1

// kernel: densepool_forward.9
$region0: #{densepool_forward.9}
  #allocation0 [shape = 'u32[]', space=smem, size = 0x4, offset = 0x4, fixed_abs, tag = 'smem constant byte address 0x4 - core index']
  #allocation1 [shape = 'u32[144,128]{1,0:T(1,128)}', space=vmem, size = 0x12000, scoped, tag = 'internal scratch']
  %s0 = inlined_call_operand.vmem [shape: f32[2,96], index: 0, kind: input, shape index: {}]
  %s1 = inlined_call_operand.vmem [shape: f32[96,3], index: 1, kind: input, shape index: {}]
  %s2 = inlined_call_operand.vmem [shape: f32[1,3], index: 2, kind: input, shape index: {}]
  %s3 = inlined_call_operand.hbm [shape: f32[2,3], index: 3, kind: output, shape index: {}]
  %s4 = sld [smem:[#allocation0]]
  $region22: #{densepool_forward.9} parent=0
    _
  %s6 = ssub.s32 1, %s4
  %s7 = scalar_select 0, %s6, %s4
  $region1: #{densepool_forward.9} parent=0
    #allocation2 [shape = 'u8[1024]{0}', space=vmem, size = 0x400, scoped, tag = 'output window, operand 0, single buffered']
    #allocation3 [shape = 's32[1]{0}', space=sflag, size = 0x4, scoped, tag = 'scoped memory for densepool_forward.9']
    %8 = vsyncpa [#allocation3], 0
    // Predicated region
    $region2: #{densepool_forward.9} parent=1 // pred_check
      _
    $region3: #{densepool_forward.9} parent=1 // pred_check_branch
      %10 = sbr.rel (0) target = $region5
    $region4: #{densepool_forward.9} parent=1 // pred_region
      _
    $region5: #{densepool_forward.9} parent=1 // pred_fallthru
      _
    // Predicated region
    $region6: #{densepool_forward.9} parent=1 // pred_check
      _
    $region7: #{densepool_forward.9} parent=1 // pred_check_branch
      %12 = sbr.rel (0) target = $region9
    $region8: #{densepool_forward.9} parent=1 // pred_region
      _
    $region9: #{densepool_forward.9} parent=1 // pred_fallthru
      _
    // Predicated region
    $region10: #{densepool_forward.9} parent=1 // pred_check
      _
    $region11: #{densepool_forward.9} parent=1 // pred_check_branch
      %14 = sbr.rel (0) target = $region13
    $region12: #{densepool_forward.9} parent=1 // pred_region
      _
    $region13: #{densepool_forward.9} parent=1 // pred_fallthru
      _
    %v16 = vld [vmem:[%s0] sm:$0x3]
    %v17 = vpack.c.bf16 %v16, %v16
    %v18 = vld [vmem:[%s1] sm:$0xff]
    %v19 = vld [vmem:[%s1 + $0x8] sm:$0xff]
    %v20 = vld [vmem:[%s1 + $0x10] sm:$0xff]
    %v21 = vld [vmem:[%s1 + $0x18] sm:$0xff]
    %v22 = vld [vmem:[%s1 + $0x20] sm:$0xff]
    %v23 = vld [vmem:[%s1 + $0x28] sm:$0xff]
    %v24 = vld [vmem:[%s1 + $0x30] sm:$0xff]
    %v25 = vld [vmem:[%s1 + $0x38] sm:$0xff]
    %v26 = vld [vmem:[%s1 + $0x40] sm:$0xff]
    %v27 = vld [vmem:[%s1 + $0x48] sm:$0xff]
    %v28 = vld [vmem:[%s1 + $0x50] sm:$0xff]
    %v29 = vld [vmem:[%s1 + $0x58] sm:$0xff]
    %v30 = vpack.c.bf16 %v19, %v18
    %v31 = vpack.c.bf16 %v21, %v20
    %v32 = vpack.c.bf16 %v23, %v22
    %v33 = vpack.c.bf16 %v25, %v24
    %v34 = vpack.c.bf16 %v27, %v26
    %v35 = vpack.c.bf16 %v29, %v28
    %v36 = vld [vmem:[%s2] sm:$0x1]
    %v38 = vlaneseq
    %v39 = vshrl.u32 %v38, 7
    %v40 = vsub.s32 0, %v39
    %v41 = vrot.slane %v36, %v40
    %vm43 = vcmask 785408
    %v45 = vsel %vm43, %v17, 0
    %47 = vmatprep.subr.bf16.mxu0 0
    %48 = vmatpush1.bf16.msra.mxu0 %v30
    %49 = vmatprep.subr.bf16.mxu0 0
    %50 = vmatpush1.bf16.msra.mxu0 %v31
    %51 = vmatprep.subr.bf16.mxu0 0
    %52 = vmatpush1.bf16.msra.mxu0 %v32
    %53 = vmatprep.subr.bf16.mxu0 0
    %54 = vmatpush1.bf16.msra.mxu0 %v33
    %55 = vmatprep.subr.bf16.mxu0 0
    %56 = vmatpush1.bf16.msra.mxu0 %v34
    %57 = vmatprep.subr.bf16.mxu0 0
    %58 = vmatpush1.bf16.msra.mxu0 %v35
    %59 = vmatprep.subr.bf16.mxu0 0
    %60 = vmatpush1.bf16.msra.mxu0 0
    %61 = vmatprep.subr.bf16.mxu0 0
    %62 = vmatpush1.bf16.msra.mxu0 0
    %63 = vmatprep.subr.bf16.mxu0 0
    %64 = vmatpush1.bf16.msra.mxu0 0
    %65 = vmatprep.subr.bf16.mxu0 0
    %66 = vmatpush1.bf16.msra.mxu0 0
    %67 = vmatprep.subr.bf16.mxu0 0
    %68 = vmatpush1.bf16.msra.mxu0 0
    %69 = vmatprep.subr.bf16.mxu0 0
    %70 = vmatpush1.bf16.msra.mxu0 0
    %71 = vmatprep.subr.bf16.mxu0 0
    %72 = vmatpush1.bf16.msra.mxu0 0
    %73 = vmatprep.subr.bf16.mxu0 0
    %74 = vmatpush1.bf16.msra.mxu0 0
    %75 = vmatprep.subr.bf16.mxu0 0
    %76 = vmatpush1.bf16.msra.mxu0 0
    %77 = vmatprep.subr.bf16.mxu0 0
    %78 = vmatpush1.bf16.msra.mxu0 0
    %79 = vmatprep.mubr.bf16.mxu0 0
    %80 = vmatmul.mubr.bf16.gmra.mrb[0].mxu0 %v45
    %v81 = vpop.f32.mrb[0].mxu0
    %v82 = vadd.f32 %v41, %v81
    %v83 = vpop.f32.mrb[0].mxu0
    %v84 = vpop.f32.mrb[0].mxu0
    %v85 = vpop.f32.mrb[0].mxu0
    %86 = vdwg.mxu0
    %vm87 = vcmask 17408
    %88 = vst.msk [vmem:[#allocation2] sm:$0x3] %vm87, %v82
    // Predicated region
    $region14: #{densepool_forward.9} parent=1 // pred_check
      _
    $region15: #{densepool_forward.9} parent=1 // pred_check_branch
      %90 = sbr.rel (0) target = $region17
    $region16: #{densepool_forward.9} parent=1 // pred_region
      %s92 = ssub.s32 32, 32
      %93 = vsyncadd [#allocation3], %s92
      %s95 = sshll.u32 [#allocation2], 4
      %s96 = int_to_ptr.vmem [resolvable:$true] %s95
      %98 = dma.vmem_to_hbm [thread:$0]  %s96, 32, %s3, [#allocation3]
    $region17: #{densepool_forward.9} parent=1 // pred_fallthru
      _
    // Predicated region
    $region18: #{densepool_forward.9} parent=1 // pred_check
      _
    $region19: #{densepool_forward.9} parent=1 // pred_check_branch
      %100 = sbr.rel (0) target = $region21
    $region20: #{densepool_forward.9} parent=1 // pred_region
      %101 = dma.done [#allocation3], 32
    $region21: #{densepool_forward.9} parent=1 // pred_fallthru
      _
    %102 = vsyncpa [#allocation3], 1

</llo_original>
